<compile_context>
chip_gen: v7x
topology: tpu7x:2x2x1
jax: 0.10.0
libtpu: 0.0.40
codegen_flags: <defaults>
</compile_context>

<pallas_src>
import numpy as np
import jax
import jax.numpy as jnp
from jax import lax
from jax.experimental import pallas as pl
from jax.experimental.pallas import tpu as pltpu

IMPOSSIBLE = -10000.0


# ----------------------------------------------------------------------------
# Fused kernel: BiLSTM -> CRF fc -> CRF forward + gold score -> Viterbi + backtrace
# ----------------------------------------------------------------------------
def bilstm_crf_kernel(x_ref, m_ref, tags_ref,
                      wih_ref, whh_f_ref, whh_b_ref, b_ref,
                      fc_w_ref, fc_b_ref, trans_ref,
                      fwd_ref, gold_ref, best_score_ref, paths_ref,
                      out_scr):
    B, L = m_ref.shape
    H = whh_f_ref.shape[0]
    C = trans_ref.shape[0]
    G = 4 * H
    start_idx = C - 2
    stop_idx = C - 1

    m_all = m_ref[...]                       # [B, L] (loaded once, register-resident)
    tags_all = tags_ref[...]                 # [B, L] int32
    trans = trans_ref[...]                   # [C, C], trans[to, from]

    # ---- hoisted input projection: single well-shaped matmul [L*B, E] x [E, 8H] ----
    gates_in = (jnp.dot(x_ref[...], wih_ref[...],
                        preferred_element_type=jnp.float32)
                + b_ref[...])                # [L*B, 8H]; cols [0:4H] fwd, [4H:8H] bwd

    whh_f = whh_f_ref[...]                   # [H, 4H]
    whh_b = whh_b_ref[...]                   # [H, 4H]

    def cell(gi, h, c, whh, keep):
        gates = gi + jnp.dot(h, whh, preferred_element_type=jnp.float32)   # [B, 4H]
        i_g = jax.nn.sigmoid(gates[:, 0 * H:1 * H])
        f_g = jax.nn.sigmoid(gates[:, 1 * H:2 * H])
        g_g = jnp.tanh(gates[:, 2 * H:3 * H])
        o_g = jax.nn.sigmoid(gates[:, 3 * H:4 * H])
        c_new = f_g * c + i_g * g_g
        h_new = o_g * jnp.tanh(c_new)
        h_out = jnp.where(keep, h_new, h)    # don't advance state on pad
        c_out = jnp.where(keep, c_new, c)
        y = jnp.where(keep, h_new, 0.0)      # pad_packed gives zeros on pads
        return h_out, c_out, y

    zeros_bh = jnp.zeros((B, H), jnp.float32)
    hf, cf, hb, cb = zeros_bh, zeros_bh, zeros_bh, zeros_bh

    # ---- interleaved fwd/bwd recurrence (fully unrolled; L static & small) ----
    for k in range(L):
        tf = k
        tb = L - 1 - k
        keep_f = m_all[:, tf:tf + 1] > 0.0                       # [B, 1] bool
        keep_b = m_all[:, tb:tb + 1] > 0.0
        gi_f = gates_in[tf * B:(tf + 1) * B, 0:G]                # [B, 4H]
        gi_b = gates_in[tb * B:(tb + 1) * B, G:2 * G]
        hf, cf, yf = cell(gi_f, hf, cf, whh_f, keep_f)
        hb, cb, yb = cell(gi_b, hb, cb, whh_b, keep_b)
        out_scr[tf * B:(tf + 1) * B, 0:H] = yf                   # fwd half
        out_scr[tb * B:(tb + 1) * B, H:2 * H] = yb               # bwd half

    # ---- CRF feature projection: one matmul over all timesteps & both directions ----
    feats_all = (jnp.dot(out_scr[...], fc_w_ref[...],
                         preferred_element_type=jnp.float32)
                 + fc_b_ref[...])                                # [L*B, C]

    # ---- merged CRF forward-algorithm + gold score + Viterbi time loop ----
    iota_c = lax.broadcasted_iota(jnp.int32, (B, C), 1)
    iota3 = lax.broadcasted_iota(jnp.int32, (B, C, C), 2)
    start_oh = (iota_c == start_idx).astype(jnp.float32)
    trans_b = trans[None, :, :]                                  # hoisted broadcast [1,C,C]

    alpha = jnp.where(iota_c == start_idx, 0.0, IMPOSSIBLE)      # [B, C] log-partition
    vit = alpha                                                  # [B, C] viterbi scores
    prev_oh = start_oh
    last_oh = start_oh
    gold = jnp.zeros((B, 1), jnp.float32)
    bps = []                                                     # per-step backpointers

    for t in range(L):
        emit = feats_all[t * B:(t + 1) * B, :]                   # [B, C]
        keep = m_all[:, t:t + 1] > 0.0                           # [B, 1]
        tag_oh = (tags_all[:, t:t + 1] == iota_c).astype(jnp.float32)   # [B, C]

        # forward algorithm (stabilized logsumexp over "from" axis; emit added after)
        scores_mat = alpha[:, None, :] + trans_b                 # [B, C, C]
        mx = jnp.max(scores_mat, axis=-1)
        lse = mx + jnp.log(jnp.sum(jnp.exp(scores_mat - mx[..., None]), axis=-1))
        alpha = jnp.where(keep, lse + emit, alpha)

        # gold (sentence) score: one-hot select of trans[tag_t, tag_{t-1}] (no MXU)
        emit_gold = jnp.sum(emit * tag_oh, axis=-1, keepdims=True)          # [B, 1]
        trans_from = jnp.sum(trans_b * prev_oh[:, None, :], axis=-1)        # [B, C]
        trans_gold = jnp.sum(trans_from * tag_oh, axis=-1, keepdims=True)   # [B, 1]
        gold = gold + jnp.where(keep, emit_gold + trans_gold, 0.0)
        prev_oh = tag_oh                            # unconditional, as in torch
        last_oh = jnp.where(keep, tag_oh, last_oh)

        # viterbi recursion (backpointers written even on padded steps, as in torch)
        acc = vit[:, None, :] + trans_b                                     # [B, C, C]
        best = jnp.max(acc, axis=-1)                                        # [B, C]
        bp = jnp.min(jnp.where(acc == best[..., None], iota3, C), axis=-1)  # first argmax
        bps.append(bp)
        vit = jnp.where(keep, best + emit, vit)

    stop_row = trans[stop_idx:stop_idx + 1, :]                              # [1, C]

    final_alpha = alpha + stop_row
    mxa = jnp.max(final_alpha, axis=-1, keepdims=True)
    fwd_ref[...] = mxa + jnp.log(jnp.sum(jnp.exp(final_alpha - mxa),
                                         axis=-1, keepdims=True))
    gold_ref[...] = gold + jnp.sum(stop_row * last_oh, axis=-1, keepdims=True)

    final_vit = vit + stop_row
    best_val = jnp.max(final_vit, axis=-1, keepdims=True)                   # [B, 1]
    best_score_ref[...] = best_val
    best_tag = jnp.min(jnp.where(final_vit == best_val, iota_c, C),
                       axis=-1, keepdims=True)                              # [B, 1] int32

    # ---- on-device Viterbi backtrace (vectorized over batch) ----
    slen = jnp.sum(m_all, axis=1, keepdims=True).astype(jnp.int32)          # [B, 1]
    iota_l = lax.broadcasted_iota(jnp.int32, (B, L), 1)
    cur = best_tag
    decoded = jnp.zeros((B, L), jnp.int32)
    for t in range(L - 1, -1, -1):
        if t < L - 1:
            cur_oh = (cur == iota_c)                                        # [B, C]
            prev = jnp.sum(jnp.where(cur_oh, bps[t + 1], 0).astype(jnp.float32),
                           axis=-1, keepdims=True).astype(jnp.int32)        # [B, 1]
            cur = jnp.where(slen - 1 == t, best_tag,
                            jnp.where(t < slen - 1, prev, cur))
        decoded = jnp.where((iota_l == t) & (t < slen), cur, decoded)
    paths_ref[...] = decoded


def run_fused(x2d, mask_bl, tags_bl, params):
    B, L = mask_bl.shape
    H = params["whh_f"].shape[0]
    vmem = pl.BlockSpec(memory_space=pltpu.MemorySpace.VMEM)
    out_shape = (
        jax.ShapeDtypeStruct((B, 1), jnp.float32),   # forward (partition) score
        jax.ShapeDtypeStruct((B, 1), jnp.float32),   # gold (sentence) score
        jax.ShapeDtypeStruct((B, 1), jnp.float32),   # best viterbi score
        jax.ShapeDtypeStruct((B, L), jnp.int32),     # decoded tags (padded with 0)
    )
    return pl.pallas_call(
        bilstm_crf_kernel,
        out_shape=out_shape,
        in_specs=[vmem] * 10,
        out_specs=(vmem, vmem, vmem, vmem),
        scratch_shapes=[pltpu.VMEM((L * B, 2 * H), jnp.float32)],
    )(x2d, mask_bl, tags_bl,
      params["wih_cat"], params["whh_f"], params["whh_b"], params["b_cat"],
      params["fc_w"], params["fc_b"], params["trans"])


# ----------------------------------------------------------------------------
# Parameter init (deterministic, mirrors the PyTorch module's shapes)
# ----------------------------------------------------------------------------
def init_params(key, V, E, H, C):
    ks = jax.random.split(key, 13)

    def rn(k, shape, scale=0.1):
        return (jax.random.normal(k, shape) * scale).astype(jnp.float32)

    emb = rn(ks[0], (V, E), 1.0).at[0].set(0.0)          # padding_idx=0 row zeroed

    wih_f = rn(ks[1], (4 * H, E)); whh_f = rn(ks[2], (4 * H, H))
    b_f = rn(ks[3], (4 * H,)) + rn(ks[4], (4 * H,))      # b_ih + b_hh
    wih_b = rn(ks[5], (4 * H, E)); whh_b = rn(ks[6], (4 * H, H))
    b_b = rn(ks[7], (4 * H,)) + rn(ks[8], (4 * H,))

    fc_w = rn(ks[9], (C, 2 * H)); fc_b = rn(ks[10], (C,))

    trans = jax.random.normal(ks[11], (C, C)).astype(jnp.float32)
    start_idx, stop_idx = C - 2, C - 1
    trans = trans.at[start_idx, :].set(IMPOSSIBLE)
    trans = trans.at[:, stop_idx].set(IMPOSSIBLE)

    return dict(
        emb=emb,
        wih_cat=jnp.concatenate([wih_f.T, wih_b.T], axis=1),     # [E, 8H]
        whh_f=whh_f.T, whh_b=whh_b.T,                            # [H, 4H] each
        b_cat=jnp.concatenate([b_f, b_b])[None, :],              # [1, 8H]
        fc_w=fc_w.T, fc_b=fc_b[None, :],                         # [2H, C], [1, C]
        trans=trans,
    )


# ----------------------------------------------------------------------------
# Full forward pass (mirrors BiLSTM_CRF.forward -> (loss, tag_seq))
# ----------------------------------------------------------------------------
def bilstm_crf_forward(params, sent, labels, lengths, masks):
    B, L = sent.shape

    # Embedding lookup (glue: tiny gather over the vocab table).
    embedded = params["emb"][sent]                                       # [B, L, E]
    # Dropout == identity (inference).

    # Time-major rows (row index = t*B + b) for the hoisted input-projection matmul.
    x2d = jnp.transpose(embedded, (1, 0, 2)).reshape(L * B, -1)          # [L*B, E]
    mask_bl = masks.astype(jnp.float32)                                  # [B, L]
    tags_bl = labels.astype(jnp.int32)                                   # [B, L]

    fwd, gold, best_score, paths = run_fused(x2d, mask_bl, tags_bl, params)
    loss = jnp.mean(fwd[:, 0] - gold[:, 0])

    # Host side only truncates the already-decoded [B, L] paths to each sequence length.
    paths_np = np.asarray(paths)
    lens_np = np.asarray(jnp.sum(mask_bl, axis=1)).astype(np.int64)
    best_paths = [paths_np[b, :int(lens_np[b])].tolist() for b in range(B)]

    return loss, best_score[:, 0], best_paths


if __name__ == "__main__":
    B, L, E, H, V, C = 2, 8, 16, 32, 50, 6   # C includes START and STOP (4 real tags)

    key = jax.random.PRNGKey(0)
    k_param, k_sent, k_lab = jax.random.split(key, 3)

    params = init_params(k_param, V, E, H, C)

    lengths = jnp.array([8, 5], dtype=jnp.int32)                 # sorted descending
    masks = (jnp.arange(L)[None, :] < lengths[:, None]).astype(jnp.float32)  # [B, L]
    sent = jax.random.randint(k_sent, (B, L), 1, V).astype(jnp.int32)
    sent = jnp.where(masks > 0, sent, 0)                          # pad token id 0
    labels = jax.random.randint(k_lab, (B, L), 0, C - 2).astype(jnp.int32)  # real tags only
    labels = jnp.where(masks > 0, labels, 0)

    loss, best_score, tag_seq = bilstm_crf_forward(params, sent, labels, lengths, masks)
    jax.block_until_ready(loss)
    jax.block_until_ready(best_score)

    assert np.isfinite(float(loss))
    assert all(len(p) == int(l) for p, l in zip(tag_seq, np.asarray(lengths)))
    print("KERNEL_OK")
</pallas_src>

<mosaic_0001>
module attributes {stable_mosaic.version = 11 : i64} {
  func.func @bilstm_crf_kernel(%arg0: memref<16x16xf32, #tpu.memory_space<vmem>>, %arg1: memref<2x8xf32, #tpu.memory_space<vmem>>, %arg2: memref<2x8xi32, #tpu.memory_space<vmem>>, %arg3: memref<16x256xf32, #tpu.memory_space<vmem>>, %arg4: memref<32x128xf32, #tpu.memory_space<vmem>>, %arg5: memref<32x128xf32, #tpu.memory_space<vmem>>, %arg6: memref<1x256xf32, #tpu.memory_space<vmem>>, %arg7: memref<64x6xf32, #tpu.memory_space<vmem>>, %arg8: memref<1x6xf32, #tpu.memory_space<vmem>>, %arg9: memref<6x6xf32, #tpu.memory_space<vmem>>, %arg10: memref<2x1xf32, #tpu.memory_space<vmem>>, %arg11: memref<2x1xf32, #tpu.memory_space<vmem>>, %arg12: memref<2x1xf32, #tpu.memory_space<vmem>>, %arg13: memref<2x8xi32, #tpu.memory_space<vmem>>, %arg14: memref<16x64xf32, #tpu.memory_space<vmem>>) attributes {dimension_semantics = [], scalar_prefetch = 0 : i64, scratch_operands = 1 : i64, tpu.core_type = #tpu.core_type<tc>} {
    %c0 = arith.constant 0 : index
    %c0_0 = arith.constant 0 : index
    %0 = vector.load %arg1[%c0, %c0_0] : memref<2x8xf32, #tpu.memory_space<vmem>>, vector<2x8xf32>
    %c0_1 = arith.constant 0 : index
    %c0_2 = arith.constant 0 : index
    %1 = vector.load %arg2[%c0_1, %c0_2] : memref<2x8xi32, #tpu.memory_space<vmem>>, vector<2x8xi32>
    %c0_3 = arith.constant 0 : index
    %c0_4 = arith.constant 0 : index
    %2 = vector.load %arg9[%c0_3, %c0_4] : memref<6x6xf32, #tpu.memory_space<vmem>>, vector<6x6xf32>
    %c0_5 = arith.constant 0 : index
    %c0_6 = arith.constant 0 : index
    %3 = vector.load %arg0[%c0_5, %c0_6] : memref<16x16xf32, #tpu.memory_space<vmem>>, vector<16x16xf32>
    %c0_7 = arith.constant 0 : index
    %c0_8 = arith.constant 0 : index
    %4 = vector.load %arg3[%c0_7, %c0_8] : memref<16x256xf32, #tpu.memory_space<vmem>>, vector<16x256xf32>
    %cst = arith.constant dense<0.000000e+00> : vector<16x256xf32>
    %5 = tpu.matmul %3, %4, %cst {dimension_numbers = #tpu.dot_dimension_numbers<[1], [0], [0], [1], [0, 0, 1, 1], [], []>} : vector<16x16xf32>, vector<16x256xf32>, vector<16x256xf32> -> vector<16x256xf32>
    %c0_9 = arith.constant 0 : index
    %c0_10 = arith.constant 0 : index
    %6 = vector.load %arg6[%c0_9, %c0_10] : memref<1x256xf32, #tpu.memory_space<vmem>>, vector<1x256xf32>
    %7 = vector.broadcast %6 : vector<1x256xf32> to vector<16x256xf32>
    %8 = arith.addf %5, %7 : vector<16x256xf32>
    %c0_11 = arith.constant 0 : index
    %c0_12 = arith.constant 0 : index
    %9 = vector.load %arg4[%c0_11, %c0_12] : memref<32x128xf32, #tpu.memory_space<vmem>>, vector<32x128xf32>
    %c0_13 = arith.constant 0 : index
    %c0_14 = arith.constant 0 : index
    %10 = vector.load %arg5[%c0_13, %c0_14] : memref<32x128xf32, #tpu.memory_space<vmem>>, vector<32x128xf32>
    %cst_15 = arith.constant 0.000000e+00 : f32
    %11 = vector.broadcast %cst_15 : f32 to vector<2x32xf32>
    %12 = vector.extract_strided_slice %0 {offsets = [0, 0], sizes = [2, 1], strides = [1, 1]} : vector<2x8xf32> to vector<2x1xf32>
    %cst_16 = arith.constant 0.000000e+00 : f32
    %13 = vector.broadcast %cst_16 : f32 to vector<2x1xf32>
    %14 = arith.cmpf ogt, %12, %13 : vector<2x1xf32>
    %15 = vector.extract_strided_slice %0 {offsets = [0, 7], sizes = [2, 1], strides = [1, 1]} : vector<2x8xf32> to vector<2x1xf32>
    %cst_17 = arith.constant 0.000000e+00 : f32
    %16 = vector.broadcast %cst_17 : f32 to vector<2x1xf32>
    %17 = arith.cmpf ogt, %15, %16 : vector<2x1xf32>
    %18 = vector.extract_strided_slice %8 {offsets = [0, 0], sizes = [2, 128], strides = [1, 1]} : vector<16x256xf32> to vector<2x128xf32>
    %19 = vector.extract_strided_slice %8 {offsets = [14, 128], sizes = [2, 128], strides = [1, 1]} : vector<16x256xf32> to vector<2x128xf32>
    %cst_18 = arith.constant dense<0.000000e+00> : vector<2x128xf32>
    %20 = tpu.matmul %11, %9, %cst_18 {dimension_numbers = #tpu.dot_dimension_numbers<[1], [0], [0], [1], [0, 0, 1, 1], [], []>} : vector<2x32xf32>, vector<32x128xf32>, vector<2x128xf32> -> vector<2x128xf32>
    %21 = arith.addf %18, %20 : vector<2x128xf32>
    %22 = vector.extract_strided_slice %21 {offsets = [0, 0], sizes = [2, 32], strides = [1, 1]} : vector<2x128xf32> to vector<2x32xf32>
    %23 = arith.negf %22 : vector<2x32xf32>
    %24 = math.exp %23 : vector<2x32xf32>
    %cst_19 = arith.constant 1.000000e+00 : f32
    %25 = vector.broadcast %cst_19 : f32 to vector<2x32xf32>
    %26 = arith.addf %25, %24 : vector<2x32xf32>
    %27 = arith.divf %25, %26 : vector<2x32xf32>
    %28 = vector.extract_strided_slice %21 {offsets = [0, 32], sizes = [2, 32], strides = [1, 1]} : vector<2x128xf32> to vector<2x32xf32>
    %29 = arith.negf %28 : vector<2x32xf32>
    %30 = math.exp %29 : vector<2x32xf32>
    %cst_20 = arith.constant 1.000000e+00 : f32
    %31 = vector.broadcast %cst_20 : f32 to vector<2x32xf32>
    %32 = arith.addf %31, %30 : vector<2x32xf32>
    %33 = arith.divf %31, %32 : vector<2x32xf32>
    %34 = vector.extract_strided_slice %21 {offsets = [0, 64], sizes = [2, 32], strides = [1, 1]} : vector<2x128xf32> to vector<2x32xf32>
    %35 = math.tanh %34 : vector<2x32xf32>
    %36 = vector.extract_strided_slice %21 {offsets = [0, 96], sizes = [2, 32], strides = [1, 1]} : vector<2x128xf32> to vector<2x32xf32>
    %37 = arith.negf %36 : vector<2x32xf32>
    %38 = math.exp %37 : vector<2x32xf32>
    %cst_21 = arith.constant 1.000000e+00 : f32
    %39 = vector.broadcast %cst_21 : f32 to vector<2x32xf32>
    %40 = arith.addf %39, %38 : vector<2x32xf32>
    %41 = arith.divf %39, %40 : vector<2x32xf32>
    %42 = arith.mulf %33, %11 : vector<2x32xf32>
    %43 = arith.mulf %27, %35 : vector<2x32xf32>
    %44 = arith.addf %42, %43 : vector<2x32xf32>
    %45 = math.tanh %44 : vector<2x32xf32>
    %46 = arith.mulf %41, %45 : vector<2x32xf32>
    %47 = vector.shape_cast %14 : vector<2x1xi1> to vector<2x1xi1>
    %48 = vector.broadcast %47 : vector<2x1xi1> to vector<2x32xi1>
    %49 = arith.select %48, %46, %11 : vector<2x32xi1>, vector<2x32xf32>
    %50 = vector.shape_cast %14 : vector<2x1xi1> to vector<2x1xi1>
    %51 = vector.broadcast %50 : vector<2x1xi1> to vector<2x32xi1>
    %52 = arith.select %51, %44, %11 : vector<2x32xi1>, vector<2x32xf32>
    %cst_22 = arith.constant 0.000000e+00 : f32
    %53 = vector.shape_cast %14 : vector<2x1xi1> to vector<2x1xi1>
    %54 = vector.broadcast %53 : vector<2x1xi1> to vector<2x32xi1>
    %55 = vector.broadcast %cst_22 : f32 to vector<2x32xf32>
    %56 = arith.select %54, %46, %55 : vector<2x32xi1>, vector<2x32xf32>
    %cst_23 = arith.constant dense<0.000000e+00> : vector<2x128xf32>
    %57 = tpu.matmul %11, %10, %cst_23 {dimension_numbers = #tpu.dot_dimension_numbers<[1], [0], [0], [1], [0, 0, 1, 1], [], []>} : vector<2x32xf32>, vector<32x128xf32>, vector<2x128xf32> -> vector<2x128xf32>
    %58 = arith.addf %19, %57 : vector<2x128xf32>
    %59 = vector.extract_strided_slice %58 {offsets = [0, 0], sizes = [2, 32], strides = [1, 1]} : vector<2x128xf32> to vector<2x32xf32>
    %60 = arith.negf %59 : vector<2x32xf32>
    %61 = math.exp %60 : vector<2x32xf32>
    %cst_24 = arith.constant 1.000000e+00 : f32
    %62 = vector.broadcast %cst_24 : f32 to vector<2x32xf32>
    %63 = arith.addf %62, %61 : vector<2x32xf32>
    %64 = arith.divf %62, %63 : vector<2x32xf32>
    %65 = vector.extract_strided_slice %58 {offsets = [0, 32], sizes = [2, 32], strides = [1, 1]} : vector<2x128xf32> to vector<2x32xf32>
    %66 = arith.negf %65 : vector<2x32xf32>
    %67 = math.exp %66 : vector<2x32xf32>
    %cst_25 = arith.constant 1.000000e+00 : f32
    %68 = vector.broadcast %cst_25 : f32 to vector<2x32xf32>
    %69 = arith.addf %68, %67 : vector<2x32xf32>
    %70 = arith.divf %68, %69 : vector<2x32xf32>
    %71 = vector.extract_strided_slice %58 {offsets = [0, 64], sizes = [2, 32], strides = [1, 1]} : vector<2x128xf32> to vector<2x32xf32>
    %72 = math.tanh %71 : vector<2x32xf32>
    %73 = vector.extract_strided_slice %58 {offsets = [0, 96], sizes = [2, 32], strides = [1, 1]} : vector<2x128xf32> to vector<2x32xf32>
    %74 = arith.negf %73 : vector<2x32xf32>
    %75 = math.exp %74 : vector<2x32xf32>
    %cst_26 = arith.constant 1.000000e+00 : f32
    %76 = vector.broadcast %cst_26 : f32 to vector<2x32xf32>
    %77 = arith.addf %76, %75 : vector<2x32xf32>
    %78 = arith.divf %76, %77 : vector<2x32xf32>
    %79 = arith.mulf %70, %11 : vector<2x32xf32>
    %80 = arith.mulf %64, %72 : vector<2x32xf32>
    %81 = arith.addf %79, %80 : vector<2x32xf32>
    %82 = math.tanh %81 : vector<2x32xf32>
    %83 = arith.mulf %78, %82 : vector<2x32xf32>
    %84 = vector.shape_cast %17 : vector<2x1xi1> to vector<2x1xi1>
    %85 = vector.broadcast %84 : vector<2x1xi1> to vector<2x32xi1>
    %86 = arith.select %85, %83, %11 : vector<2x32xi1>, vector<2x32xf32>
    %87 = vector.shape_cast %17 : vector<2x1xi1> to vector<2x1xi1>
    %88 = vector.broadcast %87 : vector<2x1xi1> to vector<2x32xi1>
    %89 = arith.select %88, %81, %11 : vector<2x32xi1>, vector<2x32xf32>
    %cst_27 = arith.constant 0.000000e+00 : f32
    %90 = vector.shape_cast %17 : vector<2x1xi1> to vector<2x1xi1>
    %91 = vector.broadcast %90 : vector<2x1xi1> to vector<2x32xi1>
    %92 = vector.broadcast %cst_27 : f32 to vector<2x32xf32>
    %93 = arith.select %91, %83, %92 : vector<2x32xi1>, vector<2x32xf32>
    %c0_28 = arith.constant 0 : index
    %c0_29 = arith.constant 0 : index
    %94 = vector.load %arg14[%c0_28, %c0_29] : memref<16x64xf32, #tpu.memory_space<vmem>>, vector<2x32xf32>
    tpu.vector_store %arg14[%c0_28, %c0_29], %56 {strides = array<i32>} : memref<16x64xf32, #tpu.memory_space<vmem>>, vector<2x32xf32>,
    %c14 = arith.constant 14 : index
    %c32 = arith.constant 32 : index
    %95 = vector.load %arg14[%c14, %c32] : memref<16x64xf32, #tpu.memory_space<vmem>>, vector<2x32xf32>
    tpu.vector_store %arg14[%c14, %c32], %93 {strides = array<i32>} : memref<16x64xf32, #tpu.memory_space<vmem>>, vector<2x32xf32>,
    %96 = vector.extract_strided_slice %0 {offsets = [0, 1], sizes = [2, 1], strides = [1, 1]} : vector<2x8xf32> to vector<2x1xf32>
    %cst_30 = arith.constant 0.000000e+00 : f32
    %97 = vector.broadcast %cst_30 : f32 to vector<2x1xf32>
    %98 = arith.cmpf ogt, %96, %97 : vector<2x1xf32>
    %99 = vector.extract_strided_slice %0 {offsets = [0, 6], sizes = [2, 1], strides = [1, 1]} : vector<2x8xf32> to vector<2x1xf32>
    %cst_31 = arith.constant 0.000000e+00 : f32
    %100 = vector.broadcast %cst_31 : f32 to vector<2x1xf32>
    %101 = arith.cmpf ogt, %99, %100 : vector<2x1xf32>
    %102 = vector.extract_strided_slice %8 {offsets = [2, 0], sizes = [2, 128], strides = [1, 1]} : vector<16x256xf32> to vector<2x128xf32>
    %103 = vector.extract_strided_slice %8 {offsets = [12, 128], sizes = [2, 128], strides = [1, 1]} : vector<16x256xf32> to vector<2x128xf32>
    %cst_32 = arith.constant dense<0.000000e+00> : vector<2x128xf32>
    %104 = tpu.matmul %49, %9, %cst_32 {dimension_numbers = #tpu.dot_dimension_numbers<[1], [0], [0], [1], [0, 0, 1, 1], [], []>} : vector<2x32xf32>, vector<32x128xf32>, vector<2x128xf32> -> vector<2x128xf32>
    %105 = arith.addf %102, %104 : vector<2x128xf32>
    %106 = vector.extract_strided_slice %105 {offsets = [0, 0], sizes = [2, 32], strides = [1, 1]} : vector<2x128xf32> to vector<2x32xf32>
    %107 = arith.negf %106 : vector<2x32xf32>
    %108 = math.exp %107 : vector<2x32xf32>
    %cst_33 = arith.constant 1.000000e+00 : f32
    %109 = vector.broadcast %cst_33 : f32 to vector<2x32xf32>
    %110 = arith.addf %109, %108 : vector<2x32xf32>
    %111 = arith.divf %109, %110 : vector<2x32xf32>
    %112 = vector.extract_strided_slice %105 {offsets = [0, 32], sizes = [2, 32], strides = [1, 1]} : vector<2x128xf32> to vector<2x32xf32>
    %113 = arith.negf %112 : vector<2x32xf32>
    %114 = math.exp %113 : vector<2x32xf32>
    %cst_34 = arith.constant 1.000000e+00 : f32
    %115 = vector.broadcast %cst_34 : f32 to vector<2x32xf32>
    %116 = arith.addf %115, %114 : vector<2x32xf32>
    %117 = arith.divf %115, %116 : vector<2x32xf32>
    %118 = vector.extract_strided_slice %105 {offsets = [0, 64], sizes = [2, 32], strides = [1, 1]} : vector<2x128xf32> to vector<2x32xf32>
    %119 = math.tanh %118 : vector<2x32xf32>
    %120 = vector.extract_strided_slice %105 {offsets = [0, 96], sizes = [2, 32], strides = [1, 1]} : vector<2x128xf32> to vector<2x32xf32>
    %121 = arith.negf %120 : vector<2x32xf32>
    %122 = math.exp %121 : vector<2x32xf32>
    %cst_35 = arith.constant 1.000000e+00 : f32
    %123 = vector.broadcast %cst_35 : f32 to vector<2x32xf32>
    %124 = arith.addf %123, %122 : vector<2x32xf32>
    %125 = arith.divf %123, %124 : vector<2x32xf32>
    %126 = arith.mulf %117, %52 : vector<2x32xf32>
    %127 = arith.mulf %111, %119 : vector<2x32xf32>
    %128 = arith.addf %126, %127 : vector<2x32xf32>
    %129 = math.tanh %128 : vector<2x32xf32>
    %130 = arith.mulf %125, %129 : vector<2x32xf32>
    %131 = vector.shape_cast %98 : vector<2x1xi1> to vector<2x1xi1>
    %132 = vector.broadcast %131 : vector<2x1xi1> to vector<2x32xi1>
    %133 = arith.select %132, %130, %49 : vector<2x32xi1>, vector<2x32xf32>
    %134 = vector.shape_cast %98 : vector<2x1xi1> to vector<2x1xi1>
    %135 = vector.broadcast %134 : vector<2x1xi1> to vector<2x32xi1>
    %136 = arith.select %135, %128, %52 : vector<2x32xi1>, vector<2x32xf32>
    %cst_36 = arith.constant 0.000000e+00 : f32
    %137 = vector.shape_cast %98 : vector<2x1xi1> to vector<2x1xi1>
    %138 = vector.broadcast %137 : vector<2x1xi1> to vector<2x32xi1>
    %139 = vector.broadcast %cst_36 : f32 to vector<2x32xf32>
    %140 = arith.select %138, %130, %139 : vector<2x32xi1>, vector<2x32xf32>
    %cst_37 = arith.constant dense<0.000000e+00> : vector<2x128xf32>
    %141 = tpu.matmul %86, %10, %cst_37 {dimension_numbers = #tpu.dot_dimension_numbers<[1], [0], [0], [1], [0, 0, 1, 1], [], []>} : vector<2x32xf32>, vector<32x128xf32>, vector<2x128xf32> -> vector<2x128xf32>
    %142 = arith.addf %103, %141 : vector<2x128xf32>
    %143 = vector.extract_strided_slice %142 {offsets = [0, 0], sizes = [2, 32], strides = [1, 1]} : vector<2x128xf32> to vector<2x32xf32>
    %144 = arith.negf %143 : vector<2x32xf32>
    %145 = math.exp %144 : vector<2x32xf32>
    %cst_38 = arith.constant 1.000000e+00 : f32
    %146 = vector.broadcast %cst_38 : f32 to vector<2x32xf32>
    %147 = arith.addf %146, %145 : vector<2x32xf32>
    %148 = arith.divf %146, %147 : vector<2x32xf32>
    %149 = vector.extract_strided_slice %142 {offsets = [0, 32], sizes = [2, 32], strides = [1, 1]} : vector<2x128xf32> to vector<2x32xf32>
    %150 = arith.negf %149 : vector<2x32xf32>
    %151 = math.exp %150 : vector<2x32xf32>
    %cst_39 = arith.constant 1.000000e+00 : f32
    %152 = vector.broadcast %cst_39 : f32 to vector<2x32xf32>
    %153 = arith.addf %152, %151 : vector<2x32xf32>
    %154 = arith.divf %152, %153 : vector<2x32xf32>
    %155 = vector.extract_strided_slice %142 {offsets = [0, 64], sizes = [2, 32], strides = [1, 1]} : vector<2x128xf32> to vector<2x32xf32>
    %156 = math.tanh %155 : vector<2x32xf32>
    %157 = vector.extract_strided_slice %142 {offsets = [0, 96], sizes = [2, 32], strides = [1, 1]} : vector<2x128xf32> to vector<2x32xf32>
    %158 = arith.negf %157 : vector<2x32xf32>
    %159 = math.exp %158 : vector<2x32xf32>
    %cst_40 = arith.constant 1.000000e+00 : f32
    %160 = vector.broadcast %cst_40 : f32 to vector<2x32xf32>
    %161 = arith.addf %160, %159 : vector<2x32xf32>
    %162 = arith.divf %160, %161 : vector<2x32xf32>
    %163 = arith.mulf %154, %89 : vector<2x32xf32>
    %164 = arith.mulf %148, %156 : vector<2x32xf32>
    %165 = arith.addf %163, %164 : vector<2x32xf32>
    %166 = math.tanh %165 : vector<2x32xf32>
    %167 = arith.mulf %162, %166 : vector<2x32xf32>
    %168 = vector.shape_cast %101 : vector<2x1xi1> to vector<2x1xi1>
    %169 = vector.broadcast %168 : vector<2x1xi1> to vector<2x32xi1>
    %170 = arith.select %169, %167, %86 : vector<2x32xi1>, vector<2x32xf32>
    %171 = vector.shape_cast %101 : vector<2x1xi1> to vector<2x1xi1>
    %172 = vector.broadcast %171 : vector<2x1xi1> to vector<2x32xi1>
    %173 = arith.select %172, %165, %89 : vector<2x32xi1>, vector<2x32xf32>
    %cst_41 = arith.constant 0.000000e+00 : f32
    %174 = vector.shape_cast %101 : vector<2x1xi1> to vector<2x1xi1>
    %175 = vector.broadcast %174 : vector<2x1xi1> to vector<2x32xi1>
    %176 = vector.broadcast %cst_41 : f32 to vector<2x32xf32>
    %177 = arith.select %175, %167, %176 : vector<2x32xi1>, vector<2x32xf32>
    %c2 = arith.constant 2 : index
    %c0_42 = arith.constant 0 : index
    %178 = vector.load %arg14[%c2, %c0_42] : memref<16x64xf32, #tpu.memory_space<vmem>>, vector<2x32xf32>
    tpu.vector_store %arg14[%c2, %c0_42], %140 {strides = array<i32>} : memref<16x64xf32, #tpu.memory_space<vmem>>, vector<2x32xf32>,
    %c12 = arith.constant 12 : index
    %c32_43 = arith.constant 32 : index
    %179 = vector.load %arg14[%c12, %c32_43] : memref<16x64xf32, #tpu.memory_space<vmem>>, vector<2x32xf32>
    tpu.vector_store %arg14[%c12, %c32_43], %177 {strides = array<i32>} : memref<16x64xf32, #tpu.memory_space<vmem>>, vector<2x32xf32>,
    %180 = vector.extract_strided_slice %0 {offsets = [0, 2], sizes = [2, 1], strides = [1, 1]} : vector<2x8xf32> to vector<2x1xf32>
    %cst_44 = arith.constant 0.000000e+00 : f32
    %181 = vector.broadcast %cst_44 : f32 to vector<2x1xf32>
    %182 = arith.cmpf ogt, %180, %181 : vector<2x1xf32>
    %183 = vector.extract_strided_slice %0 {offsets = [0, 5], sizes = [2, 1], strides = [1, 1]} : vector<2x8xf32> to vector<2x1xf32>
    %cst_45 = arith.constant 0.000000e+00 : f32
    %184 = vector.broadcast %cst_45 : f32 to vector<2x1xf32>
    %185 = arith.cmpf ogt, %183, %184 : vector<2x1xf32>
    %186 = vector.extract_strided_slice %8 {offsets = [4, 0], sizes = [2, 128], strides = [1, 1]} : vector<16x256xf32> to vector<2x128xf32>
    %187 = vector.extract_strided_slice %8 {offsets = [10, 128], sizes = [2, 128], strides = [1, 1]} : vector<16x256xf32> to vector<2x128xf32>
    %cst_46 = arith.constant dense<0.000000e+00> : vector<2x128xf32>
    %188 = tpu.matmul %133, %9, %cst_46 {dimension_numbers = #tpu.dot_dimension_numbers<[1], [0], [0], [1], [0, 0, 1, 1], [], []>} : vector<2x32xf32>, vector<32x128xf32>, vector<2x128xf32> -> vector<2x128xf32>
    %189 = arith.addf %186, %188 : vector<2x128xf32>
    %190 = vector.extract_strided_slice %189 {offsets = [0, 0], sizes = [2, 32], strides = [1, 1]} : vector<2x128xf32> to vector<2x32xf32>
    %191 = arith.negf %190 : vector<2x32xf32>
    %192 = math.exp %191 : vector<2x32xf32>
    %cst_47 = arith.constant 1.000000e+00 : f32
    %193 = vector.broadcast %cst_47 : f32 to vector<2x32xf32>
    %194 = arith.addf %193, %192 : vector<2x32xf32>
    %195 = arith.divf %193, %194 : vector<2x32xf32>
    %196 = vector.extract_strided_slice %189 {offsets = [0, 32], sizes = [2, 32], strides = [1, 1]} : vector<2x128xf32> to vector<2x32xf32>
    %197 = arith.negf %196 : vector<2x32xf32>
    %198 = math.exp %197 : vector<2x32xf32>
    %cst_48 = arith.constant 1.000000e+00 : f32
    %199 = vector.broadcast %cst_48 : f32 to vector<2x32xf32>
    %200 = arith.addf %199, %198 : vector<2x32xf32>
    %201 = arith.divf %199, %200 : vector<2x32xf32>
    %202 = vector.extract_strided_slice %189 {offsets = [0, 64], sizes = [2, 32], strides = [1, 1]} : vector<2x128xf32> to vector<2x32xf32>
    %203 = math.tanh %202 : vector<2x32xf32>
    %204 = vector.extract_strided_slice %189 {offsets = [0, 96], sizes = [2, 32], strides = [1, 1]} : vector<2x128xf32> to vector<2x32xf32>
    %205 = arith.negf %204 : vector<2x32xf32>
    %206 = math.exp %205 : vector<2x32xf32>
    %cst_49 = arith.constant 1.000000e+00 : f32
    %207 = vector.broadcast %cst_49 : f32 to vector<2x32xf32>
    %208 = arith.addf %207, %206 : vector<2x32xf32>
    %209 = arith.divf %207, %208 : vector<2x32xf32>
    %210 = arith.mulf %201, %136 : vector<2x32xf32>
    %211 = arith.mulf %195, %203 : vector<2x32xf32>
    %212 = arith.addf %210, %211 : vector<2x32xf32>
    %213 = math.tanh %212 : vector<2x32xf32>
    %214 = arith.mulf %209, %213 : vector<2x32xf32>
    %215 = vector.shape_cast %182 : vector<2x1xi1> to vector<2x1xi1>
    %216 = vector.broadcast %215 : vector<2x1xi1> to vector<2x32xi1>
    %217 = arith.select %216, %214, %133 : vector<2x32xi1>, vector<2x32xf32>
    %218 = vector.shape_cast %182 : vector<2x1xi1> to vector<2x1xi1>
    %219 = vector.broadcast %218 : vector<2x1xi1> to vector<2x32xi1>
    %220 = arith.select %219, %212, %136 : vector<2x32xi1>, vector<2x32xf32>
    %cst_50 = arith.constant 0.000000e+00 : f32
    %221 = vector.shape_cast %182 : vector<2x1xi1> to vector<2x1xi1>
    %222 = vector.broadcast %221 : vector<2x1xi1> to vector<2x32xi1>
    %223 = vector.broadcast %cst_50 : f32 to vector<2x32xf32>
    %224 = arith.select %222, %214, %223 : vector<2x32xi1>, vector<2x32xf32>
    %cst_51 = arith.constant dense<0.000000e+00> : vector<2x128xf32>
    %225 = tpu.matmul %170, %10, %cst_51 {dimension_numbers = #tpu.dot_dimension_numbers<[1], [0], [0], [1], [0, 0, 1, 1], [], []>} : vector<2x32xf32>, vector<32x128xf32>, vector<2x128xf32> -> vector<2x128xf32>
    %226 = arith.addf %187, %225 : vector<2x128xf32>
    %227 = vector.extract_strided_slice %226 {offsets = [0, 0], sizes = [2, 32], strides = [1, 1]} : vector<2x128xf32> to vector<2x32xf32>
    %228 = arith.negf %227 : vector<2x32xf32>
    %229 = math.exp %228 : vector<2x32xf32>
    %cst_52 = arith.constant 1.000000e+00 : f32
    %230 = vector.broadcast %cst_52 : f32 to vector<2x32xf32>
    %231 = arith.addf %230, %229 : vector<2x32xf32>
    %232 = arith.divf %230, %231 : vector<2x32xf32>
    %233 = vector.extract_strided_slice %226 {offsets = [0, 32], sizes = [2, 32], strides = [1, 1]} : vector<2x128xf32> to vector<2x32xf32>
    %234 = arith.negf %233 : vector<2x32xf32>
    %235 = math.exp %234 : vector<2x32xf32>
    %cst_53 = arith.constant 1.000000e+00 : f32
    %236 = vector.broadcast %cst_53 : f32 to vector<2x32xf32>
    %237 = arith.addf %236, %235 : vector<2x32xf32>
    %238 = arith.divf %236, %237 : vector<2x32xf32>
    %239 = vector.extract_strided_slice %226 {offsets = [0, 64], sizes = [2, 32], strides = [1, 1]} : vector<2x128xf32> to vector<2x32xf32>
    %240 = math.tanh %239 : vector<2x32xf32>
    %241 = vector.extract_strided_slice %226 {offsets = [0, 96], sizes = [2, 32], strides = [1, 1]} : vector<2x128xf32> to vector<2x32xf32>
    %242 = arith.negf %241 : vector<2x32xf32>
    %243 = math.exp %242 : vector<2x32xf32>
    %cst_54 = arith.constant 1.000000e+00 : f32
    %244 = vector.broadcast %cst_54 : f32 to vector<2x32xf32>
    %245 = arith.addf %244, %243 : vector<2x32xf32>
    %246 = arith.divf %244, %245 : vector<2x32xf32>
    %247 = arith.mulf %238, %173 : vector<2x32xf32>
    %248 = arith.mulf %232, %240 : vector<2x32xf32>
    %249 = arith.addf %247, %248 : vector<2x32xf32>
    %250 = math.tanh %249 : vector<2x32xf32>
    %251 = arith.mulf %246, %250 : vector<2x32xf32>
    %252 = vector.shape_cast %185 : vector<2x1xi1> to vector<2x1xi1>
    %253 = vector.broadcast %252 : vector<2x1xi1> to vector<2x32xi1>
    %254 = arith.select %253, %251, %170 : vector<2x32xi1>, vector<2x32xf32>
    %255 = vector.shape_cast %185 : vector<2x1xi1> to vector<2x1xi1>
    %256 = vector.broadcast %255 : vector<2x1xi1> to vector<2x32xi1>
    %257 = arith.select %256, %249, %173 : vector<2x32xi1>, vector<2x32xf32>
    %cst_55 = arith.constant 0.000000e+00 : f32
    %258 = vector.shape_cast %185 : vector<2x1xi1> to vector<2x1xi1>
    %259 = vector.broadcast %258 : vector<2x1xi1> to vector<2x32xi1>
    %260 = vector.broadcast %cst_55 : f32 to vector<2x32xf32>
    %261 = arith.select %259, %251, %260 : vector<2x32xi1>, vector<2x32xf32>
    %c4 = arith.constant 4 : index
    %c0_56 = arith.constant 0 : index
    %262 = vector.load %arg14[%c4, %c0_56] : memref<16x64xf32, #tpu.memory_space<vmem>>, vector<2x32xf32>
    tpu.vector_store %arg14[%c4, %c0_56], %224 {strides = array<i32>} : memref<16x64xf32, #tpu.memory_space<vmem>>, vector<2x32xf32>,
    %c10 = arith.constant 10 : index
    %c32_57 = arith.constant 32 : index
    %263 = vector.load %arg14[%c10, %c32_57] : memref<16x64xf32, #tpu.memory_space<vmem>>, vector<2x32xf32>
    tpu.vector_store %arg14[%c10, %c32_57], %261 {strides = array<i32>} : memref<16x64xf32, #tpu.memory_space<vmem>>, vector<2x32xf32>,
    %264 = vector.extract_strided_slice %0 {offsets = [0, 3], sizes = [2, 1], strides = [1, 1]} : vector<2x8xf32> to vector<2x1xf32>
    %cst_58 = arith.constant 0.000000e+00 : f32
    %265 = vector.broadcast %cst_58 : f32 to vector<2x1xf32>
    %266 = arith.cmpf ogt, %264, %265 : vector<2x1xf32>
    %267 = vector.extract_strided_slice %0 {offsets = [0, 4], sizes = [2, 1], strides = [1, 1]} : vector<2x8xf32> to vector<2x1xf32>
    %cst_59 = arith.constant 0.000000e+00 : f32
    %268 = vector.broadcast %cst_59 : f32 to vector<2x1xf32>
    %269 = arith.cmpf ogt, %267, %268 : vector<2x1xf32>
    %270 = vector.extract_strided_slice %8 {offsets = [6, 0], sizes = [2, 128], strides = [1, 1]} : vector<16x256xf32> to vector<2x128xf32>
    %271 = vector.extract_strided_slice %8 {offsets = [8, 128], sizes = [2, 128], strides = [1, 1]} : vector<16x256xf32> to vector<2x128xf32>
    %cst_60 = arith.constant dense<0.000000e+00> : vector<2x128xf32>
    %272 = tpu.matmul %217, %9, %cst_60 {dimension_numbers = #tpu.dot_dimension_numbers<[1], [0], [0], [1], [0, 0, 1, 1], [], []>} : vector<2x32xf32>, vector<32x128xf32>, vector<2x128xf32> -> vector<2x128xf32>
    %273 = arith.addf %270, %272 : vector<2x128xf32>
    %274 = vector.extract_strided_slice %273 {offsets = [0, 0], sizes = [2, 32], strides = [1, 1]} : vector<2x128xf32> to vector<2x32xf32>
    %275 = arith.negf %274 : vector<2x32xf32>
    %276 = math.exp %275 : vector<2x32xf32>
    %cst_61 = arith.constant 1.000000e+00 : f32
    %277 = vector.broadcast %cst_61 : f32 to vector<2x32xf32>
    %278 = arith.addf %277, %276 : vector<2x32xf32>
    %279 = arith.divf %277, %278 : vector<2x32xf32>
    %280 = vector.extract_strided_slice %273 {offsets = [0, 32], sizes = [2, 32], strides = [1, 1]} : vector<2x128xf32> to vector<2x32xf32>
    %281 = arith.negf %280 : vector<2x32xf32>
    %282 = math.exp %281 : vector<2x32xf32>
    %cst_62 = arith.constant 1.000000e+00 : f32
    %283 = vector.broadcast %cst_62 : f32 to vector<2x32xf32>
    %284 = arith.addf %283, %282 : vector<2x32xf32>
    %285 = arith.divf %283, %284 : vector<2x32xf32>
    %286 = vector.extract_strided_slice %273 {offsets = [0, 64], sizes = [2, 32], strides = [1, 1]} : vector<2x128xf32> to vector<2x32xf32>
    %287 = math.tanh %286 : vector<2x32xf32>
    %288 = vector.extract_strided_slice %273 {offsets = [0, 96], sizes = [2, 32], strides = [1, 1]} : vector<2x128xf32> to vector<2x32xf32>
    %289 = arith.negf %288 : vector<2x32xf32>
    %290 = math.exp %289 : vector<2x32xf32>
    %cst_63 = arith.constant 1.000000e+00 : f32
    %291 = vector.broadcast %cst_63 : f32 to vector<2x32xf32>
    %292 = arith.addf %291, %290 : vector<2x32xf32>
    %293 = arith.divf %291, %292 : vector<2x32xf32>
    %294 = arith.mulf %285, %220 : vector<2x32xf32>
    %295 = arith.mulf %279, %287 : vector<2x32xf32>
    %296 = arith.addf %294, %295 : vector<2x32xf32>
    %297 = math.tanh %296 : vector<2x32xf32>
    %298 = arith.mulf %293, %297 : vector<2x32xf32>
    %299 = vector.shape_cast %266 : vector<2x1xi1> to vector<2x1xi1>
    %300 = vector.broadcast %299 : vector<2x1xi1> to vector<2x32xi1>
    %301 = arith.select %300, %298, %217 : vector<2x32xi1>, vector<2x32xf32>
    %302 = vector.shape_cast %266 : vector<2x1xi1> to vector<2x1xi1>
    %303 = vector.broadcast %302 : vector<2x1xi1> to vector<2x32xi1>
    %304 = arith.select %303, %296, %220 : vector<2x32xi1>, vector<2x32xf32>
    %cst_64 = arith.constant 0.000000e+00 : f32
    %305 = vector.shape_cast %266 : vector<2x1xi1> to vector<2x1xi1>
    %306 = vector.broadcast %305 : vector<2x1xi1> to vector<2x32xi1>
    %307 = vector.broadcast %cst_64 : f32 to vector<2x32xf32>
    %308 = arith.select %306, %298, %307 : vector<2x32xi1>, vector<2x32xf32>
    %cst_65 = arith.constant dense<0.000000e+00> : vector<2x128xf32>
    %309 = tpu.matmul %254, %10, %cst_65 {dimension_numbers = #tpu.dot_dimension_numbers<[1], [0], [0], [1], [0, 0, 1, 1], [], []>} : vector<2x32xf32>, vector<32x128xf32>, vector<2x128xf32> -> vector<2x128xf32>
    %310 = arith.addf %271, %309 : vector<2x128xf32>
    %311 = vector.extract_strided_slice %310 {offsets = [0, 0], sizes = [2, 32], strides = [1, 1]} : vector<2x128xf32> to vector<2x32xf32>
    %312 = arith.negf %311 : vector<2x32xf32>
    %313 = math.exp %312 : vector<2x32xf32>
    %cst_66 = arith.constant 1.000000e+00 : f32
    %314 = vector.broadcast %cst_66 : f32 to vector<2x32xf32>
    %315 = arith.addf %314, %313 : vector<2x32xf32>
    %316 = arith.divf %314, %315 : vector<2x32xf32>
    %317 = vector.extract_strided_slice %310 {offsets = [0, 32], sizes = [2, 32], strides = [1, 1]} : vector<2x128xf32> to vector<2x32xf32>
    %318 = arith.negf %317 : vector<2x32xf32>
    %319 = math.exp %318 : vector<2x32xf32>
    %cst_67 = arith.constant 1.000000e+00 : f32
    %320 = vector.broadcast %cst_67 : f32 to vector<2x32xf32>
    %321 = arith.addf %320, %319 : vector<2x32xf32>
    %322 = arith.divf %320, %321 : vector<2x32xf32>
    %323 = vector.extract_strided_slice %310 {offsets = [0, 64], sizes = [2, 32], strides = [1, 1]} : vector<2x128xf32> to vector<2x32xf32>
    %324 = math.tanh %323 : vector<2x32xf32>
    %325 = vector.extract_strided_slice %310 {offsets = [0, 96], sizes = [2, 32], strides = [1, 1]} : vector<2x128xf32> to vector<2x32xf32>
    %326 = arith.negf %325 : vector<2x32xf32>
    %327 = math.exp %326 : vector<2x32xf32>
    %cst_68 = arith.constant 1.000000e+00 : f32
    %328 = vector.broadcast %cst_68 : f32 to vector<2x32xf32>
    %329 = arith.addf %328, %327 : vector<2x32xf32>
    %330 = arith.divf %328, %329 : vector<2x32xf32>
    %331 = arith.mulf %322, %257 : vector<2x32xf32>
    %332 = arith.mulf %316, %324 : vector<2x32xf32>
    %333 = arith.addf %331, %332 : vector<2x32xf32>
    %334 = math.tanh %333 : vector<2x32xf32>
    %335 = arith.mulf %330, %334 : vector<2x32xf32>
    %336 = vector.shape_cast %269 : vector<2x1xi1> to vector<2x1xi1>
    %337 = vector.broadcast %336 : vector<2x1xi1> to vector<2x32xi1>
    %338 = arith.select %337, %335, %254 : vector<2x32xi1>, vector<2x32xf32>
    %339 = vector.shape_cast %269 : vector<2x1xi1> to vector<2x1xi1>
    %340 = vector.broadcast %339 : vector<2x1xi1> to vector<2x32xi1>
    %341 = arith.select %340, %333, %257 : vector<2x32xi1>, vector<2x32xf32>
    %cst_69 = arith.constant 0.000000e+00 : f32
    %342 = vector.shape_cast %269 : vector<2x1xi1> to vector<2x1xi1>
    %343 = vector.broadcast %342 : vector<2x1xi1> to vector<2x32xi1>
    %344 = vector.broadcast %cst_69 : f32 to vector<2x32xf32>
    %345 = arith.select %343, %335, %344 : vector<2x32xi1>, vector<2x32xf32>
    %c6 = arith.constant 6 : index
    %c0_70 = arith.constant 0 : index
    %346 = vector.load %arg14[%c6, %c0_70] : memref<16x64xf32, #tpu.memory_space<vmem>>, vector<2x32xf32>
    tpu.vector_store %arg14[%c6, %c0_70], %308 {strides = array<i32>} : memref<16x64xf32, #tpu.memory_space<vmem>>, vector<2x32xf32>,
    %c8 = arith.constant 8 : index
    %c32_71 = arith.constant 32 : index
    %347 = vector.load %arg14[%c8, %c32_71] : memref<16x64xf32, #tpu.memory_space<vmem>>, vector<2x32xf32>
    tpu.vector_store %arg14[%c8, %c32_71], %345 {strides = array<i32>} : memref<16x64xf32, #tpu.memory_space<vmem>>, vector<2x32xf32>,
    %348 = vector.extract_strided_slice %0 {offsets = [0, 4], sizes = [2, 1], strides = [1, 1]} : vector<2x8xf32> to vector<2x1xf32>
    %cst_72 = arith.constant 0.000000e+00 : f32
    %349 = vector.broadcast %cst_72 : f32 to vector<2x1xf32>
    %350 = arith.cmpf ogt, %348, %349 : vector<2x1xf32>
    %351 = vector.extract_strided_slice %0 {offsets = [0, 3], sizes = [2, 1], strides = [1, 1]} : vector<2x8xf32> to vector<2x1xf32>
    %cst_73 = arith.constant 0.000000e+00 : f32
    %352 = vector.broadcast %cst_73 : f32 to vector<2x1xf32>
    %353 = arith.cmpf ogt, %351, %352 : vector<2x1xf32>
    %354 = vector.extract_strided_slice %8 {offsets = [8, 0], sizes = [2, 128], strides = [1, 1]} : vector<16x256xf32> to vector<2x128xf32>
    %355 = vector.extract_strided_slice %8 {offsets = [6, 128], sizes = [2, 128], strides = [1, 1]} : vector<16x256xf32> to vector<2x128xf32>
    %cst_74 = arith.constant dense<0.000000e+00> : vector<2x128xf32>
    %356 = tpu.matmul %301, %9, %cst_74 {dimension_numbers = #tpu.dot_dimension_numbers<[1], [0], [0], [1], [0, 0, 1, 1], [], []>} : vector<2x32xf32>, vector<32x128xf32>, vector<2x128xf32> -> vector<2x128xf32>
    %357 = arith.addf %354, %356 : vector<2x128xf32>
    %358 = vector.extract_strided_slice %357 {offsets = [0, 0], sizes = [2, 32], strides = [1, 1]} : vector<2x128xf32> to vector<2x32xf32>
    %359 = arith.negf %358 : vector<2x32xf32>
    %360 = math.exp %359 : vector<2x32xf32>
    %cst_75 = arith.constant 1.000000e+00 : f32
    %361 = vector.broadcast %cst_75 : f32 to vector<2x32xf32>
    %362 = arith.addf %361, %360 : vector<2x32xf32>
    %363 = arith.divf %361, %362 : vector<2x32xf32>
    %364 = vector.extract_strided_slice %357 {offsets = [0, 32], sizes = [2, 32], strides = [1, 1]} : vector<2x128xf32> to vector<2x32xf32>
    %365 = arith.negf %364 : vector<2x32xf32>
    %366 = math.exp %365 : vector<2x32xf32>
    %cst_76 = arith.constant 1.000000e+00 : f32
    %367 = vector.broadcast %cst_76 : f32 to vector<2x32xf32>
    %368 = arith.addf %367, %366 : vector<2x32xf32>
    %369 = arith.divf %367, %368 : vector<2x32xf32>
    %370 = vector.extract_strided_slice %357 {offsets = [0, 64], sizes = [2, 32], strides = [1, 1]} : vector<2x128xf32> to vector<2x32xf32>
    %371 = math.tanh %370 : vector<2x32xf32>
    %372 = vector.extract_strided_slice %357 {offsets = [0, 96], sizes = [2, 32], strides = [1, 1]} : vector<2x128xf32> to vector<2x32xf32>
    %373 = arith.negf %372 : vector<2x32xf32>
    %374 = math.exp %373 : vector<2x32xf32>
    %cst_77 = arith.constant 1.000000e+00 : f32
    %375 = vector.broadcast %cst_77 : f32 to vector<2x32xf32>
    %376 = arith.addf %375, %374 : vector<2x32xf32>
    %377 = arith.divf %375, %376 : vector<2x32xf32>
    %378 = arith.mulf %369, %304 : vector<2x32xf32>
    %379 = arith.mulf %363, %371 : vector<2x32xf32>
    %380 = arith.addf %378, %379 : vector<2x32xf32>
    %381 = math.tanh %380 : vector<2x32xf32>
    %382 = arith.mulf %377, %381 : vector<2x32xf32>
    %383 = vector.shape_cast %350 : vector<2x1xi1> to vector<2x1xi1>
    %384 = vector.broadcast %383 : vector<2x1xi1> to vector<2x32xi1>
    %385 = arith.select %384, %382, %301 : vector<2x32xi1>, vector<2x32xf32>
    %386 = vector.shape_cast %350 : vector<2x1xi1> to vector<2x1xi1>
    %387 = vector.broadcast %386 : vector<2x1xi1> to vector<2x32xi1>
    %388 = arith.select %387, %380, %304 : vector<2x32xi1>, vector<2x32xf32>
    %cst_78 = arith.constant 0.000000e+00 : f32
    %389 = vector.shape_cast %350 : vector<2x1xi1> to vector<2x1xi1>
    %390 = vector.broadcast %389 : vector<2x1xi1> to vector<2x32xi1>
    %391 = vector.broadcast %cst_78 : f32 to vector<2x32xf32>
    %392 = arith.select %390, %382, %391 : vector<2x32xi1>, vector<2x32xf32>
    %cst_79 = arith.constant dense<0.000000e+00> : vector<2x128xf32>
    %393 = tpu.matmul %338, %10, %cst_79 {dimension_numbers = #tpu.dot_dimension_numbers<[1], [0], [0], [1], [0, 0, 1, 1], [], []>} : vector<2x32xf32>, vector<32x128xf32>, vector<2x128xf32> -> vector<2x128xf32>
    %394 = arith.addf %355, %393 : vector<2x128xf32>
    %395 = vector.extract_strided_slice %394 {offsets = [0, 0], sizes = [2, 32], strides = [1, 1]} : vector<2x128xf32> to vector<2x32xf32>
    %396 = arith.negf %395 : vector<2x32xf32>
    %397 = math.exp %396 : vector<2x32xf32>
    %cst_80 = arith.constant 1.000000e+00 : f32
    %398 = vector.broadcast %cst_80 : f32 to vector<2x32xf32>
    %399 = arith.addf %398, %397 : vector<2x32xf32>
    %400 = arith.divf %398, %399 : vector<2x32xf32>
    %401 = vector.extract_strided_slice %394 {offsets = [0, 32], sizes = [2, 32], strides = [1, 1]} : vector<2x128xf32> to vector<2x32xf32>
    %402 = arith.negf %401 : vector<2x32xf32>
    %403 = math.exp %402 : vector<2x32xf32>
    %cst_81 = arith.constant 1.000000e+00 : f32
    %404 = vector.broadcast %cst_81 : f32 to vector<2x32xf32>
    %405 = arith.addf %404, %403 : vector<2x32xf32>
    %406 = arith.divf %404, %405 : vector<2x32xf32>
    %407 = vector.extract_strided_slice %394 {offsets = [0, 64], sizes = [2, 32], strides = [1, 1]} : vector<2x128xf32> to vector<2x32xf32>
    %408 = math.tanh %407 : vector<2x32xf32>
    %409 = vector.extract_strided_slice %394 {offsets = [0, 96], sizes = [2, 32], strides = [1, 1]} : vector<2x128xf32> to vector<2x32xf32>
    %410 = arith.negf %409 : vector<2x32xf32>
    %411 = math.exp %410 : vector<2x32xf32>
    %cst_82 = arith.constant 1.000000e+00 : f32
    %412 = vector.broadcast %cst_82 : f32 to vector<2x32xf32>
    %413 = arith.addf %412, %411 : vector<2x32xf32>
    %414 = arith.divf %412, %413 : vector<2x32xf32>
    %415 = arith.mulf %406, %341 : vector<2x32xf32>
    %416 = arith.mulf %400, %408 : vector<2x32xf32>
    %417 = arith.addf %415, %416 : vector<2x32xf32>
    %418 = math.tanh %417 : vector<2x32xf32>
    %419 = arith.mulf %414, %418 : vector<2x32xf32>
    %420 = vector.shape_cast %353 : vector<2x1xi1> to vector<2x1xi1>
    %421 = vector.broadcast %420 : vector<2x1xi1> to vector<2x32xi1>
    %422 = arith.select %421, %419, %338 : vector<2x32xi1>, vector<2x32xf32>
    %423 = vector.shape_cast %353 : vector<2x1xi1> to vector<2x1xi1>
    %424 = vector.broadcast %423 : vector<2x1xi1> to vector<2x32xi1>
    %425 = arith.select %424, %417, %341 : vector<2x32xi1>, vector<2x32xf32>
    %cst_83 = arith.constant 0.000000e+00 : f32
    %426 = vector.shape_cast %353 : vector<2x1xi1> to vector<2x1xi1>
    %427 = vector.broadcast %426 : vector<2x1xi1> to vector<2x32xi1>
    %428 = vector.broadcast %cst_83 : f32 to vector<2x32xf32>
    %429 = arith.select %427, %419, %428 : vector<2x32xi1>, vector<2x32xf32>
    %c8_84 = arith.constant 8 : index
    %c0_85 = arith.constant 0 : index
    %430 = vector.load %arg14[%c8_84, %c0_85] : memref<16x64xf32, #tpu.memory_space<vmem>>, vector<2x32xf32>
    tpu.vector_store %arg14[%c8_84, %c0_85], %392 {strides = array<i32>} : memref<16x64xf32, #tpu.memory_space<vmem>>, vector<2x32xf32>,
    %c6_86 = arith.constant 6 : index
    %c32_87 = arith.constant 32 : index
    %431 = vector.load %arg14[%c6_86, %c32_87] : memref<16x64xf32, #tpu.memory_space<vmem>>, vector<2x32xf32>
    tpu.vector_store %arg14[%c6_86, %c32_87], %429 {strides = array<i32>} : memref<16x64xf32, #tpu.memory_space<vmem>>, vector<2x32xf32>,
    %432 = vector.extract_strided_slice %0 {offsets = [0, 5], sizes = [2, 1], strides = [1, 1]} : vector<2x8xf32> to vector<2x1xf32>
    %cst_88 = arith.constant 0.000000e+00 : f32
    %433 = vector.broadcast %cst_88 : f32 to vector<2x1xf32>
    %434 = arith.cmpf ogt, %432, %433 : vector<2x1xf32>
    %435 = vector.extract_strided_slice %0 {offsets = [0, 2], sizes = [2, 1], strides = [1, 1]} : vector<2x8xf32> to vector<2x1xf32>
    %cst_89 = arith.constant 0.000000e+00 : f32
    %436 = vector.broadcast %cst_89 : f32 to vector<2x1xf32>
    %437 = arith.cmpf ogt, %435, %436 : vector<2x1xf32>
    %438 = vector.extract_strided_slice %8 {offsets = [10, 0], sizes = [2, 128], strides = [1, 1]} : vector<16x256xf32> to vector<2x128xf32>
    %439 = vector.extract_strided_slice %8 {offsets = [4, 128], sizes = [2, 128], strides = [1, 1]} : vector<16x256xf32> to vector<2x128xf32>
    %cst_90 = arith.constant dense<0.000000e+00> : vector<2x128xf32>
    %440 = tpu.matmul %385, %9, %cst_90 {dimension_numbers = #tpu.dot_dimension_numbers<[1], [0], [0], [1], [0, 0, 1, 1], [], []>} : vector<2x32xf32>, vector<32x128xf32>, vector<2x128xf32> -> vector<2x128xf32>
    %441 = arith.addf %438, %440 : vector<2x128xf32>
    %442 = vector.extract_strided_slice %441 {offsets = [0, 0], sizes = [2, 32], strides = [1, 1]} : vector<2x128xf32> to vector<2x32xf32>
    %443 = arith.negf %442 : vector<2x32xf32>
    %444 = math.exp %443 : vector<2x32xf32>
    %cst_91 = arith.constant 1.000000e+00 : f32
    %445 = vector.broadcast %cst_91 : f32 to vector<2x32xf32>
    %446 = arith.addf %445, %444 : vector<2x32xf32>
    %447 = arith.divf %445, %446 : vector<2x32xf32>
    %448 = vector.extract_strided_slice %441 {offsets = [0, 32], sizes = [2, 32], strides = [1, 1]} : vector<2x128xf32> to vector<2x32xf32>
    %449 = arith.negf %448 : vector<2x32xf32>
    %450 = math.exp %449 : vector<2x32xf32>
    %cst_92 = arith.constant 1.000000e+00 : f32
    %451 = vector.broadcast %cst_92 : f32 to vector<2x32xf32>
    %452 = arith.addf %451, %450 : vector<2x32xf32>
    %453 = arith.divf %451, %452 : vector<2x32xf32>
    %454 = vector.extract_strided_slice %441 {offsets = [0, 64], sizes = [2, 32], strides = [1, 1]} : vector<2x128xf32> to vector<2x32xf32>
    %455 = math.tanh %454 : vector<2x32xf32>
    %456 = vector.extract_strided_slice %441 {offsets = [0, 96], sizes = [2, 32], strides = [1, 1]} : vector<2x128xf32> to vector<2x32xf32>
    %457 = arith.negf %456 : vector<2x32xf32>
    %458 = math.exp %457 : vector<2x32xf32>
    %cst_93 = arith.constant 1.000000e+00 : f32
    %459 = vector.broadcast %cst_93 : f32 to vector<2x32xf32>
    %460 = arith.addf %459, %458 : vector<2x32xf32>
    %461 = arith.divf %459, %460 : vector<2x32xf32>
    %462 = arith.mulf %453, %388 : vector<2x32xf32>
    %463 = arith.mulf %447, %455 : vector<2x32xf32>
    %464 = arith.addf %462, %463 : vector<2x32xf32>
    %465 = math.tanh %464 : vector<2x32xf32>
    %466 = arith.mulf %461, %465 : vector<2x32xf32>
    %467 = vector.shape_cast %434 : vector<2x1xi1> to vector<2x1xi1>
    %468 = vector.broadcast %467 : vector<2x1xi1> to vector<2x32xi1>
    %469 = arith.select %468, %466, %385 : vector<2x32xi1>, vector<2x32xf32>
    %470 = vector.shape_cast %434 : vector<2x1xi1> to vector<2x1xi1>
    %471 = vector.broadcast %470 : vector<2x1xi1> to vector<2x32xi1>
    %472 = arith.select %471, %464, %388 : vector<2x32xi1>, vector<2x32xf32>
    %cst_94 = arith.constant 0.000000e+00 : f32
    %473 = vector.shape_cast %434 : vector<2x1xi1> to vector<2x1xi1>
    %474 = vector.broadcast %473 : vector<2x1xi1> to vector<2x32xi1>
    %475 = vector.broadcast %cst_94 : f32 to vector<2x32xf32>
    %476 = arith.select %474, %466, %475 : vector<2x32xi1>, vector<2x32xf32>
    %cst_95 = arith.constant dense<0.000000e+00> : vector<2x128xf32>
    %477 = tpu.matmul %422, %10, %cst_95 {dimension_numbers = #tpu.dot_dimension_numbers<[1], [0], [0], [1], [0, 0, 1, 1], [], []>} : vector<2x32xf32>, vector<32x128xf32>, vector<2x128xf32> -> vector<2x128xf32>
    %478 = arith.addf %439, %477 : vector<2x128xf32>
    %479 = vector.extract_strided_slice %478 {offsets = [0, 0], sizes = [2, 32], strides = [1, 1]} : vector<2x128xf32> to vector<2x32xf32>
    %480 = arith.negf %479 : vector<2x32xf32>
    %481 = math.exp %480 : vector<2x32xf32>
    %cst_96 = arith.constant 1.000000e+00 : f32
    %482 = vector.broadcast %cst_96 : f32 to vector<2x32xf32>
    %483 = arith.addf %482, %481 : vector<2x32xf32>
    %484 = arith.divf %482, %483 : vector<2x32xf32>
    %485 = vector.extract_strided_slice %478 {offsets = [0, 32], sizes = [2, 32], strides = [1, 1]} : vector<2x128xf32> to vector<2x32xf32>
    %486 = arith.negf %485 : vector<2x32xf32>
    %487 = math.exp %486 : vector<2x32xf32>
    %cst_97 = arith.constant 1.000000e+00 : f32
    %488 = vector.broadcast %cst_97 : f32 to vector<2x32xf32>
    %489 = arith.addf %488, %487 : vector<2x32xf32>
    %490 = arith.divf %488, %489 : vector<2x32xf32>
    %491 = vector.extract_strided_slice %478 {offsets = [0, 64], sizes = [2, 32], strides = [1, 1]} : vector<2x128xf32> to vector<2x32xf32>
    %492 = math.tanh %491 : vector<2x32xf32>
    %493 = vector.extract_strided_slice %478 {offsets = [0, 96], sizes = [2, 32], strides = [1, 1]} : vector<2x128xf32> to vector<2x32xf32>
    %494 = arith.negf %493 : vector<2x32xf32>
    %495 = math.exp %494 : vector<2x32xf32>
    %cst_98 = arith.constant 1.000000e+00 : f32
    %496 = vector.broadcast %cst_98 : f32 to vector<2x32xf32>
    %497 = arith.addf %496, %495 : vector<2x32xf32>
    %498 = arith.divf %496, %497 : vector<2x32xf32>
    %499 = arith.mulf %490, %425 : vector<2x32xf32>
    %500 = arith.mulf %484, %492 : vector<2x32xf32>
    %501 = arith.addf %499, %500 : vector<2x32xf32>
    %502 = math.tanh %501 : vector<2x32xf32>
    %503 = arith.mulf %498, %502 : vector<2x32xf32>
    %504 = vector.shape_cast %437 : vector<2x1xi1> to vector<2x1xi1>
    %505 = vector.broadcast %504 : vector<2x1xi1> to vector<2x32xi1>
    %506 = arith.select %505, %503, %422 : vector<2x32xi1>, vector<2x32xf32>
    %507 = vector.shape_cast %437 : vector<2x1xi1> to vector<2x1xi1>
    %508 = vector.broadcast %507 : vector<2x1xi1> to vector<2x32xi1>
    %509 = arith.select %508, %501, %425 : vector<2x32xi1>, vector<2x32xf32>
    %cst_99 = arith.constant 0.000000e+00 : f32
    %510 = vector.shape_cast %437 : vector<2x1xi1> to vector<2x1xi1>
    %511 = vector.broadcast %510 : vector<2x1xi1> to vector<2x32xi1>
    %512 = vector.broadcast %cst_99 : f32 to vector<2x32xf32>
    %513 = arith.select %511, %503, %512 : vector<2x32xi1>, vector<2x32xf32>
    %c10_100 = arith.constant 10 : index
    %c0_101 = arith.constant 0 : index
    %514 = vector.load %arg14[%c10_100, %c0_101] : memref<16x64xf32, #tpu.memory_space<vmem>>, vector<2x32xf32>
    tpu.vector_store %arg14[%c10_100, %c0_101], %476 {strides = array<i32>} : memref<16x64xf32, #tpu.memory_space<vmem>>, vector<2x32xf32>,
    %c4_102 = arith.constant 4 : index
    %c32_103 = arith.constant 32 : index
    %515 = vector.load %arg14[%c4_102, %c32_103] : memref<16x64xf32, #tpu.memory_space<vmem>>, vector<2x32xf32>
    tpu.vector_store %arg14[%c4_102, %c32_103], %513 {strides = array<i32>} : memref<16x64xf32, #tpu.memory_space<vmem>>, vector<2x32xf32>,
    %516 = vector.extract_strided_slice %0 {offsets = [0, 6], sizes = [2, 1], strides = [1, 1]} : vector<2x8xf32> to vector<2x1xf32>
    %cst_104 = arith.constant 0.000000e+00 : f32
    %517 = vector.broadcast %cst_104 : f32 to vector<2x1xf32>
    %518 = arith.cmpf ogt, %516, %517 : vector<2x1xf32>
    %519 = vector.extract_strided_slice %0 {offsets = [0, 1], sizes = [2, 1], strides = [1, 1]} : vector<2x8xf32> to vector<2x1xf32>
    %cst_105 = arith.constant 0.000000e+00 : f32
    %520 = vector.broadcast %cst_105 : f32 to vector<2x1xf32>
    %521 = arith.cmpf ogt, %519, %520 : vector<2x1xf32>
    %522 = vector.extract_strided_slice %8 {offsets = [12, 0], sizes = [2, 128], strides = [1, 1]} : vector<16x256xf32> to vector<2x128xf32>
    %523 = vector.extract_strided_slice %8 {offsets = [2, 128], sizes = [2, 128], strides = [1, 1]} : vector<16x256xf32> to vector<2x128xf32>
    %cst_106 = arith.constant dense<0.000000e+00> : vector<2x128xf32>
    %524 = tpu.matmul %469, %9, %cst_106 {dimension_numbers = #tpu.dot_dimension_numbers<[1], [0], [0], [1], [0, 0, 1, 1], [], []>} : vector<2x32xf32>, vector<32x128xf32>, vector<2x128xf32> -> vector<2x128xf32>
    %525 = arith.addf %522, %524 : vector<2x128xf32>
    %526 = vector.extract_strided_slice %525 {offsets = [0, 0], sizes = [2, 32], strides = [1, 1]} : vector<2x128xf32> to vector<2x32xf32>
    %527 = arith.negf %526 : vector<2x32xf32>
    %528 = math.exp %527 : vector<2x32xf32>
    %cst_107 = arith.constant 1.000000e+00 : f32
    %529 = vector.broadcast %cst_107 : f32 to vector<2x32xf32>
    %530 = arith.addf %529, %528 : vector<2x32xf32>
    %531 = arith.divf %529, %530 : vector<2x32xf32>
    %532 = vector.extract_strided_slice %525 {offsets = [0, 32], sizes = [2, 32], strides = [1, 1]} : vector<2x128xf32> to vector<2x32xf32>
    %533 = arith.negf %532 : vector<2x32xf32>
    %534 = math.exp %533 : vector<2x32xf32>
    %cst_108 = arith.constant 1.000000e+00 : f32
    %535 = vector.broadcast %cst_108 : f32 to vector<2x32xf32>
    %536 = arith.addf %535, %534 : vector<2x32xf32>
    %537 = arith.divf %535, %536 : vector<2x32xf32>
    %538 = vector.extract_strided_slice %525 {offsets = [0, 64], sizes = [2, 32], strides = [1, 1]} : vector<2x128xf32> to vector<2x32xf32>
    %539 = math.tanh %538 : vector<2x32xf32>
    %540 = vector.extract_strided_slice %525 {offsets = [0, 96], sizes = [2, 32], strides = [1, 1]} : vector<2x128xf32> to vector<2x32xf32>
    %541 = arith.negf %540 : vector<2x32xf32>
    %542 = math.exp %541 : vector<2x32xf32>
    %cst_109 = arith.constant 1.000000e+00 : f32
    %543 = vector.broadcast %cst_109 : f32 to vector<2x32xf32>
    %544 = arith.addf %543, %542 : vector<2x32xf32>
    %545 = arith.divf %543, %544 : vector<2x32xf32>
    %546 = arith.mulf %537, %472 : vector<2x32xf32>
    %547 = arith.mulf %531, %539 : vector<2x32xf32>
    %548 = arith.addf %546, %547 : vector<2x32xf32>
    %549 = math.tanh %548 : vector<2x32xf32>
    %550 = arith.mulf %545, %549 : vector<2x32xf32>
    %551 = vector.shape_cast %518 : vector<2x1xi1> to vector<2x1xi1>
    %552 = vector.broadcast %551 : vector<2x1xi1> to vector<2x32xi1>
    %553 = arith.select %552, %550, %469 : vector<2x32xi1>, vector<2x32xf32>
    %554 = vector.shape_cast %518 : vector<2x1xi1> to vector<2x1xi1>
    %555 = vector.broadcast %554 : vector<2x1xi1> to vector<2x32xi1>
    %556 = arith.select %555, %548, %472 : vector<2x32xi1>, vector<2x32xf32>
    %cst_110 = arith.constant 0.000000e+00 : f32
    %557 = vector.shape_cast %518 : vector<2x1xi1> to vector<2x1xi1>
    %558 = vector.broadcast %557 : vector<2x1xi1> to vector<2x32xi1>
    %559 = vector.broadcast %cst_110 : f32 to vector<2x32xf32>
    %560 = arith.select %558, %550, %559 : vector<2x32xi1>, vector<2x32xf32>
    %cst_111 = arith.constant dense<0.000000e+00> : vector<2x128xf32>
    %561 = tpu.matmul %506, %10, %cst_111 {dimension_numbers = #tpu.dot_dimension_numbers<[1], [0], [0], [1], [0, 0, 1, 1], [], []>} : vector<2x32xf32>, vector<32x128xf32>, vector<2x128xf32> -> vector<2x128xf32>
    %562 = arith.addf %523, %561 : vector<2x128xf32>
    %563 = vector.extract_strided_slice %562 {offsets = [0, 0], sizes = [2, 32], strides = [1, 1]} : vector<2x128xf32> to vector<2x32xf32>
    %564 = arith.negf %563 : vector<2x32xf32>
    %565 = math.exp %564 : vector<2x32xf32>
    %cst_112 = arith.constant 1.000000e+00 : f32
    %566 = vector.broadcast %cst_112 : f32 to vector<2x32xf32>
    %567 = arith.addf %566, %565 : vector<2x32xf32>
    %568 = arith.divf %566, %567 : vector<2x32xf32>
    %569 = vector.extract_strided_slice %562 {offsets = [0, 32], sizes = [2, 32], strides = [1, 1]} : vector<2x128xf32> to vector<2x32xf32>
    %570 = arith.negf %569 : vector<2x32xf32>
    %571 = math.exp %570 : vector<2x32xf32>
    %cst_113 = arith.constant 1.000000e+00 : f32
    %572 = vector.broadcast %cst_113 : f32 to vector<2x32xf32>
    %573 = arith.addf %572, %571 : vector<2x32xf32>
    %574 = arith.divf %572, %573 : vector<2x32xf32>
    %575 = vector.extract_strided_slice %562 {offsets = [0, 64], sizes = [2, 32], strides = [1, 1]} : vector<2x128xf32> to vector<2x32xf32>
    %576 = math.tanh %575 : vector<2x32xf32>
    %577 = vector.extract_strided_slice %562 {offsets = [0, 96], sizes = [2, 32], strides = [1, 1]} : vector<2x128xf32> to vector<2x32xf32>
    %578 = arith.negf %577 : vector<2x32xf32>
    %579 = math.exp %578 : vector<2x32xf32>
    %cst_114 = arith.constant 1.000000e+00 : f32
    %580 = vector.broadcast %cst_114 : f32 to vector<2x32xf32>
    %581 = arith.addf %580, %579 : vector<2x32xf32>
    %582 = arith.divf %580, %581 : vector<2x32xf32>
    %583 = arith.mulf %574, %509 : vector<2x32xf32>
    %584 = arith.mulf %568, %576 : vector<2x32xf32>
    %585 = arith.addf %583, %584 : vector<2x32xf32>
    %586 = math.tanh %585 : vector<2x32xf32>
    %587 = arith.mulf %582, %586 : vector<2x32xf32>
    %588 = vector.shape_cast %521 : vector<2x1xi1> to vector<2x1xi1>
    %589 = vector.broadcast %588 : vector<2x1xi1> to vector<2x32xi1>
    %590 = arith.select %589, %587, %506 : vector<2x32xi1>, vector<2x32xf32>
    %591 = vector.shape_cast %521 : vector<2x1xi1> to vector<2x1xi1>
    %592 = vector.broadcast %591 : vector<2x1xi1> to vector<2x32xi1>
    %593 = arith.select %592, %585, %509 : vector<2x32xi1>, vector<2x32xf32>
    %cst_115 = arith.constant 0.000000e+00 : f32
    %594 = vector.shape_cast %521 : vector<2x1xi1> to vector<2x1xi1>
    %595 = vector.broadcast %594 : vector<2x1xi1> to vector<2x32xi1>
    %596 = vector.broadcast %cst_115 : f32 to vector<2x32xf32>
    %597 = arith.select %595, %587, %596 : vector<2x32xi1>, vector<2x32xf32>
    %c12_116 = arith.constant 12 : index
    %c0_117 = arith.constant 0 : index
    %598 = vector.load %arg14[%c12_116, %c0_117] : memref<16x64xf32, #tpu.memory_space<vmem>>, vector<2x32xf32>
    tpu.vector_store %arg14[%c12_116, %c0_117], %560 {strides = array<i32>} : memref<16x64xf32, #tpu.memory_space<vmem>>, vector<2x32xf32>,
    %c2_118 = arith.constant 2 : index
    %c32_119 = arith.constant 32 : index
    %599 = vector.load %arg14[%c2_118, %c32_119] : memref<16x64xf32, #tpu.memory_space<vmem>>, vector<2x32xf32>
    tpu.vector_store %arg14[%c2_118, %c32_119], %597 {strides = array<i32>} : memref<16x64xf32, #tpu.memory_space<vmem>>, vector<2x32xf32>,
    %600 = vector.extract_strided_slice %0 {offsets = [0, 7], sizes = [2, 1], strides = [1, 1]} : vector<2x8xf32> to vector<2x1xf32>
    %cst_120 = arith.constant 0.000000e+00 : f32
    %601 = vector.broadcast %cst_120 : f32 to vector<2x1xf32>
    %602 = arith.cmpf ogt, %600, %601 : vector<2x1xf32>
    %603 = vector.extract_strided_slice %0 {offsets = [0, 0], sizes = [2, 1], strides = [1, 1]} : vector<2x8xf32> to vector<2x1xf32>
    %cst_121 = arith.constant 0.000000e+00 : f32
    %604 = vector.broadcast %cst_121 : f32 to vector<2x1xf32>
    %605 = arith.cmpf ogt, %603, %604 : vector<2x1xf32>
    %606 = vector.extract_strided_slice %8 {offsets = [14, 0], sizes = [2, 128], strides = [1, 1]} : vector<16x256xf32> to vector<2x128xf32>
    %607 = vector.extract_strided_slice %8 {offsets = [0, 128], sizes = [2, 128], strides = [1, 1]} : vector<16x256xf32> to vector<2x128xf32>
    %cst_122 = arith.constant dense<0.000000e+00> : vector<2x128xf32>
    %608 = tpu.matmul %553, %9, %cst_122 {dimension_numbers = #tpu.dot_dimension_numbers<[1], [0], [0], [1], [0, 0, 1, 1], [], []>} : vector<2x32xf32>, vector<32x128xf32>, vector<2x128xf32> -> vector<2x128xf32>
    %609 = arith.addf %606, %608 : vector<2x128xf32>
    %610 = vector.extract_strided_slice %609 {offsets = [0, 0], sizes = [2, 32], strides = [1, 1]} : vector<2x128xf32> to vector<2x32xf32>
    %611 = arith.negf %610 : vector<2x32xf32>
    %612 = math.exp %611 : vector<2x32xf32>
    %cst_123 = arith.constant 1.000000e+00 : f32
    %613 = vector.broadcast %cst_123 : f32 to vector<2x32xf32>
    %614 = arith.addf %613, %612 : vector<2x32xf32>
    %615 = arith.divf %613, %614 : vector<2x32xf32>
    %616 = vector.extract_strided_slice %609 {offsets = [0, 32], sizes = [2, 32], strides = [1, 1]} : vector<2x128xf32> to vector<2x32xf32>
    %617 = arith.negf %616 : vector<2x32xf32>
    %618 = math.exp %617 : vector<2x32xf32>
    %cst_124 = arith.constant 1.000000e+00 : f32
    %619 = vector.broadcast %cst_124 : f32 to vector<2x32xf32>
    %620 = arith.addf %619, %618 : vector<2x32xf32>
    %621 = arith.divf %619, %620 : vector<2x32xf32>
    %622 = vector.extract_strided_slice %609 {offsets = [0, 64], sizes = [2, 32], strides = [1, 1]} : vector<2x128xf32> to vector<2x32xf32>
    %623 = math.tanh %622 : vector<2x32xf32>
    %624 = vector.extract_strided_slice %609 {offsets = [0, 96], sizes = [2, 32], strides = [1, 1]} : vector<2x128xf32> to vector<2x32xf32>
    %625 = arith.negf %624 : vector<2x32xf32>
    %626 = math.exp %625 : vector<2x32xf32>
    %cst_125 = arith.constant 1.000000e+00 : f32
    %627 = vector.broadcast %cst_125 : f32 to vector<2x32xf32>
    %628 = arith.addf %627, %626 : vector<2x32xf32>
    %629 = arith.divf %627, %628 : vector<2x32xf32>
    %630 = arith.mulf %621, %556 : vector<2x32xf32>
    %631 = arith.mulf %615, %623 : vector<2x32xf32>
    %632 = arith.addf %630, %631 : vector<2x32xf32>
    %633 = math.tanh %632 : vector<2x32xf32>
    %634 = arith.mulf %629, %633 : vector<2x32xf32>
    %cst_126 = arith.constant 0.000000e+00 : f32
    %635 = vector.shape_cast %602 : vector<2x1xi1> to vector<2x1xi1>
    %636 = vector.broadcast %635 : vector<2x1xi1> to vector<2x32xi1>
    %637 = vector.broadcast %cst_126 : f32 to vector<2x32xf32>
    %638 = arith.select %636, %634, %637 : vector<2x32xi1>, vector<2x32xf32>
    %cst_127 = arith.constant dense<0.000000e+00> : vector<2x128xf32>
    %639 = tpu.matmul %590, %10, %cst_127 {dimension_numbers = #tpu.dot_dimension_numbers<[1], [0], [0], [1], [0, 0, 1, 1], [], []>} : vector<2x32xf32>, vector<32x128xf32>, vector<2x128xf32> -> vector<2x128xf32>
    %640 = arith.addf %607, %639 : vector<2x128xf32>
    %641 = vector.extract_strided_slice %640 {offsets = [0, 0], sizes = [2, 32], strides = [1, 1]} : vector<2x128xf32> to vector<2x32xf32>
    %642 = arith.negf %641 : vector<2x32xf32>
    %643 = math.exp %642 : vector<2x32xf32>
    %cst_128 = arith.constant 1.000000e+00 : f32
    %644 = vector.broadcast %cst_128 : f32 to vector<2x32xf32>
    %645 = arith.addf %644, %643 : vector<2x32xf32>
    %646 = arith.divf %644, %645 : vector<2x32xf32>
    %647 = vector.extract_strided_slice %640 {offsets = [0, 32], sizes = [2, 32], strides = [1, 1]} : vector<2x128xf32> to vector<2x32xf32>
    %648 = arith.negf %647 : vector<2x32xf32>
    %649 = math.exp %648 : vector<2x32xf32>
    %cst_129 = arith.constant 1.000000e+00 : f32
    %650 = vector.broadcast %cst_129 : f32 to vector<2x32xf32>
    %651 = arith.addf %650, %649 : vector<2x32xf32>
    %652 = arith.divf %650, %651 : vector<2x32xf32>
    %653 = vector.extract_strided_slice %640 {offsets = [0, 64], sizes = [2, 32], strides = [1, 1]} : vector<2x128xf32> to vector<2x32xf32>
    %654 = math.tanh %653 : vector<2x32xf32>
    %655 = vector.extract_strided_slice %640 {offsets = [0, 96], sizes = [2, 32], strides = [1, 1]} : vector<2x128xf32> to vector<2x32xf32>
    %656 = arith.negf %655 : vector<2x32xf32>
    %657 = math.exp %656 : vector<2x32xf32>
    %cst_130 = arith.constant 1.000000e+00 : f32
    %658 = vector.broadcast %cst_130 : f32 to vector<2x32xf32>
    %659 = arith.addf %658, %657 : vector<2x32xf32>
    %660 = arith.divf %658, %659 : vector<2x32xf32>
    %661 = arith.mulf %652, %593 : vector<2x32xf32>
    %662 = arith.mulf %646, %654 : vector<2x32xf32>
    %663 = arith.addf %661, %662 : vector<2x32xf32>
    %664 = math.tanh %663 : vector<2x32xf32>
    %665 = arith.mulf %660, %664 : vector<2x32xf32>
    %cst_131 = arith.constant 0.000000e+00 : f32
    %666 = vector.shape_cast %605 : vector<2x1xi1> to vector<2x1xi1>
    %667 = vector.broadcast %666 : vector<2x1xi1> to vector<2x32xi1>
    %668 = vector.broadcast %cst_131 : f32 to vector<2x32xf32>
    %669 = arith.select %667, %665, %668 : vector<2x32xi1>, vector<2x32xf32>
    %c14_132 = arith.constant 14 : index
    %c0_133 = arith.constant 0 : index
    %670 = vector.load %arg14[%c14_132, %c0_133] : memref<16x64xf32, #tpu.memory_space<vmem>>, vector<2x32xf32>
    tpu.vector_store %arg14[%c14_132, %c0_133], %638 {strides = array<i32>} : memref<16x64xf32, #tpu.memory_space<vmem>>, vector<2x32xf32>,
    %c0_134 = arith.constant 0 : index
    %c32_135 = arith.constant 32 : index
    %671 = vector.load %arg14[%c0_134, %c32_135] : memref<16x64xf32, #tpu.memory_space<vmem>>, vector<2x32xf32>
    tpu.vector_store %arg14[%c0_134, %c32_135], %669 {strides = array<i32>} : memref<16x64xf32, #tpu.memory_space<vmem>>, vector<2x32xf32>,
    %c0_136 = arith.constant 0 : index
    %c0_137 = arith.constant 0 : index
    %672 = vector.load %arg14[%c0_136, %c0_137] : memref<16x64xf32, #tpu.memory_space<vmem>>, vector<16x64xf32>
    %c0_138 = arith.constant 0 : index
    %c0_139 = arith.constant 0 : index
    %673 = vector.load %arg7[%c0_138, %c0_139] : memref<64x6xf32, #tpu.memory_space<vmem>>, vector<64x6xf32>
    %cst_140 = arith.constant dense<0.000000e+00> : vector<16x6xf32>
    %674 = tpu.matmul %672, %673, %cst_140 {dimension_numbers = #tpu.dot_dimension_numbers<[1], [0], [0], [1], [0, 0, 1, 1], [], []>} : vector<16x64xf32>, vector<64x6xf32>, vector<16x6xf32> -> vector<16x6xf32>
    %c0_141 = arith.constant 0 : index
    %c0_142 = arith.constant 0 : index
    %675 = vector.load %arg8[%c0_141, %c0_142] : memref<1x6xf32, #tpu.memory_space<vmem>>, vector<1x6xf32>
    %676 = vector.broadcast %675 : vector<1x6xf32> to vector<16x6xf32>
    %677 = arith.addf %674, %676 : vector<16x6xf32>
    %678 = tpu.iota {dimensions = array<i32: 1>} : vector<2x6xi32>
    %679 = tpu.iota {dimensions = array<i32: 2>} : vector<2x6x6xi32>
    %c4_i32 = arith.constant 4 : i32
    %680 = vector.broadcast %c4_i32 : i32 to vector<2x6xi32>
    %681 = arith.cmpi eq, %678, %680 : vector<2x6xi32>
    %682 = arith.extui %681 : vector<2x6xi1> to vector<2x6xi32>
    %683 = arith.sitofp %682 : vector<2x6xi32> to vector<2x6xf32>
    %684 = vector.shape_cast %2 : vector<6x6xf32> to vector<1x6x6xf32>
    %c4_i32_143 = arith.constant 4 : i32
    %685 = vector.broadcast %c4_i32_143 : i32 to vector<2x6xi32>
    %686 = arith.cmpi eq, %678, %685 : vector<2x6xi32>
    %cst_144 = arith.constant 0.000000e+00 : f32
    %cst_145 = arith.constant -1.000000e+04 : f32
    %687 = vector.broadcast %cst_144 : f32 to vector<2x6xf32>
    %688 = vector.broadcast %cst_145 : f32 to vector<2x6xf32>
    %689 = arith.select %686, %687, %688 : vector<2x6xi1>, vector<2x6xf32>
    %cst_146 = arith.constant 0.000000e+00 : f32
    %690 = vector.broadcast %cst_146 : f32 to vector<2x1xf32>
    %691 = vector.extract_strided_slice %677 {offsets = [0, 0], sizes = [2, 6], strides = [1, 1]} : vector<16x6xf32> to vector<2x6xf32>
    %692 = vector.extract_strided_slice %0 {offsets = [0, 0], sizes = [2, 1], strides = [1, 1]} : vector<2x8xf32> to vector<2x1xf32>
    %cst_147 = arith.constant 0.000000e+00 : f32
    %693 = vector.broadcast %cst_147 : f32 to vector<2x1xf32>
    %694 = arith.cmpf ogt, %692, %693 : vector<2x1xf32>
    %695 = vector.extract_strided_slice %1 {offsets = [0, 0], sizes = [2, 1], strides = [1, 1]} : vector<2x8xi32> to vector<2x1xi32>
    %696 = vector.broadcast %695 : vector<2x1xi32> to vector<2x6xi32>
    %697 = arith.cmpi eq, %696, %678 : vector<2x6xi32>
    %698 = arith.extui %697 : vector<2x6xi1> to vector<2x6xi32>
    %699 = arith.sitofp %698 : vector<2x6xi32> to vector<2x6xf32>
    %700 = vector.shape_cast %689 : vector<2x6xf32> to vector<2x1x6xf32>
    %701 = vector.broadcast %700 : vector<2x1x6xf32> to vector<2x6x6xf32>
    %702 = vector.broadcast %684 : vector<1x6x6xf32> to vector<2x6x6xf32>
    %703 = arith.addf %701, %702 : vector<2x6x6xf32>
    %cst_148 = arith.constant dense<0xFF800000> : vector<2x6xf32>
    %704 = vector.multi_reduction <maximumf>, %703, %cst_148 [2] : vector<2x6x6xf32> to vector<2x6xf32>
    %705 = vector.shape_cast %704 : vector<2x6xf32> to vector<2x6x1xf32>
    %706 = vector.broadcast %705 : vector<2x6x1xf32> to vector<2x6x6xf32>
    %707 = arith.subf %703, %706 : vector<2x6x6xf32>
    %708 = math.exp %707 : vector<2x6x6xf32>
    %cst_149 = arith.constant dense<0.000000e+00> : vector<2x6xf32>
    %709 = vector.multi_reduction <add>, %708, %cst_149 [2] : vector<2x6x6xf32> to vector<2x6xf32>
    %710 = math.log %709 : vector<2x6xf32>
    %711 = arith.addf %704, %710 : vector<2x6xf32>
    %712 = arith.addf %711, %691 : vector<2x6xf32>
    %713 = vector.shape_cast %694 : vector<2x1xi1> to vector<2x1xi1>
    %714 = vector.broadcast %713 : vector<2x1xi1> to vector<2x6xi1>
    %715 = arith.select %714, %712, %689 : vector<2x6xi1>, vector<2x6xf32>
    %716 = arith.mulf %691, %699 : vector<2x6xf32>
    %cst_150 = arith.constant dense<0.000000e+00> : vector<2xf32>
    %717 = vector.multi_reduction <add>, %716, %cst_150 [1] : vector<2x6xf32> to vector<2xf32>
    %718 = vector.shape_cast %717 : vector<2xf32> to vector<2x1xf32>
    %719 = vector.shape_cast %683 : vector<2x6xf32> to vector<2x1x6xf32>
    %720 = vector.broadcast %684 : vector<1x6x6xf32> to vector<2x6x6xf32>
    %721 = vector.broadcast %719 : vector<2x1x6xf32> to vector<2x6x6xf32>
    %722 = arith.mulf %720, %721 : vector<2x6x6xf32>
    %cst_151 = arith.constant dense<0.000000e+00> : vector<2x6xf32>
    %723 = vector.multi_reduction <add>, %722, %cst_151 [2] : vector<2x6x6xf32> to vector<2x6xf32>
    %724 = arith.mulf %723, %699 : vector<2x6xf32>
    %cst_152 = arith.constant dense<0.000000e+00> : vector<2xf32>
    %725 = vector.multi_reduction <add>, %724, %cst_152 [1] : vector<2x6xf32> to vector<2xf32>
    %726 = vector.shape_cast %725 : vector<2xf32> to vector<2x1xf32>
    %727 = arith.addf %718, %726 : vector<2x1xf32>
    %cst_153 = arith.constant 0.000000e+00 : f32
    %728 = vector.broadcast %cst_153 : f32 to vector<2x1xf32>
    %729 = arith.select %694, %727, %728 : vector<2x1xi1>, vector<2x1xf32>
    %730 = arith.addf %690, %729 : vector<2x1xf32>
    %731 = vector.shape_cast %694 : vector<2x1xi1> to vector<2x1xi1>
    %732 = vector.broadcast %731 : vector<2x1xi1> to vector<2x6xi1>
    %733 = arith.select %732, %699, %683 : vector<2x6xi1>, vector<2x6xf32>
    %734 = vector.shape_cast %689 : vector<2x6xf32> to vector<2x1x6xf32>
    %735 = vector.broadcast %734 : vector<2x1x6xf32> to vector<2x6x6xf32>
    %736 = vector.broadcast %684 : vector<1x6x6xf32> to vector<2x6x6xf32>
    %737 = arith.addf %735, %736 : vector<2x6x6xf32>
    %cst_154 = arith.constant dense<0xFF800000> : vector<2x6xf32>
    %738 = vector.multi_reduction <maximumf>, %737, %cst_154 [2] : vector<2x6x6xf32> to vector<2x6xf32>
    %739 = arith.addf %738, %691 : vector<2x6xf32>
    %740 = vector.shape_cast %694 : vector<2x1xi1> to vector<2x1xi1>
    %741 = vector.broadcast %740 : vector<2x1xi1> to vector<2x6xi1>
    %742 = arith.select %741, %739, %689 : vector<2x6xi1>, vector<2x6xf32>
    %743 = vector.extract_strided_slice %677 {offsets = [2, 0], sizes = [2, 6], strides = [1, 1]} : vector<16x6xf32> to vector<2x6xf32>
    %744 = vector.extract_strided_slice %0 {offsets = [0, 1], sizes = [2, 1], strides = [1, 1]} : vector<2x8xf32> to vector<2x1xf32>
    %cst_155 = arith.constant 0.000000e+00 : f32
    %745 = vector.broadcast %cst_155 : f32 to vector<2x1xf32>
    %746 = arith.cmpf ogt, %744, %745 : vector<2x1xf32>
    %747 = vector.extract_strided_slice %1 {offsets = [0, 1], sizes = [2, 1], strides = [1, 1]} : vector<2x8xi32> to vector<2x1xi32>
    %748 = vector.broadcast %747 : vector<2x1xi32> to vector<2x6xi32>
    %749 = arith.cmpi eq, %748, %678 : vector<2x6xi32>
    %750 = arith.extui %749 : vector<2x6xi1> to vector<2x6xi32>
    %751 = arith.sitofp %750 : vector<2x6xi32> to vector<2x6xf32>
    %752 = vector.shape_cast %715 : vector<2x6xf32> to vector<2x1x6xf32>
    %753 = vector.broadcast %752 : vector<2x1x6xf32> to vector<2x6x6xf32>
    %754 = vector.broadcast %684 : vector<1x6x6xf32> to vector<2x6x6xf32>
    %755 = arith.addf %753, %754 : vector<2x6x6xf32>
    %cst_156 = arith.constant dense<0xFF800000> : vector<2x6xf32>
    %756 = vector.multi_reduction <maximumf>, %755, %cst_156 [2] : vector<2x6x6xf32> to vector<2x6xf32>
    %757 = vector.shape_cast %756 : vector<2x6xf32> to vector<2x6x1xf32>
    %758 = vector.broadcast %757 : vector<2x6x1xf32> to vector<2x6x6xf32>
    %759 = arith.subf %755, %758 : vector<2x6x6xf32>
    %760 = math.exp %759 : vector<2x6x6xf32>
    %cst_157 = arith.constant dense<0.000000e+00> : vector<2x6xf32>
    %761 = vector.multi_reduction <add>, %760, %cst_157 [2] : vector<2x6x6xf32> to vector<2x6xf32>
    %762 = math.log %761 : vector<2x6xf32>
    %763 = arith.addf %756, %762 : vector<2x6xf32>
    %764 = arith.addf %763, %743 : vector<2x6xf32>
    %765 = vector.shape_cast %746 : vector<2x1xi1> to vector<2x1xi1>
    %766 = vector.broadcast %765 : vector<2x1xi1> to vector<2x6xi1>
    %767 = arith.select %766, %764, %715 : vector<2x6xi1>, vector<2x6xf32>
    %768 = arith.mulf %743, %751 : vector<2x6xf32>
    %cst_158 = arith.constant dense<0.000000e+00> : vector<2xf32>
    %769 = vector.multi_reduction <add>, %768, %cst_158 [1] : vector<2x6xf32> to vector<2xf32>
    %770 = vector.shape_cast %769 : vector<2xf32> to vector<2x1xf32>
    %771 = vector.shape_cast %699 : vector<2x6xf32> to vector<2x1x6xf32>
    %772 = vector.broadcast %684 : vector<1x6x6xf32> to vector<2x6x6xf32>
    %773 = vector.broadcast %771 : vector<2x1x6xf32> to vector<2x6x6xf32>
    %774 = arith.mulf %772, %773 : vector<2x6x6xf32>
    %cst_159 = arith.constant dense<0.000000e+00> : vector<2x6xf32>
    %775 = vector.multi_reduction <add>, %774, %cst_159 [2] : vector<2x6x6xf32> to vector<2x6xf32>
    %776 = arith.mulf %775, %751 : vector<2x6xf32>
    %cst_160 = arith.constant dense<0.000000e+00> : vector<2xf32>
    %777 = vector.multi_reduction <add>, %776, %cst_160 [1] : vector<2x6xf32> to vector<2xf32>
    %778 = vector.shape_cast %777 : vector<2xf32> to vector<2x1xf32>
    %779 = arith.addf %770, %778 : vector<2x1xf32>
    %cst_161 = arith.constant 0.000000e+00 : f32
    %780 = vector.broadcast %cst_161 : f32 to vector<2x1xf32>
    %781 = arith.select %746, %779, %780 : vector<2x1xi1>, vector<2x1xf32>
    %782 = arith.addf %730, %781 : vector<2x1xf32>
    %783 = vector.shape_cast %746 : vector<2x1xi1> to vector<2x1xi1>
    %784 = vector.broadcast %783 : vector<2x1xi1> to vector<2x6xi1>
    %785 = arith.select %784, %751, %733 : vector<2x6xi1>, vector<2x6xf32>
    %786 = vector.shape_cast %742 : vector<2x6xf32> to vector<2x1x6xf32>
    %787 = vector.broadcast %786 : vector<2x1x6xf32> to vector<2x6x6xf32>
    %788 = vector.broadcast %684 : vector<1x6x6xf32> to vector<2x6x6xf32>
    %789 = arith.addf %787, %788 : vector<2x6x6xf32>
    %cst_162 = arith.constant dense<0xFF800000> : vector<2x6xf32>
    %790 = vector.multi_reduction <maximumf>, %789, %cst_162 [2] : vector<2x6x6xf32> to vector<2x6xf32>
    %791 = vector.shape_cast %790 : vector<2x6xf32> to vector<2x6x1xf32>
    %792 = vector.broadcast %791 : vector<2x6x1xf32> to vector<2x6x6xf32>
    %793 = arith.cmpf oeq, %789, %792 : vector<2x6x6xf32>
    %c6_i32 = arith.constant 6 : i32
    %794 = vector.broadcast %c6_i32 : i32 to vector<2x6x6xi32>
    %795 = arith.select %793, %679, %794 : vector<2x6x6xi1>, vector<2x6x6xi32>
    %cst_163 = arith.constant dense<2147483647> : vector<2x6xi32>
    %796 = vector.multi_reduction <minsi>, %795, %cst_163 [2] : vector<2x6x6xi32> to vector<2x6xi32>
    %797 = arith.addf %790, %743 : vector<2x6xf32>
    %798 = vector.shape_cast %746 : vector<2x1xi1> to vector<2x1xi1>
    %799 = vector.broadcast %798 : vector<2x1xi1> to vector<2x6xi1>
    %800 = arith.select %799, %797, %742 : vector<2x6xi1>, vector<2x6xf32>
    %801 = vector.extract_strided_slice %677 {offsets = [4, 0], sizes = [2, 6], strides = [1, 1]} : vector<16x6xf32> to vector<2x6xf32>
    %802 = vector.extract_strided_slice %0 {offsets = [0, 2], sizes = [2, 1], strides = [1, 1]} : vector<2x8xf32> to vector<2x1xf32>
    %cst_164 = arith.constant 0.000000e+00 : f32
    %803 = vector.broadcast %cst_164 : f32 to vector<2x1xf32>
    %804 = arith.cmpf ogt, %802, %803 : vector<2x1xf32>
    %805 = vector.extract_strided_slice %1 {offsets = [0, 2], sizes = [2, 1], strides = [1, 1]} : vector<2x8xi32> to vector<2x1xi32>
    %806 = vector.broadcast %805 : vector<2x1xi32> to vector<2x6xi32>
    %807 = arith.cmpi eq, %806, %678 : vector<2x6xi32>
    %808 = arith.extui %807 : vector<2x6xi1> to vector<2x6xi32>
    %809 = arith.sitofp %808 : vector<2x6xi32> to vector<2x6xf32>
    %810 = vector.shape_cast %767 : vector<2x6xf32> to vector<2x1x6xf32>
    %811 = vector.broadcast %810 : vector<2x1x6xf32> to vector<2x6x6xf32>
    %812 = vector.broadcast %684 : vector<1x6x6xf32> to vector<2x6x6xf32>
    %813 = arith.addf %811, %812 : vector<2x6x6xf32>
    %cst_165 = arith.constant dense<0xFF800000> : vector<2x6xf32>
    %814 = vector.multi_reduction <maximumf>, %813, %cst_165 [2] : vector<2x6x6xf32> to vector<2x6xf32>
    %815 = vector.shape_cast %814 : vector<2x6xf32> to vector<2x6x1xf32>
    %816 = vector.broadcast %815 : vector<2x6x1xf32> to vector<2x6x6xf32>
    %817 = arith.subf %813, %816 : vector<2x6x6xf32>
    %818 = math.exp %817 : vector<2x6x6xf32>
    %cst_166 = arith.constant dense<0.000000e+00> : vector<2x6xf32>
    %819 = vector.multi_reduction <add>, %818, %cst_166 [2] : vector<2x6x6xf32> to vector<2x6xf32>
    %820 = math.log %819 : vector<2x6xf32>
    %821 = arith.addf %814, %820 : vector<2x6xf32>
    %822 = arith.addf %821, %801 : vector<2x6xf32>
    %823 = vector.shape_cast %804 : vector<2x1xi1> to vector<2x1xi1>
    %824 = vector.broadcast %823 : vector<2x1xi1> to vector<2x6xi1>
    %825 = arith.select %824, %822, %767 : vector<2x6xi1>, vector<2x6xf32>
    %826 = arith.mulf %801, %809 : vector<2x6xf32>
    %cst_167 = arith.constant dense<0.000000e+00> : vector<2xf32>
    %827 = vector.multi_reduction <add>, %826, %cst_167 [1] : vector<2x6xf32> to vector<2xf32>
    %828 = vector.shape_cast %827 : vector<2xf32> to vector<2x1xf32>
    %829 = vector.shape_cast %751 : vector<2x6xf32> to vector<2x1x6xf32>
    %830 = vector.broadcast %684 : vector<1x6x6xf32> to vector<2x6x6xf32>
    %831 = vector.broadcast %829 : vector<2x1x6xf32> to vector<2x6x6xf32>
    %832 = arith.mulf %830, %831 : vector<2x6x6xf32>
    %cst_168 = arith.constant dense<0.000000e+00> : vector<2x6xf32>
    %833 = vector.multi_reduction <add>, %832, %cst_168 [2] : vector<2x6x6xf32> to vector<2x6xf32>
    %834 = arith.mulf %833, %809 : vector<2x6xf32>
    %cst_169 = arith.constant dense<0.000000e+00> : vector<2xf32>
    %835 = vector.multi_reduction <add>, %834, %cst_169 [1] : vector<2x6xf32> to vector<2xf32>
    %836 = vector.shape_cast %835 : vector<2xf32> to vector<2x1xf32>
    %837 = arith.addf %828, %836 : vector<2x1xf32>
    %cst_170 = arith.constant 0.000000e+00 : f32
    %838 = vector.broadcast %cst_170 : f32 to vector<2x1xf32>
    %839 = arith.select %804, %837, %838 : vector<2x1xi1>, vector<2x1xf32>
    %840 = arith.addf %782, %839 : vector<2x1xf32>
    %841 = vector.shape_cast %804 : vector<2x1xi1> to vector<2x1xi1>
    %842 = vector.broadcast %841 : vector<2x1xi1> to vector<2x6xi1>
    %843 = arith.select %842, %809, %785 : vector<2x6xi1>, vector<2x6xf32>
    %844 = vector.shape_cast %800 : vector<2x6xf32> to vector<2x1x6xf32>
    %845 = vector.broadcast %844 : vector<2x1x6xf32> to vector<2x6x6xf32>
    %846 = vector.broadcast %684 : vector<1x6x6xf32> to vector<2x6x6xf32>
    %847 = arith.addf %845, %846 : vector<2x6x6xf32>
    %cst_171 = arith.constant dense<0xFF800000> : vector<2x6xf32>
    %848 = vector.multi_reduction <maximumf>, %847, %cst_171 [2] : vector<2x6x6xf32> to vector<2x6xf32>
    %849 = vector.shape_cast %848 : vector<2x6xf32> to vector<2x6x1xf32>
    %850 = vector.broadcast %849 : vector<2x6x1xf32> to vector<2x6x6xf32>
    %851 = arith.cmpf oeq, %847, %850 : vector<2x6x6xf32>
    %c6_i32_172 = arith.constant 6 : i32
    %852 = vector.broadcast %c6_i32_172 : i32 to vector<2x6x6xi32>
    %853 = arith.select %851, %679, %852 : vector<2x6x6xi1>, vector<2x6x6xi32>
    %cst_173 = arith.constant dense<2147483647> : vector<2x6xi32>
    %854 = vector.multi_reduction <minsi>, %853, %cst_173 [2] : vector<2x6x6xi32> to vector<2x6xi32>
    %855 = arith.addf %848, %801 : vector<2x6xf32>
    %856 = vector.shape_cast %804 : vector<2x1xi1> to vector<2x1xi1>
    %857 = vector.broadcast %856 : vector<2x1xi1> to vector<2x6xi1>
    %858 = arith.select %857, %855, %800 : vector<2x6xi1>, vector<2x6xf32>
    %859 = vector.extract_strided_slice %677 {offsets = [6, 0], sizes = [2, 6], strides = [1, 1]} : vector<16x6xf32> to vector<2x6xf32>
    %860 = vector.extract_strided_slice %0 {offsets = [0, 3], sizes = [2, 1], strides = [1, 1]} : vector<2x8xf32> to vector<2x1xf32>
    %cst_174 = arith.constant 0.000000e+00 : f32
    %861 = vector.broadcast %cst_174 : f32 to vector<2x1xf32>
    %862 = arith.cmpf ogt, %860, %861 : vector<2x1xf32>
    %863 = vector.extract_strided_slice %1 {offsets = [0, 3], sizes = [2, 1], strides = [1, 1]} : vector<2x8xi32> to vector<2x1xi32>
    %864 = vector.broadcast %863 : vector<2x1xi32> to vector<2x6xi32>
    %865 = arith.cmpi eq, %864, %678 : vector<2x6xi32>
    %866 = arith.extui %865 : vector<2x6xi1> to vector<2x6xi32>
    %867 = arith.sitofp %866 : vector<2x6xi32> to vector<2x6xf32>
    %868 = vector.shape_cast %825 : vector<2x6xf32> to vector<2x1x6xf32>
    %869 = vector.broadcast %868 : vector<2x1x6xf32> to vector<2x6x6xf32>
    %870 = vector.broadcast %684 : vector<1x6x6xf32> to vector<2x6x6xf32>
    %871 = arith.addf %869, %870 : vector<2x6x6xf32>
    %cst_175 = arith.constant dense<0xFF800000> : vector<2x6xf32>
    %872 = vector.multi_reduction <maximumf>, %871, %cst_175 [2] : vector<2x6x6xf32> to vector<2x6xf32>
    %873 = vector.shape_cast %872 : vector<2x6xf32> to vector<2x6x1xf32>
    %874 = vector.broadcast %873 : vector<2x6x1xf32> to vector<2x6x6xf32>
    %875 = arith.subf %871, %874 : vector<2x6x6xf32>
    %876 = math.exp %875 : vector<2x6x6xf32>
    %cst_176 = arith.constant dense<0.000000e+00> : vector<2x6xf32>
    %877 = vector.multi_reduction <add>, %876, %cst_176 [2] : vector<2x6x6xf32> to vector<2x6xf32>
    %878 = math.log %877 : vector<2x6xf32>
    %879 = arith.addf %872, %878 : vector<2x6xf32>
    %880 = arith.addf %879, %859 : vector<2x6xf32>
    %881 = vector.shape_cast %862 : vector<2x1xi1> to vector<2x1xi1>
    %882 = vector.broadcast %881 : vector<2x1xi1> to vector<2x6xi1>
    %883 = arith.select %882, %880, %825 : vector<2x6xi1>, vector<2x6xf32>
    %884 = arith.mulf %859, %867 : vector<2x6xf32>
    %cst_177 = arith.constant dense<0.000000e+00> : vector<2xf32>
    %885 = vector.multi_reduction <add>, %884, %cst_177 [1] : vector<2x6xf32> to vector<2xf32>
    %886 = vector.shape_cast %885 : vector<2xf32> to vector<2x1xf32>
    %887 = vector.shape_cast %809 : vector<2x6xf32> to vector<2x1x6xf32>
    %888 = vector.broadcast %684 : vector<1x6x6xf32> to vector<2x6x6xf32>
    %889 = vector.broadcast %887 : vector<2x1x6xf32> to vector<2x6x6xf32>
    %890 = arith.mulf %888, %889 : vector<2x6x6xf32>
    %cst_178 = arith.constant dense<0.000000e+00> : vector<2x6xf32>
    %891 = vector.multi_reduction <add>, %890, %cst_178 [2] : vector<2x6x6xf32> to vector<2x6xf32>
    %892 = arith.mulf %891, %867 : vector<2x6xf32>
    %cst_179 = arith.constant dense<0.000000e+00> : vector<2xf32>
    %893 = vector.multi_reduction <add>, %892, %cst_179 [1] : vector<2x6xf32> to vector<2xf32>
    %894 = vector.shape_cast %893 : vector<2xf32> to vector<2x1xf32>
    %895 = arith.addf %886, %894 : vector<2x1xf32>
    %cst_180 = arith.constant 0.000000e+00 : f32
    %896 = vector.broadcast %cst_180 : f32 to vector<2x1xf32>
    %897 = arith.select %862, %895, %896 : vector<2x1xi1>, vector<2x1xf32>
    %898 = arith.addf %840, %897 : vector<2x1xf32>
    %899 = vector.shape_cast %862 : vector<2x1xi1> to vector<2x1xi1>
    %900 = vector.broadcast %899 : vector<2x1xi1> to vector<2x6xi1>
    %901 = arith.select %900, %867, %843 : vector<2x6xi1>, vector<2x6xf32>
    %902 = vector.shape_cast %858 : vector<2x6xf32> to vector<2x1x6xf32>
    %903 = vector.broadcast %902 : vector<2x1x6xf32> to vector<2x6x6xf32>
    %904 = vector.broadcast %684 : vector<1x6x6xf32> to vector<2x6x6xf32>
    %905 = arith.addf %903, %904 : vector<2x6x6xf32>
    %cst_181 = arith.constant dense<0xFF800000> : vector<2x6xf32>
    %906 = vector.multi_reduction <maximumf>, %905, %cst_181 [2] : vector<2x6x6xf32> to vector<2x6xf32>
    %907 = vector.shape_cast %906 : vector<2x6xf32> to vector<2x6x1xf32>
    %908 = vector.broadcast %907 : vector<2x6x1xf32> to vector<2x6x6xf32>
    %909 = arith.cmpf oeq, %905, %908 : vector<2x6x6xf32>
    %c6_i32_182 = arith.constant 6 : i32
    %910 = vector.broadcast %c6_i32_182 : i32 to vector<2x6x6xi32>
    %911 = arith.select %909, %679, %910 : vector<2x6x6xi1>, vector<2x6x6xi32>
    %cst_183 = arith.constant dense<2147483647> : vector<2x6xi32>
    %912 = vector.multi_reduction <minsi>, %911, %cst_183 [2] : vector<2x6x6xi32> to vector<2x6xi32>
    %913 = arith.addf %906, %859 : vector<2x6xf32>
    %914 = vector.shape_cast %862 : vector<2x1xi1> to vector<2x1xi1>
    %915 = vector.broadcast %914 : vector<2x1xi1> to vector<2x6xi1>
    %916 = arith.select %915, %913, %858 : vector<2x6xi1>, vector<2x6xf32>
    %917 = vector.extract_strided_slice %677 {offsets = [8, 0], sizes = [2, 6], strides = [1, 1]} : vector<16x6xf32> to vector<2x6xf32>
    %918 = vector.extract_strided_slice %0 {offsets = [0, 4], sizes = [2, 1], strides = [1, 1]} : vector<2x8xf32> to vector<2x1xf32>
    %cst_184 = arith.constant 0.000000e+00 : f32
    %919 = vector.broadcast %cst_184 : f32 to vector<2x1xf32>
    %920 = arith.cmpf ogt, %918, %919 : vector<2x1xf32>
    %921 = vector.extract_strided_slice %1 {offsets = [0, 4], sizes = [2, 1], strides = [1, 1]} : vector<2x8xi32> to vector<2x1xi32>
    %922 = vector.broadcast %921 : vector<2x1xi32> to vector<2x6xi32>
    %923 = arith.cmpi eq, %922, %678 : vector<2x6xi32>
    %924 = arith.extui %923 : vector<2x6xi1> to vector<2x6xi32>
    %925 = arith.sitofp %924 : vector<2x6xi32> to vector<2x6xf32>
    %926 = vector.shape_cast %883 : vector<2x6xf32> to vector<2x1x6xf32>
    %927 = vector.broadcast %926 : vector<2x1x6xf32> to vector<2x6x6xf32>
    %928 = vector.broadcast %684 : vector<1x6x6xf32> to vector<2x6x6xf32>
    %929 = arith.addf %927, %928 : vector<2x6x6xf32>
    %cst_185 = arith.constant dense<0xFF800000> : vector<2x6xf32>
    %930 = vector.multi_reduction <maximumf>, %929, %cst_185 [2] : vector<2x6x6xf32> to vector<2x6xf32>
    %931 = vector.shape_cast %930 : vector<2x6xf32> to vector<2x6x1xf32>
    %932 = vector.broadcast %931 : vector<2x6x1xf32> to vector<2x6x6xf32>
    %933 = arith.subf %929, %932 : vector<2x6x6xf32>
    %934 = math.exp %933 : vector<2x6x6xf32>
    %cst_186 = arith.constant dense<0.000000e+00> : vector<2x6xf32>
    %935 = vector.multi_reduction <add>, %934, %cst_186 [2] : vector<2x6x6xf32> to vector<2x6xf32>
    %936 = math.log %935 : vector<2x6xf32>
    %937 = arith.addf %930, %936 : vector<2x6xf32>
    %938 = arith.addf %937, %917 : vector<2x6xf32>
    %939 = vector.shape_cast %920 : vector<2x1xi1> to vector<2x1xi1>
    %940 = vector.broadcast %939 : vector<2x1xi1> to vector<2x6xi1>
    %941 = arith.select %940, %938, %883 : vector<2x6xi1>, vector<2x6xf32>
    %942 = arith.mulf %917, %925 : vector<2x6xf32>
    %cst_187 = arith.constant dense<0.000000e+00> : vector<2xf32>
    %943 = vector.multi_reduction <add>, %942, %cst_187 [1] : vector<2x6xf32> to vector<2xf32>
    %944 = vector.shape_cast %943 : vector<2xf32> to vector<2x1xf32>
    %945 = vector.shape_cast %867 : vector<2x6xf32> to vector<2x1x6xf32>
    %946 = vector.broadcast %684 : vector<1x6x6xf32> to vector<2x6x6xf32>
    %947 = vector.broadcast %945 : vector<2x1x6xf32> to vector<2x6x6xf32>
    %948 = arith.mulf %946, %947 : vector<2x6x6xf32>
    %cst_188 = arith.constant dense<0.000000e+00> : vector<2x6xf32>
    %949 = vector.multi_reduction <add>, %948, %cst_188 [2] : vector<2x6x6xf32> to vector<2x6xf32>
    %950 = arith.mulf %949, %925 : vector<2x6xf32>
    %cst_189 = arith.constant dense<0.000000e+00> : vector<2xf32>
    %951 = vector.multi_reduction <add>, %950, %cst_189 [1] : vector<2x6xf32> to vector<2xf32>
    %952 = vector.shape_cast %951 : vector<2xf32> to vector<2x1xf32>
    %953 = arith.addf %944, %952 : vector<2x1xf32>
    %cst_190 = arith.constant 0.000000e+00 : f32
    %954 = vector.broadcast %cst_190 : f32 to vector<2x1xf32>
    %955 = arith.select %920, %953, %954 : vector<2x1xi1>, vector<2x1xf32>
    %956 = arith.addf %898, %955 : vector<2x1xf32>
    %957 = vector.shape_cast %920 : vector<2x1xi1> to vector<2x1xi1>
    %958 = vector.broadcast %957 : vector<2x1xi1> to vector<2x6xi1>
    %959 = arith.select %958, %925, %901 : vector<2x6xi1>, vector<2x6xf32>
    %960 = vector.shape_cast %916 : vector<2x6xf32> to vector<2x1x6xf32>
    %961 = vector.broadcast %960 : vector<2x1x6xf32> to vector<2x6x6xf32>
    %962 = vector.broadcast %684 : vector<1x6x6xf32> to vector<2x6x6xf32>
    %963 = arith.addf %961, %962 : vector<2x6x6xf32>
    %cst_191 = arith.constant dense<0xFF800000> : vector<2x6xf32>
    %964 = vector.multi_reduction <maximumf>, %963, %cst_191 [2] : vector<2x6x6xf32> to vector<2x6xf32>
    %965 = vector.shape_cast %964 : vector<2x6xf32> to vector<2x6x1xf32>
    %966 = vector.broadcast %965 : vector<2x6x1xf32> to vector<2x6x6xf32>
    %967 = arith.cmpf oeq, %963, %966 : vector<2x6x6xf32>
    %c6_i32_192 = arith.constant 6 : i32
    %968 = vector.broadcast %c6_i32_192 : i32 to vector<2x6x6xi32>
    %969 = arith.select %967, %679, %968 : vector<2x6x6xi1>, vector<2x6x6xi32>
    %cst_193 = arith.constant dense<2147483647> : vector<2x6xi32>
    %970 = vector.multi_reduction <minsi>, %969, %cst_193 [2] : vector<2x6x6xi32> to vector<2x6xi32>
    %971 = arith.addf %964, %917 : vector<2x6xf32>
    %972 = vector.shape_cast %920 : vector<2x1xi1> to vector<2x1xi1>
    %973 = vector.broadcast %972 : vector<2x1xi1> to vector<2x6xi1>
    %974 = arith.select %973, %971, %916 : vector<2x6xi1>, vector<2x6xf32>
    %975 = vector.extract_strided_slice %677 {offsets = [10, 0], sizes = [2, 6], strides = [1, 1]} : vector<16x6xf32> to vector<2x6xf32>
    %976 = vector.extract_strided_slice %0 {offsets = [0, 5], sizes = [2, 1], strides = [1, 1]} : vector<2x8xf32> to vector<2x1xf32>
    %cst_194 = arith.constant 0.000000e+00 : f32
    %977 = vector.broadcast %cst_194 : f32 to vector<2x1xf32>
    %978 = arith.cmpf ogt, %976, %977 : vector<2x1xf32>
    %979 = vector.extract_strided_slice %1 {offsets = [0, 5], sizes = [2, 1], strides = [1, 1]} : vector<2x8xi32> to vector<2x1xi32>
    %980 = vector.broadcast %979 : vector<2x1xi32> to vector<2x6xi32>
    %981 = arith.cmpi eq, %980, %678 : vector<2x6xi32>
    %982 = arith.extui %981 : vector<2x6xi1> to vector<2x6xi32>
    %983 = arith.sitofp %982 : vector<2x6xi32> to vector<2x6xf32>
    %984 = vector.shape_cast %941 : vector<2x6xf32> to vector<2x1x6xf32>
    %985 = vector.broadcast %984 : vector<2x1x6xf32> to vector<2x6x6xf32>
    %986 = vector.broadcast %684 : vector<1x6x6xf32> to vector<2x6x6xf32>
    %987 = arith.addf %985, %986 : vector<2x6x6xf32>
    %cst_195 = arith.constant dense<0xFF800000> : vector<2x6xf32>
    %988 = vector.multi_reduction <maximumf>, %987, %cst_195 [2] : vector<2x6x6xf32> to vector<2x6xf32>
    %989 = vector.shape_cast %988 : vector<2x6xf32> to vector<2x6x1xf32>
    %990 = vector.broadcast %989 : vector<2x6x1xf32> to vector<2x6x6xf32>
    %991 = arith.subf %987, %990 : vector<2x6x6xf32>
    %992 = math.exp %991 : vector<2x6x6xf32>
    %cst_196 = arith.constant dense<0.000000e+00> : vector<2x6xf32>
    %993 = vector.multi_reduction <add>, %992, %cst_196 [2] : vector<2x6x6xf32> to vector<2x6xf32>
    %994 = math.log %993 : vector<2x6xf32>
    %995 = arith.addf %988, %994 : vector<2x6xf32>
    %996 = arith.addf %995, %975 : vector<2x6xf32>
    %997 = vector.shape_cast %978 : vector<2x1xi1> to vector<2x1xi1>
    %998 = vector.broadcast %997 : vector<2x1xi1> to vector<2x6xi1>
    %999 = arith.select %998, %996, %941 : vector<2x6xi1>, vector<2x6xf32>
    %1000 = arith.mulf %975, %983 : vector<2x6xf32>
    %cst_197 = arith.constant dense<0.000000e+00> : vector<2xf32>
    %1001 = vector.multi_reduction <add>, %1000, %cst_197 [1] : vector<2x6xf32> to vector<2xf32>
    %1002 = vector.shape_cast %1001 : vector<2xf32> to vector<2x1xf32>
    %1003 = vector.shape_cast %925 : vector<2x6xf32> to vector<2x1x6xf32>
    %1004 = vector.broadcast %684 : vector<1x6x6xf32> to vector<2x6x6xf32>
    %1005 = vector.broadcast %1003 : vector<2x1x6xf32> to vector<2x6x6xf32>
    %1006 = arith.mulf %1004, %1005 : vector<2x6x6xf32>
    %cst_198 = arith.constant dense<0.000000e+00> : vector<2x6xf32>
    %1007 = vector.multi_reduction <add>, %1006, %cst_198 [2] : vector<2x6x6xf32> to vector<2x6xf32>
    %1008 = arith.mulf %1007, %983 : vector<2x6xf32>
    %cst_199 = arith.constant dense<0.000000e+00> : vector<2xf32>
    %1009 = vector.multi_reduction <add>, %1008, %cst_199 [1] : vector<2x6xf32> to vector<2xf32>
    %1010 = vector.shape_cast %1009 : vector<2xf32> to vector<2x1xf32>
    %1011 = arith.addf %1002, %1010 : vector<2x1xf32>
    %cst_200 = arith.constant 0.000000e+00 : f32
    %1012 = vector.broadcast %cst_200 : f32 to vector<2x1xf32>
    %1013 = arith.select %978, %1011, %1012 : vector<2x1xi1>, vector<2x1xf32>
    %1014 = arith.addf %956, %1013 : vector<2x1xf32>
    %1015 = vector.shape_cast %978 : vector<2x1xi1> to vector<2x1xi1>
    %1016 = vector.broadcast %1015 : vector<2x1xi1> to vector<2x6xi1>
    %1017 = arith.select %1016, %983, %959 : vector<2x6xi1>, vector<2x6xf32>
    %1018 = vector.shape_cast %974 : vector<2x6xf32> to vector<2x1x6xf32>
    %1019 = vector.broadcast %1018 : vector<2x1x6xf32> to vector<2x6x6xf32>
    %1020 = vector.broadcast %684 : vector<1x6x6xf32> to vector<2x6x6xf32>
    %1021 = arith.addf %1019, %1020 : vector<2x6x6xf32>
    %cst_201 = arith.constant dense<0xFF800000> : vector<2x6xf32>
    %1022 = vector.multi_reduction <maximumf>, %1021, %cst_201 [2] : vector<2x6x6xf32> to vector<2x6xf32>
    %1023 = vector.shape_cast %1022 : vector<2x6xf32> to vector<2x6x1xf32>
    %1024 = vector.broadcast %1023 : vector<2x6x1xf32> to vector<2x6x6xf32>
    %1025 = arith.cmpf oeq, %1021, %1024 : vector<2x6x6xf32>
    %c6_i32_202 = arith.constant 6 : i32
    %1026 = vector.broadcast %c6_i32_202 : i32 to vector<2x6x6xi32>
    %1027 = arith.select %1025, %679, %1026 : vector<2x6x6xi1>, vector<2x6x6xi32>
    %cst_203 = arith.constant dense<2147483647> : vector<2x6xi32>
    %1028 = vector.multi_reduction <minsi>, %1027, %cst_203 [2] : vector<2x6x6xi32> to vector<2x6xi32>
    %1029 = arith.addf %1022, %975 : vector<2x6xf32>
    %1030 = vector.shape_cast %978 : vector<2x1xi1> to vector<2x1xi1>
    %1031 = vector.broadcast %1030 : vector<2x1xi1> to vector<2x6xi1>
    %1032 = arith.select %1031, %1029, %974 : vector<2x6xi1>, vector<2x6xf32>
    %1033 = vector.extract_strided_slice %677 {offsets = [12, 0], sizes = [2, 6], strides = [1, 1]} : vector<16x6xf32> to vector<2x6xf32>
    %1034 = vector.extract_strided_slice %0 {offsets = [0, 6], sizes = [2, 1], strides = [1, 1]} : vector<2x8xf32> to vector<2x1xf32>
    %cst_204 = arith.constant 0.000000e+00 : f32
    %1035 = vector.broadcast %cst_204 : f32 to vector<2x1xf32>
    %1036 = arith.cmpf ogt, %1034, %1035 : vector<2x1xf32>
    %1037 = vector.extract_strided_slice %1 {offsets = [0, 6], sizes = [2, 1], strides = [1, 1]} : vector<2x8xi32> to vector<2x1xi32>
    %1038 = vector.broadcast %1037 : vector<2x1xi32> to vector<2x6xi32>
    %1039 = arith.cmpi eq, %1038, %678 : vector<2x6xi32>
    %1040 = arith.extui %1039 : vector<2x6xi1> to vector<2x6xi32>
    %1041 = arith.sitofp %1040 : vector<2x6xi32> to vector<2x6xf32>
    %1042 = vector.shape_cast %999 : vector<2x6xf32> to vector<2x1x6xf32>
    %1043 = vector.broadcast %1042 : vector<2x1x6xf32> to vector<2x6x6xf32>
    %1044 = vector.broadcast %684 : vector<1x6x6xf32> to vector<2x6x6xf32>
    %1045 = arith.addf %1043, %1044 : vector<2x6x6xf32>
    %cst_205 = arith.constant dense<0xFF800000> : vector<2x6xf32>
    %1046 = vector.multi_reduction <maximumf>, %1045, %cst_205 [2] : vector<2x6x6xf32> to vector<2x6xf32>
    %1047 = vector.shape_cast %1046 : vector<2x6xf32> to vector<2x6x1xf32>
    %1048 = vector.broadcast %1047 : vector<2x6x1xf32> to vector<2x6x6xf32>
    %1049 = arith.subf %1045, %1048 : vector<2x6x6xf32>
    %1050 = math.exp %1049 : vector<2x6x6xf32>
    %cst_206 = arith.constant dense<0.000000e+00> : vector<2x6xf32>
    %1051 = vector.multi_reduction <add>, %1050, %cst_206 [2] : vector<2x6x6xf32> to vector<2x6xf32>
    %1052 = math.log %1051 : vector<2x6xf32>
    %1053 = arith.addf %1046, %1052 : vector<2x6xf32>
    %1054 = arith.addf %1053, %1033 : vector<2x6xf32>
    %1055 = vector.shape_cast %1036 : vector<2x1xi1> to vector<2x1xi1>
    %1056 = vector.broadcast %1055 : vector<2x1xi1> to vector<2x6xi1>
    %1057 = arith.select %1056, %1054, %999 : vector<2x6xi1>, vector<2x6xf32>
    %1058 = arith.mulf %1033, %1041 : vector<2x6xf32>
    %cst_207 = arith.constant dense<0.000000e+00> : vector<2xf32>
    %1059 = vector.multi_reduction <add>, %1058, %cst_207 [1] : vector<2x6xf32> to vector<2xf32>
    %1060 = vector.shape_cast %1059 : vector<2xf32> to vector<2x1xf32>
    %1061 = vector.shape_cast %983 : vector<2x6xf32> to vector<2x1x6xf32>
    %1062 = vector.broadcast %684 : vector<1x6x6xf32> to vector<2x6x6xf32>
    %1063 = vector.broadcast %1061 : vector<2x1x6xf32> to vector<2x6x6xf32>
    %1064 = arith.mulf %1062, %1063 : vector<2x6x6xf32>
    %cst_208 = arith.constant dense<0.000000e+00> : vector<2x6xf32>
    %1065 = vector.multi_reduction <add>, %1064, %cst_208 [2] : vector<2x6x6xf32> to vector<2x6xf32>
    %1066 = arith.mulf %1065, %1041 : vector<2x6xf32>
    %cst_209 = arith.constant dense<0.000000e+00> : vector<2xf32>
    %1067 = vector.multi_reduction <add>, %1066, %cst_209 [1] : vector<2x6xf32> to vector<2xf32>
    %1068 = vector.shape_cast %1067 : vector<2xf32> to vector<2x1xf32>
    %1069 = arith.addf %1060, %1068 : vector<2x1xf32>
    %cst_210 = arith.constant 0.000000e+00 : f32
    %1070 = vector.broadcast %cst_210 : f32 to vector<2x1xf32>
    %1071 = arith.select %1036, %1069, %1070 : vector<2x1xi1>, vector<2x1xf32>
    %1072 = arith.addf %1014, %1071 : vector<2x1xf32>
    %1073 = vector.shape_cast %1036 : vector<2x1xi1> to vector<2x1xi1>
    %1074 = vector.broadcast %1073 : vector<2x1xi1> to vector<2x6xi1>
    %1075 = arith.select %1074, %1041, %1017 : vector<2x6xi1>, vector<2x6xf32>
    %1076 = vector.shape_cast %1032 : vector<2x6xf32> to vector<2x1x6xf32>
    %1077 = vector.broadcast %1076 : vector<2x1x6xf32> to vector<2x6x6xf32>
    %1078 = vector.broadcast %684 : vector<1x6x6xf32> to vector<2x6x6xf32>
    %1079 = arith.addf %1077, %1078 : vector<2x6x6xf32>
    %cst_211 = arith.constant dense<0xFF800000> : vector<2x6xf32>
    %1080 = vector.multi_reduction <maximumf>, %1079, %cst_211 [2] : vector<2x6x6xf32> to vector<2x6xf32>
    %1081 = vector.shape_cast %1080 : vector<2x6xf32> to vector<2x6x1xf32>
    %1082 = vector.broadcast %1081 : vector<2x6x1xf32> to vector<2x6x6xf32>
    %1083 = arith.cmpf oeq, %1079, %1082 : vector<2x6x6xf32>
    %c6_i32_212 = arith.constant 6 : i32
    %1084 = vector.broadcast %c6_i32_212 : i32 to vector<2x6x6xi32>
    %1085 = arith.select %1083, %679, %1084 : vector<2x6x6xi1>, vector<2x6x6xi32>
    %cst_213 = arith.constant dense<2147483647> : vector<2x6xi32>
    %1086 = vector.multi_reduction <minsi>, %1085, %cst_213 [2] : vector<2x6x6xi32> to vector<2x6xi32>
    %1087 = arith.addf %1080, %1033 : vector<2x6xf32>
    %1088 = vector.shape_cast %1036 : vector<2x1xi1> to vector<2x1xi1>
    %1089 = vector.broadcast %1088 : vector<2x1xi1> to vector<2x6xi1>
    %1090 = arith.select %1089, %1087, %1032 : vector<2x6xi1>, vector<2x6xf32>
    %1091 = vector.extract_strided_slice %677 {offsets = [14, 0], sizes = [2, 6], strides = [1, 1]} : vector<16x6xf32> to vector<2x6xf32>
    %1092 = vector.extract_strided_slice %0 {offsets = [0, 7], sizes = [2, 1], strides = [1, 1]} : vector<2x8xf32> to vector<2x1xf32>
    %cst_214 = arith.constant 0.000000e+00 : f32
    %1093 = vector.broadcast %cst_214 : f32 to vector<2x1xf32>
    %1094 = arith.cmpf ogt, %1092, %1093 : vector<2x1xf32>
    %1095 = vector.extract_strided_slice %1 {offsets = [0, 7], sizes = [2, 1], strides = [1, 1]} : vector<2x8xi32> to vector<2x1xi32>
    %1096 = vector.broadcast %1095 : vector<2x1xi32> to vector<2x6xi32>
    %1097 = arith.cmpi eq, %1096, %678 : vector<2x6xi32>
    %1098 = arith.extui %1097 : vector<2x6xi1> to vector<2x6xi32>
    %1099 = arith.sitofp %1098 : vector<2x6xi32> to vector<2x6xf32>
    %1100 = vector.shape_cast %1057 : vector<2x6xf32> to vector<2x1x6xf32>
    %1101 = vector.broadcast %1100 : vector<2x1x6xf32> to vector<2x6x6xf32>
    %1102 = vector.broadcast %684 : vector<1x6x6xf32> to vector<2x6x6xf32>
    %1103 = arith.addf %1101, %1102 : vector<2x6x6xf32>
    %cst_215 = arith.constant dense<0xFF800000> : vector<2x6xf32>
    %1104 = vector.multi_reduction <maximumf>, %1103, %cst_215 [2] : vector<2x6x6xf32> to vector<2x6xf32>
    %1105 = vector.shape_cast %1104 : vector<2x6xf32> to vector<2x6x1xf32>
    %1106 = vector.broadcast %1105 : vector<2x6x1xf32> to vector<2x6x6xf32>
    %1107 = arith.subf %1103, %1106 : vector<2x6x6xf32>
    %1108 = math.exp %1107 : vector<2x6x6xf32>
    %cst_216 = arith.constant dense<0.000000e+00> : vector<2x6xf32>
    %1109 = vector.multi_reduction <add>, %1108, %cst_216 [2] : vector<2x6x6xf32> to vector<2x6xf32>
    %1110 = math.log %1109 : vector<2x6xf32>
    %1111 = arith.addf %1104, %1110 : vector<2x6xf32>
    %1112 = arith.addf %1111, %1091 : vector<2x6xf32>
    %1113 = vector.shape_cast %1094 : vector<2x1xi1> to vector<2x1xi1>
    %1114 = vector.broadcast %1113 : vector<2x1xi1> to vector<2x6xi1>
    %1115 = arith.select %1114, %1112, %1057 : vector<2x6xi1>, vector<2x6xf32>
    %1116 = arith.mulf %1091, %1099 : vector<2x6xf32>
    %cst_217 = arith.constant dense<0.000000e+00> : vector<2xf32>
    %1117 = vector.multi_reduction <add>, %1116, %cst_217 [1] : vector<2x6xf32> to vector<2xf32>
    %1118 = vector.shape_cast %1117 : vector<2xf32> to vector<2x1xf32>
    %1119 = vector.shape_cast %1041 : vector<2x6xf32> to vector<2x1x6xf32>
    %1120 = vector.broadcast %684 : vector<1x6x6xf32> to vector<2x6x6xf32>
    %1121 = vector.broadcast %1119 : vector<2x1x6xf32> to vector<2x6x6xf32>
    %1122 = arith.mulf %1120, %1121 : vector<2x6x6xf32>
    %cst_218 = arith.constant dense<0.000000e+00> : vector<2x6xf32>
    %1123 = vector.multi_reduction <add>, %1122, %cst_218 [2] : vector<2x6x6xf32> to vector<2x6xf32>
    %1124 = arith.mulf %1123, %1099 : vector<2x6xf32>
    %cst_219 = arith.constant dense<0.000000e+00> : vector<2xf32>
    %1125 = vector.multi_reduction <add>, %1124, %cst_219 [1] : vector<2x6xf32> to vector<2xf32>
    %1126 = vector.shape_cast %1125 : vector<2xf32> to vector<2x1xf32>
    %1127 = arith.addf %1118, %1126 : vector<2x1xf32>
    %cst_220 = arith.constant 0.000000e+00 : f32
    %1128 = vector.broadcast %cst_220 : f32 to vector<2x1xf32>
    %1129 = arith.select %1094, %1127, %1128 : vector<2x1xi1>, vector<2x1xf32>
    %1130 = arith.addf %1072, %1129 : vector<2x1xf32>
    %1131 = vector.shape_cast %1094 : vector<2x1xi1> to vector<2x1xi1>
    %1132 = vector.broadcast %1131 : vector<2x1xi1> to vector<2x6xi1>
    %1133 = arith.select %1132, %1099, %1075 : vector<2x6xi1>, vector<2x6xf32>
    %1134 = vector.shape_cast %1090 : vector<2x6xf32> to vector<2x1x6xf32>
    %1135 = vector.broadcast %1134 : vector<2x1x6xf32> to vector<2x6x6xf32>
    %1136 = vector.broadcast %684 : vector<1x6x6xf32> to vector<2x6x6xf32>
    %1137 = arith.addf %1135, %1136 : vector<2x6x6xf32>
    %cst_221 = arith.constant dense<0xFF800000> : vector<2x6xf32>
    %1138 = vector.multi_reduction <maximumf>, %1137, %cst_221 [2] : vector<2x6x6xf32> to vector<2x6xf32>
    %1139 = vector.shape_cast %1138 : vector<2x6xf32> to vector<2x6x1xf32>
    %1140 = vector.broadcast %1139 : vector<2x6x1xf32> to vector<2x6x6xf32>
    %1141 = arith.cmpf oeq, %1137, %1140 : vector<2x6x6xf32>
    %c6_i32_222 = arith.constant 6 : i32
    %1142 = vector.broadcast %c6_i32_222 : i32 to vector<2x6x6xi32>
    %1143 = arith.select %1141, %679, %1142 : vector<2x6x6xi1>, vector<2x6x6xi32>
    %cst_223 = arith.constant dense<2147483647> : vector<2x6xi32>
    %1144 = vector.multi_reduction <minsi>, %1143, %cst_223 [2] : vector<2x6x6xi32> to vector<2x6xi32>
    %1145 = arith.addf %1138, %1091 : vector<2x6xf32>
    %1146 = vector.shape_cast %1094 : vector<2x1xi1> to vector<2x1xi1>
    %1147 = vector.broadcast %1146 : vector<2x1xi1> to vector<2x6xi1>
    %1148 = arith.select %1147, %1145, %1090 : vector<2x6xi1>, vector<2x6xf32>
    %1149 = vector.extract_strided_slice %2 {offsets = [5, 0], sizes = [1, 6], strides = [1, 1]} : vector<6x6xf32> to vector<1x6xf32>
    %1150 = vector.broadcast %1149 : vector<1x6xf32> to vector<2x6xf32>
    %1151 = arith.addf %1115, %1150 : vector<2x6xf32>
    %cst_224 = arith.constant dense<0xFF800000> : vector<2xf32>
    %1152 = vector.multi_reduction <maximumf>, %1151, %cst_224 [1] : vector<2x6xf32> to vector<2xf32>
    %1153 = vector.shape_cast %1152 : vector<2xf32> to vector<2x1xf32>
    %1154 = vector.broadcast %1153 : vector<2x1xf32> to vector<2x6xf32>
    %1155 = arith.subf %1151, %1154 : vector<2x6xf32>
    %1156 = math.exp %1155 : vector<2x6xf32>
    %cst_225 = arith.constant dense<0.000000e+00> : vector<2xf32>
    %1157 = vector.multi_reduction <add>, %1156, %cst_225 [1] : vector<2x6xf32> to vector<2xf32>
    %1158 = vector.shape_cast %1157 : vector<2xf32> to vector<2x1xf32>
    %1159 = math.log %1158 : vector<2x1xf32>
    %1160 = arith.addf %1153, %1159 : vector<2x1xf32>
    %c0_226 = arith.constant 0 : index
    %c0_227 = arith.constant 0 : index
    %1161 = vector.load %arg10[%c0_226, %c0_227] : memref<2x1xf32, #tpu.memory_space<vmem>>, vector<2x1xf32>
    tpu.vector_store %arg10[%c0_226, %c0_227], %1160 {strides = array<i32>} : memref<2x1xf32, #tpu.memory_space<vmem>>, vector<2x1xf32>,
    %1162 = vector.broadcast %1149 : vector<1x6xf32> to vector<2x6xf32>
    %1163 = arith.mulf %1162, %1133 : vector<2x6xf32>
    %cst_228 = arith.constant dense<0.000000e+00> : vector<2xf32>
    %1164 = vector.multi_reduction <add>, %1163, %cst_228 [1] : vector<2x6xf32> to vector<2xf32>
    %1165 = vector.shape_cast %1164 : vector<2xf32> to vector<2x1xf32>
    %1166 = arith.addf %1130, %1165 : vector<2x1xf32>
    %c0_229 = arith.constant 0 : index
    %c0_230 = arith.constant 0 : index
    %1167 = vector.load %arg11[%c0_229, %c0_230] : memref<2x1xf32, #tpu.memory_space<vmem>>, vector<2x1xf32>
    tpu.vector_store %arg11[%c0_229, %c0_230], %1166 {strides = array<i32>} : memref<2x1xf32, #tpu.memory_space<vmem>>, vector<2x1xf32>,
    %1168 = vector.broadcast %1149 : vector<1x6xf32> to vector<2x6xf32>
    %1169 = arith.addf %1148, %1168 : vector<2x6xf32>
    %cst_231 = arith.constant dense<0xFF800000> : vector<2xf32>
    %1170 = vector.multi_reduction <maximumf>, %1169, %cst_231 [1] : vector<2x6xf32> to vector<2xf32>
    %1171 = vector.shape_cast %1170 : vector<2xf32> to vector<2x1xf32>
    %c0_232 = arith.constant 0 : index
    %c0_233 = arith.constant 0 : index
    %1172 = vector.load %arg12[%c0_232, %c0_233] : memref<2x1xf32, #tpu.memory_space<vmem>>, vector<2x1xf32>
    tpu.vector_store %arg12[%c0_232, %c0_233], %1171 {strides = array<i32>} : memref<2x1xf32, #tpu.memory_space<vmem>>, vector<2x1xf32>,
    %1173 = vector.broadcast %1171 : vector<2x1xf32> to vector<2x6xf32>
    %1174 = arith.cmpf oeq, %1169, %1173 : vector<2x6xf32>
    %c6_i32_234 = arith.constant 6 : i32
    %1175 = vector.broadcast %c6_i32_234 : i32 to vector<2x6xi32>
    %1176 = arith.select %1174, %678, %1175 : vector<2x6xi1>, vector<2x6xi32>
    %cst_235 = arith.constant dense<2147483647> : vector<2xi32>
    %1177 = vector.multi_reduction <minsi>, %1176, %cst_235 [1] : vector<2x6xi32> to vector<2xi32>
    %1178 = vector.shape_cast %1177 : vector<2xi32> to vector<2x1xi32>
    %cst_236 = arith.constant dense<0.000000e+00> : vector<2xf32>
    %1179 = vector.multi_reduction <add>, %0, %cst_236 [1] : vector<2x8xf32> to vector<2xf32>
    %1180 = vector.shape_cast %1179 : vector<2xf32> to vector<2x1xf32>
    %1181 = arith.fptosi %1180 : vector<2x1xf32> to vector<2x1xi32>
    %1182 = tpu.iota {dimensions = array<i32: 1>} : vector<2x8xi32>
    %c0_i32 = arith.constant 0 : i32
    %1183 = vector.broadcast %c0_i32 : i32 to vector<2x8xi32>
    %c7_i32 = arith.constant 7 : i32
    %1184 = vector.broadcast %c7_i32 : i32 to vector<2x8xi32>
    %1185 = arith.cmpi eq, %1182, %1184 : vector<2x8xi32>
    %c7_i32_237 = arith.constant 7 : i32
    %1186 = vector.broadcast %c7_i32_237 : i32 to vector<2x1xi32>
    %1187 = arith.cmpi sgt, %1181, %1186 : vector<2x1xi32>
    %1188 = vector.broadcast %1187 : vector<2x1xi1> to vector<2x8xi1>
    %1189 = arith.andi %1185, %1188 : vector<2x8xi1>
    %1190 = vector.shape_cast %1178 : vector<2x1xi32> to vector<2x1xi32>
    %1191 = vector.broadcast %1190 : vector<2x1xi32> to vector<2x8xi32>
    %1192 = arith.select %1189, %1191, %1183 : vector<2x8xi1>, vector<2x8xi32>
    %1193 = vector.broadcast %1178 : vector<2x1xi32> to vector<2x6xi32>
    %1194 = arith.cmpi eq, %1193, %678 : vector<2x6xi32>
    %c0_i32_238 = arith.constant 0 : i32
    %1195 = vector.broadcast %c0_i32_238 : i32 to vector<2x6xi32>
    %1196 = arith.select %1194, %1144, %1195 : vector<2x6xi1>, vector<2x6xi32>
    %1197 = arith.sitofp %1196 : vector<2x6xi32> to vector<2x6xf32>
    %cst_239 = arith.constant dense<0.000000e+00> : vector<2xf32>
    %1198 = vector.multi_reduction <add>, %1197, %cst_239 [1] : vector<2x6xf32> to vector<2xf32>
    %1199 = vector.shape_cast %1198 : vector<2xf32> to vector<2x1xf32>
    %1200 = arith.fptosi %1199 : vector<2x1xf32> to vector<2x1xi32>
    %c1_i32 = arith.constant 1 : i32
    %1201 = vector.broadcast %c1_i32 : i32 to vector<2x1xi32>
    %1202 = arith.subi %1181, %1201 : vector<2x1xi32>
    %c6_i32_240 = arith.constant 6 : i32
    %1203 = vector.broadcast %c6_i32_240 : i32 to vector<2x1xi32>
    %1204 = arith.cmpi eq, %1202, %1203 : vector<2x1xi32>
    %c1_i32_241 = arith.constant 1 : i32
    %1205 = vector.broadcast %c1_i32_241 : i32 to vector<2x1xi32>
    %1206 = arith.subi %1181, %1205 : vector<2x1xi32>
    %c6_i32_242 = arith.constant 6 : i32
    %1207 = vector.broadcast %c6_i32_242 : i32 to vector<2x1xi32>
    %1208 = arith.cmpi sgt, %1206, %1207 : vector<2x1xi32>
    %1209 = arith.select %1208, %1200, %1178 : vector<2x1xi1>, vector<2x1xi32>
    %1210 = arith.select %1204, %1178, %1209 : vector<2x1xi1>, vector<2x1xi32>
    %c6_i32_243 = arith.constant 6 : i32
    %1211 = vector.broadcast %c6_i32_243 : i32 to vector<2x8xi32>
    %1212 = arith.cmpi eq, %1182, %1211 : vector<2x8xi32>
    %c6_i32_244 = arith.constant 6 : i32
    %1213 = vector.broadcast %c6_i32_244 : i32 to vector<2x1xi32>
    %1214 = arith.cmpi sgt, %1181, %1213 : vector<2x1xi32>
    %1215 = vector.broadcast %1214 : vector<2x1xi1> to vector<2x8xi1>
    %1216 = arith.andi %1212, %1215 : vector<2x8xi1>
    %1217 = vector.shape_cast %1210 : vector<2x1xi32> to vector<2x1xi32>
    %1218 = vector.broadcast %1217 : vector<2x1xi32> to vector<2x8xi32>
    %1219 = arith.select %1216, %1218, %1192 : vector<2x8xi1>, vector<2x8xi32>
    %1220 = vector.broadcast %1210 : vector<2x1xi32> to vector<2x6xi32>
    %1221 = arith.cmpi eq, %1220, %678 : vector<2x6xi32>
    %c0_i32_245 = arith.constant 0 : i32
    %1222 = vector.broadcast %c0_i32_245 : i32 to vector<2x6xi32>
    %1223 = arith.select %1221, %1086, %1222 : vector<2x6xi1>, vector<2x6xi32>
    %1224 = arith.sitofp %1223 : vector<2x6xi32> to vector<2x6xf32>
    %cst_246 = arith.constant dense<0.000000e+00> : vector<2xf32>
    %1225 = vector.multi_reduction <add>, %1224, %cst_246 [1] : vector<2x6xf32> to vector<2xf32>
    %1226 = vector.shape_cast %1225 : vector<2xf32> to vector<2x1xf32>
    %1227 = arith.fptosi %1226 : vector<2x1xf32> to vector<2x1xi32>
    %c1_i32_247 = arith.constant 1 : i32
    %1228 = vector.broadcast %c1_i32_247 : i32 to vector<2x1xi32>
    %1229 = arith.subi %1181, %1228 : vector<2x1xi32>
    %c5_i32 = arith.constant 5 : i32
    %1230 = vector.broadcast %c5_i32 : i32 to vector<2x1xi32>
    %1231 = arith.cmpi eq, %1229, %1230 : vector<2x1xi32>
    %c1_i32_248 = arith.constant 1 : i32
    %1232 = vector.broadcast %c1_i32_248 : i32 to vector<2x1xi32>
    %1233 = arith.subi %1181, %1232 : vector<2x1xi32>
    %c5_i32_249 = arith.constant 5 : i32
    %1234 = vector.broadcast %c5_i32_249 : i32 to vector<2x1xi32>
    %1235 = arith.cmpi sgt, %1233, %1234 : vector<2x1xi32>
    %1236 = arith.select %1235, %1227, %1210 : vector<2x1xi1>, vector<2x1xi32>
    %1237 = arith.select %1231, %1178, %1236 : vector<2x1xi1>, vector<2x1xi32>
    %c5_i32_250 = arith.constant 5 : i32
    %1238 = vector.broadcast %c5_i32_250 : i32 to vector<2x8xi32>
    %1239 = arith.cmpi eq, %1182, %1238 : vector<2x8xi32>
    %c5_i32_251 = arith.constant 5 : i32
    %1240 = vector.broadcast %c5_i32_251 : i32 to vector<2x1xi32>
    %1241 = arith.cmpi sgt, %1181, %1240 : vector<2x1xi32>
    %1242 = vector.broadcast %1241 : vector<2x1xi1> to vector<2x8xi1>
    %1243 = arith.andi %1239, %1242 : vector<2x8xi1>
    %1244 = vector.shape_cast %1237 : vector<2x1xi32> to vector<2x1xi32>
    %1245 = vector.broadcast %1244 : vector<2x1xi32> to vector<2x8xi32>
    %1246 = arith.select %1243, %1245, %1219 : vector<2x8xi1>, vector<2x8xi32>
    %1247 = vector.broadcast %1237 : vector<2x1xi32> to vector<2x6xi32>
    %1248 = arith.cmpi eq, %1247, %678 : vector<2x6xi32>
    %c0_i32_252 = arith.constant 0 : i32
    %1249 = vector.broadcast %c0_i32_252 : i32 to vector<2x6xi32>
    %1250 = arith.select %1248, %1028, %1249 : vector<2x6xi1>, vector<2x6xi32>
    %1251 = arith.sitofp %1250 : vector<2x6xi32> to vector<2x6xf32>
    %cst_253 = arith.constant dense<0.000000e+00> : vector<2xf32>
    %1252 = vector.multi_reduction <add>, %1251, %cst_253 [1] : vector<2x6xf32> to vector<2xf32>
    %1253 = vector.shape_cast %1252 : vector<2xf32> to vector<2x1xf32>
    %1254 = arith.fptosi %1253 : vector<2x1xf32> to vector<2x1xi32>
    %c1_i32_254 = arith.constant 1 : i32
    %1255 = vector.broadcast %c1_i32_254 : i32 to vector<2x1xi32>
    %1256 = arith.subi %1181, %1255 : vector<2x1xi32>
    %c4_i32_255 = arith.constant 4 : i32
    %1257 = vector.broadcast %c4_i32_255 : i32 to vector<2x1xi32>
    %1258 = arith.cmpi eq, %1256, %1257 : vector<2x1xi32>
    %c1_i32_256 = arith.constant 1 : i32
    %1259 = vector.broadcast %c1_i32_256 : i32 to vector<2x1xi32>
    %1260 = arith.subi %1181, %1259 : vector<2x1xi32>
    %c4_i32_257 = arith.constant 4 : i32
    %1261 = vector.broadcast %c4_i32_257 : i32 to vector<2x1xi32>
    %1262 = arith.cmpi sgt, %1260, %1261 : vector<2x1xi32>
    %1263 = arith.select %1262, %1254, %1237 : vector<2x1xi1>, vector<2x1xi32>
    %1264 = arith.select %1258, %1178, %1263 : vector<2x1xi1>, vector<2x1xi32>
    %c4_i32_258 = arith.constant 4 : i32
    %1265 = vector.broadcast %c4_i32_258 : i32 to vector<2x8xi32>
    %1266 = arith.cmpi eq, %1182, %1265 : vector<2x8xi32>
    %c4_i32_259 = arith.constant 4 : i32
    %1267 = vector.broadcast %c4_i32_259 : i32 to vector<2x1xi32>
    %1268 = arith.cmpi sgt, %1181, %1267 : vector<2x1xi32>
    %1269 = vector.broadcast %1268 : vector<2x1xi1> to vector<2x8xi1>
    %1270 = arith.andi %1266, %1269 : vector<2x8xi1>
    %1271 = vector.shape_cast %1264 : vector<2x1xi32> to vector<2x1xi32>
    %1272 = vector.broadcast %1271 : vector<2x1xi32> to vector<2x8xi32>
    %1273 = arith.select %1270, %1272, %1246 : vector<2x8xi1>, vector<2x8xi32>
    %1274 = vector.broadcast %1264 : vector<2x1xi32> to vector<2x6xi32>
    %1275 = arith.cmpi eq, %1274, %678 : vector<2x6xi32>
    %c0_i32_260 = arith.constant 0 : i32
    %1276 = vector.broadcast %c0_i32_260 : i32 to vector<2x6xi32>
    %1277 = arith.select %1275, %970, %1276 : vector<2x6xi1>, vector<2x6xi32>
    %1278 = arith.sitofp %1277 : vector<2x6xi32> to vector<2x6xf32>
    %cst_261 = arith.constant dense<0.000000e+00> : vector<2xf32>
    %1279 = vector.multi_reduction <add>, %1278, %cst_261 [1] : vector<2x6xf32> to vector<2xf32>
    %1280 = vector.shape_cast %1279 : vector<2xf32> to vector<2x1xf32>
    %1281 = arith.fptosi %1280 : vector<2x1xf32> to vector<2x1xi32>
    %c1_i32_262 = arith.constant 1 : i32
    %1282 = vector.broadcast %c1_i32_262 : i32 to vector<2x1xi32>
    %1283 = arith.subi %1181, %1282 : vector<2x1xi32>
    %c3_i32 = arith.constant 3 : i32
    %1284 = vector.broadcast %c3_i32 : i32 to vector<2x1xi32>
    %1285 = arith.cmpi eq, %1283, %1284 : vector<2x1xi32>
    %c1_i32_263 = arith.constant 1 : i32
    %1286 = vector.broadcast %c1_i32_263 : i32 to vector<2x1xi32>
    %1287 = arith.subi %1181, %1286 : vector<2x1xi32>
    %c3_i32_264 = arith.constant 3 : i32
    %1288 = vector.broadcast %c3_i32_264 : i32 to vector<2x1xi32>
    %1289 = arith.cmpi sgt, %1287, %1288 : vector<2x1xi32>
    %1290 = arith.select %1289, %1281, %1264 : vector<2x1xi1>, vector<2x1xi32>
    %1291 = arith.select %1285, %1178, %1290 : vector<2x1xi1>, vector<2x1xi32>
    %c3_i32_265 = arith.constant 3 : i32
    %1292 = vector.broadcast %c3_i32_265 : i32 to vector<2x8xi32>
    %1293 = arith.cmpi eq, %1182, %1292 : vector<2x8xi32>
    %c3_i32_266 = arith.constant 3 : i32
    %1294 = vector.broadcast %c3_i32_266 : i32 to vector<2x1xi32>
    %1295 = arith.cmpi sgt, %1181, %1294 : vector<2x1xi32>
    %1296 = vector.broadcast %1295 : vector<2x1xi1> to vector<2x8xi1>
    %1297 = arith.andi %1293, %1296 : vector<2x8xi1>
    %1298 = vector.shape_cast %1291 : vector<2x1xi32> to vector<2x1xi32>
    %1299 = vector.broadcast %1298 : vector<2x1xi32> to vector<2x8xi32>
    %1300 = arith.select %1297, %1299, %1273 : vector<2x8xi1>, vector<2x8xi32>
    %1301 = vector.broadcast %1291 : vector<2x1xi32> to vector<2x6xi32>
    %1302 = arith.cmpi eq, %1301, %678 : vector<2x6xi32>
    %c0_i32_267 = arith.constant 0 : i32
    %1303 = vector.broadcast %c0_i32_267 : i32 to vector<2x6xi32>
    %1304 = arith.select %1302, %912, %1303 : vector<2x6xi1>, vector<2x6xi32>
    %1305 = arith.sitofp %1304 : vector<2x6xi32> to vector<2x6xf32>
    %cst_268 = arith.constant dense<0.000000e+00> : vector<2xf32>
    %1306 = vector.multi_reduction <add>, %1305, %cst_268 [1] : vector<2x6xf32> to vector<2xf32>
    %1307 = vector.shape_cast %1306 : vector<2xf32> to vector<2x1xf32>
    %1308 = arith.fptosi %1307 : vector<2x1xf32> to vector<2x1xi32>
    %c1_i32_269 = arith.constant 1 : i32
    %1309 = vector.broadcast %c1_i32_269 : i32 to vector<2x1xi32>
    %1310 = arith.subi %1181, %1309 : vector<2x1xi32>
    %c2_i32 = arith.constant 2 : i32
    %1311 = vector.broadcast %c2_i32 : i32 to vector<2x1xi32>
    %1312 = arith.cmpi eq, %1310, %1311 : vector<2x1xi32>
    %c1_i32_270 = arith.constant 1 : i32
    %1313 = vector.broadcast %c1_i32_270 : i32 to vector<2x1xi32>
    %1314 = arith.subi %1181, %1313 : vector<2x1xi32>
    %c2_i32_271 = arith.constant 2 : i32
    %1315 = vector.broadcast %c2_i32_271 : i32 to vector<2x1xi32>
    %1316 = arith.cmpi sgt, %1314, %1315 : vector<2x1xi32>
    %1317 = arith.select %1316, %1308, %1291 : vector<2x1xi1>, vector<2x1xi32>
    %1318 = arith.select %1312, %1178, %1317 : vector<2x1xi1>, vector<2x1xi32>
    %c2_i32_272 = arith.constant 2 : i32
    %1319 = vector.broadcast %c2_i32_272 : i32 to vector<2x8xi32>
    %1320 = arith.cmpi eq, %1182, %1319 : vector<2x8xi32>
    %c2_i32_273 = arith.constant 2 : i32
    %1321 = vector.broadcast %c2_i32_273 : i32 to vector<2x1xi32>
    %1322 = arith.cmpi sgt, %1181, %1321 : vector<2x1xi32>
    %1323 = vector.broadcast %1322 : vector<2x1xi1> to vector<2x8xi1>
    %1324 = arith.andi %1320, %1323 : vector<2x8xi1>
    %1325 = vector.shape_cast %1318 : vector<2x1xi32> to vector<2x1xi32>
    %1326 = vector.broadcast %1325 : vector<2x1xi32> to vector<2x8xi32>
    %1327 = arith.select %1324, %1326, %1300 : vector<2x8xi1>, vector<2x8xi32>
    %1328 = vector.broadcast %1318 : vector<2x1xi32> to vector<2x6xi32>
    %1329 = arith.cmpi eq, %1328, %678 : vector<2x6xi32>
    %c0_i32_274 = arith.constant 0 : i32
    %1330 = vector.broadcast %c0_i32_274 : i32 to vector<2x6xi32>
    %1331 = arith.select %1329, %854, %1330 : vector<2x6xi1>, vector<2x6xi32>
    %1332 = arith.sitofp %1331 : vector<2x6xi32> to vector<2x6xf32>
    %cst_275 = arith.constant dense<0.000000e+00> : vector<2xf32>
    %1333 = vector.multi_reduction <add>, %1332, %cst_275 [1] : vector<2x6xf32> to vector<2xf32>
    %1334 = vector.shape_cast %1333 : vector<2xf32> to vector<2x1xf32>
    %1335 = arith.fptosi %1334 : vector<2x1xf32> to vector<2x1xi32>
    %c1_i32_276 = arith.constant 1 : i32
    %1336 = vector.broadcast %c1_i32_276 : i32 to vector<2x1xi32>
    %1337 = arith.subi %1181, %1336 : vector<2x1xi32>
    %c1_i32_277 = arith.constant 1 : i32
    %1338 = vector.broadcast %c1_i32_277 : i32 to vector<2x1xi32>
    %1339 = arith.cmpi eq, %1337, %1338 : vector<2x1xi32>
    %c1_i32_278 = arith.constant 1 : i32
    %1340 = vector.broadcast %c1_i32_278 : i32 to vector<2x1xi32>
    %1341 = arith.subi %1181, %1340 : vector<2x1xi32>
    %c1_i32_279 = arith.constant 1 : i32
    %1342 = vector.broadcast %c1_i32_279 : i32 to vector<2x1xi32>
    %1343 = arith.cmpi sgt, %1341, %1342 : vector<2x1xi32>
    %1344 = arith.select %1343, %1335, %1318 : vector<2x1xi1>, vector<2x1xi32>
    %1345 = arith.select %1339, %1178, %1344 : vector<2x1xi1>, vector<2x1xi32>
    %c1_i32_280 = arith.constant 1 : i32
    %1346 = vector.broadcast %c1_i32_280 : i32 to vector<2x8xi32>
    %1347 = arith.cmpi eq, %1182, %1346 : vector<2x8xi32>
    %c1_i32_281 = arith.constant 1 : i32
    %1348 = vector.broadcast %c1_i32_281 : i32 to vector<2x1xi32>
    %1349 = arith.cmpi sgt, %1181, %1348 : vector<2x1xi32>
    %1350 = vector.broadcast %1349 : vector<2x1xi1> to vector<2x8xi1>
    %1351 = arith.andi %1347, %1350 : vector<2x8xi1>
    %1352 = vector.shape_cast %1345 : vector<2x1xi32> to vector<2x1xi32>
    %1353 = vector.broadcast %1352 : vector<2x1xi32> to vector<2x8xi32>
    %1354 = arith.select %1351, %1353, %1327 : vector<2x8xi1>, vector<2x8xi32>
    %1355 = vector.broadcast %1345 : vector<2x1xi32> to vector<2x6xi32>
    %1356 = arith.cmpi eq, %1355, %678 : vector<2x6xi32>
    %c0_i32_282 = arith.constant 0 : i32
    %1357 = vector.broadcast %c0_i32_282 : i32 to vector<2x6xi32>
    %1358 = arith.select %1356, %796, %1357 : vector<2x6xi1>, vector<2x6xi32>
    %1359 = arith.sitofp %1358 : vector<2x6xi32> to vector<2x6xf32>
    %cst_283 = arith.constant dense<0.000000e+00> : vector<2xf32>
    %1360 = vector.multi_reduction <add>, %1359, %cst_283 [1] : vector<2x6xf32> to vector<2xf32>
    %1361 = vector.shape_cast %1360 : vector<2xf32> to vector<2x1xf32>
    %1362 = arith.fptosi %1361 : vector<2x1xf32> to vector<2x1xi32>
    %c1_i32_284 = arith.constant 1 : i32
    %1363 = vector.broadcast %c1_i32_284 : i32 to vector<2x1xi32>
    %1364 = arith.subi %1181, %1363 : vector<2x1xi32>
    %c0_i32_285 = arith.constant 0 : i32
    %1365 = vector.broadcast %c0_i32_285 : i32 to vector<2x1xi32>
    %1366 = arith.cmpi eq, %1364, %1365 : vector<2x1xi32>
    %c1_i32_286 = arith.constant 1 : i32
    %1367 = vector.broadcast %c1_i32_286 : i32 to vector<2x1xi32>
    %1368 = arith.subi %1181, %1367 : vector<2x1xi32>
    %c0_i32_287 = arith.constant 0 : i32
    %1369 = vector.broadcast %c0_i32_287 : i32 to vector<2x1xi32>
    %1370 = arith.cmpi sgt, %1368, %1369 : vector<2x1xi32>
    %1371 = arith.select %1370, %1362, %1345 : vector<2x1xi1>, vector<2x1xi32>
    %1372 = arith.select %1366, %1178, %1371 : vector<2x1xi1>, vector<2x1xi32>
    %c0_i32_288 = arith.constant 0 : i32
    %1373 = vector.broadcast %c0_i32_288 : i32 to vector<2x8xi32>
    %1374 = arith.cmpi eq, %1182, %1373 : vector<2x8xi32>
    %c0_i32_289 = arith.constant 0 : i32
    %1375 = vector.broadcast %c0_i32_289 : i32 to vector<2x1xi32>
    %1376 = arith.cmpi sgt, %1181, %1375 : vector<2x1xi32>
    %1377 = vector.broadcast %1376 : vector<2x1xi1> to vector<2x8xi1>
    %1378 = arith.andi %1374, %1377 : vector<2x8xi1>
    %1379 = vector.shape_cast %1372 : vector<2x1xi32> to vector<2x1xi32>
    %1380 = vector.broadcast %1379 : vector<2x1xi32> to vector<2x8xi32>
    %1381 = arith.select %1378, %1380, %1354 : vector<2x8xi1>, vector<2x8xi32>
    %c0_290 = arith.constant 0 : index
    %c0_291 = arith.constant 0 : index
    %1382 = vector.load %arg13[%c0_290, %c0_291] : memref<2x8xi32, #tpu.memory_space<vmem>>, vector<2x8xi32>
    tpu.vector_store %arg13[%c0_290, %c0_291], %1381 {strides = array<i32>} : memref<2x8xi32, #tpu.memory_space<vmem>>, vector<2x8xi32>,
    return
  }
}

</mosaic_0001>

<llo_original>
// kernel: tpu_custom_call.1
$region0: #{tpu_custom_call.1}
  #allocation0 [shape = 'u32[]', space=smem, size = 0x4, offset = 0x4, fixed_abs, tag = 'smem constant byte address 0x4 - core index']
  #allocation1 [shape = 'u32[144,128]{1,0:T(1,128)}', space=vmem, size = 0x12000, scoped, tag = 'internal scratch']
  #allocation2 [shape = 'f32[16,64]{1,0:T(8,128)}', space=vmem, size = 0x2000, scoped, tag = 'scratch operand']
  %s0 = inlined_call_operand.hbm [shape: f32[16,16], index: 0, kind: input, shape index: {}]
  %s1 = inlined_call_operand.vmem [shape: f32[2,8], index: 1, kind: input, shape index: {}]
  %s2 = inlined_call_operand.vmem [shape: s32[2,8], index: 2, kind: input, shape index: {}]
  %s3 = inlined_call_operand.vmem [shape: f32[16,256], index: 3, kind: input, shape index: {}]
  %s4 = inlined_call_operand.vmem [shape: f32[32,128], index: 4, kind: input, shape index: {}]
  %s5 = inlined_call_operand.hbm [shape: f32[32,128], index: 5, kind: input, shape index: {}]
  %s6 = inlined_call_operand.vmem [shape: f32[1,256], index: 6, kind: input, shape index: {}]
  %s7 = inlined_call_operand.vmem [shape: f32[64,6], index: 7, kind: input, shape index: {}]
  %s8 = inlined_call_operand.vmem [shape: f32[1,6], index: 8, kind: input, shape index: {}]
  %s9 = inlined_call_operand.vmem [shape: f32[6,6], index: 9, kind: input, shape index: {}]
  %s10 = inlined_call_operand.vmem [shape: f32[2,1], index: 10, kind: output, shape index: {0}]
  %s11 = inlined_call_operand.vmem [shape: f32[2,1], index: 11, kind: output, shape index: {1}]
  %s12 = inlined_call_operand.vmem [shape: f32[2,1], index: 12, kind: output, shape index: {2}]
  %s13 = inlined_call_operand.hbm [shape: s32[2,8], index: 13, kind: output, shape index: {3}]
  %14 = xla_tuple %s10, %s11, %s12, %s13
  %s15 = sld [smem:[#allocation0]]
  $region82: #{tpu_custom_call.1} parent=0
    _
  %s17 = ssub.s32 1, %s15
  %s18 = scalar_select 0, %s17, %s15
  $region1: #{tpu_custom_call.1} parent=0
    #allocation3 [shape = 'u8[8192]{0}', space=vmem, size = 0x2000, scoped, tag = 'input window, operand 0, single buffered']
    #allocation4 [shape = 's32[1]{0}', space=sflag, size = 0x4, scoped, tag = 'scoped memory for tpu_custom_call.1']
    #allocation5 [shape = 's32[1]{0}', space=sflag, size = 0x4, scoped, tag = 'scoped memory for tpu_custom_call.1']
    #allocation6 [shape = 'u8[16384]{0}', space=vmem, size = 0x4000, scoped, tag = 'input window, operand 5, single buffered']
    #allocation7 [shape = 's32[1]{0}', space=sflag, size = 0x4, scoped, tag = 'scoped memory for tpu_custom_call.1']
    #allocation8 [shape = 'u8[1024]{0}', space=vmem, size = 0x400, scoped, tag = 'output window, operand 3, single buffered']
    %19 = vsyncpa [#allocation4], 0
    %20 = vsyncpa [#allocation7], 0
    %21 = vsyncpa [#allocation5], 0
    // Predicated region
    $region2: #{tpu_custom_call.1} parent=1 // pred_check
      _
    $region3: #{tpu_custom_call.1} parent=1 // pred_check_branch
      %23 = sbr.rel (0) target = $region5
    $region4: #{tpu_custom_call.1} parent=1 // pred_region
      %s25 = ssub.s32 256, 256
      %26 = vsyncadd [#allocation4], %s25
      %s27 = sshll.u32 [#allocation3], 4
      %s28 = int_to_ptr.vmem [resolvable:$true] %s27
      %33 = dma.hbm_to_vmem [thread:$0]  %s0, 256, %s28, [#allocation4], 128, 128, 8
    $region5: #{tpu_custom_call.1} parent=1 // pred_fallthru
      _
    // Predicated region
    $region6: #{tpu_custom_call.1} parent=1 // pred_check
      _
    $region7: #{tpu_custom_call.1} parent=1 // pred_check_branch
      %35 = sbr.rel (0) target = $region9
    $region8: #{tpu_custom_call.1} parent=1 // pred_region
      _
    $region9: #{tpu_custom_call.1} parent=1 // pred_fallthru
      _
    // Predicated region
    $region10: #{tpu_custom_call.1} parent=1 // pred_check
      _
    $region11: #{tpu_custom_call.1} parent=1 // pred_check_branch
      %37 = sbr.rel (0) target = $region13
    $region12: #{tpu_custom_call.1} parent=1 // pred_region
      _
    $region13: #{tpu_custom_call.1} parent=1 // pred_fallthru
      _
    // Predicated region
    $region14: #{tpu_custom_call.1} parent=1 // pred_check
      _
    $region15: #{tpu_custom_call.1} parent=1 // pred_check_branch
      %39 = sbr.rel (0) target = $region17
    $region16: #{tpu_custom_call.1} parent=1 // pred_region
      _
    $region17: #{tpu_custom_call.1} parent=1 // pred_fallthru
      _
    // Predicated region
    $region18: #{tpu_custom_call.1} parent=1 // pred_check
      _
    $region19: #{tpu_custom_call.1} parent=1 // pred_check_branch
      %41 = sbr.rel (0) target = $region21
    $region20: #{tpu_custom_call.1} parent=1 // pred_region
      _
    $region21: #{tpu_custom_call.1} parent=1 // pred_fallthru
      _
    // Predicated region
    $region22: #{tpu_custom_call.1} parent=1 // pred_check
      _
    $region23: #{tpu_custom_call.1} parent=1 // pred_check_branch
      %43 = sbr.rel (0) target = $region25
    $region24: #{tpu_custom_call.1} parent=1 // pred_region
      %s45 = ssub.s32 512, 512
      %46 = vsyncadd [#allocation7], %s45
      %s47 = sshll.u32 [#allocation6], 4
      %s48 = int_to_ptr.vmem [resolvable:$true] %s47
      %53 = dma.hbm_to_vmem [thread:$0]  %s5, 512, %s48, [#allocation7], 128, 128, 8
    $region25: #{tpu_custom_call.1} parent=1 // pred_fallthru
      _
    // Predicated region
    $region26: #{tpu_custom_call.1} parent=1 // pred_check
      _
    $region27: #{tpu_custom_call.1} parent=1 // pred_check_branch
      %55 = sbr.rel (0) target = $region29
    $region28: #{tpu_custom_call.1} parent=1 // pred_region
      _
    $region29: #{tpu_custom_call.1} parent=1 // pred_fallthru
      _
    // Predicated region
    $region30: #{tpu_custom_call.1} parent=1 // pred_check
      _
    $region31: #{tpu_custom_call.1} parent=1 // pred_check_branch
      %57 = sbr.rel (0) target = $region33
    $region32: #{tpu_custom_call.1} parent=1 // pred_region
      _
    $region33: #{tpu_custom_call.1} parent=1 // pred_fallthru
      _
    // Predicated region
    $region34: #{tpu_custom_call.1} parent=1 // pred_check
      _
    $region35: #{tpu_custom_call.1} parent=1 // pred_check_branch
      %59 = sbr.rel (0) target = $region37
    $region36: #{tpu_custom_call.1} parent=1 // pred_region
      _
    $region37: #{tpu_custom_call.1} parent=1 // pred_fallthru
      _
    // Predicated region
    $region38: #{tpu_custom_call.1} parent=1 // pred_check
      _
    $region39: #{tpu_custom_call.1} parent=1 // pred_check_branch
      %61 = sbr.rel (0) target = $region41
    $region40: #{tpu_custom_call.1} parent=1 // pred_region
      _
    $region41: #{tpu_custom_call.1} parent=1 // pred_fallthru
      _
    // Predicated region
    $region42: #{tpu_custom_call.1} parent=1 // pred_check
      _
    $region43: #{tpu_custom_call.1} parent=1 // pred_check_branch
      %63 = sbr.rel (0) target = $region45
    $region44: #{tpu_custom_call.1} parent=1 // pred_region
      %64 = dma.done [#allocation4], 256
    $region45: #{tpu_custom_call.1} parent=1 // pred_fallthru
      _
    // Predicated region
    $region46: #{tpu_custom_call.1} parent=1 // pred_check
      _
    $region47: #{tpu_custom_call.1} parent=1 // pred_check_branch
      %66 = sbr.rel (0) target = $region49
    $region48: #{tpu_custom_call.1} parent=1 // pred_region
      %67 = dma.done [#allocation7], 512
    $region49: #{tpu_custom_call.1} parent=1 // pred_fallthru
      _
    %v68 = vld [vmem:[%s1] sm:$0x3]
    %v69 = vld [vmem:[%s2] sm:$0x3]
    %v70 = vld [vmem:[%s9] sm:$0x3f]
    %v71 = vld [vmem:[#allocation3] sm:$0xff]
    %v72 = vld [vmem:[#allocation3 + $0x8] sm:$0xff]
    %v73 = vld [vmem:[%s3] sm:$0xff]
    %v74 = vld [vmem:[%s3 + $0x8] sm:$0xff]
    %v75 = vld [vmem:[%s3 + $0x10] sm:$0xff]
    %v76 = vld [vmem:[%s3 + $0x18] sm:$0xff]
    %v77 = vld [vmem:[%s6] sm:$0x3]
    %v79 = vlaneseq
    %v80 = vshrl.u32 %v79, 7
    %v81 = vsub.s32 0, %v80
    %v82 = vrot.slane %v77, %v81
    %v83 = vlaneseq
    %v84 = vshrl.u32 %v83, 7
    %v85 = vsub.s32 1, %v84
    %v86 = vrot.slane %v77, %v85
    %vm89 = vcmask 130048
    %v91 = vsel %vm89, %v71, 0
    %v94 = vsel %vm89, %v72, 0
    %96 = vmatprep.subr.mxu0 %v74
    %97 = vmatpush1.msra.mxu0 %v73
    %98 = vmatprep.subr.mxu0 %v76
    %99 = vmatpush1.msra.mxu0 %v75
    %100 = vmatprep.subr.mxu0 0.0
    %101 = vmatpush1.msra.mxu0 0.0
    %102 = vmatprep.subr.mxu0 0.0
    %103 = vmatpush1.msra.mxu0 0.0
    %104 = vmatprep.subr.mxu0 0.0
    %105 = vmatpush1.msra.mxu0 0.0
    %106 = vmatprep.subr.mxu0 0.0
    %107 = vmatpush1.msra.mxu0 0.0
    %108 = vmatprep.subr.mxu0 0.0
    %109 = vmatpush1.msra.mxu0 0.0
    %110 = vmatprep.subr.mxu0 0.0
    %111 = vmatpush1.msra.mxu0 0.0
    %112 = vmatprep.subr.mxu0 0.0
    %113 = vmatpush1.msra.mxu0 0.0
    %114 = vmatprep.subr.mxu0 0.0
    %115 = vmatpush1.msra.mxu0 0.0
    %116 = vmatprep.subr.mxu0 0.0
    %117 = vmatpush1.msra.mxu0 0.0
    %118 = vmatprep.subr.mxu0 0.0
    %119 = vmatpush1.msra.mxu0 0.0
    %120 = vmatprep.subr.mxu0 0.0
    %121 = vmatpush1.msra.mxu0 0.0
    %122 = vmatprep.subr.mxu0 0.0
    %123 = vmatpush1.msra.mxu0 0.0
    %124 = vmatprep.subr.mxu0 0.0
    %125 = vmatpush1.msra.mxu0 0.0
    %126 = vmatprep.subr.mxu0 0.0
    %127 = vmatpush1.msra.mxu0 0.0
    %128 = vmatprep.subr.mxu0 0.0
    %129 = vmatpush1.msra.mxu0 0.0
    %130 = vmatprep.subr.mxu0 0.0
    %131 = vmatpush1.msra.mxu0 0.0
    %132 = vmatprep.subr.mxu0 0.0
    %133 = vmatpush1.msra.mxu0 0.0
    %134 = vmatprep.subr.mxu0 0.0
    %135 = vmatpush1.msra.mxu0 0.0
    %136 = vmatprep.subr.mxu0 0.0
    %137 = vmatpush1.msra.mxu0 0.0
    %138 = vmatprep.subr.mxu0 0.0
    %139 = vmatpush1.msra.mxu0 0.0
    %140 = vmatprep.subr.mxu0 0.0
    %141 = vmatpush1.msra.mxu0 0.0
    %142 = vmatprep.subr.mxu0 0.0
    %143 = vmatpush1.msra.mxu0 0.0
    %144 = vmatprep.subr.mxu0 0.0
    %145 = vmatpush1.msra.mxu0 0.0
    %146 = vmatprep.subr.mxu0 0.0
    %147 = vmatpush1.msra.mxu0 0.0
    %148 = vmatprep.subr.mxu0 0.0
    %149 = vmatpush1.msra.mxu0 0.0
    %150 = vmatprep.subr.mxu0 0.0
    %151 = vmatpush1.msra.mxu0 0.0
    %152 = vmatprep.subr.mxu0 0.0
    %153 = vmatpush1.msra.mxu0 0.0
    %154 = vmatprep.subr.mxu0 0.0
    %155 = vmatpush1.msra.mxu0 0.0
    %156 = vmatprep.subr.mxu0 0.0
    %157 = vmatpush1.msra.mxu0 0.0
    %158 = vmatprep.subr.mxu0 0.0
    %159 = vmatpush1.msra.mxu0 0.0
    %160 = vmatprep.mubr.f32.mxu0 0.0
    %161 = vmatmul.mubr.f32.gmra.mrb[0].mxu0 %v91
    %v162 = vpop.f32.mrb[0].mxu0
    %v163 = vadd.f32 %v82, %v162
    %v164 = vpop.f32.mrb[0].mxu0
    %v165 = vadd.f32 %v86, %v164
    %166 = vmatprep.mubr.f32.mxu0 0.0
    %167 = vmatmul.mubr.f32.gmra.mrb[0].mxu0 %v94
    %v168 = vpop.f32.mrb[0].mxu0
    %v169 = vadd.f32 %v82, %v168
    %v170 = vpop.f32.mrb[0].mxu0
    %v171 = vadd.f32 %v86, %v170
    %172 = vdwg.mxu0
    %v173 = vld [vmem:[%s4] sm:$0xff]
    %v174 = vld [vmem:[%s4 + $0x8] sm:$0xff]
    %v175 = vld [vmem:[%s4 + $0x10] sm:$0xff]
    %v176 = vld [vmem:[%s4 + $0x18] sm:$0xff]
    %v177 = vld [vmem:[#allocation6] sm:$0xff]
    %v178 = vld [vmem:[#allocation6 + $0x8] sm:$0xff]
    %v179 = vld [vmem:[#allocation6 + $0x10] sm:$0xff]
    %v180 = vld [vmem:[#allocation6 + $0x18] sm:$0xff]
    %vm181 = vcmp.gt.f32.partialorder %v68, 0.0
    %vm182 = vcmask 261120
    %v184 = vsel %vm182, 0.0, 0
    %186 = vmatprep.subr.mxu0 0.0
    %187 = vmatpush1.msra.mxu0 %v173
    %188 = vmatprep.subr.mxu0 0.0
    %189 = vmatpush1.msra.mxu0 %v174
    %190 = vmatprep.subr.mxu0 0.0
    %191 = vmatpush1.msra.mxu0 %v175
    %192 = vmatprep.subr.mxu0 0.0
    %193 = vmatpush1.msra.mxu0 %v176
    %194 = vmatprep.subr.mxu0 0.0
    %195 = vmatpush1.msra.mxu0 0.0
    %196 = vmatprep.subr.mxu0 0.0
    %197 = vmatpush1.msra.mxu0 0.0
    %198 = vmatprep.subr.mxu0 0.0
    %199 = vmatpush1.msra.mxu0 0.0
    %200 = vmatprep.subr.mxu0 0.0
    %201 = vmatpush1.msra.mxu0 0.0
    %202 = vmatprep.subr.mxu0 0.0
    %203 = vmatpush1.msra.mxu0 0.0
    %204 = vmatprep.subr.mxu0 0.0
    %205 = vmatpush1.msra.mxu0 0.0
    %206 = vmatprep.subr.mxu0 0.0
    %207 = vmatpush1.msra.mxu0 0.0
    %208 = vmatprep.subr.mxu0 0.0
    %209 = vmatpush1.msra.mxu0 0.0
    %210 = vmatprep.subr.mxu0 0.0
    %211 = vmatpush1.msra.mxu0 0.0
    %212 = vmatprep.subr.mxu0 0.0
    %213 = vmatpush1.msra.mxu0 0.0
    %214 = vmatprep.subr.mxu0 0.0
    %215 = vmatpush1.msra.mxu0 0.0
    %216 = vmatprep.subr.mxu0 0.0
    %217 = vmatpush1.msra.mxu0 0.0
    %218 = vmatprep.subr.mxu0 0.0
    %219 = vmatpush1.msra.mxu0 0.0
    %220 = vmatprep.subr.mxu0 0.0
    %221 = vmatpush1.msra.mxu0 0.0
    %222 = vmatprep.subr.mxu0 0.0
    %223 = vmatpush1.msra.mxu0 0.0
    %224 = vmatprep.subr.mxu0 0.0
    %225 = vmatpush1.msra.mxu0 0.0
    %226 = vmatprep.subr.mxu0 0.0
    %227 = vmatpush1.msra.mxu0 0.0
    %228 = vmatprep.subr.mxu0 0.0
    %229 = vmatpush1.msra.mxu0 0.0
    %230 = vmatprep.subr.mxu0 0.0
    %231 = vmatpush1.msra.mxu0 0.0
    %232 = vmatprep.subr.mxu0 0.0
    %233 = vmatpush1.msra.mxu0 0.0
    %234 = vmatprep.subr.mxu0 0.0
    %235 = vmatpush1.msra.mxu0 0.0
    %236 = vmatprep.subr.mxu0 0.0
    %237 = vmatpush1.msra.mxu0 0.0
    %238 = vmatprep.subr.mxu0 0.0
    %239 = vmatpush1.msra.mxu0 0.0
    %240 = vmatprep.subr.mxu0 0.0
    %241 = vmatpush1.msra.mxu0 0.0
    %242 = vmatprep.subr.mxu0 0.0
    %243 = vmatpush1.msra.mxu0 0.0
    %244 = vmatprep.subr.mxu0 0.0
    %245 = vmatpush1.msra.mxu0 0.0
    %246 = vmatprep.subr.mxu0 0.0
    %247 = vmatpush1.msra.mxu0 0.0
    %248 = vmatprep.subr.mxu0 0.0
    %249 = vmatpush1.msra.mxu0 0.0
    %250 = vmatprep.mubr.f32.mxu0 0.0
    %251 = vmatmul.mubr.f32.gmra.mrb[0].mxu0 %v184
    %v252 = vpop.f32.mrb[0].mxu0
    %v253 = vadd.f32 0.0, %v252
    %v254 = vpop.f32.mrb[0].mxu0
    %255 = vdwg.mxu0
    %v256 = vadd.f32 %v163, %v253
    %v257 = vxor.u32 %v256, 2147483648
    %v258 = vmul.f32 %v257, 1.442695
    %v259 = vpow.pop %v258
    %v260 = vadd.f32 %v259, 1.0
    %v261 = vrcp.pop %v260
    %v262 = vmul.f32 1.0, %v261
    %v263 = vtanh.pop %v256
    %v264 = vmul.f32 %v262, 0.0
    %266 = vrot.lane.b32.xlu0 %v263, 64
    %v267 = vpop.permute.xlu0 %266
    %v269 = vmul.f32 %v262, %v267
    %271 = vrot.lane.b32.xlu0 %v269, 32
    %v272 = vpop.permute.xlu0 %271
    %v274 = vadd.f32 %v264, %v272
    %v275 = vtanh.pop %v274
    %277 = vrot.lane.b32.xlu0 %v275, 64
    %v278 = vpop.permute.xlu0 %277
    %v280 = vmul.f32 %v262, %v278
    %v281 = vsel %vm181, 1, 0
    %282 = vset.pattern.permute.xlu0 0
    %283 = vperm.xlu0 %282, %v281
    %v284 = vpop.permute.xlu0 %283
    %vm285 = vcmp.eq.s32.totalorder %v284, 1
    %v286 = vsel %vm285, %v280, 0.0
    %v287 = vsel %vm285, %v274, 0.0
    %288 = vmatprep.subr.mxu0 0.0
    %289 = vmatpush1.msra.mxu0 %v177
    %290 = vmatprep.subr.mxu0 0.0
    %291 = vmatpush1.msra.mxu0 %v178
    %292 = vmatprep.subr.mxu0 0.0
    %293 = vmatpush1.msra.mxu0 %v179
    %294 = vmatprep.subr.mxu0 0.0
    %295 = vmatpush1.msra.mxu0 %v180
    %296 = vmatprep.subr.mxu0 0.0
    %297 = vmatpush1.msra.mxu0 0.0
    %298 = vmatprep.subr.mxu0 0.0
    %299 = vmatpush1.msra.mxu0 0.0
    %300 = vmatprep.subr.mxu0 0.0
    %301 = vmatpush1.msra.mxu0 0.0
    %302 = vmatprep.subr.mxu0 0.0
    %303 = vmatpush1.msra.mxu0 0.0
    %304 = vmatprep.subr.mxu0 0.0
    %305 = vmatpush1.msra.mxu0 0.0
    %306 = vmatprep.subr.mxu0 0.0
    %307 = vmatpush1.msra.mxu0 0.0
    %308 = vmatprep.subr.mxu0 0.0
    %309 = vmatpush1.msra.mxu0 0.0
    %310 = vmatprep.subr.mxu0 0.0
    %311 = vmatpush1.msra.mxu0 0.0
    %312 = vmatprep.subr.mxu0 0.0
    %313 = vmatpush1.msra.mxu0 0.0
    %314 = vmatprep.subr.mxu0 0.0
    %315 = vmatpush1.msra.mxu0 0.0
    %316 = vmatprep.subr.mxu0 0.0
    %317 = vmatpush1.msra.mxu0 0.0
    %318 = vmatprep.subr.mxu0 0.0
    %319 = vmatpush1.msra.mxu0 0.0
    %320 = vmatprep.subr.mxu0 0.0
    %321 = vmatpush1.msra.mxu0 0.0
    %322 = vmatprep.subr.mxu0 0.0
    %323 = vmatpush1.msra.mxu0 0.0
    %324 = vmatprep.subr.mxu0 0.0
    %325 = vmatpush1.msra.mxu0 0.0
    %326 = vmatprep.subr.mxu0 0.0
    %327 = vmatpush1.msra.mxu0 0.0
    %328 = vmatprep.subr.mxu0 0.0
    %329 = vmatpush1.msra.mxu0 0.0
    %330 = vmatprep.subr.mxu0 0.0
    %331 = vmatpush1.msra.mxu0 0.0
    %332 = vmatprep.subr.mxu0 0.0
    %333 = vmatpush1.msra.mxu0 0.0
    %334 = vmatprep.subr.mxu0 0.0
    %335 = vmatpush1.msra.mxu0 0.0
    %336 = vmatprep.subr.mxu0 0.0
    %337 = vmatpush1.msra.mxu0 0.0
    %338 = vmatprep.subr.mxu0 0.0
    %339 = vmatpush1.msra.mxu0 0.0
    %340 = vmatprep.subr.mxu0 0.0
    %341 = vmatpush1.msra.mxu0 0.0
    %342 = vmatprep.subr.mxu0 0.0
    %343 = vmatpush1.msra.mxu0 0.0
    %344 = vmatprep.subr.mxu0 0.0
    %345 = vmatpush1.msra.mxu0 0.0
    %346 = vmatprep.subr.mxu0 0.0
    %347 = vmatpush1.msra.mxu0 0.0
    %348 = vmatprep.subr.mxu0 0.0
    %349 = vmatpush1.msra.mxu0 0.0
    %350 = vmatprep.subr.mxu0 0.0
    %351 = vmatpush1.msra.mxu0 0.0
    %352 = vmatprep.mubr.f32.mxu0 0.0
    %353 = vmatmul.mubr.f32.gmra.mrb[0].mxu0 %v184
    %v354 = vpop.f32.mrb[0].mxu0
    %v355 = vadd.f32 0.0, %v354
    %v356 = vpop.f32.mrb[0].mxu0
    %357 = vdwg.mxu0
    %v359 = vrot.slane %v355, 2
    %v361 = vadd.f32 %v171, %v359
    %v362 = vxor.u32 %v361, 2147483648
    %v363 = vmul.f32 %v362, 1.442695
    %v364 = vpow.pop %v363
    %v365 = vadd.f32 %v364, 1.0
    %v366 = vrcp.pop %v365
    %v367 = vmul.f32 1.0, %v366
    %v368 = vtanh.pop %v361
    %v369 = vmul.f32 %v367, 0.0
    %371 = vrot.lane.b32.xlu0 %v368, 64
    %v372 = vpop.permute.xlu0 %371
    %v374 = vmul.f32 %v367, %v372
    %376 = vrot.lane.b32.xlu0 %v374, 32
    %v377 = vpop.permute.xlu0 %376
    %v379 = vadd.f32 %v369, %v377
    %v380 = vtanh.pop %v379
    %382 = vrot.lane.b32.xlu0 %v380, 64
    %v383 = vpop.permute.xlu0 %382
    %v385 = vmul.f32 %v367, %v383
    %386 = vset.pattern.permute.xlu0 7
    %387 = vperm.xlu0 %386, %v281
    %v388 = vpop.permute.xlu0 %387
    %vm389 = vcmp.eq.s32.totalorder %v388, 1
    %v391 = vrot.slane %v385, 6
    %392 = vrot.lane.b32.xlu0 %v391, 32
    %v393 = vpop.permute.xlu0 %392
    %v395 = vsel %vm389, %v393, 0.0
    %v397 = vrot.slane %v379, 6
    %398 = vrot.lane.b32.xlu0 %v397, 96
    %v399 = vpop.permute.xlu0 %398
    %v401 = vsel %vm389, %v399, 0.0
    %403 = vrot.lane.b32.xlu0 %v286, 32
    %v404 = vpop.permute.xlu0 %403
    %vm406 = vcmask 254976
    %407 = vst.msk [vmem:[#allocation2] sm:$0x3] %vm406, %v404
    %409 = vrot.lane.b32.xlu0 %v395, 32
    %v410 = vpop.permute.xlu0 %409
    %vm412 = vcmask 517376
    %413 = vst.msk [vmem:[#allocation2 + $0xe] sm:$0x3] %vm412, %v410
    %v414 = vsel %vm182, %v404, 0
    %416 = vmatprep.subr.mxu0 0.0
    %417 = vmatpush1.msra.mxu0 %v173
    %418 = vmatprep.subr.mxu0 0.0
    %419 = vmatpush1.msra.mxu0 %v174
    %420 = vmatprep.subr.mxu0 0.0
    %421 = vmatpush1.msra.mxu0 %v175
    %422 = vmatprep.subr.mxu0 0.0
    %423 = vmatpush1.msra.mxu0 %v176
    %424 = vmatprep.subr.mxu0 0.0
    %425 = vmatpush1.msra.mxu0 0.0
    %426 = vmatprep.subr.mxu0 0.0
    %427 = vmatpush1.msra.mxu0 0.0
    %428 = vmatprep.subr.mxu0 0.0
    %429 = vmatpush1.msra.mxu0 0.0
    %430 = vmatprep.subr.mxu0 0.0
    %431 = vmatpush1.msra.mxu0 0.0
    %432 = vmatprep.subr.mxu0 0.0
    %433 = vmatpush1.msra.mxu0 0.0
    %434 = vmatprep.subr.mxu0 0.0
    %435 = vmatpush1.msra.mxu0 0.0
    %436 = vmatprep.subr.mxu0 0.0
    %437 = vmatpush1.msra.mxu0 0.0
    %438 = vmatprep.subr.mxu0 0.0
    %439 = vmatpush1.msra.mxu0 0.0
    %440 = vmatprep.subr.mxu0 0.0
    %441 = vmatpush1.msra.mxu0 0.0
    %442 = vmatprep.subr.mxu0 0.0
    %443 = vmatpush1.msra.mxu0 0.0
    %444 = vmatprep.subr.mxu0 0.0
    %445 = vmatpush1.msra.mxu0 0.0
    %446 = vmatprep.subr.mxu0 0.0
    %447 = vmatpush1.msra.mxu0 0.0
    %448 = vmatprep.subr.mxu0 0.0
    %449 = vmatpush1.msra.mxu0 0.0
    %450 = vmatprep.subr.mxu0 0.0
    %451 = vmatpush1.msra.mxu0 0.0
    %452 = vmatprep.subr.mxu0 0.0
    %453 = vmatpush1.msra.mxu0 0.0
    %454 = vmatprep.subr.mxu0 0.0
    %455 = vmatpush1.msra.mxu0 0.0
    %456 = vmatprep.subr.mxu0 0.0
    %457 = vmatpush1.msra.mxu0 0.0
    %458 = vmatprep.subr.mxu0 0.0
    %459 = vmatpush1.msra.mxu0 0.0
    %460 = vmatprep.subr.mxu0 0.0
    %461 = vmatpush1.msra.mxu0 0.0
    %462 = vmatprep.subr.mxu0 0.0
    %463 = vmatpush1.msra.mxu0 0.0
    %464 = vmatprep.subr.mxu0 0.0
    %465 = vmatpush1.msra.mxu0 0.0
    %466 = vmatprep.subr.mxu0 0.0
    %467 = vmatpush1.msra.mxu0 0.0
    %468 = vmatprep.subr.mxu0 0.0
    %469 = vmatpush1.msra.mxu0 0.0
    %470 = vmatprep.subr.mxu0 0.0
    %471 = vmatpush1.msra.mxu0 0.0
    %472 = vmatprep.subr.mxu0 0.0
    %473 = vmatpush1.msra.mxu0 0.0
    %474 = vmatprep.subr.mxu0 0.0
    %475 = vmatpush1.msra.mxu0 0.0
    %476 = vmatprep.subr.mxu0 0.0
    %477 = vmatpush1.msra.mxu0 0.0
    %478 = vmatprep.subr.mxu0 0.0
    %479 = vmatpush1.msra.mxu0 0.0
    %480 = vmatprep.mubr.f32.mxu0 0.0
    %481 = vmatmul.mubr.f32.gmra.mrb[0].mxu0 %v414
    %v482 = vpop.f32.mrb[0].mxu0
    %v483 = vadd.f32 0.0, %v482
    %v484 = vpop.f32.mrb[0].mxu0
    %485 = vdwg.mxu0
    %v487 = vrot.slane %v483, 6
    %v489 = vadd.f32 %v163, %v487
    %v490 = vxor.u32 %v489, 2147483648
    %v491 = vmul.f32 %v490, 1.442695
    %v492 = vpow.pop %v491
    %v493 = vadd.f32 %v492, 1.0
    %v494 = vrcp.pop %v493
    %v495 = vmul.f32 1.0, %v494
    %v496 = vtanh.pop %v489
    %v498 = vrot.slane %v287, 6
    %v500 = vmul.f32 %v495, %v498
    %502 = vrot.lane.b32.xlu0 %v496, 64
    %v503 = vpop.permute.xlu0 %502
    %v505 = vmul.f32 %v495, %v503
    %507 = vrot.lane.b32.xlu0 %v505, 32
    %v508 = vpop.permute.xlu0 %507
    %v510 = vadd.f32 %v500, %v508
    %v511 = vtanh.pop %v510
    %513 = vrot.lane.b32.xlu0 %v511, 64
    %v514 = vpop.permute.xlu0 %513
    %v516 = vmul.f32 %v495, %v514
    %517 = vset.pattern.permute.xlu0 1
    %518 = vperm.xlu0 %517, %v281
    %v519 = vpop.permute.xlu0 %518
    %vm520 = vcmp.eq.s32.totalorder %v519, 1
    %v522 = vrot.slane %v516, 2
    %523 = vrot.lane.b32.xlu0 %v522, 32
    %v524 = vpop.permute.xlu0 %523
    %v526 = vsel %vm520, %v524, %v404
    %v528 = vrot.slane %v510, 2
    %529 = vrot.lane.b32.xlu0 %v528, 96
    %v530 = vpop.permute.xlu0 %529
    %532 = vrot.lane.b32.xlu0 %v287, 96
    %v533 = vpop.permute.xlu0 %532
    %v535 = vsel %vm520, %v530, %v533
    %v536 = vsel %vm520, %v524, 0.0
    %v537 = vsel %vm182, %v395, 0
    %539 = vmatprep.subr.mxu0 0.0
    %540 = vmatpush1.msra.mxu0 %v177
    %541 = vmatprep.subr.mxu0 0.0
    %542 = vmatpush1.msra.mxu0 %v178
    %543 = vmatprep.subr.mxu0 0.0
    %544 = vmatpush1.msra.mxu0 %v179
    %545 = vmatprep.subr.mxu0 0.0
    %546 = vmatpush1.msra.mxu0 %v180
    %547 = vmatprep.subr.mxu0 0.0
    %548 = vmatpush1.msra.mxu0 0.0
    %549 = vmatprep.subr.mxu0 0.0
    %550 = vmatpush1.msra.mxu0 0.0
    %551 = vmatprep.subr.mxu0 0.0
    %552 = vmatpush1.msra.mxu0 0.0
    %553 = vmatprep.subr.mxu0 0.0
    %554 = vmatpush1.msra.mxu0 0.0
    %555 = vmatprep.subr.mxu0 0.0
    %556 = vmatpush1.msra.mxu0 0.0
    %557 = vmatprep.subr.mxu0 0.0
    %558 = vmatpush1.msra.mxu0 0.0
    %559 = vmatprep.subr.mxu0 0.0
    %560 = vmatpush1.msra.mxu0 0.0
    %561 = vmatprep.subr.mxu0 0.0
    %562 = vmatpush1.msra.mxu0 0.0
    %563 = vmatprep.subr.mxu0 0.0
    %564 = vmatpush1.msra.mxu0 0.0
    %565 = vmatprep.subr.mxu0 0.0
    %566 = vmatpush1.msra.mxu0 0.0
    %567 = vmatprep.subr.mxu0 0.0
    %568 = vmatpush1.msra.mxu0 0.0
    %569 = vmatprep.subr.mxu0 0.0
    %570 = vmatpush1.msra.mxu0 0.0
    %571 = vmatprep.subr.mxu0 0.0
    %572 = vmatpush1.msra.mxu0 0.0
    %573 = vmatprep.subr.mxu0 0.0
    %574 = vmatpush1.msra.mxu0 0.0
    %575 = vmatprep.subr.mxu0 0.0
    %576 = vmatpush1.msra.mxu0 0.0
    %577 = vmatprep.subr.mxu0 0.0
    %578 = vmatpush1.msra.mxu0 0.0
    %579 = vmatprep.subr.mxu0 0.0
    %580 = vmatpush1.msra.mxu0 0.0
    %581 = vmatprep.subr.mxu0 0.0
    %582 = vmatpush1.msra.mxu0 0.0
    %583 = vmatprep.subr.mxu0 0.0
    %584 = vmatpush1.msra.mxu0 0.0
    %585 = vmatprep.subr.mxu0 0.0
    %586 = vmatpush1.msra.mxu0 0.0
    %587 = vmatprep.subr.mxu0 0.0
    %588 = vmatpush1.msra.mxu0 0.0
    %589 = vmatprep.subr.mxu0 0.0
    %590 = vmatpush1.msra.mxu0 0.0
    %591 = vmatprep.subr.mxu0 0.0
    %592 = vmatpush1.msra.mxu0 0.0
    %593 = vmatprep.subr.mxu0 0.0
    %594 = vmatpush1.msra.mxu0 0.0
    %595 = vmatprep.subr.mxu0 0.0
    %596 = vmatpush1.msra.mxu0 0.0
    %597 = vmatprep.subr.mxu0 0.0
    %598 = vmatpush1.msra.mxu0 0.0
    %599 = vmatprep.subr.mxu0 0.0
    %600 = vmatpush1.msra.mxu0 0.0
    %601 = vmatprep.subr.mxu0 0.0
    %602 = vmatpush1.msra.mxu0 0.0
    %603 = vmatprep.mubr.f32.mxu0 0.0
    %604 = vmatmul.mubr.f32.gmra.mrb[0].mxu0 %v537
    %v605 = vpop.f32.mrb[0].mxu0
    %v606 = vadd.f32 0.0, %v605
    %v607 = vpop.f32.mrb[0].mxu0
    %608 = vdwg.mxu0
    %v610 = vrot.slane %v606, 4
    %v612 = vadd.f32 %v171, %v610
    %v613 = vxor.u32 %v612, 2147483648
    %v614 = vmul.f32 %v613, 1.442695
    %v615 = vpow.pop %v614
    %v616 = vadd.f32 %v615, 1.0
    %v617 = vrcp.pop %v616
    %v618 = vmul.f32 1.0, %v617
    %v619 = vtanh.pop %v612
    %v621 = vrot.slane %v401, 4
    %622 = vrot.lane.b32.xlu0 %v621, 32
    %v623 = vpop.permute.xlu0 %622
    %v625 = vmul.f32 %v618, %v623
    %627 = vrot.lane.b32.xlu0 %v619, 64
    %v628 = vpop.permute.xlu0 %627
    %v630 = vmul.f32 %v618, %v628
    %632 = vrot.lane.b32.xlu0 %v630, 32
    %v633 = vpop.permute.xlu0 %632
    %v635 = vadd.f32 %v625, %v633
    %v636 = vtanh.pop %v635
    %638 = vrot.lane.b32.xlu0 %v636, 64
    %v639 = vpop.permute.xlu0 %638
    %v641 = vmul.f32 %v618, %v639
    %642 = vset.pattern.permute.xlu0 6
    %643 = vperm.xlu0 %642, %v281
    %v644 = vpop.permute.xlu0 %643
    %vm645 = vcmp.eq.s32.totalorder %v644, 1
    %v647 = vrot.slane %v641, 4
    %648 = vrot.lane.b32.xlu0 %v647, 32
    %v649 = vpop.permute.xlu0 %648
    %v651 = vsel %vm645, %v649, %v395
    %v653 = vrot.slane %v635, 4
    %654 = vrot.lane.b32.xlu0 %v653, 96
    %v655 = vpop.permute.xlu0 %654
    %v657 = vsel %vm645, %v655, %v401
    %v658 = vsel %vm645, %v649, 0.0
    %659 = vst.msk [vmem:[#allocation2 + $0x2] sm:$0x3] %vm406, %v536
    %661 = vrot.lane.b32.xlu0 %v658, 32
    %v662 = vpop.permute.xlu0 %661
    %664 = vst.msk [vmem:[#allocation2 + $0xc] sm:$0x3] %vm412, %v662
    %v666 = vsel %vm182, %v526, 0
    %668 = vmatprep.subr.mxu0 0.0
    %669 = vmatpush1.msra.mxu0 %v173
    %670 = vmatprep.subr.mxu0 0.0
    %671 = vmatpush1.msra.mxu0 %v174
    %672 = vmatprep.subr.mxu0 0.0
    %673 = vmatpush1.msra.mxu0 %v175
    %674 = vmatprep.subr.mxu0 0.0
    %675 = vmatpush1.msra.mxu0 %v176
    %676 = vmatprep.subr.mxu0 0.0
    %677 = vmatpush1.msra.mxu0 0.0
    %678 = vmatprep.subr.mxu0 0.0
    %679 = vmatpush1.msra.mxu0 0.0
    %680 = vmatprep.subr.mxu0 0.0
    %681 = vmatpush1.msra.mxu0 0.0
    %682 = vmatprep.subr.mxu0 0.0
    %683 = vmatpush1.msra.mxu0 0.0
    %684 = vmatprep.subr.mxu0 0.0
    %685 = vmatpush1.msra.mxu0 0.0
    %686 = vmatprep.subr.mxu0 0.0
    %687 = vmatpush1.msra.mxu0 0.0
    %688 = vmatprep.subr.mxu0 0.0
    %689 = vmatpush1.msra.mxu0 0.0
    %690 = vmatprep.subr.mxu0 0.0
    %691 = vmatpush1.msra.mxu0 0.0
    %692 = vmatprep.subr.mxu0 0.0
    %693 = vmatpush1.msra.mxu0 0.0
    %694 = vmatprep.subr.mxu0 0.0
    %695 = vmatpush1.msra.mxu0 0.0
    %696 = vmatprep.subr.mxu0 0.0
    %697 = vmatpush1.msra.mxu0 0.0
    %698 = vmatprep.subr.mxu0 0.0
    %699 = vmatpush1.msra.mxu0 0.0
    %700 = vmatprep.subr.mxu0 0.0
    %701 = vmatpush1.msra.mxu0 0.0
    %702 = vmatprep.subr.mxu0 0.0
    %703 = vmatpush1.msra.mxu0 0.0
    %704 = vmatprep.subr.mxu0 0.0
    %705 = vmatpush1.msra.mxu0 0.0
    %706 = vmatprep.subr.mxu0 0.0
    %707 = vmatpush1.msra.mxu0 0.0
    %708 = vmatprep.subr.mxu0 0.0
    %709 = vmatpush1.msra.mxu0 0.0
    %710 = vmatprep.subr.mxu0 0.0
    %711 = vmatpush1.msra.mxu0 0.0
    %712 = vmatprep.subr.mxu0 0.0
    %713 = vmatpush1.msra.mxu0 0.0
    %714 = vmatprep.subr.mxu0 0.0
    %715 = vmatpush1.msra.mxu0 0.0
    %716 = vmatprep.subr.mxu0 0.0
    %717 = vmatpush1.msra.mxu0 0.0
    %718 = vmatprep.subr.mxu0 0.0
    %719 = vmatpush1.msra.mxu0 0.0
    %720 = vmatprep.subr.mxu0 0.0
    %721 = vmatpush1.msra.mxu0 0.0
    %722 = vmatprep.subr.mxu0 0.0
    %723 = vmatpush1.msra.mxu0 0.0
    %724 = vmatprep.subr.mxu0 0.0
    %725 = vmatpush1.msra.mxu0 0.0
    %726 = vmatprep.subr.mxu0 0.0
    %727 = vmatpush1.msra.mxu0 0.0
    %728 = vmatprep.subr.mxu0 0.0
    %729 = vmatpush1.msra.mxu0 0.0
    %730 = vmatprep.subr.mxu0 0.0
    %731 = vmatpush1.msra.mxu0 0.0
    %732 = vmatprep.mubr.f32.mxu0 0.0
    %733 = vmatmul.mubr.f32.gmra.mrb[0].mxu0 %v666
    %v734 = vpop.f32.mrb[0].mxu0
    %v735 = vadd.f32 0.0, %v734
    %v736 = vpop.f32.mrb[0].mxu0
    %737 = vdwg.mxu0
    %v739 = vrot.slane %v735, 4
    %v741 = vadd.f32 %v163, %v739
    %v742 = vxor.u32 %v741, 2147483648
    %v743 = vmul.f32 %v742, 1.442695
    %v744 = vpow.pop %v743
    %v745 = vadd.f32 %v744, 1.0
    %v746 = vrcp.pop %v745
    %v747 = vmul.f32 1.0, %v746
    %v748 = vtanh.pop %v741
    %v750 = vrot.slane %v535, 4
    %751 = vrot.lane.b32.xlu0 %v750, 32
    %v752 = vpop.permute.xlu0 %751
    %v754 = vmul.f32 %v747, %v752
    %756 = vrot.lane.b32.xlu0 %v748, 64
    %v757 = vpop.permute.xlu0 %756
    %v759 = vmul.f32 %v747, %v757
    %761 = vrot.lane.b32.xlu0 %v759, 32
    %v762 = vpop.permute.xlu0 %761
    %v764 = vadd.f32 %v754, %v762
    %v765 = vtanh.pop %v764
    %767 = vrot.lane.b32.xlu0 %v765, 64
    %v768 = vpop.permute.xlu0 %767
    %v770 = vmul.f32 %v747, %v768
    %771 = vset.pattern.permute.xlu0 2
    %772 = vperm.xlu0 %771, %v281
    %v773 = vpop.permute.xlu0 %772
    %vm774 = vcmp.eq.s32.totalorder %v773, 1
    %v776 = vrot.slane %v770, 4
    %777 = vrot.lane.b32.xlu0 %v776, 32
    %v778 = vpop.permute.xlu0 %777
    %v780 = vsel %vm774, %v778, %v526
    %v782 = vrot.slane %v764, 4
    %783 = vrot.lane.b32.xlu0 %v782, 96
    %v784 = vpop.permute.xlu0 %783
    %v786 = vsel %vm774, %v784, %v535
    %v787 = vsel %vm774, %v778, 0.0
    %v789 = vsel %vm182, %v651, 0
    %791 = vmatprep.subr.mxu0 0.0
    %792 = vmatpush1.msra.mxu0 %v177
    %793 = vmatprep.subr.mxu0 0.0
    %794 = vmatpush1.msra.mxu0 %v178
    %795 = vmatprep.subr.mxu0 0.0
    %796 = vmatpush1.msra.mxu0 %v179
    %797 = vmatprep.subr.mxu0 0.0
    %798 = vmatpush1.msra.mxu0 %v180
    %799 = vmatprep.subr.mxu0 0.0
    %800 = vmatpush1.msra.mxu0 0.0
    %801 = vmatprep.subr.mxu0 0.0
    %802 = vmatpush1.msra.mxu0 0.0
    %803 = vmatprep.subr.mxu0 0.0
    %804 = vmatpush1.msra.mxu0 0.0
    %805 = vmatprep.subr.mxu0 0.0
    %806 = vmatpush1.msra.mxu0 0.0
    %807 = vmatprep.subr.mxu0 0.0
    %808 = vmatpush1.msra.mxu0 0.0
    %809 = vmatprep.subr.mxu0 0.0
    %810 = vmatpush1.msra.mxu0 0.0
    %811 = vmatprep.subr.mxu0 0.0
    %812 = vmatpush1.msra.mxu0 0.0
    %813 = vmatprep.subr.mxu0 0.0
    %814 = vmatpush1.msra.mxu0 0.0
    %815 = vmatprep.subr.mxu0 0.0
    %816 = vmatpush1.msra.mxu0 0.0
    %817 = vmatprep.subr.mxu0 0.0
    %818 = vmatpush1.msra.mxu0 0.0
    %819 = vmatprep.subr.mxu0 0.0
    %820 = vmatpush1.msra.mxu0 0.0
    %821 = vmatprep.subr.mxu0 0.0
    %822 = vmatpush1.msra.mxu0 0.0
    %823 = vmatprep.subr.mxu0 0.0
    %824 = vmatpush1.msra.mxu0 0.0
    %825 = vmatprep.subr.mxu0 0.0
    %826 = vmatpush1.msra.mxu0 0.0
    %827 = vmatprep.subr.mxu0 0.0
    %828 = vmatpush1.msra.mxu0 0.0
    %829 = vmatprep.subr.mxu0 0.0
    %830 = vmatpush1.msra.mxu0 0.0
    %831 = vmatprep.subr.mxu0 0.0
    %832 = vmatpush1.msra.mxu0 0.0
    %833 = vmatprep.subr.mxu0 0.0
    %834 = vmatpush1.msra.mxu0 0.0
    %835 = vmatprep.subr.mxu0 0.0
    %836 = vmatpush1.msra.mxu0 0.0
    %837 = vmatprep.subr.mxu0 0.0
    %838 = vmatpush1.msra.mxu0 0.0
    %839 = vmatprep.subr.mxu0 0.0
    %840 = vmatpush1.msra.mxu0 0.0
    %841 = vmatprep.subr.mxu0 0.0
    %842 = vmatpush1.msra.mxu0 0.0
    %843 = vmatprep.subr.mxu0 0.0
    %844 = vmatpush1.msra.mxu0 0.0
    %845 = vmatprep.subr.mxu0 0.0
    %846 = vmatpush1.msra.mxu0 0.0
    %847 = vmatprep.subr.mxu0 0.0
    %848 = vmatpush1.msra.mxu0 0.0
    %849 = vmatprep.subr.mxu0 0.0
    %850 = vmatpush1.msra.mxu0 0.0
    %851 = vmatprep.subr.mxu0 0.0
    %852 = vmatpush1.msra.mxu0 0.0
    %853 = vmatprep.subr.mxu0 0.0
    %854 = vmatpush1.msra.mxu0 0.0
    %855 = vmatprep.mubr.f32.mxu0 0.0
    %856 = vmatmul.mubr.f32.gmra.mrb[0].mxu0 %v789
    %v857 = vpop.f32.mrb[0].mxu0
    %v858 = vadd.f32 0.0, %v857
    %v859 = vpop.f32.mrb[0].mxu0
    %860 = vdwg.mxu0
    %v862 = vrot.slane %v858, 6
    %v864 = vadd.f32 %v171, %v862
    %v865 = vxor.u32 %v864, 2147483648
    %v866 = vmul.f32 %v865, 1.442695
    %v867 = vpow.pop %v866
    %v868 = vadd.f32 %v867, 1.0
    %v869 = vrcp.pop %v868
    %v870 = vmul.f32 1.0, %v869
    %v871 = vtanh.pop %v864
    %v873 = vrot.slane %v657, 6
    %874 = vrot.lane.b32.xlu0 %v873, 32
    %v875 = vpop.permute.xlu0 %874
    %v877 = vmul.f32 %v870, %v875
    %879 = vrot.lane.b32.xlu0 %v871, 64
    %v880 = vpop.permute.xlu0 %879
    %v882 = vmul.f32 %v870, %v880
    %884 = vrot.lane.b32.xlu0 %v882, 32
    %v885 = vpop.permute.xlu0 %884
    %v887 = vadd.f32 %v877, %v885
    %v888 = vtanh.pop %v887
    %890 = vrot.lane.b32.xlu0 %v888, 64
    %v891 = vpop.permute.xlu0 %890
    %v893 = vmul.f32 %v870, %v891
    %894 = vset.pattern.permute.xlu0 5
    %895 = vperm.xlu0 %894, %v281
    %v896 = vpop.permute.xlu0 %895
    %vm897 = vcmp.eq.s32.totalorder %v896, 1
    %v899 = vrot.slane %v893, 2
    %900 = vrot.lane.b32.xlu0 %v899, 32
    %v901 = vpop.permute.xlu0 %900
    %v903 = vsel %vm897, %v901, %v651
    %v905 = vrot.slane %v887, 2
    %906 = vrot.lane.b32.xlu0 %v905, 96
    %v907 = vpop.permute.xlu0 %906
    %v909 = vsel %vm897, %v907, %v657
    %v910 = vsel %vm897, %v901, 0.0
    %911 = vst.msk [vmem:[#allocation2 + $0x4] sm:$0x3] %vm406, %v787
    %913 = vrot.lane.b32.xlu0 %v910, 32
    %v914 = vpop.permute.xlu0 %913
    %916 = vst.msk [vmem:[#allocation2 + $0xa] sm:$0x3] %vm412, %v914
    %v918 = vsel %vm182, %v780, 0
    %920 = vmatprep.subr.mxu0 0.0
    %921 = vmatpush1.msra.mxu0 %v173
    %922 = vmatprep.subr.mxu0 0.0
    %923 = vmatpush1.msra.mxu0 %v174
    %924 = vmatprep.subr.mxu0 0.0
    %925 = vmatpush1.msra.mxu0 %v175
    %926 = vmatprep.subr.mxu0 0.0
    %927 = vmatpush1.msra.mxu0 %v176
    %928 = vmatprep.subr.mxu0 0.0
    %929 = vmatpush1.msra.mxu0 0.0
    %930 = vmatprep.subr.mxu0 0.0
    %931 = vmatpush1.msra.mxu0 0.0
    %932 = vmatprep.subr.mxu0 0.0
    %933 = vmatpush1.msra.mxu0 0.0
    %934 = vmatprep.subr.mxu0 0.0
    %935 = vmatpush1.msra.mxu0 0.0
    %936 = vmatprep.subr.mxu0 0.0
    %937 = vmatpush1.msra.mxu0 0.0
    %938 = vmatprep.subr.mxu0 0.0
    %939 = vmatpush1.msra.mxu0 0.0
    %940 = vmatprep.subr.mxu0 0.0
    %941 = vmatpush1.msra.mxu0 0.0
    %942 = vmatprep.subr.mxu0 0.0
    %943 = vmatpush1.msra.mxu0 0.0
    %944 = vmatprep.subr.mxu0 0.0
    %945 = vmatpush1.msra.mxu0 0.0
    %946 = vmatprep.subr.mxu0 0.0
    %947 = vmatpush1.msra.mxu0 0.0
    %948 = vmatprep.subr.mxu0 0.0
    %949 = vmatpush1.msra.mxu0 0.0
    %950 = vmatprep.subr.mxu0 0.0
    %951 = vmatpush1.msra.mxu0 0.0
    %952 = vmatprep.subr.mxu0 0.0
    %953 = vmatpush1.msra.mxu0 0.0
    %954 = vmatprep.subr.mxu0 0.0
    %955 = vmatpush1.msra.mxu0 0.0
    %956 = vmatprep.subr.mxu0 0.0
    %957 = vmatpush1.msra.mxu0 0.0
    %958 = vmatprep.subr.mxu0 0.0
    %959 = vmatpush1.msra.mxu0 0.0
    %960 = vmatprep.subr.mxu0 0.0
    %961 = vmatpush1.msra.mxu0 0.0
    %962 = vmatprep.subr.mxu0 0.0
    %963 = vmatpush1.msra.mxu0 0.0
    %964 = vmatprep.subr.mxu0 0.0
    %965 = vmatpush1.msra.mxu0 0.0
    %966 = vmatprep.subr.mxu0 0.0
    %967 = vmatpush1.msra.mxu0 0.0
    %968 = vmatprep.subr.mxu0 0.0
    %969 = vmatpush1.msra.mxu0 0.0
    %970 = vmatprep.subr.mxu0 0.0
    %971 = vmatpush1.msra.mxu0 0.0
    %972 = vmatprep.subr.mxu0 0.0
    %973 = vmatpush1.msra.mxu0 0.0
    %974 = vmatprep.subr.mxu0 0.0
    %975 = vmatpush1.msra.mxu0 0.0
    %976 = vmatprep.subr.mxu0 0.0
    %977 = vmatpush1.msra.mxu0 0.0
    %978 = vmatprep.subr.mxu0 0.0
    %979 = vmatpush1.msra.mxu0 0.0
    %980 = vmatprep.subr.mxu0 0.0
    %981 = vmatpush1.msra.mxu0 0.0
    %982 = vmatprep.subr.mxu0 0.0
    %983 = vmatpush1.msra.mxu0 0.0
    %984 = vmatprep.mubr.f32.mxu0 0.0
    %985 = vmatmul.mubr.f32.gmra.mrb[0].mxu0 %v918
    %v986 = vpop.f32.mrb[0].mxu0
    %v987 = vadd.f32 0.0, %v986
    %v988 = vpop.f32.mrb[0].mxu0
    %989 = vdwg.mxu0
    %v991 = vrot.slane %v987, 2
    %v993 = vadd.f32 %v163, %v991
    %v994 = vxor.u32 %v993, 2147483648
    %v995 = vmul.f32 %v994, 1.442695
    %v996 = vpow.pop %v995
    %v997 = vadd.f32 %v996, 1.0
    %v998 = vrcp.pop %v997
    %v999 = vmul.f32 1.0, %v998
    %v1000 = vtanh.pop %v993
    %v1002 = vrot.slane %v786, 2
    %1003 = vrot.lane.b32.xlu0 %v1002, 32
    %v1004 = vpop.permute.xlu0 %1003
    %v1006 = vmul.f32 %v999, %v1004
    %1008 = vrot.lane.b32.xlu0 %v1000, 64
    %v1009 = vpop.permute.xlu0 %1008
    %v1011 = vmul.f32 %v999, %v1009
    %1013 = vrot.lane.b32.xlu0 %v1011, 32
    %v1014 = vpop.permute.xlu0 %1013
    %v1016 = vadd.f32 %v1006, %v1014
    %v1017 = vtanh.pop %v1016
    %1019 = vrot.lane.b32.xlu0 %v1017, 64
    %v1020 = vpop.permute.xlu0 %1019
    %v1022 = vmul.f32 %v999, %v1020
    %1023 = vset.pattern.permute.xlu0 3
    %1024 = vperm.xlu0 %1023, %v281
    %v1025 = vpop.permute.xlu0 %1024
    %vm1026 = vcmp.eq.s32.totalorder %v1025, 1
    %v1028 = vrot.slane %v1022, 6
    %1029 = vrot.lane.b32.xlu0 %v1028, 32
    %v1030 = vpop.permute.xlu0 %1029
    %v1032 = vsel %vm1026, %v1030, %v780
    %v1034 = vrot.slane %v1016, 6
    %1035 = vrot.lane.b32.xlu0 %v1034, 96
    %v1036 = vpop.permute.xlu0 %1035
    %v1038 = vsel %vm1026, %v1036, %v786
    %v1039 = vsel %vm1026, %v1030, 0.0
    %v1041 = vsel %vm182, %v903, 0
    %1043 = vmatprep.subr.mxu0 0.0
    %1044 = vmatpush1.msra.mxu0 %v177
    %1045 = vmatprep.subr.mxu0 0.0
    %1046 = vmatpush1.msra.mxu0 %v178
    %1047 = vmatprep.subr.mxu0 0.0
    %1048 = vmatpush1.msra.mxu0 %v179
    %1049 = vmatprep.subr.mxu0 0.0
    %1050 = vmatpush1.msra.mxu0 %v180
    %1051 = vmatprep.subr.mxu0 0.0
    %1052 = vmatpush1.msra.mxu0 0.0
    %1053 = vmatprep.subr.mxu0 0.0
    %1054 = vmatpush1.msra.mxu0 0.0
    %1055 = vmatprep.subr.mxu0 0.0
    %1056 = vmatpush1.msra.mxu0 0.0
    %1057 = vmatprep.subr.mxu0 0.0
    %1058 = vmatpush1.msra.mxu0 0.0
    %1059 = vmatprep.subr.mxu0 0.0
    %1060 = vmatpush1.msra.mxu0 0.0
    %1061 = vmatprep.subr.mxu0 0.0
    %1062 = vmatpush1.msra.mxu0 0.0
    %1063 = vmatprep.subr.mxu0 0.0
    %1064 = vmatpush1.msra.mxu0 0.0
    %1065 = vmatprep.subr.mxu0 0.0
    %1066 = vmatpush1.msra.mxu0 0.0
    %1067 = vmatprep.subr.mxu0 0.0
    %1068 = vmatpush1.msra.mxu0 0.0
    %1069 = vmatprep.subr.mxu0 0.0
    %1070 = vmatpush1.msra.mxu0 0.0
    %1071 = vmatprep.subr.mxu0 0.0
    %1072 = vmatpush1.msra.mxu0 0.0
    %1073 = vmatprep.subr.mxu0 0.0
    %1074 = vmatpush1.msra.mxu0 0.0
    %1075 = vmatprep.subr.mxu0 0.0
    %1076 = vmatpush1.msra.mxu0 0.0
    %1077 = vmatprep.subr.mxu0 0.0
    %1078 = vmatpush1.msra.mxu0 0.0
    %1079 = vmatprep.subr.mxu0 0.0
    %1080 = vmatpush1.msra.mxu0 0.0
    %1081 = vmatprep.subr.mxu0 0.0
    %1082 = vmatpush1.msra.mxu0 0.0
    %1083 = vmatprep.subr.mxu0 0.0
    %1084 = vmatpush1.msra.mxu0 0.0
    %1085 = vmatprep.subr.mxu0 0.0
    %1086 = vmatpush1.msra.mxu0 0.0
    %1087 = vmatprep.subr.mxu0 0.0
    %1088 = vmatpush1.msra.mxu0 0.0
    %1089 = vmatprep.subr.mxu0 0.0
    %1090 = vmatpush1.msra.mxu0 0.0
    %1091 = vmatprep.subr.mxu0 0.0
    %1092 = vmatpush1.msra.mxu0 0.0
    %1093 = vmatprep.subr.mxu0 0.0
    %1094 = vmatpush1.msra.mxu0 0.0
    %1095 = vmatprep.subr.mxu0 0.0
    %1096 = vmatpush1.msra.mxu0 0.0
    %1097 = vmatprep.subr.mxu0 0.0
    %1098 = vmatpush1.msra.mxu0 0.0
    %1099 = vmatprep.subr.mxu0 0.0
    %1100 = vmatpush1.msra.mxu0 0.0
    %1101 = vmatprep.subr.mxu0 0.0
    %1102 = vmatpush1.msra.mxu0 0.0
    %1103 = vmatprep.subr.mxu0 0.0
    %1104 = vmatpush1.msra.mxu0 0.0
    %1105 = vmatprep.subr.mxu0 0.0
    %1106 = vmatpush1.msra.mxu0 0.0
    %1107 = vmatprep.mubr.f32.mxu0 0.0
    %1108 = vmatmul.mubr.f32.gmra.mrb[0].mxu0 %v1041
    %v1109 = vpop.f32.mrb[0].mxu0
    %v1110 = vadd.f32 0.0, %v1109
    %v1111 = vpop.f32.mrb[0].mxu0
    %1112 = vdwg.mxu0
    %v1113 = vadd.f32 %v171, %v1110
    %v1114 = vxor.u32 %v1113, 2147483648
    %v1115 = vmul.f32 %v1114, 1.442695
    %v1116 = vpow.pop %v1115
    %v1117 = vadd.f32 %v1116, 1.0
    %v1118 = vrcp.pop %v1117
    %v1119 = vmul.f32 1.0, %v1118
    %v1120 = vtanh.pop %v1113
    %1122 = vrot.lane.b32.xlu0 %v909, 32
    %v1123 = vpop.permute.xlu0 %1122
    %v1125 = vmul.f32 %v1119, %v1123
    %1127 = vrot.lane.b32.xlu0 %v1120, 64
    %v1128 = vpop.permute.xlu0 %1127
    %v1130 = vmul.f32 %v1119, %v1128
    %1132 = vrot.lane.b32.xlu0 %v1130, 32
    %v1133 = vpop.permute.xlu0 %1132
    %v1135 = vadd.f32 %v1125, %v1133
    %v1136 = vtanh.pop %v1135
    %1138 = vrot.lane.b32.xlu0 %v1136, 64
    %v1139 = vpop.permute.xlu0 %1138
    %v1141 = vmul.f32 %v1119, %v1139
    %1142 = vset.pattern.permute.xlu0 4
    %1143 = vperm.xlu0 %1142, %v281
    %v1144 = vpop.permute.xlu0 %1143
    %vm1145 = vcmp.eq.s32.totalorder %v1144, 1
    %1146 = vrot.lane.b32.xlu0 %v903, 96
    %v1147 = vpop.permute.xlu0 %1146
    %v1149 = vsel %vm1145, %v1141, %v1147
    %v1150 = vsel %vm1145, %v1135, %v1123
    %v1151 = vsel %vm1145, %v1141, 0.0
    %1152 = vst.msk [vmem:[#allocation2 + $0x6] sm:$0x3] %vm406, %v1039
    %1154 = vrot.lane.b32.xlu0 %v1151, 64
    %v1155 = vpop.permute.xlu0 %1154
    %1157 = vst.msk [vmem:[#allocation2 + $0x8] sm:$0x3] %vm412, %v1155
    %v1159 = vsel %vm182, %v1032, 0
    %1161 = vmatprep.subr.mxu0 0.0
    %1162 = vmatpush1.msra.mxu0 %v173
    %1163 = vmatprep.subr.mxu0 0.0
    %1164 = vmatpush1.msra.mxu0 %v174
    %1165 = vmatprep.subr.mxu0 0.0
    %1166 = vmatpush1.msra.mxu0 %v175
    %1167 = vmatprep.subr.mxu0 0.0
    %1168 = vmatpush1.msra.mxu0 %v176
    %1169 = vmatprep.subr.mxu0 0.0
    %1170 = vmatpush1.msra.mxu0 0.0
    %1171 = vmatprep.subr.mxu0 0.0
    %1172 = vmatpush1.msra.mxu0 0.0
    %1173 = vmatprep.subr.mxu0 0.0
    %1174 = vmatpush1.msra.mxu0 0.0
    %1175 = vmatprep.subr.mxu0 0.0
    %1176 = vmatpush1.msra.mxu0 0.0
    %1177 = vmatprep.subr.mxu0 0.0
    %1178 = vmatpush1.msra.mxu0 0.0
    %1179 = vmatprep.subr.mxu0 0.0
    %1180 = vmatpush1.msra.mxu0 0.0
    %1181 = vmatprep.subr.mxu0 0.0
    %1182 = vmatpush1.msra.mxu0 0.0
    %1183 = vmatprep.subr.mxu0 0.0
    %1184 = vmatpush1.msra.mxu0 0.0
    %1185 = vmatprep.subr.mxu0 0.0
    %1186 = vmatpush1.msra.mxu0 0.0
    %1187 = vmatprep.subr.mxu0 0.0
    %1188 = vmatpush1.msra.mxu0 0.0
    %1189 = vmatprep.subr.mxu0 0.0
    %1190 = vmatpush1.msra.mxu0 0.0
    %1191 = vmatprep.subr.mxu0 0.0
    %1192 = vmatpush1.msra.mxu0 0.0
    %1193 = vmatprep.subr.mxu0 0.0
    %1194 = vmatpush1.msra.mxu0 0.0
    %1195 = vmatprep.subr.mxu0 0.0
    %1196 = vmatpush1.msra.mxu0 0.0
    %1197 = vmatprep.subr.mxu0 0.0
    %1198 = vmatpush1.msra.mxu0 0.0
    %1199 = vmatprep.subr.mxu0 0.0
    %1200 = vmatpush1.msra.mxu0 0.0
    %1201 = vmatprep.subr.mxu0 0.0
    %1202 = vmatpush1.msra.mxu0 0.0
    %1203 = vmatprep.subr.mxu0 0.0
    %1204 = vmatpush1.msra.mxu0 0.0
    %1205 = vmatprep.subr.mxu0 0.0
    %1206 = vmatpush1.msra.mxu0 0.0
    %1207 = vmatprep.subr.mxu0 0.0
    %1208 = vmatpush1.msra.mxu0 0.0
    %1209 = vmatprep.subr.mxu0 0.0
    %1210 = vmatpush1.msra.mxu0 0.0
    %1211 = vmatprep.subr.mxu0 0.0
    %1212 = vmatpush1.msra.mxu0 0.0
    %1213 = vmatprep.subr.mxu0 0.0
    %1214 = vmatpush1.msra.mxu0 0.0
    %1215 = vmatprep.subr.mxu0 0.0
    %1216 = vmatpush1.msra.mxu0 0.0
    %1217 = vmatprep.subr.mxu0 0.0
    %1218 = vmatpush1.msra.mxu0 0.0
    %1219 = vmatprep.subr.mxu0 0.0
    %1220 = vmatpush1.msra.mxu0 0.0
    %1221 = vmatprep.subr.mxu0 0.0
    %1222 = vmatpush1.msra.mxu0 0.0
    %1223 = vmatprep.subr.mxu0 0.0
    %1224 = vmatpush1.msra.mxu0 0.0
    %1225 = vmatprep.mubr.f32.mxu0 0.0
    %1226 = vmatmul.mubr.f32.gmra.mrb[0].mxu0 %v1159
    %v1227 = vpop.f32.mrb[0].mxu0
    %v1228 = vadd.f32 0.0, %v1227
    %v1229 = vpop.f32.mrb[0].mxu0
    %1230 = vdwg.mxu0
    %v1231 = vadd.f32 %v169, %v1228
    %v1232 = vxor.u32 %v1231, 2147483648
    %v1233 = vmul.f32 %v1232, 1.442695
    %v1234 = vpow.pop %v1233
    %v1235 = vadd.f32 %v1234, 1.0
    %v1236 = vrcp.pop %v1235
    %v1237 = vmul.f32 1.0, %v1236
    %v1238 = vtanh.pop %v1231
    %1240 = vrot.lane.b32.xlu0 %v1038, 32
    %v1241 = vpop.permute.xlu0 %1240
    %v1243 = vmul.f32 %v1237, %v1241
    %1245 = vrot.lane.b32.xlu0 %v1238, 64
    %v1246 = vpop.permute.xlu0 %1245
    %v1248 = vmul.f32 %v1237, %v1246
    %1250 = vrot.lane.b32.xlu0 %v1248, 32
    %v1251 = vpop.permute.xlu0 %1250
    %v1253 = vadd.f32 %v1243, %v1251
    %v1254 = vtanh.pop %v1253
    %1256 = vrot.lane.b32.xlu0 %v1254, 64
    %v1257 = vpop.permute.xlu0 %1256
    %v1259 = vmul.f32 %v1237, %v1257
    %1260 = vrot.lane.b32.xlu0 %v1032, 96
    %v1261 = vpop.permute.xlu0 %1260
    %v1263 = vsel %vm1145, %v1259, %v1261
    %v1264 = vsel %vm1145, %v1253, %v1241
    %v1265 = vsel %vm1145, %v1259, 0.0
    %1267 = vrot.lane.b32.xlu0 %v1149, 32
    %v1268 = vpop.permute.xlu0 %1267
    %v1269 = vsel %vm182, %v1268, 0
    %1271 = vmatprep.subr.mxu0 0.0
    %1272 = vmatpush1.msra.mxu0 %v177
    %1273 = vmatprep.subr.mxu0 0.0
    %1274 = vmatpush1.msra.mxu0 %v178
    %1275 = vmatprep.subr.mxu0 0.0
    %1276 = vmatpush1.msra.mxu0 %v179
    %1277 = vmatprep.subr.mxu0 0.0
    %1278 = vmatpush1.msra.mxu0 %v180
    %1279 = vmatprep.subr.mxu0 0.0
    %1280 = vmatpush1.msra.mxu0 0.0
    %1281 = vmatprep.subr.mxu0 0.0
    %1282 = vmatpush1.msra.mxu0 0.0
    %1283 = vmatprep.subr.mxu0 0.0
    %1284 = vmatpush1.msra.mxu0 0.0
    %1285 = vmatprep.subr.mxu0 0.0
    %1286 = vmatpush1.msra.mxu0 0.0
    %1287 = vmatprep.subr.mxu0 0.0
    %1288 = vmatpush1.msra.mxu0 0.0
    %1289 = vmatprep.subr.mxu0 0.0
    %1290 = vmatpush1.msra.mxu0 0.0
    %1291 = vmatprep.subr.mxu0 0.0
    %1292 = vmatpush1.msra.mxu0 0.0
    %1293 = vmatprep.subr.mxu0 0.0
    %1294 = vmatpush1.msra.mxu0 0.0
    %1295 = vmatprep.subr.mxu0 0.0
    %1296 = vmatpush1.msra.mxu0 0.0
    %1297 = vmatprep.subr.mxu0 0.0
    %1298 = vmatpush1.msra.mxu0 0.0
    %1299 = vmatprep.subr.mxu0 0.0
    %1300 = vmatpush1.msra.mxu0 0.0
    %1301 = vmatprep.subr.mxu0 0.0
    %1302 = vmatpush1.msra.mxu0 0.0
    %1303 = vmatprep.subr.mxu0 0.0
    %1304 = vmatpush1.msra.mxu0 0.0
    %1305 = vmatprep.subr.mxu0 0.0
    %1306 = vmatpush1.msra.mxu0 0.0
    %1307 = vmatprep.subr.mxu0 0.0
    %1308 = vmatpush1.msra.mxu0 0.0
    %1309 = vmatprep.subr.mxu0 0.0
    %1310 = vmatpush1.msra.mxu0 0.0
    %1311 = vmatprep.subr.mxu0 0.0
    %1312 = vmatpush1.msra.mxu0 0.0
    %1313 = vmatprep.subr.mxu0 0.0
    %1314 = vmatpush1.msra.mxu0 0.0
    %1315 = vmatprep.subr.mxu0 0.0
    %1316 = vmatpush1.msra.mxu0 0.0
    %1317 = vmatprep.subr.mxu0 0.0
    %1318 = vmatpush1.msra.mxu0 0.0
    %1319 = vmatprep.subr.mxu0 0.0
    %1320 = vmatpush1.msra.mxu0 0.0
    %1321 = vmatprep.subr.mxu0 0.0
    %1322 = vmatpush1.msra.mxu0 0.0
    %1323 = vmatprep.subr.mxu0 0.0
    %1324 = vmatpush1.msra.mxu0 0.0
    %1325 = vmatprep.subr.mxu0 0.0
    %1326 = vmatpush1.msra.mxu0 0.0
    %1327 = vmatprep.subr.mxu0 0.0
    %1328 = vmatpush1.msra.mxu0 0.0
    %1329 = vmatprep.subr.mxu0 0.0
    %1330 = vmatpush1.msra.mxu0 0.0
    %1331 = vmatprep.subr.mxu0 0.0
    %1332 = vmatpush1.msra.mxu0 0.0
    %1333 = vmatprep.subr.mxu0 0.0
    %1334 = vmatpush1.msra.mxu0 0.0
    %1335 = vmatprep.mubr.f32.mxu0 0.0
    %1336 = vmatmul.mubr.f32.gmra.mrb[0].mxu0 %v1269
    %v1337 = vpop.f32.mrb[0].mxu0
    %v1338 = vadd.f32 0.0, %v1337
    %v1339 = vpop.f32.mrb[0].mxu0
    %1340 = vdwg.mxu0
    %v1342 = vrot.slane %v1338, 2
    %v1344 = vadd.f32 %v165, %v1342
    %v1345 = vxor.u32 %v1344, 2147483648
    %v1346 = vmul.f32 %v1345, 1.442695
    %v1347 = vpow.pop %v1346
    %v1348 = vadd.f32 %v1347, 1.0
    %v1349 = vrcp.pop %v1348
    %v1350 = vmul.f32 1.0, %v1349
    %v1351 = vtanh.pop %v1344
    %v1353 = vrot.slane %v1150, 2
    %v1355 = vmul.f32 %v1350, %v1353
    %1357 = vrot.lane.b32.xlu0 %v1351, 64
    %v1358 = vpop.permute.xlu0 %1357
    %v1360 = vmul.f32 %v1350, %v1358
    %1362 = vrot.lane.b32.xlu0 %v1360, 32
    %v1363 = vpop.permute.xlu0 %1362
    %v1365 = vadd.f32 %v1355, %v1363
    %v1366 = vtanh.pop %v1365
    %1368 = vrot.lane.b32.xlu0 %v1366, 64
    %v1369 = vpop.permute.xlu0 %1368
    %v1371 = vmul.f32 %v1350, %v1369
    %v1373 = vrot.slane %v1371, 6
    %1374 = vrot.lane.b32.xlu0 %v1373, 32
    %v1375 = vpop.permute.xlu0 %1374
    %v1378 = vsel %vm1026, %v1375, %v1268
    %v1380 = vrot.slane %v1365, 6
    %1381 = vrot.lane.b32.xlu0 %v1380, 96
    %v1382 = vpop.permute.xlu0 %1381
    %1384 = vrot.lane.b32.xlu0 %v1150, 96
    %v1385 = vpop.permute.xlu0 %1384
    %v1387 = vsel %vm1026, %v1382, %v1385
    %v1388 = vsel %vm1026, %v1375, 0.0
    %1390 = vrot.lane.b32.xlu0 %v1265, 32
    %v1391 = vpop.permute.xlu0 %1390
    %1393 = vst.msk [vmem:[#allocation2 + $0x8] sm:$0x3] %vm406, %v1391
    %1395 = vrot.lane.b32.xlu0 %v1388, 32
    %v1396 = vpop.permute.xlu0 %1395
    %1398 = vst.msk [vmem:[#allocation2 + $0x6] sm:$0x3] %vm412, %v1396
    %1400 = vrot.lane.b32.xlu0 %v1263, 32
    %v1401 = vpop.permute.xlu0 %1400
    %v1402 = vsel %vm182, %v1401, 0
    %1404 = vmatprep.subr.mxu0 0.0
    %1405 = vmatpush1.msra.mxu0 %v173
    %1406 = vmatprep.subr.mxu0 0.0
    %1407 = vmatpush1.msra.mxu0 %v174
    %1408 = vmatprep.subr.mxu0 0.0
    %1409 = vmatpush1.msra.mxu0 %v175
    %1410 = vmatprep.subr.mxu0 0.0
    %1411 = vmatpush1.msra.mxu0 %v176
    %1412 = vmatprep.subr.mxu0 0.0
    %1413 = vmatpush1.msra.mxu0 0.0
    %1414 = vmatprep.subr.mxu0 0.0
    %1415 = vmatpush1.msra.mxu0 0.0
    %1416 = vmatprep.subr.mxu0 0.0
    %1417 = vmatpush1.msra.mxu0 0.0
    %1418 = vmatprep.subr.mxu0 0.0
    %1419 = vmatpush1.msra.mxu0 0.0
    %1420 = vmatprep.subr.mxu0 0.0
    %1421 = vmatpush1.msra.mxu0 0.0
    %1422 = vmatprep.subr.mxu0 0.0
    %1423 = vmatpush1.msra.mxu0 0.0
    %1424 = vmatprep.subr.mxu0 0.0
    %1425 = vmatpush1.msra.mxu0 0.0
    %1426 = vmatprep.subr.mxu0 0.0
    %1427 = vmatpush1.msra.mxu0 0.0
    %1428 = vmatprep.subr.mxu0 0.0
    %1429 = vmatpush1.msra.mxu0 0.0
    %1430 = vmatprep.subr.mxu0 0.0
    %1431 = vmatpush1.msra.mxu0 0.0
    %1432 = vmatprep.subr.mxu0 0.0
    %1433 = vmatpush1.msra.mxu0 0.0
    %1434 = vmatprep.subr.mxu0 0.0
    %1435 = vmatpush1.msra.mxu0 0.0
    %1436 = vmatprep.subr.mxu0 0.0
    %1437 = vmatpush1.msra.mxu0 0.0
    %1438 = vmatprep.subr.mxu0 0.0
    %1439 = vmatpush1.msra.mxu0 0.0
    %1440 = vmatprep.subr.mxu0 0.0
    %1441 = vmatpush1.msra.mxu0 0.0
    %1442 = vmatprep.subr.mxu0 0.0
    %1443 = vmatpush1.msra.mxu0 0.0
    %1444 = vmatprep.subr.mxu0 0.0
    %1445 = vmatpush1.msra.mxu0 0.0
    %1446 = vmatprep.subr.mxu0 0.0
    %1447 = vmatpush1.msra.mxu0 0.0
    %1448 = vmatprep.subr.mxu0 0.0
    %1449 = vmatpush1.msra.mxu0 0.0
    %1450 = vmatprep.subr.mxu0 0.0
    %1451 = vmatpush1.msra.mxu0 0.0
    %1452 = vmatprep.subr.mxu0 0.0
    %1453 = vmatpush1.msra.mxu0 0.0
    %1454 = vmatprep.subr.mxu0 0.0
    %1455 = vmatpush1.msra.mxu0 0.0
    %1456 = vmatprep.subr.mxu0 0.0
    %1457 = vmatpush1.msra.mxu0 0.0
    %1458 = vmatprep.subr.mxu0 0.0
    %1459 = vmatpush1.msra.mxu0 0.0
    %1460 = vmatprep.subr.mxu0 0.0
    %1461 = vmatpush1.msra.mxu0 0.0
    %1462 = vmatprep.subr.mxu0 0.0
    %1463 = vmatpush1.msra.mxu0 0.0
    %1464 = vmatprep.subr.mxu0 0.0
    %1465 = vmatpush1.msra.mxu0 0.0
    %1466 = vmatprep.subr.mxu0 0.0
    %1467 = vmatpush1.msra.mxu0 0.0
    %1468 = vmatprep.mubr.f32.mxu0 0.0
    %1469 = vmatmul.mubr.f32.gmra.mrb[0].mxu0 %v1402
    %v1470 = vpop.f32.mrb[0].mxu0
    %v1471 = vadd.f32 0.0, %v1470
    %v1472 = vpop.f32.mrb[0].mxu0
    %1473 = vdwg.mxu0
    %v1475 = vrot.slane %v1471, 6
    %v1477 = vadd.f32 %v169, %v1475
    %v1478 = vxor.u32 %v1477, 2147483648
    %v1479 = vmul.f32 %v1478, 1.442695
    %v1480 = vpow.pop %v1479
    %v1481 = vadd.f32 %v1480, 1.0
    %v1482 = vrcp.pop %v1481
    %v1483 = vmul.f32 1.0, %v1482
    %v1484 = vtanh.pop %v1477
    %v1486 = vrot.slane %v1264, 6
    %v1488 = vmul.f32 %v1483, %v1486
    %1490 = vrot.lane.b32.xlu0 %v1484, 64
    %v1491 = vpop.permute.xlu0 %1490
    %v1493 = vmul.f32 %v1483, %v1491
    %1495 = vrot.lane.b32.xlu0 %v1493, 32
    %v1496 = vpop.permute.xlu0 %1495
    %v1498 = vadd.f32 %v1488, %v1496
    %v1499 = vtanh.pop %v1498
    %1501 = vrot.lane.b32.xlu0 %v1499, 64
    %v1502 = vpop.permute.xlu0 %1501
    %v1504 = vmul.f32 %v1483, %v1502
    %v1506 = vrot.slane %v1504, 2
    %1507 = vrot.lane.b32.xlu0 %v1506, 32
    %v1508 = vpop.permute.xlu0 %1507
    %v1511 = vsel %vm897, %v1508, %v1401
    %v1513 = vrot.slane %v1498, 2
    %1514 = vrot.lane.b32.xlu0 %v1513, 96
    %v1515 = vpop.permute.xlu0 %1514
    %1517 = vrot.lane.b32.xlu0 %v1264, 96
    %v1518 = vpop.permute.xlu0 %1517
    %v1520 = vsel %vm897, %v1515, %v1518
    %v1521 = vsel %vm897, %v1508, 0.0
    %v1523 = vsel %vm182, %v1378, 0
    %1525 = vmatprep.subr.mxu0 0.0
    %1526 = vmatpush1.msra.mxu0 %v177
    %1527 = vmatprep.subr.mxu0 0.0
    %1528 = vmatpush1.msra.mxu0 %v178
    %1529 = vmatprep.subr.mxu0 0.0
    %1530 = vmatpush1.msra.mxu0 %v179
    %1531 = vmatprep.subr.mxu0 0.0
    %1532 = vmatpush1.msra.mxu0 %v180
    %1533 = vmatprep.subr.mxu0 0.0
    %1534 = vmatpush1.msra.mxu0 0.0
    %1535 = vmatprep.subr.mxu0 0.0
    %1536 = vmatpush1.msra.mxu0 0.0
    %1537 = vmatprep.subr.mxu0 0.0
    %1538 = vmatpush1.msra.mxu0 0.0
    %1539 = vmatprep.subr.mxu0 0.0
    %1540 = vmatpush1.msra.mxu0 0.0
    %1541 = vmatprep.subr.mxu0 0.0
    %1542 = vmatpush1.msra.mxu0 0.0
    %1543 = vmatprep.subr.mxu0 0.0
    %1544 = vmatpush1.msra.mxu0 0.0
    %1545 = vmatprep.subr.mxu0 0.0
    %1546 = vmatpush1.msra.mxu0 0.0
    %1547 = vmatprep.subr.mxu0 0.0
    %1548 = vmatpush1.msra.mxu0 0.0
    %1549 = vmatprep.subr.mxu0 0.0
    %1550 = vmatpush1.msra.mxu0 0.0
    %1551 = vmatprep.subr.mxu0 0.0
    %1552 = vmatpush1.msra.mxu0 0.0
    %1553 = vmatprep.subr.mxu0 0.0
    %1554 = vmatpush1.msra.mxu0 0.0
    %1555 = vmatprep.subr.mxu0 0.0
    %1556 = vmatpush1.msra.mxu0 0.0
    %1557 = vmatprep.subr.mxu0 0.0
    %1558 = vmatpush1.msra.mxu0 0.0
    %1559 = vmatprep.subr.mxu0 0.0
    %1560 = vmatpush1.msra.mxu0 0.0
    %1561 = vmatprep.subr.mxu0 0.0
    %1562 = vmatpush1.msra.mxu0 0.0
    %1563 = vmatprep.subr.mxu0 0.0
    %1564 = vmatpush1.msra.mxu0 0.0
    %1565 = vmatprep.subr.mxu0 0.0
    %1566 = vmatpush1.msra.mxu0 0.0
    %1567 = vmatprep.subr.mxu0 0.0
    %1568 = vmatpush1.msra.mxu0 0.0
    %1569 = vmatprep.subr.mxu0 0.0
    %1570 = vmatpush1.msra.mxu0 0.0
    %1571 = vmatprep.subr.mxu0 0.0
    %1572 = vmatpush1.msra.mxu0 0.0
    %1573 = vmatprep.subr.mxu0 0.0
    %1574 = vmatpush1.msra.mxu0 0.0
    %1575 = vmatprep.subr.mxu0 0.0
    %1576 = vmatpush1.msra.mxu0 0.0
    %1577 = vmatprep.subr.mxu0 0.0
    %1578 = vmatpush1.msra.mxu0 0.0
    %1579 = vmatprep.subr.mxu0 0.0
    %1580 = vmatpush1.msra.mxu0 0.0
    %1581 = vmatprep.subr.mxu0 0.0
    %1582 = vmatpush1.msra.mxu0 0.0
    %1583 = vmatprep.subr.mxu0 0.0
    %1584 = vmatpush1.msra.mxu0 0.0
    %1585 = vmatprep.subr.mxu0 0.0
    %1586 = vmatpush1.msra.mxu0 0.0
    %1587 = vmatprep.subr.mxu0 0.0
    %1588 = vmatpush1.msra.mxu0 0.0
    %1589 = vmatprep.mubr.f32.mxu0 0.0
    %1590 = vmatmul.mubr.f32.gmra.mrb[0].mxu0 %v1523
    %v1591 = vpop.f32.mrb[0].mxu0
    %v1592 = vadd.f32 0.0, %v1591
    %v1593 = vpop.f32.mrb[0].mxu0
    %1594 = vdwg.mxu0
    %v1596 = vrot.slane %v1592, 4
    %v1598 = vadd.f32 %v165, %v1596
    %v1599 = vxor.u32 %v1598, 2147483648
    %v1600 = vmul.f32 %v1599, 1.442695
    %v1601 = vpow.pop %v1600
    %v1602 = vadd.f32 %v1601, 1.0
    %v1603 = vrcp.pop %v1602
    %v1604 = vmul.f32 1.0, %v1603
    %v1605 = vtanh.pop %v1598
    %v1607 = vrot.slane %v1387, 4
    %1608 = vrot.lane.b32.xlu0 %v1607, 32
    %v1609 = vpop.permute.xlu0 %1608
    %v1611 = vmul.f32 %v1604, %v1609
    %1613 = vrot.lane.b32.xlu0 %v1605, 64
    %v1614 = vpop.permute.xlu0 %1613
    %v1616 = vmul.f32 %v1604, %v1614
    %1618 = vrot.lane.b32.xlu0 %v1616, 32
    %v1619 = vpop.permute.xlu0 %1618
    %v1621 = vadd.f32 %v1611, %v1619
    %v1622 = vtanh.pop %v1621
    %1624 = vrot.lane.b32.xlu0 %v1622, 64
    %v1625 = vpop.permute.xlu0 %1624
    %v1627 = vmul.f32 %v1604, %v1625
    %v1629 = vrot.slane %v1627, 4
    %1630 = vrot.lane.b32.xlu0 %v1629, 32
    %v1631 = vpop.permute.xlu0 %1630
    %v1633 = vsel %vm774, %v1631, %v1378
    %v1635 = vrot.slane %v1621, 4
    %1636 = vrot.lane.b32.xlu0 %v1635, 96
    %v1637 = vpop.permute.xlu0 %1636
    %v1639 = vsel %vm774, %v1637, %v1387
    %v1640 = vsel %vm774, %v1631, 0.0
    %1641 = vst.msk [vmem:[#allocation2 + $0xa] sm:$0x3] %vm406, %v1521
    %1643 = vrot.lane.b32.xlu0 %v1640, 32
    %v1644 = vpop.permute.xlu0 %1643
    %1646 = vst.msk [vmem:[#allocation2 + $0x4] sm:$0x3] %vm412, %v1644
    %v1648 = vsel %vm182, %v1511, 0
    %1650 = vmatprep.subr.mxu0 0.0
    %1651 = vmatpush1.msra.mxu0 %v173
    %1652 = vmatprep.subr.mxu0 0.0
    %1653 = vmatpush1.msra.mxu0 %v174
    %1654 = vmatprep.subr.mxu0 0.0
    %1655 = vmatpush1.msra.mxu0 %v175
    %1656 = vmatprep.subr.mxu0 0.0
    %1657 = vmatpush1.msra.mxu0 %v176
    %1658 = vmatprep.subr.mxu0 0.0
    %1659 = vmatpush1.msra.mxu0 0.0
    %1660 = vmatprep.subr.mxu0 0.0
    %1661 = vmatpush1.msra.mxu0 0.0
    %1662 = vmatprep.subr.mxu0 0.0
    %1663 = vmatpush1.msra.mxu0 0.0
    %1664 = vmatprep.subr.mxu0 0.0
    %1665 = vmatpush1.msra.mxu0 0.0
    %1666 = vmatprep.subr.mxu0 0.0
    %1667 = vmatpush1.msra.mxu0 0.0
    %1668 = vmatprep.subr.mxu0 0.0
    %1669 = vmatpush1.msra.mxu0 0.0
    %1670 = vmatprep.subr.mxu0 0.0
    %1671 = vmatpush1.msra.mxu0 0.0
    %1672 = vmatprep.subr.mxu0 0.0
    %1673 = vmatpush1.msra.mxu0 0.0
    %1674 = vmatprep.subr.mxu0 0.0
    %1675 = vmatpush1.msra.mxu0 0.0
    %1676 = vmatprep.subr.mxu0 0.0
    %1677 = vmatpush1.msra.mxu0 0.0
    %1678 = vmatprep.subr.mxu0 0.0
    %1679 = vmatpush1.msra.mxu0 0.0
    %1680 = vmatprep.subr.mxu0 0.0
    %1681 = vmatpush1.msra.mxu0 0.0
    %1682 = vmatprep.subr.mxu0 0.0
    %1683 = vmatpush1.msra.mxu0 0.0
    %1684 = vmatprep.subr.mxu0 0.0
    %1685 = vmatpush1.msra.mxu0 0.0
    %1686 = vmatprep.subr.mxu0 0.0
    %1687 = vmatpush1.msra.mxu0 0.0
    %1688 = vmatprep.subr.mxu0 0.0
    %1689 = vmatpush1.msra.mxu0 0.0
    %1690 = vmatprep.subr.mxu0 0.0
    %1691 = vmatpush1.msra.mxu0 0.0
    %1692 = vmatprep.subr.mxu0 0.0
    %1693 = vmatpush1.msra.mxu0 0.0
    %1694 = vmatprep.subr.mxu0 0.0
    %1695 = vmatpush1.msra.mxu0 0.0
    %1696 = vmatprep.subr.mxu0 0.0
    %1697 = vmatpush1.msra.mxu0 0.0
    %1698 = vmatprep.subr.mxu0 0.0
    %1699 = vmatpush1.msra.mxu0 0.0
    %1700 = vmatprep.subr.mxu0 0.0
    %1701 = vmatpush1.msra.mxu0 0.0
    %1702 = vmatprep.subr.mxu0 0.0
    %1703 = vmatpush1.msra.mxu0 0.0
    %1704 = vmatprep.subr.mxu0 0.0
    %1705 = vmatpush1.msra.mxu0 0.0
    %1706 = vmatprep.subr.mxu0 0.0
    %1707 = vmatpush1.msra.mxu0 0.0
    %1708 = vmatprep.subr.mxu0 0.0
    %1709 = vmatpush1.msra.mxu0 0.0
    %1710 = vmatprep.subr.mxu0 0.0
    %1711 = vmatpush1.msra.mxu0 0.0
    %1712 = vmatprep.subr.mxu0 0.0
    %1713 = vmatpush1.msra.mxu0 0.0
    %1714 = vmatprep.mubr.f32.mxu0 0.0
    %1715 = vmatmul.mubr.f32.gmra.mrb[0].mxu0 %v1648
    %v1716 = vpop.f32.mrb[0].mxu0
    %v1717 = vadd.f32 0.0, %v1716
    %v1718 = vpop.f32.mrb[0].mxu0
    %1719 = vdwg.mxu0
    %v1721 = vrot.slane %v1717, 4
    %v1723 = vadd.f32 %v169, %v1721
    %v1724 = vxor.u32 %v1723, 2147483648
    %v1725 = vmul.f32 %v1724, 1.442695
    %v1726 = vpow.pop %v1725
    %v1727 = vadd.f32 %v1726, 1.0
    %v1728 = vrcp.pop %v1727
    %v1729 = vmul.f32 1.0, %v1728
    %v1730 = vtanh.pop %v1723
    %v1732 = vrot.slane %v1520, 4
    %1733 = vrot.lane.b32.xlu0 %v1732, 32
    %v1734 = vpop.permute.xlu0 %1733
    %v1736 = vmul.f32 %v1729, %v1734
    %1738 = vrot.lane.b32.xlu0 %v1730, 64
    %v1739 = vpop.permute.xlu0 %1738
    %v1741 = vmul.f32 %v1729, %v1739
    %1743 = vrot.lane.b32.xlu0 %v1741, 32
    %v1744 = vpop.permute.xlu0 %1743
    %v1746 = vadd.f32 %v1736, %v1744
    %v1747 = vtanh.pop %v1746
    %1749 = vrot.lane.b32.xlu0 %v1747, 64
    %v1750 = vpop.permute.xlu0 %1749
    %v1752 = vmul.f32 %v1729, %v1750
    %v1754 = vrot.slane %v1752, 4
    %1755 = vrot.lane.b32.xlu0 %v1754, 32
    %v1756 = vpop.permute.xlu0 %1755
    %v1758 = vsel %vm645, %v1756, %v1511
    %v1760 = vrot.slane %v1746, 4
    %1761 = vrot.lane.b32.xlu0 %v1760, 96
    %v1762 = vpop.permute.xlu0 %1761
    %v1764 = vsel %vm645, %v1762, %v1520
    %v1765 = vsel %vm645, %v1756, 0.0
    %v1767 = vsel %vm182, %v1633, 0
    %1769 = vmatprep.subr.mxu0 0.0
    %1770 = vmatpush1.msra.mxu0 %v177
    %1771 = vmatprep.subr.mxu0 0.0
    %1772 = vmatpush1.msra.mxu0 %v178
    %1773 = vmatprep.subr.mxu0 0.0
    %1774 = vmatpush1.msra.mxu0 %v179
    %1775 = vmatprep.subr.mxu0 0.0
    %1776 = vmatpush1.msra.mxu0 %v180
    %1777 = vmatprep.subr.mxu0 0.0
    %1778 = vmatpush1.msra.mxu0 0.0
    %1779 = vmatprep.subr.mxu0 0.0
    %1780 = vmatpush1.msra.mxu0 0.0
    %1781 = vmatprep.subr.mxu0 0.0
    %1782 = vmatpush1.msra.mxu0 0.0
    %1783 = vmatprep.subr.mxu0 0.0
    %1784 = vmatpush1.msra.mxu0 0.0
    %1785 = vmatprep.subr.mxu0 0.0
    %1786 = vmatpush1.msra.mxu0 0.0
    %1787 = vmatprep.subr.mxu0 0.0
    %1788 = vmatpush1.msra.mxu0 0.0
    %1789 = vmatprep.subr.mxu0 0.0
    %1790 = vmatpush1.msra.mxu0 0.0
    %1791 = vmatprep.subr.mxu0 0.0
    %1792 = vmatpush1.msra.mxu0 0.0
    %1793 = vmatprep.subr.mxu0 0.0
    %1794 = vmatpush1.msra.mxu0 0.0
    %1795 = vmatprep.subr.mxu0 0.0
    %1796 = vmatpush1.msra.mxu0 0.0
    %1797 = vmatprep.subr.mxu0 0.0
    %1798 = vmatpush1.msra.mxu0 0.0
    %1799 = vmatprep.subr.mxu0 0.0
    %1800 = vmatpush1.msra.mxu0 0.0
    %1801 = vmatprep.subr.mxu0 0.0
    %1802 = vmatpush1.msra.mxu0 0.0
    %1803 = vmatprep.subr.mxu0 0.0
    %1804 = vmatpush1.msra.mxu0 0.0
    %1805 = vmatprep.subr.mxu0 0.0
    %1806 = vmatpush1.msra.mxu0 0.0
    %1807 = vmatprep.subr.mxu0 0.0
    %1808 = vmatpush1.msra.mxu0 0.0
    %1809 = vmatprep.subr.mxu0 0.0
    %1810 = vmatpush1.msra.mxu0 0.0
    %1811 = vmatprep.subr.mxu0 0.0
    %1812 = vmatpush1.msra.mxu0 0.0
    %1813 = vmatprep.subr.mxu0 0.0
    %1814 = vmatpush1.msra.mxu0 0.0
    %1815 = vmatprep.subr.mxu0 0.0
    %1816 = vmatpush1.msra.mxu0 0.0
    %1817 = vmatprep.subr.mxu0 0.0
    %1818 = vmatpush1.msra.mxu0 0.0
    %1819 = vmatprep.subr.mxu0 0.0
    %1820 = vmatpush1.msra.mxu0 0.0
    %1821 = vmatprep.subr.mxu0 0.0
    %1822 = vmatpush1.msra.mxu0 0.0
    %1823 = vmatprep.subr.mxu0 0.0
    %1824 = vmatpush1.msra.mxu0 0.0
    %1825 = vmatprep.subr.mxu0 0.0
    %1826 = vmatpush1.msra.mxu0 0.0
    %1827 = vmatprep.subr.mxu0 0.0
    %1828 = vmatpush1.msra.mxu0 0.0
    %1829 = vmatprep.subr.mxu0 0.0
    %1830 = vmatpush1.msra.mxu0 0.0
    %1831 = vmatprep.subr.mxu0 0.0
    %1832 = vmatpush1.msra.mxu0 0.0
    %1833 = vmatprep.mubr.f32.mxu0 0.0
    %1834 = vmatmul.mubr.f32.gmra.mrb[0].mxu0 %v1767
    %v1835 = vpop.f32.mrb[0].mxu0
    %v1836 = vadd.f32 0.0, %v1835
    %v1837 = vpop.f32.mrb[0].mxu0
    %1838 = vdwg.mxu0
    %v1840 = vrot.slane %v1836, 6
    %v1842 = vadd.f32 %v165, %v1840
    %v1843 = vxor.u32 %v1842, 2147483648
    %v1844 = vmul.f32 %v1843, 1.442695
    %v1845 = vpow.pop %v1844
    %v1846 = vadd.f32 %v1845, 1.0
    %v1847 = vrcp.pop %v1846
    %v1848 = vmul.f32 1.0, %v1847
    %v1849 = vtanh.pop %v1842
    %v1851 = vrot.slane %v1639, 6
    %1852 = vrot.lane.b32.xlu0 %v1851, 32
    %v1853 = vpop.permute.xlu0 %1852
    %v1855 = vmul.f32 %v1848, %v1853
    %1857 = vrot.lane.b32.xlu0 %v1849, 64
    %v1858 = vpop.permute.xlu0 %1857
    %v1860 = vmul.f32 %v1848, %v1858
    %1862 = vrot.lane.b32.xlu0 %v1860, 32
    %v1863 = vpop.permute.xlu0 %1862
    %v1865 = vadd.f32 %v1855, %v1863
    %v1866 = vtanh.pop %v1865
    %1868 = vrot.lane.b32.xlu0 %v1866, 64
    %v1869 = vpop.permute.xlu0 %1868
    %v1871 = vmul.f32 %v1848, %v1869
    %v1873 = vrot.slane %v1871, 2
    %1874 = vrot.lane.b32.xlu0 %v1873, 32
    %v1875 = vpop.permute.xlu0 %1874
    %v1877 = vsel %vm520, %v1875, %v1633
    %v1879 = vrot.slane %v1865, 2
    %1880 = vrot.lane.b32.xlu0 %v1879, 96
    %v1881 = vpop.permute.xlu0 %1880
    %v1883 = vsel %vm520, %v1881, %v1639
    %v1884 = vsel %vm520, %v1875, 0.0
    %1885 = vst.msk [vmem:[#allocation2 + $0xc] sm:$0x3] %vm406, %v1765
    %1887 = vrot.lane.b32.xlu0 %v1884, 32
    %v1888 = vpop.permute.xlu0 %1887
    %1890 = vst.msk [vmem:[#allocation2 + $0x2] sm:$0x3] %vm412, %v1888
    %v1892 = vsel %vm182, %v1758, 0
    %1894 = vmatprep.subr.mxu0 0.0
    %1895 = vmatpush1.msra.mxu0 %v173
    %1896 = vmatprep.subr.mxu0 0.0
    %1897 = vmatpush1.msra.mxu0 %v174
    %1898 = vmatprep.subr.mxu0 0.0
    %1899 = vmatpush1.msra.mxu0 %v175
    %1900 = vmatprep.subr.mxu0 0.0
    %1901 = vmatpush1.msra.mxu0 %v176
    %1902 = vmatprep.subr.mxu0 0.0
    %1903 = vmatpush1.msra.mxu0 0.0
    %1904 = vmatprep.subr.mxu0 0.0
    %1905 = vmatpush1.msra.mxu0 0.0
    %1906 = vmatprep.subr.mxu0 0.0
    %1907 = vmatpush1.msra.mxu0 0.0
    %1908 = vmatprep.subr.mxu0 0.0
    %1909 = vmatpush1.msra.mxu0 0.0
    %1910 = vmatprep.subr.mxu0 0.0
    %1911 = vmatpush1.msra.mxu0 0.0
    %1912 = vmatprep.subr.mxu0 0.0
    %1913 = vmatpush1.msra.mxu0 0.0
    %1914 = vmatprep.subr.mxu0 0.0
    %1915 = vmatpush1.msra.mxu0 0.0
    %1916 = vmatprep.subr.mxu0 0.0
    %1917 = vmatpush1.msra.mxu0 0.0
    %1918 = vmatprep.subr.mxu0 0.0
    %1919 = vmatpush1.msra.mxu0 0.0
    %1920 = vmatprep.subr.mxu0 0.0
    %1921 = vmatpush1.msra.mxu0 0.0
    %1922 = vmatprep.subr.mxu0 0.0
    %1923 = vmatpush1.msra.mxu0 0.0
    %1924 = vmatprep.subr.mxu0 0.0
    %1925 = vmatpush1.msra.mxu0 0.0
    %1926 = vmatprep.subr.mxu0 0.0
    %1927 = vmatpush1.msra.mxu0 0.0
    %1928 = vmatprep.subr.mxu0 0.0
    %1929 = vmatpush1.msra.mxu0 0.0
    %1930 = vmatprep.subr.mxu0 0.0
    %1931 = vmatpush1.msra.mxu0 0.0
    %1932 = vmatprep.subr.mxu0 0.0
    %1933 = vmatpush1.msra.mxu0 0.0
    %1934 = vmatprep.subr.mxu0 0.0
    %1935 = vmatpush1.msra.mxu0 0.0
    %1936 = vmatprep.subr.mxu0 0.0
    %1937 = vmatpush1.msra.mxu0 0.0
    %1938 = vmatprep.subr.mxu0 0.0
    %1939 = vmatpush1.msra.mxu0 0.0
    %1940 = vmatprep.subr.mxu0 0.0
    %1941 = vmatpush1.msra.mxu0 0.0
    %1942 = vmatprep.subr.mxu0 0.0
    %1943 = vmatpush1.msra.mxu0 0.0
    %1944 = vmatprep.subr.mxu0 0.0
    %1945 = vmatpush1.msra.mxu0 0.0
    %1946 = vmatprep.subr.mxu0 0.0
    %1947 = vmatpush1.msra.mxu0 0.0
    %1948 = vmatprep.subr.mxu0 0.0
    %1949 = vmatpush1.msra.mxu0 0.0
    %1950 = vmatprep.subr.mxu0 0.0
    %1951 = vmatpush1.msra.mxu0 0.0
    %1952 = vmatprep.subr.mxu0 0.0
    %1953 = vmatpush1.msra.mxu0 0.0
    %1954 = vmatprep.subr.mxu0 0.0
    %1955 = vmatpush1.msra.mxu0 0.0
    %1956 = vmatprep.subr.mxu0 0.0
    %1957 = vmatpush1.msra.mxu0 0.0
    %1958 = vmatprep.mubr.f32.mxu0 0.0
    %1959 = vmatmul.mubr.f32.gmra.mrb[0].mxu0 %v1892
    %v1960 = vpop.f32.mrb[0].mxu0
    %v1961 = vadd.f32 0.0, %v1960
    %v1962 = vpop.f32.mrb[0].mxu0
    %1963 = vdwg.mxu0
    %v1965 = vrot.slane %v1961, 2
    %v1967 = vadd.f32 %v169, %v1965
    %v1968 = vxor.u32 %v1967, 2147483648
    %v1969 = vmul.f32 %v1968, 1.442695
    %v1970 = vpow.pop %v1969
    %v1971 = vadd.f32 %v1970, 1.0
    %v1972 = vrcp.pop %v1971
    %v1973 = vmul.f32 1.0, %v1972
    %v1974 = vtanh.pop %v1967
    %v1976 = vrot.slane %v1764, 2
    %1977 = vrot.lane.b32.xlu0 %v1976, 32
    %v1978 = vpop.permute.xlu0 %1977
    %v1980 = vmul.f32 %v1973, %v1978
    %1982 = vrot.lane.b32.xlu0 %v1974, 64
    %v1983 = vpop.permute.xlu0 %1982
    %v1985 = vmul.f32 %v1973, %v1983
    %1987 = vrot.lane.b32.xlu0 %v1985, 32
    %v1988 = vpop.permute.xlu0 %1987
    %v1990 = vadd.f32 %v1980, %v1988
    %v1991 = vtanh.pop %v1990
    %1993 = vrot.lane.b32.xlu0 %v1991, 64
    %v1994 = vpop.permute.xlu0 %1993
    %v1996 = vmul.f32 %v1973, %v1994
    %v1998 = vrot.slane %v1996, 6
    %1999 = vrot.lane.b32.xlu0 %v1998, 32
    %v2000 = vpop.permute.xlu0 %1999
    %v2002 = vsel %vm389, %v2000, 0.0
    %v2004 = vsel %vm182, %v1877, 0
    %2006 = vmatprep.subr.mxu0 0.0
    %2007 = vmatpush1.msra.mxu0 %v177
    %2008 = vmatprep.subr.mxu0 0.0
    %2009 = vmatpush1.msra.mxu0 %v178
    %2010 = vmatprep.subr.mxu0 0.0
    %2011 = vmatpush1.msra.mxu0 %v179
    %2012 = vmatprep.subr.mxu0 0.0
    %2013 = vmatpush1.msra.mxu0 %v180
    %2014 = vmatprep.subr.mxu0 0.0
    %2015 = vmatpush1.msra.mxu0 0.0
    %2016 = vmatprep.subr.mxu0 0.0
    %2017 = vmatpush1.msra.mxu0 0.0
    %2018 = vmatprep.subr.mxu0 0.0
    %2019 = vmatpush1.msra.mxu0 0.0
    %2020 = vmatprep.subr.mxu0 0.0
    %2021 = vmatpush1.msra.mxu0 0.0
    %2022 = vmatprep.subr.mxu0 0.0
    %2023 = vmatpush1.msra.mxu0 0.0
    %2024 = vmatprep.subr.mxu0 0.0
    %2025 = vmatpush1.msra.mxu0 0.0
    %2026 = vmatprep.subr.mxu0 0.0
    %2027 = vmatpush1.msra.mxu0 0.0
    %2028 = vmatprep.subr.mxu0 0.0
    %2029 = vmatpush1.msra.mxu0 0.0
    %2030 = vmatprep.subr.mxu0 0.0
    %2031 = vmatpush1.msra.mxu0 0.0
    %2032 = vmatprep.subr.mxu0 0.0
    %2033 = vmatpush1.msra.mxu0 0.0
    %2034 = vmatprep.subr.mxu0 0.0
    %2035 = vmatpush1.msra.mxu0 0.0
    %2036 = vmatprep.subr.mxu0 0.0
    %2037 = vmatpush1.msra.mxu0 0.0
    %2038 = vmatprep.subr.mxu0 0.0
    %2039 = vmatpush1.msra.mxu0 0.0
    %2040 = vmatprep.subr.mxu0 0.0
    %2041 = vmatpush1.msra.mxu0 0.0
    %2042 = vmatprep.subr.mxu0 0.0
    %2043 = vmatpush1.msra.mxu0 0.0
    %2044 = vmatprep.subr.mxu0 0.0
    %2045 = vmatpush1.msra.mxu0 0.0
    %2046 = vmatprep.subr.mxu0 0.0
    %2047 = vmatpush1.msra.mxu0 0.0
    %2048 = vmatprep.subr.mxu0 0.0
    %2049 = vmatpush1.msra.mxu0 0.0
    %2050 = vmatprep.subr.mxu0 0.0
    %2051 = vmatpush1.msra.mxu0 0.0
    %2052 = vmatprep.subr.mxu0 0.0
    %2053 = vmatpush1.msra.mxu0 0.0
    %2054 = vmatprep.subr.mxu0 0.0
    %2055 = vmatpush1.msra.mxu0 0.0
    %2056 = vmatprep.subr.mxu0 0.0
    %2057 = vmatpush1.msra.mxu0 0.0
    %2058 = vmatprep.subr.mxu0 0.0
    %2059 = vmatpush1.msra.mxu0 0.0
    %2060 = vmatprep.subr.mxu0 0.0
    %2061 = vmatpush1.msra.mxu0 0.0
    %2062 = vmatprep.subr.mxu0 0.0
    %2063 = vmatpush1.msra.mxu0 0.0
    %2064 = vmatprep.subr.mxu0 0.0
    %2065 = vmatpush1.msra.mxu0 0.0
    %2066 = vmatprep.subr.mxu0 0.0
    %2067 = vmatpush1.msra.mxu0 0.0
    %2068 = vmatprep.subr.mxu0 0.0
    %2069 = vmatpush1.msra.mxu0 0.0
    %2070 = vmatprep.mubr.f32.mxu0 0.0
    %2071 = vmatmul.mubr.f32.gmra.mrb[0].mxu0 %v2004
    %v2072 = vpop.f32.mrb[0].mxu0
    %v2073 = vadd.f32 0.0, %v2072
    %v2074 = vpop.f32.mrb[0].mxu0
    %2075 = vdwg.mxu0
    %v2076 = vadd.f32 %v165, %v2073
    %v2077 = vxor.u32 %v2076, 2147483648
    %v2078 = vmul.f32 %v2077, 1.442695
    %v2079 = vpow.pop %v2078
    %v2080 = vadd.f32 %v2079, 1.0
    %v2081 = vrcp.pop %v2080
    %v2082 = vmul.f32 1.0, %v2081
    %v2083 = vtanh.pop %v2076
    %2085 = vrot.lane.b32.xlu0 %v1883, 32
    %v2086 = vpop.permute.xlu0 %2085
    %v2088 = vmul.f32 %v2082, %v2086
    %2090 = vrot.lane.b32.xlu0 %v2083, 64
    %v2091 = vpop.permute.xlu0 %2090
    %v2093 = vmul.f32 %v2082, %v2091
    %2095 = vrot.lane.b32.xlu0 %v2093, 32
    %v2096 = vpop.permute.xlu0 %2095
    %v2098 = vadd.f32 %v2088, %v2096
    %v2099 = vtanh.pop %v2098
    %2101 = vrot.lane.b32.xlu0 %v2099, 64
    %v2102 = vpop.permute.xlu0 %2101
    %v2104 = vmul.f32 %v2082, %v2102
    %v2105 = vsel %vm285, %v2104, 0.0
    %2106 = vst.msk [vmem:[#allocation2 + $0xe] sm:$0x3] %vm406, %v2002
    %2108 = vrot.lane.b32.xlu0 %v2105, 64
    %v2109 = vpop.permute.xlu0 %2108
    %2111 = vst.msk [vmem:[#allocation2] sm:$0x3] %vm412, %v2109
    %v2112 = vld [vmem:[#allocation2] sm:$0xff]
    %v2113 = vld [vmem:[#allocation2 + $0x8] sm:$0xff]
    %v2114 = vld [vmem:[%s7] sm:$0xff]
    %v2115 = vld [vmem:[%s7 + $0x8] sm:$0xff]
    %v2116 = vld [vmem:[%s7 + $0x10] sm:$0xff]
    %v2117 = vld [vmem:[%s7 + $0x18] sm:$0xff]
    %v2118 = vld [vmem:[%s7 + $0x20] sm:$0xff]
    %v2119 = vld [vmem:[%s7 + $0x28] sm:$0xff]
    %v2120 = vld [vmem:[%s7 + $0x30] sm:$0xff]
    %v2121 = vld [vmem:[%s7 + $0x38] sm:$0xff]
    %v2122 = vld [vmem:[%s8] sm:$0x1]
    %v2124 = vlaneseq
    %v2125 = vshrl.u32 %v2124, 7
    %v2126 = vsub.s32 0, %v2125
    %v2127 = vrot.slane %v2122, %v2126
    %vm2129 = vcmask 523264
    %v2131 = vsel %vm2129, %v2112, 0
    %v2134 = vsel %vm2129, %v2113, 0
    %2136 = vmatprep.subr.mxu0 0.0
    %2137 = vmatpush1.msra.mxu0 %v2114
    %2138 = vmatprep.subr.mxu0 0.0
    %2139 = vmatpush1.msra.mxu0 %v2115
    %2140 = vmatprep.subr.mxu0 0.0
    %2141 = vmatpush1.msra.mxu0 %v2116
    %2142 = vmatprep.subr.mxu0 0.0
    %2143 = vmatpush1.msra.mxu0 %v2117
    %2144 = vmatprep.subr.mxu0 0.0
    %2145 = vmatpush1.msra.mxu0 %v2118
    %2146 = vmatprep.subr.mxu0 0.0
    %2147 = vmatpush1.msra.mxu0 %v2119
    %2148 = vmatprep.subr.mxu0 0.0
    %2149 = vmatpush1.msra.mxu0 %v2120
    %2150 = vmatprep.subr.mxu0 0.0
    %2151 = vmatpush1.msra.mxu0 %v2121
    %2152 = vmatprep.subr.mxu0 0.0
    %2153 = vmatpush1.msra.mxu0 0.0
    %2154 = vmatprep.subr.mxu0 0.0
    %2155 = vmatpush1.msra.mxu0 0.0
    %2156 = vmatprep.subr.mxu0 0.0
    %2157 = vmatpush1.msra.mxu0 0.0
    %2158 = vmatprep.subr.mxu0 0.0
    %2159 = vmatpush1.msra.mxu0 0.0
    %2160 = vmatprep.subr.mxu0 0.0
    %2161 = vmatpush1.msra.mxu0 0.0
    %2162 = vmatprep.subr.mxu0 0.0
    %2163 = vmatpush1.msra.mxu0 0.0
    %2164 = vmatprep.subr.mxu0 0.0
    %2165 = vmatpush1.msra.mxu0 0.0
    %2166 = vmatprep.subr.mxu0 0.0
    %2167 = vmatpush1.msra.mxu0 0.0
    %2168 = vmatprep.subr.mxu0 0.0
    %2169 = vmatpush1.msra.mxu0 0.0
    %2170 = vmatprep.subr.mxu0 0.0
    %2171 = vmatpush1.msra.mxu0 0.0
    %2172 = vmatprep.subr.mxu0 0.0
    %2173 = vmatpush1.msra.mxu0 0.0
    %2174 = vmatprep.subr.mxu0 0.0
    %2175 = vmatpush1.msra.mxu0 0.0
    %2176 = vmatprep.subr.mxu0 0.0
    %2177 = vmatpush1.msra.mxu0 0.0
    %2178 = vmatprep.subr.mxu0 0.0
    %2179 = vmatpush1.msra.mxu0 0.0
    %2180 = vmatprep.subr.mxu0 0.0
    %2181 = vmatpush1.msra.mxu0 0.0
    %2182 = vmatprep.subr.mxu0 0.0
    %2183 = vmatpush1.msra.mxu0 0.0
    %2184 = vmatprep.subr.mxu0 0.0
    %2185 = vmatpush1.msra.mxu0 0.0
    %2186 = vmatprep.subr.mxu0 0.0
    %2187 = vmatpush1.msra.mxu0 0.0
    %2188 = vmatprep.subr.mxu0 0.0
    %2189 = vmatpush1.msra.mxu0 0.0
    %2190 = vmatprep.subr.mxu0 0.0
    %2191 = vmatpush1.msra.mxu0 0.0
    %2192 = vmatprep.subr.mxu0 0.0
    %2193 = vmatpush1.msra.mxu0 0.0
    %2194 = vmatprep.subr.mxu0 0.0
    %2195 = vmatpush1.msra.mxu0 0.0
    %2196 = vmatprep.subr.mxu0 0.0
    %2197 = vmatpush1.msra.mxu0 0.0
    %2198 = vmatprep.subr.mxu0 0.0
    %2199 = vmatpush1.msra.mxu0 0.0
    %2200 = vmatprep.mubr.f32.mxu0 0.0
    %2201 = vmatmul.mubr.f32.gmra.mrb[0].mxu0 %v2131
    %v2202 = vpop.f32.mrb[0].mxu0
    %v2203 = vadd.f32 %v2127, %v2202
    %v2204 = vpop.f32.mrb[0].mxu0
    %2205 = vmatprep.mubr.f32.mxu0 0.0
    %2206 = vmatmul.mubr.f32.gmra.mrb[0].mxu0 %v2134
    %v2207 = vpop.f32.mrb[0].mxu0
    %v2208 = vadd.f32 %v2127, %v2207
    %v2209 = vpop.f32.mrb[0].mxu0
    %2210 = vdwg.mxu0
    %v2211 = vlaneseq
    %v2212 = vand.u32 %v2211, 127
    %vm2213 = vcmp.eq.s32.totalorder %v2212, 4
    %v2214 = vsel %vm2213, 1, 0
    %v2215 = vcvt.s32.f32 %v2214
    %v2216 = vsel %vm2213, 0.0, -10000.0
    %2217 = vset.pattern.permute.xlu0 0
    %2218 = vperm.xlu0 %2217, %v69
    %v2219 = vpop.permute.xlu0 %2218
    %vm2220 = vcmp.eq.s32.totalorder %v2219, %v2212
    %v2221 = vsel %vm2220, 1, 0
    %v2222 = vcvt.s32.f32 %v2221
    %v2225 = vunpack.c.l.s4 1966171168
    %v2226 = vunpack.c.0.s8 %v2225
    %v2227 = vlaneseq
    %v2228 = vshrl.u32 %v2227, 7
    %v2229 = vsub.s32 %v2226, %v2228
    %v2230 = vrot.slane %v2216, %v2229
    %v2231 = vcombine.high %v2230, %v2230
    %v2233 = vunpack.c.l.s4 1966171168
    %v2234 = vunpack.c.0.s8 %v2233
    %v2235 = vlaneseq
    %v2236 = vshrl.u32 %v2235, 7
    %v2237 = vsub.s32 %v2234, %v2236
    %v2238 = vrot.slane %v2230, %v2237
    %v2240 = vunpack.c.l.s4 1966171168
    %v2241 = vunpack.c.0.s8 %v2240
    %v2242 = vlaneseq
    %v2243 = vshrl.u32 %v2242, 7
    %v2244 = vsub.s32 %v2241, %v2243
    %v2245 = vrot.slane %v2231, %v2244
    %v2246 = vlaneseq
    %v2247 = vshrl.u32 %v2246, 7
    %v2248 = vsub.s32 0, %v2247
    %v2249 = vrot.slane %v2238, %v2248
    %v2250 = vlaneseq
    %v2251 = vshrl.u32 %v2250, 7
    %v2252 = vsub.s32 0, %v2251
    %v2253 = vrot.slane %v2245, %v2252
    %v2256 = vadd.f32 %v2249, %v70
    %v2257 = vadd.f32 %v2253, %v70
    %vm2258 = vcmask 46080
    %v2259 = vsel %vm2258, %v2256, -inf
    %2260 = vmax.xlane.f32.xlu0 %v2259
    %v2261 = vpop.xlane.xlu0 %2260
    %v2262 = vsel %vm2258, %v2257, -inf
    %2263 = vmax.xlane.f32.xlu0 %v2262
    %v2264 = vpop.xlane.xlu0 %2263
    %v2265 = vsub.f32 %v2256, %v2261
    %v2266 = vsub.f32 %v2257, %v2264
    %v2267 = vmul.f32 %v2265, 1.442695
    %v2268 = vpow.pop %v2267
    %v2269 = vmul.f32 %v2266, 1.442695
    %v2270 = vpow.pop %v2269
    %v2271 = vsel %vm2258, %v2268, 0.0
    %2272 = vadd.xlane.f32.xlu0 %v2271
    %v2273 = vpop.xlane.xlu0 %2272
    %v2274 = vsel %vm2258, %v2270, 0.0
    %2275 = vadd.xlane.f32.xlu0 %v2274
    %v2276 = vpop.xlane.xlu0 %2275
    %v2277 = vlog2.pop %v2273
    %v2278 = vmul.f32 %v2277, 0.6931472
    %v2279 = vlog2.pop %v2276
    %v2280 = vmul.f32 %v2279, 0.6931472
    %v2281 = vadd.f32 %v2261, %v2278
    %v2282 = vadd.f32 %v2264, %v2280
    %v2284 = vlaneseq
    %v2285 = vshrl.u32 %v2284, 7
    %v2286 = vsub.s32 0, %v2285
    %v2287 = vrot.slane %v2203, %v2286
    %2289 = vbcast.lane.b32.xlu0 %v2287, 256
    %v2290 = vpop.permute.xlu0 %2289
    %v2291 = vlaneseq
    %v2292 = vshrl.u32 %v2291, 7
    %v2293 = vsub.s32 1, %v2292
    %v2294 = vrot.slane %v2203, %v2293
    %2296 = vbcast.lane.b32.xlu0 %v2294, 256
    %v2297 = vpop.permute.xlu0 %2296
    %v2300 = vadd.f32 %v2281, %v2290
    %v2301 = vadd.f32 %v2282, %v2297
    %2304 = vset.pattern.permute.xlu0 0
    %2305 = vperm.xlu0 %2304, %v2300
    %v2306 = vpop.permute.xlu0 %2305
    %2307 = vset.pattern.permute.xlu0 0
    %2308 = vperm.xlu0 %2307, %v2301
    %v2309 = vpop.permute.xlu0 %2308
    %v2310 = vlaneseq
    %v2311 = vshrl.u32 %v2310, 7
    %v2312 = vsub.s32 %v2212, %v2311
    %v2313 = vrot.slane %v2306, %v2312
    %v2314 = vlaneseq
    %v2315 = vshrl.u32 %v2314, 7
    %v2316 = vsub.s32 %v2212, %v2315
    %v2317 = vrot.slane %v2309, %v2316
    %vm2318 = vcmask 1041409
    %v2319 = vsel %vm2318, %v2317, %v2313
    %v2321 = vsel %vm285, %v2319, %v2216
    %v2322 = vmul.f32 %v2203, %v2222
    %vm2323 = vcmask 41984
    %v2324 = vsel %vm2323, %v2322, 0.0
    %2325 = vadd.xlane.f32.xlu0 %v2324
    %v2326 = vpop.xlane.xlu0 %2325
    %v2329 = vunpack.c.l.s4 1966171168
    %v2330 = vunpack.c.0.s8 %v2329
    %v2331 = vlaneseq
    %v2332 = vshrl.u32 %v2331, 7
    %v2333 = vsub.s32 %v2330, %v2332
    %v2334 = vrot.slane %v2215, %v2333
    %v2335 = vcombine.high %v2334, %v2334
    %v2337 = vunpack.c.l.s4 1966171168
    %v2338 = vunpack.c.0.s8 %v2337
    %v2339 = vlaneseq
    %v2340 = vshrl.u32 %v2339, 7
    %v2341 = vsub.s32 %v2338, %v2340
    %v2342 = vrot.slane %v2334, %v2341
    %v2344 = vunpack.c.l.s4 1966171168
    %v2345 = vunpack.c.0.s8 %v2344
    %v2346 = vlaneseq
    %v2347 = vshrl.u32 %v2346, 7
    %v2348 = vsub.s32 %v2345, %v2347
    %v2349 = vrot.slane %v2335, %v2348
    %v2350 = vlaneseq
    %v2351 = vshrl.u32 %v2350, 7
    %v2352 = vsub.s32 0, %v2351
    %v2353 = vrot.slane %v2342, %v2352
    %v2354 = vlaneseq
    %v2355 = vshrl.u32 %v2354, 7
    %v2356 = vsub.s32 0, %v2355
    %v2357 = vrot.slane %v2349, %v2356
    %v2360 = vmul.f32 %v70, %v2353
    %v2361 = vmul.f32 %v70, %v2357
    %v2362 = vsel %vm2258, %v2360, 0.0
    %2363 = vadd.xlane.f32.xlu0 %v2362
    %v2364 = vpop.xlane.xlu0 %2363
    %v2365 = vsel %vm2258, %v2361, 0.0
    %2366 = vadd.xlane.f32.xlu0 %v2365
    %v2367 = vpop.xlane.xlu0 %2366
    %v2369 = vlaneseq
    %v2370 = vshrl.u32 %v2369, 7
    %v2371 = vsub.s32 0, %v2370
    %v2372 = vrot.slane %v2222, %v2371
    %2374 = vbcast.lane.b32.xlu0 %v2372, 256
    %v2375 = vpop.permute.xlu0 %2374
    %v2376 = vlaneseq
    %v2377 = vshrl.u32 %v2376, 7
    %v2378 = vsub.s32 1, %v2377
    %v2379 = vrot.slane %v2222, %v2378
    %2381 = vbcast.lane.b32.xlu0 %v2379, 256
    %v2382 = vpop.permute.xlu0 %2381
    %v2385 = vmul.f32 %v2364, %v2375
    %v2386 = vmul.f32 %v2367, %v2382
    %2389 = vset.pattern.permute.xlu0 0
    %2390 = vperm.xlu0 %2389, %v2385
    %v2391 = vpop.permute.xlu0 %2390
    %2392 = vset.pattern.permute.xlu0 0
    %2393 = vperm.xlu0 %2392, %v2386
    %v2394 = vpop.permute.xlu0 %2393
    %v2395 = vlaneseq
    %v2396 = vshrl.u32 %v2395, 7
    %v2397 = vsub.s32 %v2212, %v2396
    %v2398 = vrot.slane %v2391, %v2397
    %v2399 = vlaneseq
    %v2400 = vshrl.u32 %v2399, 7
    %v2401 = vsub.s32 %v2212, %v2400
    %v2402 = vrot.slane %v2394, %v2401
    %v2403 = vsel %vm2318, %v2402, %v2398
    %v2405 = vsel %vm2323, %v2403, 0.0
    %2406 = vadd.xlane.f32.xlu0 %v2405
    %v2407 = vpop.xlane.xlu0 %2406
    %v2408 = vadd.f32 %v2326, %v2407
    %v2409 = vsel %vm181, %v2408, 0.0
    %v2410 = vadd.f32 %v2409, 0.0
    %v2411 = vsel %vm285, %v2222, %v2215
    %v2412 = vadd.f32 %v2261, %v2290
    %v2413 = vadd.f32 %v2264, %v2297
    %2416 = vset.pattern.permute.xlu0 0
    %2417 = vperm.xlu0 %2416, %v2412
    %v2418 = vpop.permute.xlu0 %2417
    %2419 = vset.pattern.permute.xlu0 0
    %2420 = vperm.xlu0 %2419, %v2413
    %v2421 = vpop.permute.xlu0 %2420
    %v2422 = vlaneseq
    %v2423 = vshrl.u32 %v2422, 7
    %v2424 = vsub.s32 %v2212, %v2423
    %v2425 = vrot.slane %v2418, %v2424
    %v2426 = vlaneseq
    %v2427 = vshrl.u32 %v2426, 7
    %v2428 = vsub.s32 %v2212, %v2427
    %v2429 = vrot.slane %v2421, %v2428
    %v2430 = vsel %vm2318, %v2429, %v2425
    %v2432 = vsel %vm285, %v2430, %v2216
    %2433 = vset.pattern.permute.xlu0 1
    %2434 = vperm.xlu0 %2433, %v69
    %v2435 = vpop.permute.xlu0 %2434
    %vm2436 = vcmp.eq.s32.totalorder %v2435, %v2212
    %v2437 = vsel %vm2436, 1, 0
    %v2438 = vcvt.s32.f32 %v2437
    %v2441 = vunpack.c.l.s4 1966171168
    %v2442 = vunpack.c.0.s8 %v2441
    %v2443 = vlaneseq
    %v2444 = vshrl.u32 %v2443, 7
    %v2445 = vsub.s32 %v2442, %v2444
    %v2446 = vrot.slane %v2321, %v2445
    %v2447 = vcombine.high %v2446, %v2446
    %v2449 = vunpack.c.l.s4 1966171168
    %v2450 = vunpack.c.0.s8 %v2449
    %v2451 = vlaneseq
    %v2452 = vshrl.u32 %v2451, 7
    %v2453 = vsub.s32 %v2450, %v2452
    %v2454 = vrot.slane %v2446, %v2453
    %v2456 = vunpack.c.l.s4 1966171168
    %v2457 = vunpack.c.0.s8 %v2456
    %v2458 = vlaneseq
    %v2459 = vshrl.u32 %v2458, 7
    %v2460 = vsub.s32 %v2457, %v2459
    %v2461 = vrot.slane %v2447, %v2460
    %v2462 = vlaneseq
    %v2463 = vshrl.u32 %v2462, 7
    %v2464 = vsub.s32 0, %v2463
    %v2465 = vrot.slane %v2454, %v2464
    %v2466 = vlaneseq
    %v2467 = vshrl.u32 %v2466, 7
    %v2468 = vsub.s32 0, %v2467
    %v2469 = vrot.slane %v2461, %v2468
    %v2472 = vadd.f32 %v2465, %v70
    %v2473 = vadd.f32 %v2469, %v70
    %v2474 = vsel %vm2258, %v2472, -inf
    %2475 = vmax.xlane.f32.xlu0 %v2474
    %v2476 = vpop.xlane.xlu0 %2475
    %v2477 = vsel %vm2258, %v2473, -inf
    %2478 = vmax.xlane.f32.xlu0 %v2477
    %v2479 = vpop.xlane.xlu0 %2478
    %v2480 = vsub.f32 %v2472, %v2476
    %v2481 = vsub.f32 %v2473, %v2479
    %v2482 = vmul.f32 %v2480, 1.442695
    %v2483 = vpow.pop %v2482
    %v2484 = vmul.f32 %v2481, 1.442695
    %v2485 = vpow.pop %v2484
    %v2486 = vsel %vm2258, %v2483, 0.0
    %2487 = vadd.xlane.f32.xlu0 %v2486
    %v2488 = vpop.xlane.xlu0 %2487
    %v2489 = vsel %vm2258, %v2485, 0.0
    %2490 = vadd.xlane.f32.xlu0 %v2489
    %v2491 = vpop.xlane.xlu0 %2490
    %v2492 = vlog2.pop %v2488
    %v2493 = vmul.f32 %v2492, 0.6931472
    %v2494 = vlog2.pop %v2491
    %v2495 = vmul.f32 %v2494, 0.6931472
    %v2496 = vadd.f32 %v2476, %v2493
    %v2497 = vadd.f32 %v2479, %v2495
    %v2498 = vlaneseq
    %v2499 = vshrl.u32 %v2498, 7
    %v2500 = vsub.s32 2, %v2499
    %v2501 = vrot.slane %v2203, %v2500
    %2503 = vbcast.lane.b32.xlu0 %v2501, 256
    %v2504 = vpop.permute.xlu0 %2503
    %v2505 = vlaneseq
    %v2506 = vshrl.u32 %v2505, 7
    %v2507 = vsub.s32 3, %v2506
    %v2508 = vrot.slane %v2203, %v2507
    %2510 = vbcast.lane.b32.xlu0 %v2508, 256
    %v2511 = vpop.permute.xlu0 %2510
    %v2514 = vadd.f32 %v2496, %v2504
    %v2515 = vadd.f32 %v2497, %v2511
    %2518 = vset.pattern.permute.xlu0 0
    %2519 = vperm.xlu0 %2518, %v2514
    %v2520 = vpop.permute.xlu0 %2519
    %2521 = vset.pattern.permute.xlu0 0
    %2522 = vperm.xlu0 %2521, %v2515
    %v2523 = vpop.permute.xlu0 %2522
    %v2524 = vlaneseq
    %v2525 = vshrl.u32 %v2524, 7
    %v2526 = vsub.s32 %v2212, %v2525
    %v2527 = vrot.slane %v2520, %v2526
    %v2528 = vlaneseq
    %v2529 = vshrl.u32 %v2528, 7
    %v2530 = vsub.s32 %v2212, %v2529
    %v2531 = vrot.slane %v2523, %v2530
    %v2532 = vsel %vm2318, %v2531, %v2527
    %v2534 = vsel %vm520, %v2532, %v2321
    %v2536 = vrot.slane %v2438, 6
    %v2538 = vmul.f32 %v2203, %v2536
    %vm2539 = vcmask 44034
    %v2540 = vsel %vm2539, %v2538, 0.0
    %2541 = vadd.xlane.f32.xlu0 %v2540
    %v2542 = vpop.xlane.xlu0 %2541
    %v2544 = vunpack.c.l.s4 1966171168
    %v2545 = vunpack.c.0.s8 %v2544
    %v2546 = vlaneseq
    %v2547 = vshrl.u32 %v2546, 7
    %v2548 = vsub.s32 %v2545, %v2547
    %v2549 = vrot.slane %v2222, %v2548
    %v2550 = vcombine.high %v2549, %v2549
    %v2552 = vunpack.c.l.s4 1966171168
    %v2553 = vunpack.c.0.s8 %v2552
    %v2554 = vlaneseq
    %v2555 = vshrl.u32 %v2554, 7
    %v2556 = vsub.s32 %v2553, %v2555
    %v2557 = vrot.slane %v2549, %v2556
    %v2559 = vunpack.c.l.s4 1966171168
    %v2560 = vunpack.c.0.s8 %v2559
    %v2561 = vlaneseq
    %v2562 = vshrl.u32 %v2561, 7
    %v2563 = vsub.s32 %v2560, %v2562
    %v2564 = vrot.slane %v2550, %v2563
    %v2565 = vlaneseq
    %v2566 = vshrl.u32 %v2565, 7
    %v2567 = vsub.s32 0, %v2566
    %v2568 = vrot.slane %v2557, %v2567
    %v2569 = vlaneseq
    %v2570 = vshrl.u32 %v2569, 7
    %v2571 = vsub.s32 0, %v2570
    %v2572 = vrot.slane %v2564, %v2571
    %v2575 = vmul.f32 %v70, %v2568
    %v2576 = vmul.f32 %v70, %v2572
    %v2577 = vsel %vm2258, %v2575, 0.0
    %2578 = vadd.xlane.f32.xlu0 %v2577
    %v2579 = vpop.xlane.xlu0 %2578
    %v2580 = vsel %vm2258, %v2576, 0.0
    %2581 = vadd.xlane.f32.xlu0 %v2580
    %v2582 = vpop.xlane.xlu0 %2581
    %v2583 = vlaneseq
    %v2584 = vshrl.u32 %v2583, 7
    %v2585 = vsub.s32 0, %v2584
    %v2586 = vrot.slane %v2438, %v2585
    %2588 = vbcast.lane.b32.xlu0 %v2586, 256
    %v2589 = vpop.permute.xlu0 %2588
    %v2590 = vlaneseq
    %v2591 = vshrl.u32 %v2590, 7
    %v2592 = vsub.s32 1, %v2591
    %v2593 = vrot.slane %v2438, %v2592
    %2595 = vbcast.lane.b32.xlu0 %v2593, 256
    %v2596 = vpop.permute.xlu0 %2595
    %v2599 = vmul.f32 %v2579, %v2589
    %v2600 = vmul.f32 %v2582, %v2596
    %2603 = vset.pattern.permute.xlu0 0
    %2604 = vperm.xlu0 %2603, %v2599
    %v2605 = vpop.permute.xlu0 %2604
    %2606 = vset.pattern.permute.xlu0 0
    %2607 = vperm.xlu0 %2606, %v2600
    %v2608 = vpop.permute.xlu0 %2607
    %v2609 = vlaneseq
    %v2610 = vshrl.u32 %v2609, 7
    %v2611 = vsub.s32 %v2212, %v2610
    %v2612 = vrot.slane %v2605, %v2611
    %v2613 = vlaneseq
    %v2614 = vshrl.u32 %v2613, 7
    %v2615 = vsub.s32 %v2212, %v2614
    %v2616 = vrot.slane %v2608, %v2615
    %v2617 = vsel %vm2318, %v2616, %v2612
    %v2619 = vsel %vm2323, %v2617, 0.0
    %2620 = vadd.xlane.f32.xlu0 %v2619
    %v2621 = vpop.xlane.xlu0 %2620
    %v2623 = vrot.slane %v2621, 6
    %v2625 = vadd.f32 %v2542, %v2623
    %v2627 = vrot.slane %v2625, 2
    %2628 = vrot.lane.b32.xlu0 %v2627, 1
    %v2629 = vpop.permute.xlu0 %2628
    %v2631 = vsel %vm181, %v2629, 0.0
    %2633 = vrot.lane.b32.xlu0 %v2631, 127
    %v2634 = vpop.permute.xlu0 %2633
    %v2636 = vadd.f32 %v2410, %v2634
    %v2637 = vsel %vm520, %v2438, %v2411
    %v2640 = vunpack.c.l.s4 1966171168
    %v2641 = vunpack.c.0.s8 %v2640
    %v2642 = vlaneseq
    %v2643 = vshrl.u32 %v2642, 7
    %v2644 = vsub.s32 %v2641, %v2643
    %v2645 = vrot.slane %v2432, %v2644
    %v2646 = vcombine.high %v2645, %v2645
    %v2648 = vunpack.c.l.s4 1966171168
    %v2649 = vunpack.c.0.s8 %v2648
    %v2650 = vlaneseq
    %v2651 = vshrl.u32 %v2650, 7
    %v2652 = vsub.s32 %v2649, %v2651
    %v2653 = vrot.slane %v2645, %v2652
    %v2655 = vunpack.c.l.s4 1966171168
    %v2656 = vunpack.c.0.s8 %v2655
    %v2657 = vlaneseq
    %v2658 = vshrl.u32 %v2657, 7
    %v2659 = vsub.s32 %v2656, %v2658
    %v2660 = vrot.slane %v2646, %v2659
    %v2661 = vlaneseq
    %v2662 = vshrl.u32 %v2661, 7
    %v2663 = vsub.s32 0, %v2662
    %v2664 = vrot.slane %v2653, %v2663
    %v2665 = vlaneseq
    %v2666 = vshrl.u32 %v2665, 7
    %v2667 = vsub.s32 0, %v2666
    %v2668 = vrot.slane %v2660, %v2667
    %v2671 = vadd.f32 %v2664, %v70
    %v2672 = vadd.f32 %v2668, %v70
    %v2673 = vsel %vm2258, %v2671, -inf
    %2674 = vmax.xlane.f32.xlu0 %v2673
    %v2675 = vpop.xlane.xlu0 %2674
    %v2676 = vsel %vm2258, %v2672, -inf
    %2677 = vmax.xlane.f32.xlu0 %v2676
    %v2678 = vpop.xlane.xlu0 %2677
    %vm2679 = vcmp.eq.f32.partialorder %v2671, %v2675
    %vm2680 = vcmp.eq.f32.partialorder %v2672, %v2678
    %v2681 = vsel %vm2679, %v2212, 6
    %v2682 = vsel %vm2680, %v2212, 6
    %v2683 = vsel %vm2258, %v2681, 2147483647
    %v2684 = vand.u32 %v2683, 65535
    %v2685 = vshra.s32 %v2683, 16
    %v2686 = vcvt.s32.f32 %v2684
    %v2687 = vcvt.s32.f32 %v2685
    %2688 = vmin.xlane.f32.xlu0 %v2687
    %v2689 = vpop.xlane.xlu0 %2688
    %vm2690 = vcmp.eq.f32.partialorder %v2687, %v2689
    %v2691 = vsel %vm2690, %v2686, inf
    %2692 = vmin.xlane.f32.xlu0 %v2691
    %v2693 = vpop.xlane.xlu0 %2692
    %v2694 = vcvt.f32.s32 %v2693
    %v2695 = vcvt.f32.s32 %v2689
    %v2696 = vshll.u32 %v2695, 16
    %v2697 = vadd.s32 %v2696, %v2694
    %v2698 = vsel %vm2258, %v2682, 2147483647
    %v2699 = vand.u32 %v2698, 65535
    %v2700 = vshra.s32 %v2698, 16
    %v2701 = vcvt.s32.f32 %v2699
    %v2702 = vcvt.s32.f32 %v2700
    %2703 = vmin.xlane.f32.xlu0 %v2702
    %v2704 = vpop.xlane.xlu0 %2703
    %vm2705 = vcmp.eq.f32.partialorder %v2702, %v2704
    %v2706 = vsel %vm2705, %v2701, inf
    %2707 = vmin.xlane.f32.xlu0 %v2706
    %v2708 = vpop.xlane.xlu0 %2707
    %v2709 = vcvt.f32.s32 %v2708
    %v2710 = vcvt.f32.s32 %v2704
    %v2711 = vshll.u32 %v2710, 16
    %v2712 = vadd.s32 %v2711, %v2709
    %v2713 = vadd.f32 %v2675, %v2504
    %v2714 = vadd.f32 %v2678, %v2511
    %2717 = vset.pattern.permute.xlu0 0
    %2718 = vperm.xlu0 %2717, %v2713
    %v2719 = vpop.permute.xlu0 %2718
    %2720 = vset.pattern.permute.xlu0 0
    %2721 = vperm.xlu0 %2720, %v2714
    %v2722 = vpop.permute.xlu0 %2721
    %v2723 = vlaneseq
    %v2724 = vshrl.u32 %v2723, 7
    %v2725 = vsub.s32 %v2212, %v2724
    %v2726 = vrot.slane %v2719, %v2725
    %v2727 = vlaneseq
    %v2728 = vshrl.u32 %v2727, 7
    %v2729 = vsub.s32 %v2212, %v2728
    %v2730 = vrot.slane %v2722, %v2729
    %v2731 = vsel %vm2318, %v2730, %v2726
    %v2733 = vsel %vm520, %v2731, %v2432
    %2734 = vset.pattern.permute.xlu0 2
    %2735 = vperm.xlu0 %2734, %v69
    %v2736 = vpop.permute.xlu0 %2735
    %vm2737 = vcmp.eq.s32.totalorder %v2736, %v2212
    %v2738 = vsel %vm2737, 1, 0
    %v2739 = vcvt.s32.f32 %v2738
    %v2742 = vunpack.c.l.s4 1966171168
    %v2743 = vunpack.c.0.s8 %v2742
    %v2744 = vlaneseq
    %v2745 = vshrl.u32 %v2744, 7
    %v2746 = vsub.s32 %v2743, %v2745
    %v2747 = vrot.slane %v2534, %v2746
    %v2748 = vcombine.high %v2747, %v2747
    %v2750 = vunpack.c.l.s4 1966171168
    %v2751 = vunpack.c.0.s8 %v2750
    %v2752 = vlaneseq
    %v2753 = vshrl.u32 %v2752, 7
    %v2754 = vsub.s32 %v2751, %v2753
    %v2755 = vrot.slane %v2747, %v2754
    %v2757 = vunpack.c.l.s4 1966171168
    %v2758 = vunpack.c.0.s8 %v2757
    %v2759 = vlaneseq
    %v2760 = vshrl.u32 %v2759, 7
    %v2761 = vsub.s32 %v2758, %v2760
    %v2762 = vrot.slane %v2748, %v2761
    %v2763 = vlaneseq
    %v2764 = vshrl.u32 %v2763, 7
    %v2765 = vsub.s32 0, %v2764
    %v2766 = vrot.slane %v2755, %v2765
    %v2767 = vlaneseq
    %v2768 = vshrl.u32 %v2767, 7
    %v2769 = vsub.s32 0, %v2768
    %v2770 = vrot.slane %v2762, %v2769
    %v2773 = vadd.f32 %v2766, %v70
    %v2774 = vadd.f32 %v2770, %v70
    %v2775 = vsel %vm2258, %v2773, -inf
    %2776 = vmax.xlane.f32.xlu0 %v2775
    %v2777 = vpop.xlane.xlu0 %2776
    %v2778 = vsel %vm2258, %v2774, -inf
    %2779 = vmax.xlane.f32.xlu0 %v2778
    %v2780 = vpop.xlane.xlu0 %2779
    %v2781 = vsub.f32 %v2773, %v2777
    %v2782 = vsub.f32 %v2774, %v2780
    %v2783 = vmul.f32 %v2781, 1.442695
    %v2784 = vpow.pop %v2783
    %v2785 = vmul.f32 %v2782, 1.442695
    %v2786 = vpow.pop %v2785
    %v2787 = vsel %vm2258, %v2784, 0.0
    %2788 = vadd.xlane.f32.xlu0 %v2787
    %v2789 = vpop.xlane.xlu0 %2788
    %v2790 = vsel %vm2258, %v2786, 0.0
    %2791 = vadd.xlane.f32.xlu0 %v2790
    %v2792 = vpop.xlane.xlu0 %2791
    %v2793 = vlog2.pop %v2789
    %v2794 = vmul.f32 %v2793, 0.6931472
    %v2795 = vlog2.pop %v2792
    %v2796 = vmul.f32 %v2795, 0.6931472
    %v2797 = vadd.f32 %v2777, %v2794
    %v2798 = vadd.f32 %v2780, %v2796
    %v2799 = vlaneseq
    %v2800 = vshrl.u32 %v2799, 7
    %v2801 = vsub.s32 4, %v2800
    %v2802 = vrot.slane %v2203, %v2801
    %2804 = vbcast.lane.b32.xlu0 %v2802, 256
    %v2805 = vpop.permute.xlu0 %2804
    %v2806 = vlaneseq
    %v2807 = vshrl.u32 %v2806, 7
    %v2808 = vsub.s32 5, %v2807
    %v2809 = vrot.slane %v2203, %v2808
    %2811 = vbcast.lane.b32.xlu0 %v2809, 256
    %v2812 = vpop.permute.xlu0 %2811
    %v2815 = vadd.f32 %v2797, %v2805
    %v2816 = vadd.f32 %v2798, %v2812
    %2819 = vset.pattern.permute.xlu0 0
    %2820 = vperm.xlu0 %2819, %v2815
    %v2821 = vpop.permute.xlu0 %2820
    %2822 = vset.pattern.permute.xlu0 0
    %2823 = vperm.xlu0 %2822, %v2816
    %v2824 = vpop.permute.xlu0 %2823
    %v2825 = vlaneseq
    %v2826 = vshrl.u32 %v2825, 7
    %v2827 = vsub.s32 %v2212, %v2826
    %v2828 = vrot.slane %v2821, %v2827
    %v2829 = vlaneseq
    %v2830 = vshrl.u32 %v2829, 7
    %v2831 = vsub.s32 %v2212, %v2830
    %v2832 = vrot.slane %v2824, %v2831
    %v2833 = vsel %vm2318, %v2832, %v2828
    %v2835 = vsel %vm774, %v2833, %v2534
    %v2837 = vrot.slane %v2739, 4
    %v2839 = vmul.f32 %v2203, %v2837
    %vm2840 = vcmask 46084
    %v2841 = vsel %vm2840, %v2839, 0.0
    %2842 = vadd.xlane.f32.xlu0 %v2841
    %v2843 = vpop.xlane.xlu0 %2842
    %v2845 = vunpack.c.l.s4 1966171168
    %v2846 = vunpack.c.0.s8 %v2845
    %v2847 = vlaneseq
    %v2848 = vshrl.u32 %v2847, 7
    %v2849 = vsub.s32 %v2846, %v2848
    %v2850 = vrot.slane %v2438, %v2849
    %v2851 = vcombine.high %v2850, %v2850
    %v2853 = vunpack.c.l.s4 1966171168
    %v2854 = vunpack.c.0.s8 %v2853
    %v2855 = vlaneseq
    %v2856 = vshrl.u32 %v2855, 7
    %v2857 = vsub.s32 %v2854, %v2856
    %v2858 = vrot.slane %v2850, %v2857
    %v2860 = vunpack.c.l.s4 1966171168
    %v2861 = vunpack.c.0.s8 %v2860
    %v2862 = vlaneseq
    %v2863 = vshrl.u32 %v2862, 7
    %v2864 = vsub.s32 %v2861, %v2863
    %v2865 = vrot.slane %v2851, %v2864
    %v2866 = vlaneseq
    %v2867 = vshrl.u32 %v2866, 7
    %v2868 = vsub.s32 0, %v2867
    %v2869 = vrot.slane %v2858, %v2868
    %v2870 = vlaneseq
    %v2871 = vshrl.u32 %v2870, 7
    %v2872 = vsub.s32 0, %v2871
    %v2873 = vrot.slane %v2865, %v2872
    %v2876 = vmul.f32 %v70, %v2869
    %v2877 = vmul.f32 %v70, %v2873
    %v2878 = vsel %vm2258, %v2876, 0.0
    %2879 = vadd.xlane.f32.xlu0 %v2878
    %v2880 = vpop.xlane.xlu0 %2879
    %v2881 = vsel %vm2258, %v2877, 0.0
    %2882 = vadd.xlane.f32.xlu0 %v2881
    %v2883 = vpop.xlane.xlu0 %2882
    %v2884 = vlaneseq
    %v2885 = vshrl.u32 %v2884, 7
    %v2886 = vsub.s32 0, %v2885
    %v2887 = vrot.slane %v2739, %v2886
    %2889 = vbcast.lane.b32.xlu0 %v2887, 256
    %v2890 = vpop.permute.xlu0 %2889
    %v2891 = vlaneseq
    %v2892 = vshrl.u32 %v2891, 7
    %v2893 = vsub.s32 1, %v2892
    %v2894 = vrot.slane %v2739, %v2893
    %2896 = vbcast.lane.b32.xlu0 %v2894, 256
    %v2897 = vpop.permute.xlu0 %2896
    %v2900 = vmul.f32 %v2880, %v2890
    %v2901 = vmul.f32 %v2883, %v2897
    %2904 = vset.pattern.permute.xlu0 0
    %2905 = vperm.xlu0 %2904, %v2900
    %v2906 = vpop.permute.xlu0 %2905
    %2907 = vset.pattern.permute.xlu0 0
    %2908 = vperm.xlu0 %2907, %v2901
    %v2909 = vpop.permute.xlu0 %2908
    %v2910 = vlaneseq
    %v2911 = vshrl.u32 %v2910, 7
    %v2912 = vsub.s32 %v2212, %v2911
    %v2913 = vrot.slane %v2906, %v2912
    %v2914 = vlaneseq
    %v2915 = vshrl.u32 %v2914, 7
    %v2916 = vsub.s32 %v2212, %v2915
    %v2917 = vrot.slane %v2909, %v2916
    %v2918 = vsel %vm2318, %v2917, %v2913
    %v2920 = vsel %vm2323, %v2918, 0.0
    %2921 = vadd.xlane.f32.xlu0 %v2920
    %v2922 = vpop.xlane.xlu0 %2921
    %v2924 = vrot.slane %v2922, 4
    %v2926 = vadd.f32 %v2843, %v2924
    %v2928 = vrot.slane %v2926, 4
    %2929 = vrot.lane.b32.xlu0 %v2928, 2
    %v2930 = vpop.permute.xlu0 %2929
    %v2932 = vsel %vm181, %v2930, 0.0
    %2934 = vrot.lane.b32.xlu0 %v2932, 126
    %v2935 = vpop.permute.xlu0 %2934
    %v2937 = vadd.f32 %v2636, %v2935
    %v2938 = vsel %vm774, %v2739, %v2637
    %v2941 = vunpack.c.l.s4 1966171168
    %v2942 = vunpack.c.0.s8 %v2941
    %v2943 = vlaneseq
    %v2944 = vshrl.u32 %v2943, 7
    %v2945 = vsub.s32 %v2942, %v2944
    %v2946 = vrot.slane %v2733, %v2945
    %v2947 = vcombine.high %v2946, %v2946
    %v2949 = vunpack.c.l.s4 1966171168
    %v2950 = vunpack.c.0.s8 %v2949
    %v2951 = vlaneseq
    %v2952 = vshrl.u32 %v2951, 7
    %v2953 = vsub.s32 %v2950, %v2952
    %v2954 = vrot.slane %v2946, %v2953
    %v2956 = vunpack.c.l.s4 1966171168
    %v2957 = vunpack.c.0.s8 %v2956
    %v2958 = vlaneseq
    %v2959 = vshrl.u32 %v2958, 7
    %v2960 = vsub.s32 %v2957, %v2959
    %v2961 = vrot.slane %v2947, %v2960
    %v2962 = vlaneseq
    %v2963 = vshrl.u32 %v2962, 7
    %v2964 = vsub.s32 0, %v2963
    %v2965 = vrot.slane %v2954, %v2964
    %v2966 = vlaneseq
    %v2967 = vshrl.u32 %v2966, 7
    %v2968 = vsub.s32 0, %v2967
    %v2969 = vrot.slane %v2961, %v2968
    %v2972 = vadd.f32 %v2965, %v70
    %v2973 = vadd.f32 %v2969, %v70
    %v2974 = vsel %vm2258, %v2972, -inf
    %2975 = vmax.xlane.f32.xlu0 %v2974
    %v2976 = vpop.xlane.xlu0 %2975
    %v2977 = vsel %vm2258, %v2973, -inf
    %2978 = vmax.xlane.f32.xlu0 %v2977
    %v2979 = vpop.xlane.xlu0 %2978
    %vm2980 = vcmp.eq.f32.partialorder %v2972, %v2976
    %vm2981 = vcmp.eq.f32.partialorder %v2973, %v2979
    %v2982 = vsel %vm2980, %v2212, 6
    %v2983 = vsel %vm2981, %v2212, 6
    %v2984 = vsel %vm2258, %v2982, 2147483647
    %v2985 = vand.u32 %v2984, 65535
    %v2986 = vshra.s32 %v2984, 16
    %v2987 = vcvt.s32.f32 %v2985
    %v2988 = vcvt.s32.f32 %v2986
    %2989 = vmin.xlane.f32.xlu0 %v2988
    %v2990 = vpop.xlane.xlu0 %2989
    %vm2991 = vcmp.eq.f32.partialorder %v2988, %v2990
    %v2992 = vsel %vm2991, %v2987, inf
    %2993 = vmin.xlane.f32.xlu0 %v2992
    %v2994 = vpop.xlane.xlu0 %2993
    %v2995 = vcvt.f32.s32 %v2994
    %v2996 = vcvt.f32.s32 %v2990
    %v2997 = vshll.u32 %v2996, 16
    %v2998 = vadd.s32 %v2997, %v2995
    %v2999 = vsel %vm2258, %v2983, 2147483647
    %v3000 = vand.u32 %v2999, 65535
    %v3001 = vshra.s32 %v2999, 16
    %v3002 = vcvt.s32.f32 %v3000
    %v3003 = vcvt.s32.f32 %v3001
    %3004 = vmin.xlane.f32.xlu0 %v3003
    %v3005 = vpop.xlane.xlu0 %3004
    %vm3006 = vcmp.eq.f32.partialorder %v3003, %v3005
    %v3007 = vsel %vm3006, %v3002, inf
    %3008 = vmin.xlane.f32.xlu0 %v3007
    %v3009 = vpop.xlane.xlu0 %3008
    %v3010 = vcvt.f32.s32 %v3009
    %v3011 = vcvt.f32.s32 %v3005
    %v3012 = vshll.u32 %v3011, 16
    %v3013 = vadd.s32 %v3012, %v3010
    %v3014 = vadd.f32 %v2976, %v2805
    %v3015 = vadd.f32 %v2979, %v2812
    %3018 = vset.pattern.permute.xlu0 0
    %3019 = vperm.xlu0 %3018, %v3014
    %v3020 = vpop.permute.xlu0 %3019
    %3021 = vset.pattern.permute.xlu0 0
    %3022 = vperm.xlu0 %3021, %v3015
    %v3023 = vpop.permute.xlu0 %3022
    %v3024 = vlaneseq
    %v3025 = vshrl.u32 %v3024, 7
    %v3026 = vsub.s32 %v2212, %v3025
    %v3027 = vrot.slane %v3020, %v3026
    %v3028 = vlaneseq
    %v3029 = vshrl.u32 %v3028, 7
    %v3030 = vsub.s32 %v2212, %v3029
    %v3031 = vrot.slane %v3023, %v3030
    %v3032 = vsel %vm2318, %v3031, %v3027
    %v3034 = vsel %vm774, %v3032, %v2733
    %3035 = vset.pattern.permute.xlu0 3
    %3036 = vperm.xlu0 %3035, %v69
    %v3037 = vpop.permute.xlu0 %3036
    %vm3038 = vcmp.eq.s32.totalorder %v3037, %v2212
    %v3039 = vsel %vm3038, 1, 0
    %v3040 = vcvt.s32.f32 %v3039
    %v3043 = vunpack.c.l.s4 1966171168
    %v3044 = vunpack.c.0.s8 %v3043
    %v3045 = vlaneseq
    %v3046 = vshrl.u32 %v3045, 7
    %v3047 = vsub.s32 %v3044, %v3046
    %v3048 = vrot.slane %v2835, %v3047
    %v3049 = vcombine.high %v3048, %v3048
    %v3051 = vunpack.c.l.s4 1966171168
    %v3052 = vunpack.c.0.s8 %v3051
    %v3053 = vlaneseq
    %v3054 = vshrl.u32 %v3053, 7
    %v3055 = vsub.s32 %v3052, %v3054
    %v3056 = vrot.slane %v3048, %v3055
    %v3058 = vunpack.c.l.s4 1966171168
    %v3059 = vunpack.c.0.s8 %v3058
    %v3060 = vlaneseq
    %v3061 = vshrl.u32 %v3060, 7
    %v3062 = vsub.s32 %v3059, %v3061
    %v3063 = vrot.slane %v3049, %v3062
    %v3064 = vlaneseq
    %v3065 = vshrl.u32 %v3064, 7
    %v3066 = vsub.s32 0, %v3065
    %v3067 = vrot.slane %v3056, %v3066
    %v3068 = vlaneseq
    %v3069 = vshrl.u32 %v3068, 7
    %v3070 = vsub.s32 0, %v3069
    %v3071 = vrot.slane %v3063, %v3070
    %v3074 = vadd.f32 %v3067, %v70
    %v3075 = vadd.f32 %v3071, %v70
    %v3076 = vsel %vm2258, %v3074, -inf
    %3077 = vmax.xlane.f32.xlu0 %v3076
    %v3078 = vpop.xlane.xlu0 %3077
    %v3079 = vsel %vm2258, %v3075, -inf
    %3080 = vmax.xlane.f32.xlu0 %v3079
    %v3081 = vpop.xlane.xlu0 %3080
    %v3082 = vsub.f32 %v3074, %v3078
    %v3083 = vsub.f32 %v3075, %v3081
    %v3084 = vmul.f32 %v3082, 1.442695
    %v3085 = vpow.pop %v3084
    %v3086 = vmul.f32 %v3083, 1.442695
    %v3087 = vpow.pop %v3086
    %v3088 = vsel %vm2258, %v3085, 0.0
    %3089 = vadd.xlane.f32.xlu0 %v3088
    %v3090 = vpop.xlane.xlu0 %3089
    %v3091 = vsel %vm2258, %v3087, 0.0
    %3092 = vadd.xlane.f32.xlu0 %v3091
    %v3093 = vpop.xlane.xlu0 %3092
    %v3094 = vlog2.pop %v3090
    %v3095 = vmul.f32 %v3094, 0.6931472
    %v3096 = vlog2.pop %v3093
    %v3097 = vmul.f32 %v3096, 0.6931472
    %v3098 = vadd.f32 %v3078, %v3095
    %v3099 = vadd.f32 %v3081, %v3097
    %v3100 = vlaneseq
    %v3101 = vshrl.u32 %v3100, 7
    %v3102 = vsub.s32 6, %v3101
    %v3103 = vrot.slane %v2203, %v3102
    %3105 = vbcast.lane.b32.xlu0 %v3103, 256
    %v3106 = vpop.permute.xlu0 %3105
    %v3107 = vlaneseq
    %v3108 = vshrl.u32 %v3107, 7
    %v3109 = vsub.s32 7, %v3108
    %v3110 = vrot.slane %v2203, %v3109
    %3112 = vbcast.lane.b32.xlu0 %v3110, 256
    %v3113 = vpop.permute.xlu0 %3112
    %v3116 = vadd.f32 %v3098, %v3106
    %v3117 = vadd.f32 %v3099, %v3113
    %3120 = vset.pattern.permute.xlu0 0
    %3121 = vperm.xlu0 %3120, %v3116
    %v3122 = vpop.permute.xlu0 %3121
    %3123 = vset.pattern.permute.xlu0 0
    %3124 = vperm.xlu0 %3123, %v3117
    %v3125 = vpop.permute.xlu0 %3124
    %v3126 = vlaneseq
    %v3127 = vshrl.u32 %v3126, 7
    %v3128 = vsub.s32 %v2212, %v3127
    %v3129 = vrot.slane %v3122, %v3128
    %v3130 = vlaneseq
    %v3131 = vshrl.u32 %v3130, 7
    %v3132 = vsub.s32 %v2212, %v3131
    %v3133 = vrot.slane %v3125, %v3132
    %v3134 = vsel %vm2318, %v3133, %v3129
    %v3136 = vsel %vm1026, %v3134, %v2835
    %v3138 = vrot.slane %v3040, 2
    %v3140 = vmul.f32 %v2203, %v3138
    %vm3141 = vcmask 48134
    %v3142 = vsel %vm3141, %v3140, 0.0
    %3143 = vadd.xlane.f32.xlu0 %v3142
    %v3144 = vpop.xlane.xlu0 %3143
    %v3146 = vunpack.c.l.s4 1966171168
    %v3147 = vunpack.c.0.s8 %v3146
    %v3148 = vlaneseq
    %v3149 = vshrl.u32 %v3148, 7
    %v3150 = vsub.s32 %v3147, %v3149
    %v3151 = vrot.slane %v2739, %v3150
    %v3152 = vcombine.high %v3151, %v3151
    %v3154 = vunpack.c.l.s4 1966171168
    %v3155 = vunpack.c.0.s8 %v3154
    %v3156 = vlaneseq
    %v3157 = vshrl.u32 %v3156, 7
    %v3158 = vsub.s32 %v3155, %v3157
    %v3159 = vrot.slane %v3151, %v3158
    %v3161 = vunpack.c.l.s4 1966171168
    %v3162 = vunpack.c.0.s8 %v3161
    %v3163 = vlaneseq
    %v3164 = vshrl.u32 %v3163, 7
    %v3165 = vsub.s32 %v3162, %v3164
    %v3166 = vrot.slane %v3152, %v3165
    %v3167 = vlaneseq
    %v3168 = vshrl.u32 %v3167, 7
    %v3169 = vsub.s32 0, %v3168
    %v3170 = vrot.slane %v3159, %v3169
    %v3171 = vlaneseq
    %v3172 = vshrl.u32 %v3171, 7
    %v3173 = vsub.s32 0, %v3172
    %v3174 = vrot.slane %v3166, %v3173
    %v3177 = vmul.f32 %v70, %v3170
    %v3178 = vmul.f32 %v70, %v3174
    %v3179 = vsel %vm2258, %v3177, 0.0
    %3180 = vadd.xlane.f32.xlu0 %v3179
    %v3181 = vpop.xlane.xlu0 %3180
    %v3182 = vsel %vm2258, %v3178, 0.0
    %3183 = vadd.xlane.f32.xlu0 %v3182
    %v3184 = vpop.xlane.xlu0 %3183
    %v3185 = vlaneseq
    %v3186 = vshrl.u32 %v3185, 7
    %v3187 = vsub.s32 0, %v3186
    %v3188 = vrot.slane %v3040, %v3187
    %3190 = vbcast.lane.b32.xlu0 %v3188, 256
    %v3191 = vpop.permute.xlu0 %3190
    %v3192 = vlaneseq
    %v3193 = vshrl.u32 %v3192, 7
    %v3194 = vsub.s32 1, %v3193
    %v3195 = vrot.slane %v3040, %v3194
    %3197 = vbcast.lane.b32.xlu0 %v3195, 256
    %v3198 = vpop.permute.xlu0 %3197
    %v3201 = vmul.f32 %v3181, %v3191
    %v3202 = vmul.f32 %v3184, %v3198
    %3205 = vset.pattern.permute.xlu0 0
    %3206 = vperm.xlu0 %3205, %v3201
    %v3207 = vpop.permute.xlu0 %3206
    %3208 = vset.pattern.permute.xlu0 0
    %3209 = vperm.xlu0 %3208, %v3202
    %v3210 = vpop.permute.xlu0 %3209
    %v3211 = vlaneseq
    %v3212 = vshrl.u32 %v3211, 7
    %v3213 = vsub.s32 %v2212, %v3212
    %v3214 = vrot.slane %v3207, %v3213
    %v3215 = vlaneseq
    %v3216 = vshrl.u32 %v3215, 7
    %v3217 = vsub.s32 %v2212, %v3216
    %v3218 = vrot.slane %v3210, %v3217
    %v3219 = vsel %vm2318, %v3218, %v3214
    %v3221 = vsel %vm2323, %v3219, 0.0
    %3222 = vadd.xlane.f32.xlu0 %v3221
    %v3223 = vpop.xlane.xlu0 %3222
    %v3225 = vrot.slane %v3223, 2
    %v3227 = vadd.f32 %v3144, %v3225
    %v3229 = vrot.slane %v3227, 6
    %3230 = vrot.lane.b32.xlu0 %v3229, 3
    %v3231 = vpop.permute.xlu0 %3230
    %v3233 = vsel %vm181, %v3231, 0.0
    %3235 = vrot.lane.b32.xlu0 %v3233, 125
    %v3236 = vpop.permute.xlu0 %3235
    %v3238 = vadd.f32 %v2937, %v3236
    %v3239 = vsel %vm1026, %v3040, %v2938
    %v3242 = vunpack.c.l.s4 1966171168
    %v3243 = vunpack.c.0.s8 %v3242
    %v3244 = vlaneseq
    %v3245 = vshrl.u32 %v3244, 7
    %v3246 = vsub.s32 %v3243, %v3245
    %v3247 = vrot.slane %v3034, %v3246
    %v3248 = vcombine.high %v3247, %v3247
    %v3250 = vunpack.c.l.s4 1966171168
    %v3251 = vunpack.c.0.s8 %v3250
    %v3252 = vlaneseq
    %v3253 = vshrl.u32 %v3252, 7
    %v3254 = vsub.s32 %v3251, %v3253
    %v3255 = vrot.slane %v3247, %v3254
    %v3257 = vunpack.c.l.s4 1966171168
    %v3258 = vunpack.c.0.s8 %v3257
    %v3259 = vlaneseq
    %v3260 = vshrl.u32 %v3259, 7
    %v3261 = vsub.s32 %v3258, %v3260
    %v3262 = vrot.slane %v3248, %v3261
    %v3263 = vlaneseq
    %v3264 = vshrl.u32 %v3263, 7
    %v3265 = vsub.s32 0, %v3264
    %v3266 = vrot.slane %v3255, %v3265
    %v3267 = vlaneseq
    %v3268 = vshrl.u32 %v3267, 7
    %v3269 = vsub.s32 0, %v3268
    %v3270 = vrot.slane %v3262, %v3269
    %v3273 = vadd.f32 %v3266, %v70
    %v3274 = vadd.f32 %v3270, %v70
    %v3275 = vsel %vm2258, %v3273, -inf
    %3276 = vmax.xlane.f32.xlu0 %v3275
    %v3277 = vpop.xlane.xlu0 %3276
    %v3278 = vsel %vm2258, %v3274, -inf
    %3279 = vmax.xlane.f32.xlu0 %v3278
    %v3280 = vpop.xlane.xlu0 %3279
    %vm3281 = vcmp.eq.f32.partialorder %v3273, %v3277
    %vm3282 = vcmp.eq.f32.partialorder %v3274, %v3280
    %v3283 = vsel %vm3281, %v2212, 6
    %v3284 = vsel %vm3282, %v2212, 6
    %v3285 = vsel %vm2258, %v3283, 2147483647
    %v3286 = vand.u32 %v3285, 65535
    %v3287 = vshra.s32 %v3285, 16
    %v3288 = vcvt.s32.f32 %v3286
    %v3289 = vcvt.s32.f32 %v3287
    %3290 = vmin.xlane.f32.xlu0 %v3289
    %v3291 = vpop.xlane.xlu0 %3290
    %vm3292 = vcmp.eq.f32.partialorder %v3289, %v3291
    %v3293 = vsel %vm3292, %v3288, inf
    %3294 = vmin.xlane.f32.xlu0 %v3293
    %v3295 = vpop.xlane.xlu0 %3294
    %v3296 = vcvt.f32.s32 %v3295
    %v3297 = vcvt.f32.s32 %v3291
    %v3298 = vshll.u32 %v3297, 16
    %v3299 = vadd.s32 %v3298, %v3296
    %v3300 = vsel %vm2258, %v3284, 2147483647
    %v3301 = vand.u32 %v3300, 65535
    %v3302 = vshra.s32 %v3300, 16
    %v3303 = vcvt.s32.f32 %v3301
    %v3304 = vcvt.s32.f32 %v3302
    %3305 = vmin.xlane.f32.xlu0 %v3304
    %v3306 = vpop.xlane.xlu0 %3305
    %vm3307 = vcmp.eq.f32.partialorder %v3304, %v3306
    %v3308 = vsel %vm3307, %v3303, inf
    %3309 = vmin.xlane.f32.xlu0 %v3308
    %v3310 = vpop.xlane.xlu0 %3309
    %v3311 = vcvt.f32.s32 %v3310
    %v3312 = vcvt.f32.s32 %v3306
    %v3313 = vshll.u32 %v3312, 16
    %v3314 = vadd.s32 %v3313, %v3311
    %v3315 = vadd.f32 %v3277, %v3106
    %v3316 = vadd.f32 %v3280, %v3113
    %3319 = vset.pattern.permute.xlu0 0
    %3320 = vperm.xlu0 %3319, %v3315
    %v3321 = vpop.permute.xlu0 %3320
    %3322 = vset.pattern.permute.xlu0 0
    %3323 = vperm.xlu0 %3322, %v3316
    %v3324 = vpop.permute.xlu0 %3323
    %v3325 = vlaneseq
    %v3326 = vshrl.u32 %v3325, 7
    %v3327 = vsub.s32 %v2212, %v3326
    %v3328 = vrot.slane %v3321, %v3327
    %v3329 = vlaneseq
    %v3330 = vshrl.u32 %v3329, 7
    %v3331 = vsub.s32 %v2212, %v3330
    %v3332 = vrot.slane %v3324, %v3331
    %v3333 = vsel %vm2318, %v3332, %v3328
    %v3335 = vsel %vm1026, %v3333, %v3034
    %3336 = vset.pattern.permute.xlu0 4
    %3337 = vperm.xlu0 %3336, %v69
    %v3338 = vpop.permute.xlu0 %3337
    %vm3339 = vcmp.eq.s32.totalorder %v3338, %v2212
    %v3340 = vsel %vm3339, 1, 0
    %v3341 = vcvt.s32.f32 %v3340
    %v3344 = vunpack.c.l.s4 1966171168
    %v3345 = vunpack.c.0.s8 %v3344
    %v3346 = vlaneseq
    %v3347 = vshrl.u32 %v3346, 7
    %v3348 = vsub.s32 %v3345, %v3347
    %v3349 = vrot.slane %v3136, %v3348
    %v3350 = vcombine.high %v3349, %v3349
    %v3352 = vunpack.c.l.s4 1966171168
    %v3353 = vunpack.c.0.s8 %v3352
    %v3354 = vlaneseq
    %v3355 = vshrl.u32 %v3354, 7
    %v3356 = vsub.s32 %v3353, %v3355
    %v3357 = vrot.slane %v3349, %v3356
    %v3359 = vunpack.c.l.s4 1966171168
    %v3360 = vunpack.c.0.s8 %v3359
    %v3361 = vlaneseq
    %v3362 = vshrl.u32 %v3361, 7
    %v3363 = vsub.s32 %v3360, %v3362
    %v3364 = vrot.slane %v3350, %v3363
    %v3365 = vlaneseq
    %v3366 = vshrl.u32 %v3365, 7
    %v3367 = vsub.s32 0, %v3366
    %v3368 = vrot.slane %v3357, %v3367
    %v3369 = vlaneseq
    %v3370 = vshrl.u32 %v3369, 7
    %v3371 = vsub.s32 0, %v3370
    %v3372 = vrot.slane %v3364, %v3371
    %v3375 = vadd.f32 %v3368, %v70
    %v3376 = vadd.f32 %v3372, %v70
    %v3377 = vsel %vm2258, %v3375, -inf
    %3378 = vmax.xlane.f32.xlu0 %v3377
    %v3379 = vpop.xlane.xlu0 %3378
    %v3380 = vsel %vm2258, %v3376, -inf
    %3381 = vmax.xlane.f32.xlu0 %v3380
    %v3382 = vpop.xlane.xlu0 %3381
    %v3383 = vsub.f32 %v3375, %v3379
    %v3384 = vsub.f32 %v3376, %v3382
    %v3385 = vmul.f32 %v3383, 1.442695
    %v3386 = vpow.pop %v3385
    %v3387 = vmul.f32 %v3384, 1.442695
    %v3388 = vpow.pop %v3387
    %v3389 = vsel %vm2258, %v3386, 0.0
    %3390 = vadd.xlane.f32.xlu0 %v3389
    %v3391 = vpop.xlane.xlu0 %3390
    %v3392 = vsel %vm2258, %v3388, 0.0
    %3393 = vadd.xlane.f32.xlu0 %v3392
    %v3394 = vpop.xlane.xlu0 %3393
    %v3395 = vlog2.pop %v3391
    %v3396 = vmul.f32 %v3395, 0.6931472
    %v3397 = vlog2.pop %v3394
    %v3398 = vmul.f32 %v3397, 0.6931472
    %v3399 = vadd.f32 %v3379, %v3396
    %v3400 = vadd.f32 %v3382, %v3398
    %v3402 = vlaneseq
    %v3403 = vshrl.u32 %v3402, 7
    %v3404 = vsub.s32 0, %v3403
    %v3405 = vrot.slane %v2208, %v3404
    %3407 = vbcast.lane.b32.xlu0 %v3405, 256
    %v3408 = vpop.permute.xlu0 %3407
    %v3409 = vlaneseq
    %v3410 = vshrl.u32 %v3409, 7
    %v3411 = vsub.s32 1, %v3410
    %v3412 = vrot.slane %v2208, %v3411
    %3414 = vbcast.lane.b32.xlu0 %v3412, 256
    %v3415 = vpop.permute.xlu0 %3414
    %v3418 = vadd.f32 %v3399, %v3408
    %v3419 = vadd.f32 %v3400, %v3415
    %3422 = vset.pattern.permute.xlu0 0
    %3423 = vperm.xlu0 %3422, %v3418
    %v3424 = vpop.permute.xlu0 %3423
    %3425 = vset.pattern.permute.xlu0 0
    %3426 = vperm.xlu0 %3425, %v3419
    %v3427 = vpop.permute.xlu0 %3426
    %v3428 = vlaneseq
    %v3429 = vshrl.u32 %v3428, 7
    %v3430 = vsub.s32 %v2212, %v3429
    %v3431 = vrot.slane %v3424, %v3430
    %v3432 = vlaneseq
    %v3433 = vshrl.u32 %v3432, 7
    %v3434 = vsub.s32 %v2212, %v3433
    %v3435 = vrot.slane %v3427, %v3434
    %v3436 = vsel %vm2318, %v3435, %v3431
    %v3438 = vsel %vm1145, %v3436, %v3136
    %v3439 = vmul.f32 %v2208, %v3341
    %v3440 = vsel %vm2323, %v3439, 0.0
    %3441 = vadd.xlane.f32.xlu0 %v3440
    %v3442 = vpop.xlane.xlu0 %3441
    %v3444 = vunpack.c.l.s4 1966171168
    %v3445 = vunpack.c.0.s8 %v3444
    %v3446 = vlaneseq
    %v3447 = vshrl.u32 %v3446, 7
    %v3448 = vsub.s32 %v3445, %v3447
    %v3449 = vrot.slane %v3040, %v3448
    %v3450 = vcombine.high %v3449, %v3449
    %v3452 = vunpack.c.l.s4 1966171168
    %v3453 = vunpack.c.0.s8 %v3452
    %v3454 = vlaneseq
    %v3455 = vshrl.u32 %v3454, 7
    %v3456 = vsub.s32 %v3453, %v3455
    %v3457 = vrot.slane %v3449, %v3456
    %v3459 = vunpack.c.l.s4 1966171168
    %v3460 = vunpack.c.0.s8 %v3459
    %v3461 = vlaneseq
    %v3462 = vshrl.u32 %v3461, 7
    %v3463 = vsub.s32 %v3460, %v3462
    %v3464 = vrot.slane %v3450, %v3463
    %v3465 = vlaneseq
    %v3466 = vshrl.u32 %v3465, 7
    %v3467 = vsub.s32 0, %v3466
    %v3468 = vrot.slane %v3457, %v3467
    %v3469 = vlaneseq
    %v3470 = vshrl.u32 %v3469, 7
    %v3471 = vsub.s32 0, %v3470
    %v3472 = vrot.slane %v3464, %v3471
    %v3475 = vmul.f32 %v70, %v3468
    %v3476 = vmul.f32 %v70, %v3472
    %v3477 = vsel %vm2258, %v3475, 0.0
    %3478 = vadd.xlane.f32.xlu0 %v3477
    %v3479 = vpop.xlane.xlu0 %3478
    %v3480 = vsel %vm2258, %v3476, 0.0
    %3481 = vadd.xlane.f32.xlu0 %v3480
    %v3482 = vpop.xlane.xlu0 %3481
    %v3484 = vlaneseq
    %v3485 = vshrl.u32 %v3484, 7
    %v3486 = vsub.s32 0, %v3485
    %v3487 = vrot.slane %v3341, %v3486
    %3489 = vbcast.lane.b32.xlu0 %v3487, 256
    %v3490 = vpop.permute.xlu0 %3489
    %v3491 = vlaneseq
    %v3492 = vshrl.u32 %v3491, 7
    %v3493 = vsub.s32 1, %v3492
    %v3494 = vrot.slane %v3341, %v3493
    %3496 = vbcast.lane.b32.xlu0 %v3494, 256
    %v3497 = vpop.permute.xlu0 %3496
    %v3500 = vmul.f32 %v3479, %v3490
    %v3501 = vmul.f32 %v3482, %v3497
    %3504 = vset.pattern.permute.xlu0 0
    %3505 = vperm.xlu0 %3504, %v3500
    %v3506 = vpop.permute.xlu0 %3505
    %3507 = vset.pattern.permute.xlu0 0
    %3508 = vperm.xlu0 %3507, %v3501
    %v3509 = vpop.permute.xlu0 %3508
    %v3510 = vlaneseq
    %v3511 = vshrl.u32 %v3510, 7
    %v3512 = vsub.s32 %v2212, %v3511
    %v3513 = vrot.slane %v3506, %v3512
    %v3514 = vlaneseq
    %v3515 = vshrl.u32 %v3514, 7
    %v3516 = vsub.s32 %v2212, %v3515
    %v3517 = vrot.slane %v3509, %v3516
    %v3518 = vsel %vm2318, %v3517, %v3513
    %v3520 = vsel %vm2323, %v3518, 0.0
    %3521 = vadd.xlane.f32.xlu0 %v3520
    %v3522 = vpop.xlane.xlu0 %3521
    %v3523 = vadd.f32 %v3442, %v3522
    %v3524 = vsel %vm181, %v3523, 0.0
    %3526 = vrot.lane.b32.xlu0 %v3524, 124
    %v3527 = vpop.permute.xlu0 %3526
    %v3529 = vadd.f32 %v3238, %v3527
    %v3530 = vsel %vm1145, %v3341, %v3239
    %v3533 = vunpack.c.l.s4 1966171168
    %v3534 = vunpack.c.0.s8 %v3533
    %v3535 = vlaneseq
    %v3536 = vshrl.u32 %v3535, 7
    %v3537 = vsub.s32 %v3534, %v3536
    %v3538 = vrot.slane %v3335, %v3537
    %v3539 = vcombine.high %v3538, %v3538
    %v3541 = vunpack.c.l.s4 1966171168
    %v3542 = vunpack.c.0.s8 %v3541
    %v3543 = vlaneseq
    %v3544 = vshrl.u32 %v3543, 7
    %v3545 = vsub.s32 %v3542, %v3544
    %v3546 = vrot.slane %v3538, %v3545
    %v3548 = vunpack.c.l.s4 1966171168
    %v3549 = vunpack.c.0.s8 %v3548
    %v3550 = vlaneseq
    %v3551 = vshrl.u32 %v3550, 7
    %v3552 = vsub.s32 %v3549, %v3551
    %v3553 = vrot.slane %v3539, %v3552
    %v3554 = vlaneseq
    %v3555 = vshrl.u32 %v3554, 7
    %v3556 = vsub.s32 0, %v3555
    %v3557 = vrot.slane %v3546, %v3556
    %v3558 = vlaneseq
    %v3559 = vshrl.u32 %v3558, 7
    %v3560 = vsub.s32 0, %v3559
    %v3561 = vrot.slane %v3553, %v3560
    %v3564 = vadd.f32 %v3557, %v70
    %v3565 = vadd.f32 %v3561, %v70
    %v3566 = vsel %vm2258, %v3564, -inf
    %3567 = vmax.xlane.f32.xlu0 %v3566
    %v3568 = vpop.xlane.xlu0 %3567
    %v3569 = vsel %vm2258, %v3565, -inf
    %3570 = vmax.xlane.f32.xlu0 %v3569
    %v3571 = vpop.xlane.xlu0 %3570
    %vm3572 = vcmp.eq.f32.partialorder %v3564, %v3568
    %vm3573 = vcmp.eq.f32.partialorder %v3565, %v3571
    %v3574 = vsel %vm3572, %v2212, 6
    %v3575 = vsel %vm3573, %v2212, 6
    %v3576 = vsel %vm2258, %v3574, 2147483647
    %v3577 = vand.u32 %v3576, 65535
    %v3578 = vshra.s32 %v3576, 16
    %v3579 = vcvt.s32.f32 %v3577
    %v3580 = vcvt.s32.f32 %v3578
    %3581 = vmin.xlane.f32.xlu0 %v3580
    %v3582 = vpop.xlane.xlu0 %3581
    %vm3583 = vcmp.eq.f32.partialorder %v3580, %v3582
    %v3584 = vsel %vm3583, %v3579, inf
    %3585 = vmin.xlane.f32.xlu0 %v3584
    %v3586 = vpop.xlane.xlu0 %3585
    %v3587 = vcvt.f32.s32 %v3586
    %v3588 = vcvt.f32.s32 %v3582
    %v3589 = vshll.u32 %v3588, 16
    %v3590 = vadd.s32 %v3589, %v3587
    %v3591 = vsel %vm2258, %v3575, 2147483647
    %v3592 = vand.u32 %v3591, 65535
    %v3593 = vshra.s32 %v3591, 16
    %v3594 = vcvt.s32.f32 %v3592
    %v3595 = vcvt.s32.f32 %v3593
    %3596 = vmin.xlane.f32.xlu0 %v3595
    %v3597 = vpop.xlane.xlu0 %3596
    %vm3598 = vcmp.eq.f32.partialorder %v3595, %v3597
    %v3599 = vsel %vm3598, %v3594, inf
    %3600 = vmin.xlane.f32.xlu0 %v3599
    %v3601 = vpop.xlane.xlu0 %3600
    %v3602 = vcvt.f32.s32 %v3601
    %v3603 = vcvt.f32.s32 %v3597
    %v3604 = vshll.u32 %v3603, 16
    %v3605 = vadd.s32 %v3604, %v3602
    %v3606 = vadd.f32 %v3568, %v3408
    %v3607 = vadd.f32 %v3571, %v3415
    %3610 = vset.pattern.permute.xlu0 0
    %3611 = vperm.xlu0 %3610, %v3606
    %v3612 = vpop.permute.xlu0 %3611
    %3613 = vset.pattern.permute.xlu0 0
    %3614 = vperm.xlu0 %3613, %v3607
    %v3615 = vpop.permute.xlu0 %3614
    %v3616 = vlaneseq
    %v3617 = vshrl.u32 %v3616, 7
    %v3618 = vsub.s32 %v2212, %v3617
    %v3619 = vrot.slane %v3612, %v3618
    %v3620 = vlaneseq
    %v3621 = vshrl.u32 %v3620, 7
    %v3622 = vsub.s32 %v2212, %v3621
    %v3623 = vrot.slane %v3615, %v3622
    %v3624 = vsel %vm2318, %v3623, %v3619
    %v3626 = vsel %vm1145, %v3624, %v3335
    %3627 = vset.pattern.permute.xlu0 5
    %3628 = vperm.xlu0 %3627, %v69
    %v3629 = vpop.permute.xlu0 %3628
    %vm3630 = vcmp.eq.s32.totalorder %v3629, %v2212
    %v3631 = vsel %vm3630, 1, 0
    %v3632 = vcvt.s32.f32 %v3631
    %v3635 = vunpack.c.l.s4 1966171168
    %v3636 = vunpack.c.0.s8 %v3635
    %v3637 = vlaneseq
    %v3638 = vshrl.u32 %v3637, 7
    %v3639 = vsub.s32 %v3636, %v3638
    %v3640 = vrot.slane %v3438, %v3639
    %v3641 = vcombine.high %v3640, %v3640
    %v3643 = vunpack.c.l.s4 1966171168
    %v3644 = vunpack.c.0.s8 %v3643
    %v3645 = vlaneseq
    %v3646 = vshrl.u32 %v3645, 7
    %v3647 = vsub.s32 %v3644, %v3646
    %v3648 = vrot.slane %v3640, %v3647
    %v3650 = vunpack.c.l.s4 1966171168
    %v3651 = vunpack.c.0.s8 %v3650
    %v3652 = vlaneseq
    %v3653 = vshrl.u32 %v3652, 7
    %v3654 = vsub.s32 %v3651, %v3653
    %v3655 = vrot.slane %v3641, %v3654
    %v3656 = vlaneseq
    %v3657 = vshrl.u32 %v3656, 7
    %v3658 = vsub.s32 0, %v3657
    %v3659 = vrot.slane %v3648, %v3658
    %v3660 = vlaneseq
    %v3661 = vshrl.u32 %v3660, 7
    %v3662 = vsub.s32 0, %v3661
    %v3663 = vrot.slane %v3655, %v3662
    %v3666 = vadd.f32 %v3659, %v70
    %v3667 = vadd.f32 %v3663, %v70
    %v3668 = vsel %vm2258, %v3666, -inf
    %3669 = vmax.xlane.f32.xlu0 %v3668
    %v3670 = vpop.xlane.xlu0 %3669
    %v3671 = vsel %vm2258, %v3667, -inf
    %3672 = vmax.xlane.f32.xlu0 %v3671
    %v3673 = vpop.xlane.xlu0 %3672
    %v3674 = vsub.f32 %v3666, %v3670
    %v3675 = vsub.f32 %v3667, %v3673
    %v3676 = vmul.f32 %v3674, 1.442695
    %v3677 = vpow.pop %v3676
    %v3678 = vmul.f32 %v3675, 1.442695
    %v3679 = vpow.pop %v3678
    %v3680 = vsel %vm2258, %v3677, 0.0
    %3681 = vadd.xlane.f32.xlu0 %v3680
    %v3682 = vpop.xlane.xlu0 %3681
    %v3683 = vsel %vm2258, %v3679, 0.0
    %3684 = vadd.xlane.f32.xlu0 %v3683
    %v3685 = vpop.xlane.xlu0 %3684
    %v3686 = vlog2.pop %v3682
    %v3687 = vmul.f32 %v3686, 0.6931472
    %v3688 = vlog2.pop %v3685
    %v3689 = vmul.f32 %v3688, 0.6931472
    %v3690 = vadd.f32 %v3670, %v3687
    %v3691 = vadd.f32 %v3673, %v3689
    %v3692 = vlaneseq
    %v3693 = vshrl.u32 %v3692, 7
    %v3694 = vsub.s32 2, %v3693
    %v3695 = vrot.slane %v2208, %v3694
    %3697 = vbcast.lane.b32.xlu0 %v3695, 256
    %v3698 = vpop.permute.xlu0 %3697
    %v3699 = vlaneseq
    %v3700 = vshrl.u32 %v3699, 7
    %v3701 = vsub.s32 3, %v3700
    %v3702 = vrot.slane %v2208, %v3701
    %3704 = vbcast.lane.b32.xlu0 %v3702, 256
    %v3705 = vpop.permute.xlu0 %3704
    %v3708 = vadd.f32 %v3690, %v3698
    %v3709 = vadd.f32 %v3691, %v3705
    %3712 = vset.pattern.permute.xlu0 0
    %3713 = vperm.xlu0 %3712, %v3708
    %v3714 = vpop.permute.xlu0 %3713
    %3715 = vset.pattern.permute.xlu0 0
    %3716 = vperm.xlu0 %3715, %v3709
    %v3717 = vpop.permute.xlu0 %3716
    %v3718 = vlaneseq
    %v3719 = vshrl.u32 %v3718, 7
    %v3720 = vsub.s32 %v2212, %v3719
    %v3721 = vrot.slane %v3714, %v3720
    %v3722 = vlaneseq
    %v3723 = vshrl.u32 %v3722, 7
    %v3724 = vsub.s32 %v2212, %v3723
    %v3725 = vrot.slane %v3717, %v3724
    %v3726 = vsel %vm2318, %v3725, %v3721
    %v3728 = vsel %vm897, %v3726, %v3438
    %v3730 = vrot.slane %v3632, 6
    %v3732 = vmul.f32 %v2208, %v3730
    %v3733 = vsel %vm2539, %v3732, 0.0
    %3734 = vadd.xlane.f32.xlu0 %v3733
    %v3735 = vpop.xlane.xlu0 %3734
    %v3737 = vunpack.c.l.s4 1966171168
    %v3738 = vunpack.c.0.s8 %v3737
    %v3739 = vlaneseq
    %v3740 = vshrl.u32 %v3739, 7
    %v3741 = vsub.s32 %v3738, %v3740
    %v3742 = vrot.slane %v3341, %v3741
    %v3743 = vcombine.high %v3742, %v3742
    %v3745 = vunpack.c.l.s4 1966171168
    %v3746 = vunpack.c.0.s8 %v3745
    %v3747 = vlaneseq
    %v3748 = vshrl.u32 %v3747, 7
    %v3749 = vsub.s32 %v3746, %v3748
    %v3750 = vrot.slane %v3742, %v3749
    %v3752 = vunpack.c.l.s4 1966171168
    %v3753 = vunpack.c.0.s8 %v3752
    %v3754 = vlaneseq
    %v3755 = vshrl.u32 %v3754, 7
    %v3756 = vsub.s32 %v3753, %v3755
    %v3757 = vrot.slane %v3743, %v3756
    %v3758 = vlaneseq
    %v3759 = vshrl.u32 %v3758, 7
    %v3760 = vsub.s32 0, %v3759
    %v3761 = vrot.slane %v3750, %v3760
    %v3762 = vlaneseq
    %v3763 = vshrl.u32 %v3762, 7
    %v3764 = vsub.s32 0, %v3763
    %v3765 = vrot.slane %v3757, %v3764
    %v3768 = vmul.f32 %v70, %v3761
    %v3769 = vmul.f32 %v70, %v3765
    %v3770 = vsel %vm2258, %v3768, 0.0
    %3771 = vadd.xlane.f32.xlu0 %v3770
    %v3772 = vpop.xlane.xlu0 %3771
    %v3773 = vsel %vm2258, %v3769, 0.0
    %3774 = vadd.xlane.f32.xlu0 %v3773
    %v3775 = vpop.xlane.xlu0 %3774
    %v3776 = vlaneseq
    %v3777 = vshrl.u32 %v3776, 7
    %v3778 = vsub.s32 0, %v3777
    %v3779 = vrot.slane %v3632, %v3778
    %3781 = vbcast.lane.b32.xlu0 %v3779, 256
    %v3782 = vpop.permute.xlu0 %3781
    %v3783 = vlaneseq
    %v3784 = vshrl.u32 %v3783, 7
    %v3785 = vsub.s32 1, %v3784
    %v3786 = vrot.slane %v3632, %v3785
    %3788 = vbcast.lane.b32.xlu0 %v3786, 256
    %v3789 = vpop.permute.xlu0 %3788
    %v3792 = vmul.f32 %v3772, %v3782
    %v3793 = vmul.f32 %v3775, %v3789
    %3796 = vset.pattern.permute.xlu0 0
    %3797 = vperm.xlu0 %3796, %v3792
    %v3798 = vpop.permute.xlu0 %3797
    %3799 = vset.pattern.permute.xlu0 0
    %3800 = vperm.xlu0 %3799, %v3793
    %v3801 = vpop.permute.xlu0 %3800
    %v3802 = vlaneseq
    %v3803 = vshrl.u32 %v3802, 7
    %v3804 = vsub.s32 %v2212, %v3803
    %v3805 = vrot.slane %v3798, %v3804
    %v3806 = vlaneseq
    %v3807 = vshrl.u32 %v3806, 7
    %v3808 = vsub.s32 %v2212, %v3807
    %v3809 = vrot.slane %v3801, %v3808
    %v3810 = vsel %vm2318, %v3809, %v3805
    %v3812 = vsel %vm2323, %v3810, 0.0
    %3813 = vadd.xlane.f32.xlu0 %v3812
    %v3814 = vpop.xlane.xlu0 %3813
    %v3816 = vrot.slane %v3814, 6
    %v3818 = vadd.f32 %v3735, %v3816
    %v3820 = vrot.slane %v3818, 2
    %3821 = vrot.lane.b32.xlu0 %v3820, 5
    %v3822 = vpop.permute.xlu0 %3821
    %v3824 = vsel %vm181, %v3822, 0.0
    %3826 = vrot.lane.b32.xlu0 %v3824, 123
    %v3827 = vpop.permute.xlu0 %3826
    %v3829 = vadd.f32 %v3529, %v3827
    %v3830 = vsel %vm897, %v3632, %v3530
    %v3833 = vunpack.c.l.s4 1966171168
    %v3834 = vunpack.c.0.s8 %v3833
    %v3835 = vlaneseq
    %v3836 = vshrl.u32 %v3835, 7
    %v3837 = vsub.s32 %v3834, %v3836
    %v3838 = vrot.slane %v3626, %v3837
    %v3839 = vcombine.high %v3838, %v3838
    %v3841 = vunpack.c.l.s4 1966171168
    %v3842 = vunpack.c.0.s8 %v3841
    %v3843 = vlaneseq
    %v3844 = vshrl.u32 %v3843, 7
    %v3845 = vsub.s32 %v3842, %v3844
    %v3846 = vrot.slane %v3838, %v3845
    %v3848 = vunpack.c.l.s4 1966171168
    %v3849 = vunpack.c.0.s8 %v3848
    %v3850 = vlaneseq
    %v3851 = vshrl.u32 %v3850, 7
    %v3852 = vsub.s32 %v3849, %v3851
    %v3853 = vrot.slane %v3839, %v3852
    %v3854 = vlaneseq
    %v3855 = vshrl.u32 %v3854, 7
    %v3856 = vsub.s32 0, %v3855
    %v3857 = vrot.slane %v3846, %v3856
    %v3858 = vlaneseq
    %v3859 = vshrl.u32 %v3858, 7
    %v3860 = vsub.s32 0, %v3859
    %v3861 = vrot.slane %v3853, %v3860
    %v3864 = vadd.f32 %v3857, %v70
    %v3865 = vadd.f32 %v3861, %v70
    %v3866 = vsel %vm2258, %v3864, -inf
    %3867 = vmax.xlane.f32.xlu0 %v3866
    %v3868 = vpop.xlane.xlu0 %3867
    %v3869 = vsel %vm2258, %v3865, -inf
    %3870 = vmax.xlane.f32.xlu0 %v3869
    %v3871 = vpop.xlane.xlu0 %3870
    %vm3872 = vcmp.eq.f32.partialorder %v3864, %v3868
    %vm3873 = vcmp.eq.f32.partialorder %v3865, %v3871
    %v3874 = vsel %vm3872, %v2212, 6
    %v3875 = vsel %vm3873, %v2212, 6
    %v3876 = vsel %vm2258, %v3874, 2147483647
    %v3877 = vand.u32 %v3876, 65535
    %v3878 = vshra.s32 %v3876, 16
    %v3879 = vcvt.s32.f32 %v3877
    %v3880 = vcvt.s32.f32 %v3878
    %3881 = vmin.xlane.f32.xlu0 %v3880
    %v3882 = vpop.xlane.xlu0 %3881
    %vm3883 = vcmp.eq.f32.partialorder %v3880, %v3882
    %v3884 = vsel %vm3883, %v3879, inf
    %3885 = vmin.xlane.f32.xlu0 %v3884
    %v3886 = vpop.xlane.xlu0 %3885
    %v3887 = vcvt.f32.s32 %v3886
    %v3888 = vcvt.f32.s32 %v3882
    %v3889 = vshll.u32 %v3888, 16
    %v3890 = vadd.s32 %v3889, %v3887
    %v3891 = vsel %vm2258, %v3875, 2147483647
    %v3892 = vand.u32 %v3891, 65535
    %v3893 = vshra.s32 %v3891, 16
    %v3894 = vcvt.s32.f32 %v3892
    %v3895 = vcvt.s32.f32 %v3893
    %3896 = vmin.xlane.f32.xlu0 %v3895
    %v3897 = vpop.xlane.xlu0 %3896
    %vm3898 = vcmp.eq.f32.partialorder %v3895, %v3897
    %v3899 = vsel %vm3898, %v3894, inf
    %3900 = vmin.xlane.f32.xlu0 %v3899
    %v3901 = vpop.xlane.xlu0 %3900
    %v3902 = vcvt.f32.s32 %v3901
    %v3903 = vcvt.f32.s32 %v3897
    %v3904 = vshll.u32 %v3903, 16
    %v3905 = vadd.s32 %v3904, %v3902
    %v3906 = vadd.f32 %v3868, %v3698
    %v3907 = vadd.f32 %v3871, %v3705
    %3910 = vset.pattern.permute.xlu0 0
    %3911 = vperm.xlu0 %3910, %v3906
    %v3912 = vpop.permute.xlu0 %3911
    %3913 = vset.pattern.permute.xlu0 0
    %3914 = vperm.xlu0 %3913, %v3907
    %v3915 = vpop.permute.xlu0 %3914
    %v3916 = vlaneseq
    %v3917 = vshrl.u32 %v3916, 7
    %v3918 = vsub.s32 %v2212, %v3917
    %v3919 = vrot.slane %v3912, %v3918
    %v3920 = vlaneseq
    %v3921 = vshrl.u32 %v3920, 7
    %v3922 = vsub.s32 %v2212, %v3921
    %v3923 = vrot.slane %v3915, %v3922
    %v3924 = vsel %vm2318, %v3923, %v3919
    %v3926 = vsel %vm897, %v3924, %v3626
    %3927 = vset.pattern.permute.xlu0 6
    %3928 = vperm.xlu0 %3927, %v69
    %v3929 = vpop.permute.xlu0 %3928
    %vm3930 = vcmp.eq.s32.totalorder %v3929, %v2212
    %v3931 = vsel %vm3930, 1, 0
    %v3932 = vcvt.s32.f32 %v3931
    %v3935 = vunpack.c.l.s4 1966171168
    %v3936 = vunpack.c.0.s8 %v3935
    %v3937 = vlaneseq
    %v3938 = vshrl.u32 %v3937, 7
    %v3939 = vsub.s32 %v3936, %v3938
    %v3940 = vrot.slane %v3728, %v3939
    %v3941 = vcombine.high %v3940, %v3940
    %v3943 = vunpack.c.l.s4 1966171168
    %v3944 = vunpack.c.0.s8 %v3943
    %v3945 = vlaneseq
    %v3946 = vshrl.u32 %v3945, 7
    %v3947 = vsub.s32 %v3944, %v3946
    %v3948 = vrot.slane %v3940, %v3947
    %v3950 = vunpack.c.l.s4 1966171168
    %v3951 = vunpack.c.0.s8 %v3950
    %v3952 = vlaneseq
    %v3953 = vshrl.u32 %v3952, 7
    %v3954 = vsub.s32 %v3951, %v3953
    %v3955 = vrot.slane %v3941, %v3954
    %v3956 = vlaneseq
    %v3957 = vshrl.u32 %v3956, 7
    %v3958 = vsub.s32 0, %v3957
    %v3959 = vrot.slane %v3948, %v3958
    %v3960 = vlaneseq
    %v3961 = vshrl.u32 %v3960, 7
    %v3962 = vsub.s32 0, %v3961
    %v3963 = vrot.slane %v3955, %v3962
    %v3966 = vadd.f32 %v3959, %v70
    %v3967 = vadd.f32 %v3963, %v70
    %v3968 = vsel %vm2258, %v3966, -inf
    %3969 = vmax.xlane.f32.xlu0 %v3968
    %v3970 = vpop.xlane.xlu0 %3969
    %v3971 = vsel %vm2258, %v3967, -inf
    %3972 = vmax.xlane.f32.xlu0 %v3971
    %v3973 = vpop.xlane.xlu0 %3972
    %v3974 = vsub.f32 %v3966, %v3970
    %v3975 = vsub.f32 %v3967, %v3973
    %v3976 = vmul.f32 %v3974, 1.442695
    %v3977 = vpow.pop %v3976
    %v3978 = vmul.f32 %v3975, 1.442695
    %v3979 = vpow.pop %v3978
    %v3980 = vsel %vm2258, %v3977, 0.0
    %3981 = vadd.xlane.f32.xlu0 %v3980
    %v3982 = vpop.xlane.xlu0 %3981
    %v3983 = vsel %vm2258, %v3979, 0.0
    %3984 = vadd.xlane.f32.xlu0 %v3983
    %v3985 = vpop.xlane.xlu0 %3984
    %v3986 = vlog2.pop %v3982
    %v3987 = vmul.f32 %v3986, 0.6931472
    %v3988 = vlog2.pop %v3985
    %v3989 = vmul.f32 %v3988, 0.6931472
    %v3990 = vadd.f32 %v3970, %v3987
    %v3991 = vadd.f32 %v3973, %v3989
    %v3992 = vlaneseq
    %v3993 = vshrl.u32 %v3992, 7
    %v3994 = vsub.s32 4, %v3993
    %v3995 = vrot.slane %v2208, %v3994
    %3997 = vbcast.lane.b32.xlu0 %v3995, 256
    %v3998 = vpop.permute.xlu0 %3997
    %v3999 = vlaneseq
    %v4000 = vshrl.u32 %v3999, 7
    %v4001 = vsub.s32 5, %v4000
    %v4002 = vrot.slane %v2208, %v4001
    %4004 = vbcast.lane.b32.xlu0 %v4002, 256
    %v4005 = vpop.permute.xlu0 %4004
    %v4008 = vadd.f32 %v3990, %v3998
    %v4009 = vadd.f32 %v3991, %v4005
    %4012 = vset.pattern.permute.xlu0 0
    %4013 = vperm.xlu0 %4012, %v4008
    %v4014 = vpop.permute.xlu0 %4013
    %4015 = vset.pattern.permute.xlu0 0
    %4016 = vperm.xlu0 %4015, %v4009
    %v4017 = vpop.permute.xlu0 %4016
    %v4018 = vlaneseq
    %v4019 = vshrl.u32 %v4018, 7
    %v4020 = vsub.s32 %v2212, %v4019
    %v4021 = vrot.slane %v4014, %v4020
    %v4022 = vlaneseq
    %v4023 = vshrl.u32 %v4022, 7
    %v4024 = vsub.s32 %v2212, %v4023
    %v4025 = vrot.slane %v4017, %v4024
    %v4026 = vsel %vm2318, %v4025, %v4021
    %v4028 = vsel %vm645, %v4026, %v3728
    %v4030 = vrot.slane %v3932, 4
    %v4032 = vmul.f32 %v2208, %v4030
    %v4033 = vsel %vm2840, %v4032, 0.0
    %4034 = vadd.xlane.f32.xlu0 %v4033
    %v4035 = vpop.xlane.xlu0 %4034
    %v4037 = vunpack.c.l.s4 1966171168
    %v4038 = vunpack.c.0.s8 %v4037
    %v4039 = vlaneseq
    %v4040 = vshrl.u32 %v4039, 7
    %v4041 = vsub.s32 %v4038, %v4040
    %v4042 = vrot.slane %v3632, %v4041
    %v4043 = vcombine.high %v4042, %v4042
    %v4045 = vunpack.c.l.s4 1966171168
    %v4046 = vunpack.c.0.s8 %v4045
    %v4047 = vlaneseq
    %v4048 = vshrl.u32 %v4047, 7
    %v4049 = vsub.s32 %v4046, %v4048
    %v4050 = vrot.slane %v4042, %v4049
    %v4052 = vunpack.c.l.s4 1966171168
    %v4053 = vunpack.c.0.s8 %v4052
    %v4054 = vlaneseq
    %v4055 = vshrl.u32 %v4054, 7
    %v4056 = vsub.s32 %v4053, %v4055
    %v4057 = vrot.slane %v4043, %v4056
    %v4058 = vlaneseq
    %v4059 = vshrl.u32 %v4058, 7
    %v4060 = vsub.s32 0, %v4059
    %v4061 = vrot.slane %v4050, %v4060
    %v4062 = vlaneseq
    %v4063 = vshrl.u32 %v4062, 7
    %v4064 = vsub.s32 0, %v4063
    %v4065 = vrot.slane %v4057, %v4064
    %v4068 = vmul.f32 %v70, %v4061
    %v4069 = vmul.f32 %v70, %v4065
    %v4070 = vsel %vm2258, %v4068, 0.0
    %4071 = vadd.xlane.f32.xlu0 %v4070
    %v4072 = vpop.xlane.xlu0 %4071
    %v4073 = vsel %vm2258, %v4069, 0.0
    %4074 = vadd.xlane.f32.xlu0 %v4073
    %v4075 = vpop.xlane.xlu0 %4074
    %v4076 = vlaneseq
    %v4077 = vshrl.u32 %v4076, 7
    %v4078 = vsub.s32 0, %v4077
    %v4079 = vrot.slane %v3932, %v4078
    %4081 = vbcast.lane.b32.xlu0 %v4079, 256
    %v4082 = vpop.permute.xlu0 %4081
    %v4083 = vlaneseq
    %v4084 = vshrl.u32 %v4083, 7
    %v4085 = vsub.s32 1, %v4084
    %v4086 = vrot.slane %v3932, %v4085
    %4088 = vbcast.lane.b32.xlu0 %v4086, 256
    %v4089 = vpop.permute.xlu0 %4088
    %v4092 = vmul.f32 %v4072, %v4082
    %v4093 = vmul.f32 %v4075, %v4089
    %4096 = vset.pattern.permute.xlu0 0
    %4097 = vperm.xlu0 %4096, %v4092
    %v4098 = vpop.permute.xlu0 %4097
    %4099 = vset.pattern.permute.xlu0 0
    %4100 = vperm.xlu0 %4099, %v4093
    %v4101 = vpop.permute.xlu0 %4100
    %v4102 = vlaneseq
    %v4103 = vshrl.u32 %v4102, 7
    %v4104 = vsub.s32 %v2212, %v4103
    %v4105 = vrot.slane %v4098, %v4104
    %v4106 = vlaneseq
    %v4107 = vshrl.u32 %v4106, 7
    %v4108 = vsub.s32 %v2212, %v4107
    %v4109 = vrot.slane %v4101, %v4108
    %v4110 = vsel %vm2318, %v4109, %v4105
    %v4112 = vsel %vm2323, %v4110, 0.0
    %4113 = vadd.xlane.f32.xlu0 %v4112
    %v4114 = vpop.xlane.xlu0 %4113
    %v4116 = vrot.slane %v4114, 4
    %v4118 = vadd.f32 %v4035, %v4116
    %v4120 = vrot.slane %v4118, 4
    %4121 = vrot.lane.b32.xlu0 %v4120, 6
    %v4122 = vpop.permute.xlu0 %4121
    %v4124 = vsel %vm181, %v4122, 0.0
    %4126 = vrot.lane.b32.xlu0 %v4124, 122
    %v4127 = vpop.permute.xlu0 %4126
    %v4129 = vadd.f32 %v3829, %v4127
    %v4130 = vsel %vm645, %v3932, %v3830
    %v4133 = vunpack.c.l.s4 1966171168
    %v4134 = vunpack.c.0.s8 %v4133
    %v4135 = vlaneseq
    %v4136 = vshrl.u32 %v4135, 7
    %v4137 = vsub.s32 %v4134, %v4136
    %v4138 = vrot.slane %v3926, %v4137
    %v4139 = vcombine.high %v4138, %v4138
    %v4141 = vunpack.c.l.s4 1966171168
    %v4142 = vunpack.c.0.s8 %v4141
    %v4143 = vlaneseq
    %v4144 = vshrl.u32 %v4143, 7
    %v4145 = vsub.s32 %v4142, %v4144
    %v4146 = vrot.slane %v4138, %v4145
    %v4148 = vunpack.c.l.s4 1966171168
    %v4149 = vunpack.c.0.s8 %v4148
    %v4150 = vlaneseq
    %v4151 = vshrl.u32 %v4150, 7
    %v4152 = vsub.s32 %v4149, %v4151
    %v4153 = vrot.slane %v4139, %v4152
    %v4154 = vlaneseq
    %v4155 = vshrl.u32 %v4154, 7
    %v4156 = vsub.s32 0, %v4155
    %v4157 = vrot.slane %v4146, %v4156
    %v4158 = vlaneseq
    %v4159 = vshrl.u32 %v4158, 7
    %v4160 = vsub.s32 0, %v4159
    %v4161 = vrot.slane %v4153, %v4160
    %v4164 = vadd.f32 %v4157, %v70
    %v4165 = vadd.f32 %v4161, %v70
    %v4166 = vsel %vm2258, %v4164, -inf
    %4167 = vmax.xlane.f32.xlu0 %v4166
    %v4168 = vpop.xlane.xlu0 %4167
    %v4169 = vsel %vm2258, %v4165, -inf
    %4170 = vmax.xlane.f32.xlu0 %v4169
    %v4171 = vpop.xlane.xlu0 %4170
    %vm4172 = vcmp.eq.f32.partialorder %v4164, %v4168
    %vm4173 = vcmp.eq.f32.partialorder %v4165, %v4171
    %v4174 = vsel %vm4172, %v2212, 6
    %v4175 = vsel %vm4173, %v2212, 6
    %v4176 = vsel %vm2258, %v4174, 2147483647
    %v4177 = vand.u32 %v4176, 65535
    %v4178 = vshra.s32 %v4176, 16
    %v4179 = vcvt.s32.f32 %v4177
    %v4180 = vcvt.s32.f32 %v4178
    %4181 = vmin.xlane.f32.xlu0 %v4180
    %v4182 = vpop.xlane.xlu0 %4181
    %vm4183 = vcmp.eq.f32.partialorder %v4180, %v4182
    %v4184 = vsel %vm4183, %v4179, inf
    %4185 = vmin.xlane.f32.xlu0 %v4184
    %v4186 = vpop.xlane.xlu0 %4185
    %v4187 = vcvt.f32.s32 %v4186
    %v4188 = vcvt.f32.s32 %v4182
    %v4189 = vshll.u32 %v4188, 16
    %v4190 = vadd.s32 %v4189, %v4187
    %v4191 = vsel %vm2258, %v4175, 2147483647
    %v4192 = vand.u32 %v4191, 65535
    %v4193 = vshra.s32 %v4191, 16
    %v4194 = vcvt.s32.f32 %v4192
    %v4195 = vcvt.s32.f32 %v4193
    %4196 = vmin.xlane.f32.xlu0 %v4195
    %v4197 = vpop.xlane.xlu0 %4196
    %vm4198 = vcmp.eq.f32.partialorder %v4195, %v4197
    %v4199 = vsel %vm4198, %v4194, inf
    %4200 = vmin.xlane.f32.xlu0 %v4199
    %v4201 = vpop.xlane.xlu0 %4200
    %v4202 = vcvt.f32.s32 %v4201
    %v4203 = vcvt.f32.s32 %v4197
    %v4204 = vshll.u32 %v4203, 16
    %v4205 = vadd.s32 %v4204, %v4202
    %v4206 = vadd.f32 %v4168, %v3998
    %v4207 = vadd.f32 %v4171, %v4005
    %4210 = vset.pattern.permute.xlu0 0
    %4211 = vperm.xlu0 %4210, %v4206
    %v4212 = vpop.permute.xlu0 %4211
    %4213 = vset.pattern.permute.xlu0 0
    %4214 = vperm.xlu0 %4213, %v4207
    %v4215 = vpop.permute.xlu0 %4214
    %v4216 = vlaneseq
    %v4217 = vshrl.u32 %v4216, 7
    %v4218 = vsub.s32 %v2212, %v4217
    %v4219 = vrot.slane %v4212, %v4218
    %v4220 = vlaneseq
    %v4221 = vshrl.u32 %v4220, 7
    %v4222 = vsub.s32 %v2212, %v4221
    %v4223 = vrot.slane %v4215, %v4222
    %v4224 = vsel %vm2318, %v4223, %v4219
    %v4226 = vsel %vm645, %v4224, %v3926
    %4227 = vset.pattern.permute.xlu0 7
    %4228 = vperm.xlu0 %4227, %v69
    %v4229 = vpop.permute.xlu0 %4228
    %vm4230 = vcmp.eq.s32.totalorder %v4229, %v2212
    %v4231 = vsel %vm4230, 1, 0
    %v4232 = vcvt.s32.f32 %v4231
    %v4235 = vunpack.c.l.s4 1966171168
    %v4236 = vunpack.c.0.s8 %v4235
    %v4237 = vlaneseq
    %v4238 = vshrl.u32 %v4237, 7
    %v4239 = vsub.s32 %v4236, %v4238
    %v4240 = vrot.slane %v4028, %v4239
    %v4241 = vcombine.high %v4240, %v4240
    %v4243 = vunpack.c.l.s4 1966171168
    %v4244 = vunpack.c.0.s8 %v4243
    %v4245 = vlaneseq
    %v4246 = vshrl.u32 %v4245, 7
    %v4247 = vsub.s32 %v4244, %v4246
    %v4248 = vrot.slane %v4240, %v4247
    %v4250 = vunpack.c.l.s4 1966171168
    %v4251 = vunpack.c.0.s8 %v4250
    %v4252 = vlaneseq
    %v4253 = vshrl.u32 %v4252, 7
    %v4254 = vsub.s32 %v4251, %v4253
    %v4255 = vrot.slane %v4241, %v4254
    %v4256 = vlaneseq
    %v4257 = vshrl.u32 %v4256, 7
    %v4258 = vsub.s32 0, %v4257
    %v4259 = vrot.slane %v4248, %v4258
    %v4260 = vlaneseq
    %v4261 = vshrl.u32 %v4260, 7
    %v4262 = vsub.s32 0, %v4261
    %v4263 = vrot.slane %v4255, %v4262
    %v4266 = vadd.f32 %v4259, %v70
    %v4267 = vadd.f32 %v4263, %v70
    %v4268 = vsel %vm2258, %v4266, -inf
    %4269 = vmax.xlane.f32.xlu0 %v4268
    %v4270 = vpop.xlane.xlu0 %4269
    %v4271 = vsel %vm2258, %v4267, -inf
    %4272 = vmax.xlane.f32.xlu0 %v4271
    %v4273 = vpop.xlane.xlu0 %4272
    %v4274 = vsub.f32 %v4266, %v4270
    %v4275 = vsub.f32 %v4267, %v4273
    %v4276 = vmul.f32 %v4274, 1.442695
    %v4277 = vpow.pop %v4276
    %v4278 = vmul.f32 %v4275, 1.442695
    %v4279 = vpow.pop %v4278
    %v4280 = vsel %vm2258, %v4277, 0.0
    %4281 = vadd.xlane.f32.xlu0 %v4280
    %v4282 = vpop.xlane.xlu0 %4281
    %v4283 = vsel %vm2258, %v4279, 0.0
    %4284 = vadd.xlane.f32.xlu0 %v4283
    %v4285 = vpop.xlane.xlu0 %4284
    %v4286 = vlog2.pop %v4282
    %v4287 = vmul.f32 %v4286, 0.6931472
    %v4288 = vlog2.pop %v4285
    %v4289 = vmul.f32 %v4288, 0.6931472
    %v4290 = vadd.f32 %v4270, %v4287
    %v4291 = vadd.f32 %v4273, %v4289
    %v4292 = vlaneseq
    %v4293 = vshrl.u32 %v4292, 7
    %v4294 = vsub.s32 6, %v4293
    %v4295 = vrot.slane %v2208, %v4294
    %4297 = vbcast.lane.b32.xlu0 %v4295, 256
    %v4298 = vpop.permute.xlu0 %4297
    %v4299 = vlaneseq
    %v4300 = vshrl.u32 %v4299, 7
    %v4301 = vsub.s32 7, %v4300
    %v4302 = vrot.slane %v2208, %v4301
    %4304 = vbcast.lane.b32.xlu0 %v4302, 256
    %v4305 = vpop.permute.xlu0 %4304
    %v4308 = vadd.f32 %v4290, %v4298
    %v4309 = vadd.f32 %v4291, %v4305
    %4312 = vset.pattern.permute.xlu0 0
    %4313 = vperm.xlu0 %4312, %v4308
    %v4314 = vpop.permute.xlu0 %4313
    %4315 = vset.pattern.permute.xlu0 0
    %4316 = vperm.xlu0 %4315, %v4309
    %v4317 = vpop.permute.xlu0 %4316
    %v4318 = vlaneseq
    %v4319 = vshrl.u32 %v4318, 7
    %v4320 = vsub.s32 %v2212, %v4319
    %v4321 = vrot.slane %v4314, %v4320
    %v4322 = vlaneseq
    %v4323 = vshrl.u32 %v4322, 7
    %v4324 = vsub.s32 %v2212, %v4323
    %v4325 = vrot.slane %v4317, %v4324
    %v4326 = vsel %vm2318, %v4325, %v4321
    %v4328 = vsel %vm389, %v4326, %v4028
    %v4330 = vrot.slane %v4232, 2
    %v4332 = vmul.f32 %v2208, %v4330
    %v4333 = vsel %vm3141, %v4332, 0.0
    %4334 = vadd.xlane.f32.xlu0 %v4333
    %v4335 = vpop.xlane.xlu0 %4334
    %v4337 = vunpack.c.l.s4 1966171168
    %v4338 = vunpack.c.0.s8 %v4337
    %v4339 = vlaneseq
    %v4340 = vshrl.u32 %v4339, 7
    %v4341 = vsub.s32 %v4338, %v4340
    %v4342 = vrot.slane %v3932, %v4341
    %v4343 = vcombine.high %v4342, %v4342
    %v4345 = vunpack.c.l.s4 1966171168
    %v4346 = vunpack.c.0.s8 %v4345
    %v4347 = vlaneseq
    %v4348 = vshrl.u32 %v4347, 7
    %v4349 = vsub.s32 %v4346, %v4348
    %v4350 = vrot.slane %v4342, %v4349
    %v4352 = vunpack.c.l.s4 1966171168
    %v4353 = vunpack.c.0.s8 %v4352
    %v4354 = vlaneseq
    %v4355 = vshrl.u32 %v4354, 7
    %v4356 = vsub.s32 %v4353, %v4355
    %v4357 = vrot.slane %v4343, %v4356
    %v4358 = vlaneseq
    %v4359 = vshrl.u32 %v4358, 7
    %v4360 = vsub.s32 0, %v4359
    %v4361 = vrot.slane %v4350, %v4360
    %v4362 = vlaneseq
    %v4363 = vshrl.u32 %v4362, 7
    %v4364 = vsub.s32 0, %v4363
    %v4365 = vrot.slane %v4357, %v4364
    %v4368 = vmul.f32 %v70, %v4361
    %v4369 = vmul.f32 %v70, %v4365
    %v4370 = vsel %vm2258, %v4368, 0.0
    %4371 = vadd.xlane.f32.xlu0 %v4370
    %v4372 = vpop.xlane.xlu0 %4371
    %v4373 = vsel %vm2258, %v4369, 0.0
    %4374 = vadd.xlane.f32.xlu0 %v4373
    %v4375 = vpop.xlane.xlu0 %4374
    %v4376 = vlaneseq
    %v4377 = vshrl.u32 %v4376, 7
    %v4378 = vsub.s32 0, %v4377
    %v4379 = vrot.slane %v4232, %v4378
    %4381 = vbcast.lane.b32.xlu0 %v4379, 256
    %v4382 = vpop.permute.xlu0 %4381
    %v4383 = vlaneseq
    %v4384 = vshrl.u32 %v4383, 7
    %v4385 = vsub.s32 1, %v4384
    %v4386 = vrot.slane %v4232, %v4385
    %4388 = vbcast.lane.b32.xlu0 %v4386, 256
    %v4389 = vpop.permute.xlu0 %4388
    %v4392 = vmul.f32 %v4372, %v4382
    %v4393 = vmul.f32 %v4375, %v4389
    %4396 = vset.pattern.permute.xlu0 0
    %4397 = vperm.xlu0 %4396, %v4392
    %v4398 = vpop.permute.xlu0 %4397
    %4399 = vset.pattern.permute.xlu0 0
    %4400 = vperm.xlu0 %4399, %v4393
    %v4401 = vpop.permute.xlu0 %4400
    %v4402 = vlaneseq
    %v4403 = vshrl.u32 %v4402, 7
    %v4404 = vsub.s32 %v2212, %v4403
    %v4405 = vrot.slane %v4398, %v4404
    %v4406 = vlaneseq
    %v4407 = vshrl.u32 %v4406, 7
    %v4408 = vsub.s32 %v2212, %v4407
    %v4409 = vrot.slane %v4401, %v4408
    %v4410 = vsel %vm2318, %v4409, %v4405
    %v4412 = vsel %vm2323, %v4410, 0.0
    %4413 = vadd.xlane.f32.xlu0 %v4412
    %v4414 = vpop.xlane.xlu0 %4413
    %v4416 = vrot.slane %v4414, 2
    %v4418 = vadd.f32 %v4335, %v4416
    %v4420 = vrot.slane %v4418, 6
    %4421 = vrot.lane.b32.xlu0 %v4420, 7
    %v4422 = vpop.permute.xlu0 %4421
    %v4424 = vsel %vm181, %v4422, 0.0
    %4426 = vrot.lane.b32.xlu0 %v4424, 121
    %v4427 = vpop.permute.xlu0 %4426
    %v4429 = vadd.f32 %v4129, %v4427
    %v4430 = vsel %vm389, %v4232, %v4130
    %v4433 = vunpack.c.l.s4 1966171168
    %v4434 = vunpack.c.0.s8 %v4433
    %v4435 = vlaneseq
    %v4436 = vshrl.u32 %v4435, 7
    %v4437 = vsub.s32 %v4434, %v4436
    %v4438 = vrot.slane %v4226, %v4437
    %v4439 = vcombine.high %v4438, %v4438
    %v4441 = vunpack.c.l.s4 1966171168
    %v4442 = vunpack.c.0.s8 %v4441
    %v4443 = vlaneseq
    %v4444 = vshrl.u32 %v4443, 7
    %v4445 = vsub.s32 %v4442, %v4444
    %v4446 = vrot.slane %v4438, %v4445
    %v4448 = vunpack.c.l.s4 1966171168
    %v4449 = vunpack.c.0.s8 %v4448
    %v4450 = vlaneseq
    %v4451 = vshrl.u32 %v4450, 7
    %v4452 = vsub.s32 %v4449, %v4451
    %v4453 = vrot.slane %v4439, %v4452
    %v4454 = vlaneseq
    %v4455 = vshrl.u32 %v4454, 7
    %v4456 = vsub.s32 0, %v4455
    %v4457 = vrot.slane %v4446, %v4456
    %v4458 = vlaneseq
    %v4459 = vshrl.u32 %v4458, 7
    %v4460 = vsub.s32 0, %v4459
    %v4461 = vrot.slane %v4453, %v4460
    %v4464 = vadd.f32 %v4457, %v70
    %v4465 = vadd.f32 %v4461, %v70
    %v4466 = vsel %vm2258, %v4464, -inf
    %4467 = vmax.xlane.f32.xlu0 %v4466
    %v4468 = vpop.xlane.xlu0 %4467
    %v4469 = vsel %vm2258, %v4465, -inf
    %4470 = vmax.xlane.f32.xlu0 %v4469
    %v4471 = vpop.xlane.xlu0 %4470
    %vm4472 = vcmp.eq.f32.partialorder %v4464, %v4468
    %vm4473 = vcmp.eq.f32.partialorder %v4465, %v4471
    %v4474 = vsel %vm4472, %v2212, 6
    %v4475 = vsel %vm4473, %v2212, 6
    %v4476 = vsel %vm2258, %v4474, 2147483647
    %v4477 = vand.u32 %v4476, 65535
    %v4478 = vshra.s32 %v4476, 16
    %v4479 = vcvt.s32.f32 %v4477
    %v4480 = vcvt.s32.f32 %v4478
    %4481 = vmin.xlane.f32.xlu0 %v4480
    %v4482 = vpop.xlane.xlu0 %4481
    %vm4483 = vcmp.eq.f32.partialorder %v4480, %v4482
    %v4484 = vsel %vm4483, %v4479, inf
    %4485 = vmin.xlane.f32.xlu0 %v4484
    %v4486 = vpop.xlane.xlu0 %4485
    %v4487 = vcvt.f32.s32 %v4486
    %v4488 = vcvt.f32.s32 %v4482
    %v4489 = vshll.u32 %v4488, 16
    %v4490 = vadd.s32 %v4489, %v4487
    %v4491 = vsel %vm2258, %v4475, 2147483647
    %v4492 = vand.u32 %v4491, 65535
    %v4493 = vshra.s32 %v4491, 16
    %v4494 = vcvt.s32.f32 %v4492
    %v4495 = vcvt.s32.f32 %v4493
    %4496 = vmin.xlane.f32.xlu0 %v4495
    %v4497 = vpop.xlane.xlu0 %4496
    %vm4498 = vcmp.eq.f32.partialorder %v4495, %v4497
    %v4499 = vsel %vm4498, %v4494, inf
    %4500 = vmin.xlane.f32.xlu0 %v4499
    %v4501 = vpop.xlane.xlu0 %4500
    %v4502 = vcvt.f32.s32 %v4501
    %v4503 = vcvt.f32.s32 %v4497
    %v4504 = vshll.u32 %v4503, 16
    %v4505 = vadd.s32 %v4504, %v4502
    %v4506 = vadd.f32 %v4468, %v4298
    %v4507 = vadd.f32 %v4471, %v4305
    %4510 = vset.pattern.permute.xlu0 0
    %4511 = vperm.xlu0 %4510, %v4506
    %v4512 = vpop.permute.xlu0 %4511
    %4513 = vset.pattern.permute.xlu0 0
    %4514 = vperm.xlu0 %4513, %v4507
    %v4515 = vpop.permute.xlu0 %4514
    %v4516 = vlaneseq
    %v4517 = vshrl.u32 %v4516, 7
    %v4518 = vsub.s32 %v2212, %v4517
    %v4519 = vrot.slane %v4512, %v4518
    %v4520 = vlaneseq
    %v4521 = vshrl.u32 %v4520, 7
    %v4522 = vsub.s32 %v2212, %v4521
    %v4523 = vrot.slane %v4515, %v4522
    %v4524 = vsel %vm2318, %v4523, %v4519
    %v4526 = vsel %vm389, %v4524, %v4226
    %v4527 = vlaneseq
    %v4528 = vshrl.u32 %v4527, 7
    %v4529 = vsub.s32 5, %v4528
    %v4530 = vrot.slane %v70, %v4529
    %v4531 = vadd.f32 %v4328, %v4530
    %v4532 = vsel %vm2323, %v4531, -inf
    %4533 = vmax.xlane.f32.xlu0 %v4532
    %v4534 = vpop.xlane.xlu0 %4533
    %v4535 = vsub.f32 %v4531, %v4534
    %v4536 = vmul.f32 %v4535, 1.442695
    %v4537 = vpow.pop %v4536
    %v4538 = vsel %vm2323, %v4537, 0.0
    %4539 = vadd.xlane.f32.xlu0 %v4538
    %v4540 = vpop.xlane.xlu0 %4539
    %v4541 = vlog2.pop %v4540
    %v4542 = vmul.f32 %v4541, 0.6931472
    %v4543 = vadd.f32 %v4534, %v4542
    %vm4544 = vcmask 1024
    %4545 = vst.msk [vmem:[%s10] sm:$0x3] %vm4544, %v4543
    %v4546 = vmul.f32 %v4530, %v4430
    %v4547 = vsel %vm2323, %v4546, 0.0
    %4548 = vadd.xlane.f32.xlu0 %v4547
    %v4549 = vpop.xlane.xlu0 %4548
    %v4550 = vadd.f32 %v4429, %v4549
    %4551 = vst.msk [vmem:[%s11] sm:$0x3] %vm4544, %v4550
    %v4552 = vadd.f32 %v4526, %v4530
    %v4553 = vsel %vm2323, %v4552, -inf
    %4554 = vmax.xlane.f32.xlu0 %v4553
    %v4555 = vpop.xlane.xlu0 %4554
    %4556 = vst.msk [vmem:[%s12] sm:$0x3] %vm4544, %v4555
    %vm4557 = vcmp.eq.f32.partialorder %v4552, %v4555
    %v4558 = vsel %vm4557, %v2212, 6
    %v4559 = vsel %vm2323, %v4558, 2147483647
    %v4560 = vand.u32 %v4559, 65535
    %v4561 = vshra.s32 %v4559, 16
    %v4562 = vcvt.s32.f32 %v4560
    %v4563 = vcvt.s32.f32 %v4561
    %4564 = vmin.xlane.f32.xlu0 %v4563
    %v4565 = vpop.xlane.xlu0 %4564
    %vm4566 = vcmp.eq.f32.partialorder %v4563, %v4565
    %v4567 = vsel %vm4566, %v4562, inf
    %4568 = vmin.xlane.f32.xlu0 %v4567
    %v4569 = vpop.xlane.xlu0 %4568
    %v4570 = vcvt.f32.s32 %v4569
    %v4571 = vcvt.f32.s32 %v4565
    %v4572 = vshll.u32 %v4571, 16
    %v4573 = vadd.s32 %v4572, %v4570
    %vm4574 = vcmask 58368
    %v4575 = vsel %vm4574, %v68, 0.0
    %4576 = vadd.xlane.f32.xlu0 %v4575
    %v4577 = vpop.xlane.xlu0 %4576
    %v4578 = vcvt.f32.s32.to.zero.pseudo %v4577
    %vm4579 = vcmp.eq.s32.totalorder %v2212, 7
    %vm4580 = vcmp.gt.s32.totalorder %v4578, 7
    %v4581 = vsel %vm4580, 1, 0
    %vm4582 = vcmp.eq.s32.totalorder %v4581, 1
    %vm4583 = vmand %vm4579, %vm4582
    %v4584 = vsel %vm4583, %v4573, 0
    %vm4585 = vcmp.eq.s32.totalorder %v4573, %v2212
    %v4586 = vlaneseq
    %v4587 = vshrl.u32 %v4586, 7
    %v4588 = vsub.s32 %v2212, %v4587
    %v4589 = vrot.slane %v4490, %v4588
    %v4590 = vlaneseq
    %v4591 = vshrl.u32 %v4590, 7
    %v4592 = vsub.s32 %v2212, %v4591
    %v4593 = vrot.slane %v4505, %v4592
    %v4594 = vsel %vm2318, %v4593, %v4589
    %v4595 = vsel %vm4585, %v4594, 0
    %v4596 = vcvt.s32.f32 %v4595
    %v4597 = vsel %vm2323, %v4596, 0.0
    %4598 = vadd.xlane.f32.xlu0 %v4597
    %v4599 = vpop.xlane.xlu0 %4598
    %v4600 = vcvt.f32.s32.to.zero.pseudo %v4599
    %v4601 = vsub.s32 %v4578, 1
    %vm4602 = vcmp.eq.s32.totalorder %v4601, 6
    %vm4603 = vcmp.gt.s32.totalorder %v4601, 6
    %v4604 = vsel %vm4603, %v4600, %v4573
    %v4605 = vsel %vm4602, %v4573, %v4604
    %vm4606 = vcmp.eq.s32.totalorder %v2212, 6
    %vm4607 = vcmp.gt.s32.totalorder %v4578, 6
    %v4608 = vsel %vm4607, 1, 0
    %vm4609 = vcmp.eq.s32.totalorder %v4608, 1
    %vm4610 = vmand %vm4606, %vm4609
    %v4611 = vsel %vm4610, %v4605, %v4584
    %vm4612 = vcmp.eq.s32.totalorder %v4605, %v2212
    %v4613 = vlaneseq
    %v4614 = vshrl.u32 %v4613, 7
    %v4615 = vsub.s32 %v2212, %v4614
    %v4616 = vrot.slane %v4190, %v4615
    %v4617 = vlaneseq
    %v4618 = vshrl.u32 %v4617, 7
    %v4619 = vsub.s32 %v2212, %v4618
    %v4620 = vrot.slane %v4205, %v4619
    %v4621 = vsel %vm2318, %v4620, %v4616
    %v4622 = vsel %vm4612, %v4621, 0
    %v4623 = vcvt.s32.f32 %v4622
    %v4624 = vsel %vm2323, %v4623, 0.0
    %4625 = vadd.xlane.f32.xlu0 %v4624
    %v4626 = vpop.xlane.xlu0 %4625
    %v4627 = vcvt.f32.s32.to.zero.pseudo %v4626
    %vm4628 = vcmp.eq.s32.totalorder %v4601, 5
    %vm4629 = vcmp.gt.s32.totalorder %v4601, 5
    %v4630 = vsel %vm4629, %v4627, %v4605
    %v4631 = vsel %vm4628, %v4573, %v4630
    %vm4632 = vcmp.eq.s32.totalorder %v2212, 5
    %vm4633 = vcmp.gt.s32.totalorder %v4578, 5
    %v4634 = vsel %vm4633, 1, 0
    %vm4635 = vcmp.eq.s32.totalorder %v4634, 1
    %vm4636 = vmand %vm4632, %vm4635
    %v4637 = vsel %vm4636, %v4631, %v4611
    %vm4638 = vcmp.eq.s32.totalorder %v4631, %v2212
    %v4639 = vlaneseq
    %v4640 = vshrl.u32 %v4639, 7
    %v4641 = vsub.s32 %v2212, %v4640
    %v4642 = vrot.slane %v3890, %v4641
    %v4643 = vlaneseq
    %v4644 = vshrl.u32 %v4643, 7
    %v4645 = vsub.s32 %v2212, %v4644
    %v4646 = vrot.slane %v3905, %v4645
    %v4647 = vsel %vm2318, %v4646, %v4642
    %v4648 = vsel %vm4638, %v4647, 0
    %v4649 = vcvt.s32.f32 %v4648
    %v4650 = vsel %vm2323, %v4649, 0.0
    %4651 = vadd.xlane.f32.xlu0 %v4650
    %v4652 = vpop.xlane.xlu0 %4651
    %v4653 = vcvt.f32.s32.to.zero.pseudo %v4652
    %vm4654 = vcmp.eq.s32.totalorder %v4601, 4
    %vm4655 = vcmp.gt.s32.totalorder %v4601, 4
    %v4656 = vsel %vm4655, %v4653, %v4631
    %v4657 = vsel %vm4654, %v4573, %v4656
    %vm4658 = vcmp.gt.s32.totalorder %v4578, 4
    %v4659 = vsel %vm4658, 1, 0
    %vm4660 = vcmp.eq.s32.totalorder %v4659, 1
    %vm4661 = vmand %vm2213, %vm4660
    %v4662 = vsel %vm4661, %v4657, %v4637
    %vm4663 = vcmp.eq.s32.totalorder %v4657, %v2212
    %v4664 = vlaneseq
    %v4665 = vshrl.u32 %v4664, 7
    %v4666 = vsub.s32 %v2212, %v4665
    %v4667 = vrot.slane %v3590, %v4666
    %v4668 = vlaneseq
    %v4669 = vshrl.u32 %v4668, 7
    %v4670 = vsub.s32 %v2212, %v4669
    %v4671 = vrot.slane %v3605, %v4670
    %v4672 = vsel %vm2318, %v4671, %v4667
    %v4673 = vsel %vm4663, %v4672, 0
    %v4674 = vcvt.s32.f32 %v4673
    %v4675 = vsel %vm2323, %v4674, 0.0
    %4676 = vadd.xlane.f32.xlu0 %v4675
    %v4677 = vpop.xlane.xlu0 %4676
    %v4678 = vcvt.f32.s32.to.zero.pseudo %v4677
    %vm4679 = vcmp.eq.s32.totalorder %v4601, 3
    %vm4680 = vcmp.gt.s32.totalorder %v4601, 3
    %v4681 = vsel %vm4680, %v4678, %v4657
    %v4682 = vsel %vm4679, %v4573, %v4681
    %vm4683 = vcmp.eq.s32.totalorder %v2212, 3
    %vm4684 = vcmp.gt.s32.totalorder %v4578, 3
    %v4685 = vsel %vm4684, 1, 0
    %vm4686 = vcmp.eq.s32.totalorder %v4685, 1
    %vm4687 = vmand %vm4683, %vm4686
    %v4688 = vsel %vm4687, %v4682, %v4662
    %vm4689 = vcmp.eq.s32.totalorder %v4682, %v2212
    %v4690 = vlaneseq
    %v4691 = vshrl.u32 %v4690, 7
    %v4692 = vsub.s32 %v2212, %v4691
    %v4693 = vrot.slane %v3299, %v4692
    %v4694 = vlaneseq
    %v4695 = vshrl.u32 %v4694, 7
    %v4696 = vsub.s32 %v2212, %v4695
    %v4697 = vrot.slane %v3314, %v4696
    %v4698 = vsel %vm2318, %v4697, %v4693
    %v4699 = vsel %vm4689, %v4698, 0
    %v4700 = vcvt.s32.f32 %v4699
    %v4701 = vsel %vm2323, %v4700, 0.0
    %4702 = vadd.xlane.f32.xlu0 %v4701
    %v4703 = vpop.xlane.xlu0 %4702
    %v4704 = vcvt.f32.s32.to.zero.pseudo %v4703
    %vm4705 = vcmp.eq.s32.totalorder %v4601, 2
    %vm4706 = vcmp.gt.s32.totalorder %v4601, 2
    %v4707 = vsel %vm4706, %v4704, %v4682
    %v4708 = vsel %vm4705, %v4573, %v4707
    %vm4709 = vcmp.eq.s32.totalorder %v2212, 2
    %vm4710 = vcmp.gt.s32.totalorder %v4578, 2
    %v4711 = vsel %vm4710, 1, 0
    %vm4712 = vcmp.eq.s32.totalorder %v4711, 1
    %vm4713 = vmand %vm4709, %vm4712
    %v4714 = vsel %vm4713, %v4708, %v4688
    %vm4715 = vcmp.eq.s32.totalorder %v4708, %v2212
    %v4716 = vlaneseq
    %v4717 = vshrl.u32 %v4716, 7
    %v4718 = vsub.s32 %v2212, %v4717
    %v4719 = vrot.slane %v2998, %v4718
    %v4720 = vlaneseq
    %v4721 = vshrl.u32 %v4720, 7
    %v4722 = vsub.s32 %v2212, %v4721
    %v4723 = vrot.slane %v3013, %v4722
    %v4724 = vsel %vm2318, %v4723, %v4719
    %v4725 = vsel %vm4715, %v4724, 0
    %v4726 = vcvt.s32.f32 %v4725
    %v4727 = vsel %vm2323, %v4726, 0.0
    %4728 = vadd.xlane.f32.xlu0 %v4727
    %v4729 = vpop.xlane.xlu0 %4728
    %v4730 = vcvt.f32.s32.to.zero.pseudo %v4729
    %vm4731 = vcmp.eq.s32.totalorder %v4601, 1
    %vm4732 = vcmp.gt.s32.totalorder %v4601, 1
    %v4733 = vsel %vm4732, %v4730, %v4708
    %v4734 = vsel %vm4731, %v4573, %v4733
    %vm4735 = vcmp.eq.s32.totalorder %v2212, 1
    %vm4736 = vcmp.gt.s32.totalorder %v4578, 1
    %v4737 = vsel %vm4736, 1, 0
    %vm4738 = vcmp.eq.s32.totalorder %v4737, 1
    %vm4739 = vmand %vm4735, %vm4738
    %v4740 = vsel %vm4739, %v4734, %v4714
    %vm4741 = vcmp.eq.s32.totalorder %v4734, %v2212
    %v4742 = vlaneseq
    %v4743 = vshrl.u32 %v4742, 7
    %v4744 = vsub.s32 %v2212, %v4743
    %v4745 = vrot.slane %v2697, %v4744
    %v4746 = vlaneseq
    %v4747 = vshrl.u32 %v4746, 7
    %v4748 = vsub.s32 %v2212, %v4747
    %v4749 = vrot.slane %v2712, %v4748
    %v4750 = vsel %vm2318, %v4749, %v4745
    %v4751 = vsel %vm4741, %v4750, 0
    %v4752 = vcvt.s32.f32 %v4751
    %v4753 = vsel %vm2323, %v4752, 0.0
    %4754 = vadd.xlane.f32.xlu0 %v4753
    %v4755 = vpop.xlane.xlu0 %4754
    %v4756 = vcvt.f32.s32.to.zero.pseudo %v4755
    %vm4757 = vcmp.eq.s32.totalorder %v4601, 0
    %vm4758 = vcmp.gt.s32.totalorder %v4601, 0
    %v4759 = vsel %vm4758, %v4756, %v4734
    %v4760 = vsel %vm4757, %v4573, %v4759
    %vm4761 = vcmp.eq.s32.totalorder %v2212, 0
    %vm4762 = vcmp.gt.s32.totalorder %v4578, 0
    %v4763 = vsel %vm4762, 1, 0
    %vm4764 = vcmp.eq.s32.totalorder %v4763, 1
    %vm4765 = vmand %vm4761, %vm4764
    %v4766 = vsel %vm4765, %v4760, %v4740
    %4767 = vst.msk [vmem:[#allocation8] sm:$0x3] %vm4574, %v4766
    // Predicated region
    $region50: #{tpu_custom_call.1} parent=1 // pred_check
      _
    $region51: #{tpu_custom_call.1} parent=1 // pred_check_branch
      %4769 = sbr.rel (0) target = $region53
    $region52: #{tpu_custom_call.1} parent=1 // pred_region
      _
    $region53: #{tpu_custom_call.1} parent=1 // pred_fallthru
      _
    // Predicated region
    $region54: #{tpu_custom_call.1} parent=1 // pred_check
      _
    $region55: #{tpu_custom_call.1} parent=1 // pred_check_branch
      %4771 = sbr.rel (0) target = $region57
    $region56: #{tpu_custom_call.1} parent=1 // pred_region
      _
    $region57: #{tpu_custom_call.1} parent=1 // pred_fallthru
      _
    // Predicated region
    $region58: #{tpu_custom_call.1} parent=1 // pred_check
      _
    $region59: #{tpu_custom_call.1} parent=1 // pred_check_branch
      %4773 = sbr.rel (0) target = $region61
    $region60: #{tpu_custom_call.1} parent=1 // pred_region
      _
    $region61: #{tpu_custom_call.1} parent=1 // pred_fallthru
      _
    // Predicated region
    $region62: #{tpu_custom_call.1} parent=1 // pred_check
      _
    $region63: #{tpu_custom_call.1} parent=1 // pred_check_branch
      %4775 = sbr.rel (0) target = $region65
    $region64: #{tpu_custom_call.1} parent=1 // pred_region
      %s4777 = ssub.s32 32, 32
      %4778 = vsyncadd [#allocation5], %s4777
      %s4780 = sshll.u32 [#allocation8], 4
      %s4781 = int_to_ptr.vmem [resolvable:$true] %s4780
      %4783 = dma.vmem_to_hbm [thread:$0]  %s4781, 32, %s13, [#allocation5]
    $region65: #{tpu_custom_call.1} parent=1 // pred_fallthru
      _
    // Predicated region
    $region66: #{tpu_custom_call.1} parent=1 // pred_check
      _
    $region67: #{tpu_custom_call.1} parent=1 // pred_check_branch
      %4785 = sbr.rel (0) target = $region69
    $region68: #{tpu_custom_call.1} parent=1 // pred_region
      _
    $region69: #{tpu_custom_call.1} parent=1 // pred_fallthru
      _
    // Predicated region
    $region70: #{tpu_custom_call.1} parent=1 // pred_check
      _
    $region71: #{tpu_custom_call.1} parent=1 // pred_check_branch
      %4787 = sbr.rel (0) target = $region73
    $region72: #{tpu_custom_call.1} parent=1 // pred_region
      _
    $region73: #{tpu_custom_call.1} parent=1 // pred_fallthru
      _
    // Predicated region
    $region74: #{tpu_custom_call.1} parent=1 // pred_check
      _
    $region75: #{tpu_custom_call.1} parent=1 // pred_check_branch
      %4789 = sbr.rel (0) target = $region77
    $region76: #{tpu_custom_call.1} parent=1 // pred_region
      _
    $region77: #{tpu_custom_call.1} parent=1 // pred_fallthru
      _
    // Predicated region
    $region78: #{tpu_custom_call.1} parent=1 // pred_check
      _
    $region79: #{tpu_custom_call.1} parent=1 // pred_check_branch
      %4791 = sbr.rel (0) target = $region81
    $region80: #{tpu_custom_call.1} parent=1 // pred_region
      %4792 = dma.done [#allocation5], 32
    $region81: #{tpu_custom_call.1} parent=1 // pred_fallthru
      _
    %4793 = vsyncpa [#allocation4], 1
    %4794 = vsyncpa [#allocation7], 1
    %4795 = vsyncpa [#allocation5], 1

</llo_original>
